<compile_context>
chip_gen: v7x
topology: tpu7x:2x2x1
jax: 0.10.0
libtpu: 0.0.40
codegen_flags: <defaults>
</compile_context>

<pallas_src>
import functools

import jax
import jax.numpy as jnp
import numpy as np
from jax.experimental import pallas as pl
from jax.experimental.pallas import tpu as pltpu


def _round_up(x, m):
    return ((x + m - 1) // m) * m


def _vmem_capacity_bytes():
    try:
        return int(pltpu.get_tpu_info().vmem_capacity_bytes)
    except Exception:
        return 64 * 2**20          # conservative (v7x-sized); safe everywhere


def _block_vmem_bytes(th, wt, wc, c, cw, in_bpe, out_bpe):
    """Accurate per-step VMEM model for the pipelined blocks + kernel temps."""
    plane_blocks = th * 2 * (wc + wt) * c * in_bpe      # ee/oe (wc) + eo/oo (wt)
    halo_blocks = (wc + wt) * c * in_bpe                # ee + eo halo rows
    out_block = th * wt * c * out_bpe
    weights = 9 * c * c * in_bpe + 8 * c                # taps + f32 bias
    pipelined = 2 * (plane_blocks + halo_blocks + out_block + weights)  # dbl buf
    temps = 3 * (wc + wt) * c * in_bpe + cw * c * 4     # live row slices + acc
    return pipelined + temps + (256 << 10)              # descriptor/regalloc slack


def _make_conv_kernel(th, wt, cw):
    """Build the kernel for static (row-tile, padded output width, col band)."""
    n_chunks = wt // cw

    def kernel(ee_ref, eeh_ref, eo_ref, eoh_ref, oe_ref, oo_ref,
               w_ref, b_ref, o_ref):
        c_out = o_ref.shape[3]
        # Hoisted bias broadcast (single op, reused by every row band).
        bias_b = jnp.broadcast_to(b_ref[...].astype(jnp.float32), (cw, c_out))

        # Row 0 of the even-row planes; carried across output rows so each
        # even-row plane row is loaded from VMEM exactly once.
        ee_c = ee_ref[0, 0]                      # (Wc, C)
        eo_c = eo_ref[0, 0]                      # (Wt, C)
        for i in range(th):                      # static, fully unrolled
            oe_c = oe_ref[0, i]                  # (Wc, C)
            oo_c = oo_ref[0, i]                  # (Wt, C)
            if i + 1 < th:
                ee_n = ee_ref[0, i + 1]          # next even row (body)
                eo_n = eo_ref[0, i + 1]
            else:
                ee_n = eeh_ref[0, 0]             # next even row (halo)
                eo_n = eoh_ref[0, 0]

            for cc in range(n_chunks):
                c0 = cc * cw
                # Tap order k = kh*3 + kw, matching w_ref.  The +1 column
                # offsets are in-register sublane shifts (XLU slack).
                taps = (
                    ee_c[c0:c0 + cw], eo_c[c0:c0 + cw], ee_c[c0 + 1:c0 + 1 + cw],
                    oe_c[c0:c0 + cw], oo_c[c0:c0 + cw], oe_c[c0 + 1:c0 + 1 + cw],
                    ee_n[c0:c0 + cw], eo_n[c0:c0 + cw], ee_n[c0 + 1:c0 + 1 + cw],
                )
                acc = bias_b                      # bias-initialized accumulator
                for k in range(9):
                    acc = acc + jnp.dot(taps[k], w_ref[k],
                                        preferred_element_type=jnp.float32)
                o_ref[0, i, c0:c0 + cw, :] = acc.astype(o_ref.dtype)

            ee_c = ee_n
            eo_c = eo_n

    return kernel


def _downsample_nhwc_impl(x, weight, bias, *, tile_h, compute_dtype):
    """Conv2d(C, C, 3, stride=2, padding=1); NHWC in, NHWC out."""
    N, H, W, C = x.shape
    Ho = (H - 1) // 2 + 1
    Wo = (W - 1) // 2 + 1
    out_dtype = x.dtype
    cdt = jnp.dtype(compute_dtype) if compute_dtype is not None else jnp.dtype(out_dtype)
    in_bpe = cdt.itemsize
    out_bpe = jnp.dtype(out_dtype).itemsize

    # Column band: <=128 KiB f32 accumulator (<=32 vregs), multiple of the
    # compute dtype's sublane tile.  Wt is padded so bands tile it exactly.
    sub = max(8, 32 // in_bpe)                   # 8 for f32, 16 for bf16
    cw_cap = max(sub, ((32768 // max(C, 1)) // sub) * sub)
    cw = min(_round_up(Wo, sub), cw_cap)
    Wt = _round_up(Wo, cw)
    Wc = Wt + sub                                # even-col planes carry +1 col

    cap = _vmem_capacity_bytes()
    budget = int(cap * 0.35)                     # working-set target

    # Row tile.
    if tile_h is None:
        th = max(1, min(Ho, 16))                 # <=16: bounded kernel unroll
        if N == 1 and Ho > 1:
            th = min(th, (Ho + 1) // 2)          # keep >= 2 steps for 2-TC chips
    else:
        th = max(1, min(int(tile_h), Ho, 32))
    while th > 1 and _block_vmem_bytes(th, Wt, Wc, C, cw, in_bpe, out_bpe) > budget:
        th = (th + 1) // 2
    n_h = -(-Ho // th)
    Ho_pad = n_h * th

    # Parity planes: P[r,c][n,i,j,:] = x_pad[n, 2i+r, 2j+c, :] (zero padded).
    # Built as one fused XLA slice+pad pass; total size ~ the input.
    xc = x.astype(cdt)

    def make_plane(r, c, n_rows, n_cols):
        src = xc[:, (1 - r)::2, (1 - c)::2, :]
        top, left = 1 - r, 1 - c
        return jnp.pad(src, ((0, 0),
                             (top, n_rows - top - src.shape[1]),
                             (left, n_cols - left - src.shape[2]),
                             (0, 0)))

    p_ee = make_plane(0, 0, Ho_pad + 1, Wc)      # even rows, even cols (+1 row/col)
    p_eo = make_plane(0, 1, Ho_pad + 1, Wt)      # even rows, odd cols  (+1 row)
    p_oe = make_plane(1, 0, Ho_pad, Wc)          # odd rows,  even cols (+1 col)
    p_oo = make_plane(1, 1, Ho_pad, Wt)          # odd rows,  odd cols

    # PyTorch weight (Cout, Cin, 3, 3) -> per-tap (9, Cin, Cout), k = kh*3 + kw.
    w_taps = jnp.transpose(weight, (2, 3, 1, 0)).reshape(9, C, C).astype(cdt)
    b_row = bias.reshape(1, C).astype(jnp.float32)

    def body_map(n, i):
        return (n, i, 0, 0)

    def halo_map(n, i):
        # block height 1 -> block index == plane row index
        return (n, (i + 1) * th, 0, 0)

    body_wc = pl.BlockSpec((1, th, Wc, C), body_map)
    body_wt = pl.BlockSpec((1, th, Wt, C), body_map)
    halo_wc = pl.BlockSpec((1, 1, Wc, C), halo_map)
    halo_wt = pl.BlockSpec((1, 1, Wt, C), halo_map)
    w_spec = pl.BlockSpec((9, C, C), lambda n, i: (0, 0, 0))
    b_spec = pl.BlockSpec((1, C), lambda n, i: (0, 0))
    out_spec = pl.BlockSpec((1, th, Wt, C), body_map)

    grid = (N, n_h)
    flops = 2 * N * Ho_pad * Wt * 9 * C * C
    bytes_accessed = (N * (2 * Ho_pad + 1) * (Wc + Wt) * C * in_bpe
                      + 9 * C * C * in_bpe + 4 * C
                      + N * Ho_pad * Wt * C * out_bpe)

    need = _block_vmem_bytes(th, Wt, Wc, C, cw, in_bpe, out_bpe)
    vmem_limit = max(32 * 2**20, min(int(cap * 0.75), int(need * 1.5)),
                     need + (4 << 20))
    vmem_limit = int(min(vmem_limit, cap - (2 << 20)))

    out_padded = pl.pallas_call(
        _make_conv_kernel(th, Wt, cw),
        out_shape=jax.ShapeDtypeStruct((N, Ho_pad, Wt, C), out_dtype),
        grid_spec=pltpu.PrefetchScalarGridSpec(
            num_scalar_prefetch=0,
            grid=grid,
            in_specs=[
                body_wc, halo_wc,    # P_ee body + halo row
                body_wt, halo_wt,    # P_eo body + halo row
                body_wc,             # P_oe
                body_wt,             # P_oo
                w_spec,              # weights (resident)
                b_spec,              # bias
            ],
            out_specs=out_spec,
        ),
        compiler_params=pltpu.CompilerParams(
            dimension_semantics=("parallel", "parallel"),
            vmem_limit_bytes=vmem_limit,
        ),
        cost_estimate=pl.CostEstimate(flops=flops, transcendentals=0,
                                      bytes_accessed=bytes_accessed),
    )(p_ee, p_ee, p_eo, p_eo, p_oe, p_oo, w_taps, b_row)

    return out_padded[:, :Ho, :Wo, :]


@functools.partial(jax.jit, static_argnames=("tile_h", "compute_dtype"))
def downsample_forward_nhwc(x_nhwc, weight, bias, *, tile_h=None, compute_dtype=None):
    """NHWC in / NHWC out: skips the HBM transpose passes of the NCHW wrapper."""
    return _downsample_nhwc_impl(x_nhwc, weight, bias,
                                 tile_h=tile_h, compute_dtype=compute_dtype)


@functools.partial(jax.jit, static_argnames=("tile_h", "compute_dtype"))
def downsample_forward(x_nchw, weight, bias, *, tile_h=None, compute_dtype=None):
    """PyTorch-parity entry point: NCHW in / NCHW out."""
    x = jnp.transpose(x_nchw, (0, 2, 3, 1))
    y = _downsample_nhwc_impl(x, weight, bias,
                              tile_h=tile_h, compute_dtype=compute_dtype)
    return jnp.transpose(y, (0, 3, 1, 2))


def init_downsample_params(key, in_channels):
    """PyTorch Conv2d default init: uniform(+/- 1/sqrt(fan_in))."""
    kw, kb = jax.random.split(key)
    fan_in = in_channels * 3 * 3
    bound = 1.0 / np.sqrt(fan_in)
    weight = jax.random.uniform(
        kw, (in_channels, in_channels, 3, 3), jnp.float32, -bound, bound)
    bias = jax.random.uniform(kb, (in_channels,), jnp.float32, -bound, bound)
    return weight, bias


def _conv_ref(x, weight, bias):
    C = x.shape[1]
    return jax.lax.conv_general_dilated(
        x, weight, window_strides=(2, 2), padding=((1, 1), (1, 1)),
        dimension_numbers=("NCHW", "OIHW", "NCHW")) + bias.reshape(1, C, 1, 1)


if __name__ == "__main__":
    key = jax.random.PRNGKey(0)
    k_x, k_p, k_x2, k_p2 = jax.random.split(key, 4)

    # Test 1: module-sized case (batch=2, channels=4, spatial=16).
    N, C, H, W = 2, 4, 16, 16
    x = jax.random.normal(k_x, (N, C, H, W), jnp.float32)
    weight, bias = init_downsample_params(k_p, C)

    out = jax.block_until_ready(downsample_forward(x, weight, bias))
    ref = _conv_ref(x, weight, bias)
    assert out.shape == (N, C, H // 2, W // 2), out.shape
    assert np.allclose(np.asarray(out), np.asarray(ref), atol=1e-4, rtol=1e-4)

    # Test 1b: explicit small tile to exercise the multi-tile halo path.
    out_tiled = jax.block_until_ready(
        downsample_forward(x, weight, bias, tile_h=2))
    assert np.allclose(np.asarray(out_tiled), np.asarray(ref), atol=1e-4, rtol=1e-4)

    # Test 1c: NHWC entry point (no wrapper transposes).
    x_nhwc = jnp.transpose(x, (0, 2, 3, 1))
    out_nhwc = jax.block_until_ready(downsample_forward_nhwc(x_nhwc, weight, bias))
    ref_nhwc = jnp.transpose(ref, (0, 2, 3, 1))
    assert out_nhwc.shape == ref_nhwc.shape
    assert np.allclose(np.asarray(out_nhwc), np.asarray(ref_nhwc), atol=1e-4, rtol=1e-4)

    # Test 1d: bf16 MXU fast path (f32 accumulation), looser tolerance.
    out_bf16 = jax.block_until_ready(
        downsample_forward(x, weight, bias, compute_dtype=jnp.bfloat16))
    assert np.allclose(np.asarray(out_bf16), np.asarray(ref), atol=5e-2, rtol=5e-2)

    # Test 2: odd spatial sizes exercise padding / ragged edges / 2-tile grid.
    N2, C2, H2, W2 = 1, 8, 9, 11
    x2 = jax.random.normal(k_x2, (N2, C2, H2, W2), jnp.float32)
    w2, b2 = init_downsample_params(k_p2, C2)
    out2 = jax.block_until_ready(downsample_forward(x2, w2, b2))
    ref2 = _conv_ref(x2, w2, b2)
    assert out2.shape == ref2.shape, (out2.shape, ref2.shape)
    assert np.allclose(np.asarray(out2), np.asarray(ref2), atol=1e-4, rtol=1e-4)

    print("KERNEL_OK")
</pallas_src>

<mosaic_0001>
module attributes {stable_mosaic.version = 11 : i64} {
  func.func @kernel(%arg0: i32, %arg1: i32, %arg2: memref<1x8x16x4xf32, #tpu.memory_space<vmem>>, %arg3: memref<1x1x16x4xf32, #tpu.memory_space<vmem>>, %arg4: memref<1x8x8x4xf32, #tpu.memory_space<vmem>>, %arg5: memref<1x1x8x4xf32, #tpu.memory_space<vmem>>, %arg6: memref<1x8x16x4xf32, #tpu.memory_space<vmem>>, %arg7: memref<1x8x8x4xf32, #tpu.memory_space<vmem>>, %arg8: memref<9x4x4xf32, #tpu.memory_space<vmem>>, %arg9: memref<1x4xf32, #tpu.memory_space<vmem>>, %arg10: memref<1x8x8x4xf32, #tpu.memory_space<vmem>>) attributes {dimension_semantics = [#tpu.dimension_semantics<parallel>, #tpu.dimension_semantics<parallel>], iteration_bounds = array<i64: 2, 1>, scalar_prefetch = 0 : i64, scratch_operands = 0 : i64, tpu.core_type = #tpu.core_type<tc>, window_params = [{transform_indices = @transform_0, window_bounds = array<i64: 1, 8, 16, 4>}, {transform_indices = @transform_1, window_bounds = array<i64: 1, 1, 16, 4>}, {transform_indices = @transform_2, window_bounds = array<i64: 1, 8, 8, 4>}, {transform_indices = @transform_3, window_bounds = array<i64: 1, 1, 8, 4>}, {transform_indices = @transform_4, window_bounds = array<i64: 1, 8, 16, 4>}, {transform_indices = @transform_5, window_bounds = array<i64: 1, 8, 8, 4>}, {pipeline_mode = #tpu.pipeline_mode<synchronous>, transform_indices = @transform_6, window_bounds = array<i64: 9, 4, 4>}, {pipeline_mode = #tpu.pipeline_mode<synchronous>, transform_indices = @transform_7, window_bounds = array<i64: 1, 4>}, {transform_indices = @transform_8, window_bounds = array<i64: 1, 8, 8, 4>}]} {
    %c0 = arith.constant 0 : index
    %c0_0 = arith.constant 0 : index
    %0 = vector.load %arg9[%c0, %c0_0] : memref<1x4xf32, #tpu.memory_space<vmem>>, vector<1x4xf32>
    %1 = vector.shape_cast %0 : vector<1x4xf32> to vector<1x4xf32>
    %2 = vector.broadcast %1 : vector<1x4xf32> to vector<8x4xf32>
    %c0_1 = arith.constant 0 : index
    %c0_2 = arith.constant 0 : index
    %c0_3 = arith.constant 0 : index
    %c0_4 = arith.constant 0 : index
    %3 = vector.load %arg2[%c0_1, %c0_2, %c0_3, %c0_4] : memref<1x8x16x4xf32, #tpu.memory_space<vmem>>, vector<1x1x16x4xf32>
    %4 = vector.shape_cast %3 : vector<1x1x16x4xf32> to vector<16x4xf32>
    %c0_5 = arith.constant 0 : index
    %c0_6 = arith.constant 0 : index
    %c0_7 = arith.constant 0 : index
    %c0_8 = arith.constant 0 : index
    %5 = vector.load %arg4[%c0_5, %c0_6, %c0_7, %c0_8] : memref<1x8x8x4xf32, #tpu.memory_space<vmem>>, vector<1x1x8x4xf32>
    %6 = vector.shape_cast %5 : vector<1x1x8x4xf32> to vector<8x4xf32>
    %c0_9 = arith.constant 0 : index
    %c0_10 = arith.constant 0 : index
    %c0_11 = arith.constant 0 : index
    %c0_12 = arith.constant 0 : index
    %7 = vector.load %arg6[%c0_9, %c0_10, %c0_11, %c0_12] : memref<1x8x16x4xf32, #tpu.memory_space<vmem>>, vector<1x1x16x4xf32>
    %8 = vector.shape_cast %7 : vector<1x1x16x4xf32> to vector<16x4xf32>
    %c0_13 = arith.constant 0 : index
    %c0_14 = arith.constant 0 : index
    %c0_15 = arith.constant 0 : index
    %c0_16 = arith.constant 0 : index
    %9 = vector.load %arg7[%c0_13, %c0_14, %c0_15, %c0_16] : memref<1x8x8x4xf32, #tpu.memory_space<vmem>>, vector<1x1x8x4xf32>
    %10 = vector.shape_cast %9 : vector<1x1x8x4xf32> to vector<8x4xf32>
    %c0_17 = arith.constant 0 : index
    %c1 = arith.constant 1 : index
    %c0_18 = arith.constant 0 : index
    %c0_19 = arith.constant 0 : index
    %11 = vector.load %arg2[%c0_17, %c1, %c0_18, %c0_19] : memref<1x8x16x4xf32, #tpu.memory_space<vmem>>, vector<1x1x16x4xf32>
    %12 = vector.shape_cast %11 : vector<1x1x16x4xf32> to vector<16x4xf32>
    %c0_20 = arith.constant 0 : index
    %c1_21 = arith.constant 1 : index
    %c0_22 = arith.constant 0 : index
    %c0_23 = arith.constant 0 : index
    %13 = vector.load %arg4[%c0_20, %c1_21, %c0_22, %c0_23] : memref<1x8x8x4xf32, #tpu.memory_space<vmem>>, vector<1x1x8x4xf32>
    %14 = vector.shape_cast %13 : vector<1x1x8x4xf32> to vector<8x4xf32>
    %15 = vector.extract_strided_slice %4 {offsets = [0, 0], sizes = [8, 4], strides = [1, 1]} : vector<16x4xf32> to vector<8x4xf32>
    %16 = vector.extract_strided_slice %4 {offsets = [1, 0], sizes = [8, 4], strides = [1, 1]} : vector<16x4xf32> to vector<8x4xf32>
    %17 = vector.extract_strided_slice %8 {offsets = [0, 0], sizes = [8, 4], strides = [1, 1]} : vector<16x4xf32> to vector<8x4xf32>
    %18 = vector.extract_strided_slice %8 {offsets = [1, 0], sizes = [8, 4], strides = [1, 1]} : vector<16x4xf32> to vector<8x4xf32>
    %19 = vector.extract_strided_slice %12 {offsets = [0, 0], sizes = [8, 4], strides = [1, 1]} : vector<16x4xf32> to vector<8x4xf32>
    %20 = vector.extract_strided_slice %12 {offsets = [1, 0], sizes = [8, 4], strides = [1, 1]} : vector<16x4xf32> to vector<8x4xf32>
    %c0_24 = arith.constant 0 : index
    %c0_25 = arith.constant 0 : index
    %c0_26 = arith.constant 0 : index
    %21 = vector.load %arg8[%c0_24, %c0_25, %c0_26] : memref<9x4x4xf32, #tpu.memory_space<vmem>>, vector<1x4x4xf32>
    %22 = vector.shape_cast %21 : vector<1x4x4xf32> to vector<4x4xf32>
    %cst = arith.constant dense<0.000000e+00> : vector<8x4xf32>
    %23 = tpu.matmul %15, %22, %cst {dimension_numbers = #tpu.dot_dimension_numbers<[1], [0], [0], [1], [0, 0, 1, 1], [], []>} : vector<8x4xf32>, vector<4x4xf32>, vector<8x4xf32> -> vector<8x4xf32>
    %24 = arith.addf %2, %23 : vector<8x4xf32>
    %c1_27 = arith.constant 1 : index
    %c0_28 = arith.constant 0 : index
    %c0_29 = arith.constant 0 : index
    %25 = vector.load %arg8[%c1_27, %c0_28, %c0_29] : memref<9x4x4xf32, #tpu.memory_space<vmem>>, vector<1x4x4xf32>
    %26 = vector.shape_cast %25 : vector<1x4x4xf32> to vector<4x4xf32>
    %cst_30 = arith.constant dense<0.000000e+00> : vector<8x4xf32>
    %27 = tpu.matmul %6, %26, %cst_30 {dimension_numbers = #tpu.dot_dimension_numbers<[1], [0], [0], [1], [0, 0, 1, 1], [], []>} : vector<8x4xf32>, vector<4x4xf32>, vector<8x4xf32> -> vector<8x4xf32>
    %28 = arith.addf %24, %27 : vector<8x4xf32>
    %c2 = arith.constant 2 : index
    %c0_31 = arith.constant 0 : index
    %c0_32 = arith.constant 0 : index
    %29 = vector.load %arg8[%c2, %c0_31, %c0_32] : memref<9x4x4xf32, #tpu.memory_space<vmem>>, vector<1x4x4xf32>
    %30 = vector.shape_cast %29 : vector<1x4x4xf32> to vector<4x4xf32>
    %cst_33 = arith.constant dense<0.000000e+00> : vector<8x4xf32>
    %31 = tpu.matmul %16, %30, %cst_33 {dimension_numbers = #tpu.dot_dimension_numbers<[1], [0], [0], [1], [0, 0, 1, 1], [], []>} : vector<8x4xf32>, vector<4x4xf32>, vector<8x4xf32> -> vector<8x4xf32>
    %32 = arith.addf %28, %31 : vector<8x4xf32>
    %c3 = arith.constant 3 : index
    %c0_34 = arith.constant 0 : index
    %c0_35 = arith.constant 0 : index
    %33 = vector.load %arg8[%c3, %c0_34, %c0_35] : memref<9x4x4xf32, #tpu.memory_space<vmem>>, vector<1x4x4xf32>
    %34 = vector.shape_cast %33 : vector<1x4x4xf32> to vector<4x4xf32>
    %cst_36 = arith.constant dense<0.000000e+00> : vector<8x4xf32>
    %35 = tpu.matmul %17, %34, %cst_36 {dimension_numbers = #tpu.dot_dimension_numbers<[1], [0], [0], [1], [0, 0, 1, 1], [], []>} : vector<8x4xf32>, vector<4x4xf32>, vector<8x4xf32> -> vector<8x4xf32>
    %36 = arith.addf %32, %35 : vector<8x4xf32>
    %c4 = arith.constant 4 : index
    %c0_37 = arith.constant 0 : index
    %c0_38 = arith.constant 0 : index
    %37 = vector.load %arg8[%c4, %c0_37, %c0_38] : memref<9x4x4xf32, #tpu.memory_space<vmem>>, vector<1x4x4xf32>
    %38 = vector.shape_cast %37 : vector<1x4x4xf32> to vector<4x4xf32>
    %cst_39 = arith.constant dense<0.000000e+00> : vector<8x4xf32>
    %39 = tpu.matmul %10, %38, %cst_39 {dimension_numbers = #tpu.dot_dimension_numbers<[1], [0], [0], [1], [0, 0, 1, 1], [], []>} : vector<8x4xf32>, vector<4x4xf32>, vector<8x4xf32> -> vector<8x4xf32>
    %40 = arith.addf %36, %39 : vector<8x4xf32>
    %c5 = arith.constant 5 : index
    %c0_40 = arith.constant 0 : index
    %c0_41 = arith.constant 0 : index
    %41 = vector.load %arg8[%c5, %c0_40, %c0_41] : memref<9x4x4xf32, #tpu.memory_space<vmem>>, vector<1x4x4xf32>
    %42 = vector.shape_cast %41 : vector<1x4x4xf32> to vector<4x4xf32>
    %cst_42 = arith.constant dense<0.000000e+00> : vector<8x4xf32>
    %43 = tpu.matmul %18, %42, %cst_42 {dimension_numbers = #tpu.dot_dimension_numbers<[1], [0], [0], [1], [0, 0, 1, 1], [], []>} : vector<8x4xf32>, vector<4x4xf32>, vector<8x4xf32> -> vector<8x4xf32>
    %44 = arith.addf %40, %43 : vector<8x4xf32>
    %c6 = arith.constant 6 : index
    %c0_43 = arith.constant 0 : index
    %c0_44 = arith.constant 0 : index
    %45 = vector.load %arg8[%c6, %c0_43, %c0_44] : memref<9x4x4xf32, #tpu.memory_space<vmem>>, vector<1x4x4xf32>
    %46 = vector.shape_cast %45 : vector<1x4x4xf32> to vector<4x4xf32>
    %cst_45 = arith.constant dense<0.000000e+00> : vector<8x4xf32>
    %47 = tpu.matmul %19, %46, %cst_45 {dimension_numbers = #tpu.dot_dimension_numbers<[1], [0], [0], [1], [0, 0, 1, 1], [], []>} : vector<8x4xf32>, vector<4x4xf32>, vector<8x4xf32> -> vector<8x4xf32>
    %48 = arith.addf %44, %47 : vector<8x4xf32>
    %c7 = arith.constant 7 : index
    %c0_46 = arith.constant 0 : index
    %c0_47 = arith.constant 0 : index
    %49 = vector.load %arg8[%c7, %c0_46, %c0_47] : memref<9x4x4xf32, #tpu.memory_space<vmem>>, vector<1x4x4xf32>
    %50 = vector.shape_cast %49 : vector<1x4x4xf32> to vector<4x4xf32>
    %cst_48 = arith.constant dense<0.000000e+00> : vector<8x4xf32>
    %51 = tpu.matmul %14, %50, %cst_48 {dimension_numbers = #tpu.dot_dimension_numbers<[1], [0], [0], [1], [0, 0, 1, 1], [], []>} : vector<8x4xf32>, vector<4x4xf32>, vector<8x4xf32> -> vector<8x4xf32>
    %52 = arith.addf %48, %51 : vector<8x4xf32>
    %c8 = arith.constant 8 : index
    %c0_49 = arith.constant 0 : index
    %c0_50 = arith.constant 0 : index
    %53 = vector.load %arg8[%c8, %c0_49, %c0_50] : memref<9x4x4xf32, #tpu.memory_space<vmem>>, vector<1x4x4xf32>
    %54 = vector.shape_cast %53 : vector<1x4x4xf32> to vector<4x4xf32>
    %cst_51 = arith.constant dense<0.000000e+00> : vector<8x4xf32>
    %55 = tpu.matmul %20, %54, %cst_51 {dimension_numbers = #tpu.dot_dimension_numbers<[1], [0], [0], [1], [0, 0, 1, 1], [], []>} : vector<8x4xf32>, vector<4x4xf32>, vector<8x4xf32> -> vector<8x4xf32>
    %56 = arith.addf %52, %55 : vector<8x4xf32>
    %c0_52 = arith.constant 0 : index
    %c0_53 = arith.constant 0 : index
    %c0_54 = arith.constant 0 : index
    %c0_55 = arith.constant 0 : index
    %57 = vector.load %arg10[%c0_52, %c0_53, %c0_54, %c0_55] : memref<1x8x8x4xf32, #tpu.memory_space<vmem>>, vector<1x1x8x4xf32>
    %58 = vector.shape_cast %57 : vector<1x1x8x4xf32> to vector<8x4xf32>
    %59 = vector.shape_cast %56 : vector<8x4xf32> to vector<1x1x8x4xf32>
    tpu.vector_store %arg10[%c0_52, %c0_53, %c0_54, %c0_55], %59 {strides = array<i32>} : memref<1x8x8x4xf32, #tpu.memory_space<vmem>>, vector<1x1x8x4xf32>,
    %c0_56 = arith.constant 0 : index
    %c1_57 = arith.constant 1 : index
    %c0_58 = arith.constant 0 : index
    %c0_59 = arith.constant 0 : index
    %60 = vector.load %arg6[%c0_56, %c1_57, %c0_58, %c0_59] : memref<1x8x16x4xf32, #tpu.memory_space<vmem>>, vector<1x1x16x4xf32>
    %61 = vector.shape_cast %60 : vector<1x1x16x4xf32> to vector<16x4xf32>
    %c0_60 = arith.constant 0 : index
    %c1_61 = arith.constant 1 : index
    %c0_62 = arith.constant 0 : index
    %c0_63 = arith.constant 0 : index
    %62 = vector.load %arg7[%c0_60, %c1_61, %c0_62, %c0_63] : memref<1x8x8x4xf32, #tpu.memory_space<vmem>>, vector<1x1x8x4xf32>
    %63 = vector.shape_cast %62 : vector<1x1x8x4xf32> to vector<8x4xf32>
    %c0_64 = arith.constant 0 : index
    %c2_65 = arith.constant 2 : index
    %c0_66 = arith.constant 0 : index
    %c0_67 = arith.constant 0 : index
    %64 = vector.load %arg2[%c0_64, %c2_65, %c0_66, %c0_67] : memref<1x8x16x4xf32, #tpu.memory_space<vmem>>, vector<1x1x16x4xf32>
    %65 = vector.shape_cast %64 : vector<1x1x16x4xf32> to vector<16x4xf32>
    %c0_68 = arith.constant 0 : index
    %c2_69 = arith.constant 2 : index
    %c0_70 = arith.constant 0 : index
    %c0_71 = arith.constant 0 : index
    %66 = vector.load %arg4[%c0_68, %c2_69, %c0_70, %c0_71] : memref<1x8x8x4xf32, #tpu.memory_space<vmem>>, vector<1x1x8x4xf32>
    %67 = vector.shape_cast %66 : vector<1x1x8x4xf32> to vector<8x4xf32>
    %68 = vector.extract_strided_slice %12 {offsets = [0, 0], sizes = [8, 4], strides = [1, 1]} : vector<16x4xf32> to vector<8x4xf32>
    %69 = vector.extract_strided_slice %12 {offsets = [1, 0], sizes = [8, 4], strides = [1, 1]} : vector<16x4xf32> to vector<8x4xf32>
    %70 = vector.extract_strided_slice %61 {offsets = [0, 0], sizes = [8, 4], strides = [1, 1]} : vector<16x4xf32> to vector<8x4xf32>
    %71 = vector.extract_strided_slice %61 {offsets = [1, 0], sizes = [8, 4], strides = [1, 1]} : vector<16x4xf32> to vector<8x4xf32>
    %72 = vector.extract_strided_slice %65 {offsets = [0, 0], sizes = [8, 4], strides = [1, 1]} : vector<16x4xf32> to vector<8x4xf32>
    %73 = vector.extract_strided_slice %65 {offsets = [1, 0], sizes = [8, 4], strides = [1, 1]} : vector<16x4xf32> to vector<8x4xf32>
    %c0_72 = arith.constant 0 : index
    %c0_73 = arith.constant 0 : index
    %c0_74 = arith.constant 0 : index
    %74 = vector.load %arg8[%c0_72, %c0_73, %c0_74] : memref<9x4x4xf32, #tpu.memory_space<vmem>>, vector<1x4x4xf32>
    %75 = vector.shape_cast %74 : vector<1x4x4xf32> to vector<4x4xf32>
    %cst_75 = arith.constant dense<0.000000e+00> : vector<8x4xf32>
    %76 = tpu.matmul %68, %75, %cst_75 {dimension_numbers = #tpu.dot_dimension_numbers<[1], [0], [0], [1], [0, 0, 1, 1], [], []>} : vector<8x4xf32>, vector<4x4xf32>, vector<8x4xf32> -> vector<8x4xf32>
    %77 = arith.addf %2, %76 : vector<8x4xf32>
    %c1_76 = arith.constant 1 : index
    %c0_77 = arith.constant 0 : index
    %c0_78 = arith.constant 0 : index
    %78 = vector.load %arg8[%c1_76, %c0_77, %c0_78] : memref<9x4x4xf32, #tpu.memory_space<vmem>>, vector<1x4x4xf32>
    %79 = vector.shape_cast %78 : vector<1x4x4xf32> to vector<4x4xf32>
    %cst_79 = arith.constant dense<0.000000e+00> : vector<8x4xf32>
    %80 = tpu.matmul %14, %79, %cst_79 {dimension_numbers = #tpu.dot_dimension_numbers<[1], [0], [0], [1], [0, 0, 1, 1], [], []>} : vector<8x4xf32>, vector<4x4xf32>, vector<8x4xf32> -> vector<8x4xf32>
    %81 = arith.addf %77, %80 : vector<8x4xf32>
    %c2_80 = arith.constant 2 : index
    %c0_81 = arith.constant 0 : index
    %c0_82 = arith.constant 0 : index
    %82 = vector.load %arg8[%c2_80, %c0_81, %c0_82] : memref<9x4x4xf32, #tpu.memory_space<vmem>>, vector<1x4x4xf32>
    %83 = vector.shape_cast %82 : vector<1x4x4xf32> to vector<4x4xf32>
    %cst_83 = arith.constant dense<0.000000e+00> : vector<8x4xf32>
    %84 = tpu.matmul %69, %83, %cst_83 {dimension_numbers = #tpu.dot_dimension_numbers<[1], [0], [0], [1], [0, 0, 1, 1], [], []>} : vector<8x4xf32>, vector<4x4xf32>, vector<8x4xf32> -> vector<8x4xf32>
    %85 = arith.addf %81, %84 : vector<8x4xf32>
    %c3_84 = arith.constant 3 : index
    %c0_85 = arith.constant 0 : index
    %c0_86 = arith.constant 0 : index
    %86 = vector.load %arg8[%c3_84, %c0_85, %c0_86] : memref<9x4x4xf32, #tpu.memory_space<vmem>>, vector<1x4x4xf32>
    %87 = vector.shape_cast %86 : vector<1x4x4xf32> to vector<4x4xf32>
    %cst_87 = arith.constant dense<0.000000e+00> : vector<8x4xf32>
    %88 = tpu.matmul %70, %87, %cst_87 {dimension_numbers = #tpu.dot_dimension_numbers<[1], [0], [0], [1], [0, 0, 1, 1], [], []>} : vector<8x4xf32>, vector<4x4xf32>, vector<8x4xf32> -> vector<8x4xf32>
    %89 = arith.addf %85, %88 : vector<8x4xf32>
    %c4_88 = arith.constant 4 : index
    %c0_89 = arith.constant 0 : index
    %c0_90 = arith.constant 0 : index
    %90 = vector.load %arg8[%c4_88, %c0_89, %c0_90] : memref<9x4x4xf32, #tpu.memory_space<vmem>>, vector<1x4x4xf32>
    %91 = vector.shape_cast %90 : vector<1x4x4xf32> to vector<4x4xf32>
    %cst_91 = arith.constant dense<0.000000e+00> : vector<8x4xf32>
    %92 = tpu.matmul %63, %91, %cst_91 {dimension_numbers = #tpu.dot_dimension_numbers<[1], [0], [0], [1], [0, 0, 1, 1], [], []>} : vector<8x4xf32>, vector<4x4xf32>, vector<8x4xf32> -> vector<8x4xf32>
    %93 = arith.addf %89, %92 : vector<8x4xf32>
    %c5_92 = arith.constant 5 : index
    %c0_93 = arith.constant 0 : index
    %c0_94 = arith.constant 0 : index
    %94 = vector.load %arg8[%c5_92, %c0_93, %c0_94] : memref<9x4x4xf32, #tpu.memory_space<vmem>>, vector<1x4x4xf32>
    %95 = vector.shape_cast %94 : vector<1x4x4xf32> to vector<4x4xf32>
    %cst_95 = arith.constant dense<0.000000e+00> : vector<8x4xf32>
    %96 = tpu.matmul %71, %95, %cst_95 {dimension_numbers = #tpu.dot_dimension_numbers<[1], [0], [0], [1], [0, 0, 1, 1], [], []>} : vector<8x4xf32>, vector<4x4xf32>, vector<8x4xf32> -> vector<8x4xf32>
    %97 = arith.addf %93, %96 : vector<8x4xf32>
    %c6_96 = arith.constant 6 : index
    %c0_97 = arith.constant 0 : index
    %c0_98 = arith.constant 0 : index
    %98 = vector.load %arg8[%c6_96, %c0_97, %c0_98] : memref<9x4x4xf32, #tpu.memory_space<vmem>>, vector<1x4x4xf32>
    %99 = vector.shape_cast %98 : vector<1x4x4xf32> to vector<4x4xf32>
    %cst_99 = arith.constant dense<0.000000e+00> : vector<8x4xf32>
    %100 = tpu.matmul %72, %99, %cst_99 {dimension_numbers = #tpu.dot_dimension_numbers<[1], [0], [0], [1], [0, 0, 1, 1], [], []>} : vector<8x4xf32>, vector<4x4xf32>, vector<8x4xf32> -> vector<8x4xf32>
    %101 = arith.addf %97, %100 : vector<8x4xf32>
    %c7_100 = arith.constant 7 : index
    %c0_101 = arith.constant 0 : index
    %c0_102 = arith.constant 0 : index
    %102 = vector.load %arg8[%c7_100, %c0_101, %c0_102] : memref<9x4x4xf32, #tpu.memory_space<vmem>>, vector<1x4x4xf32>
    %103 = vector.shape_cast %102 : vector<1x4x4xf32> to vector<4x4xf32>
    %cst_103 = arith.constant dense<0.000000e+00> : vector<8x4xf32>
    %104 = tpu.matmul %67, %103, %cst_103 {dimension_numbers = #tpu.dot_dimension_numbers<[1], [0], [0], [1], [0, 0, 1, 1], [], []>} : vector<8x4xf32>, vector<4x4xf32>, vector<8x4xf32> -> vector<8x4xf32>
    %105 = arith.addf %101, %104 : vector<8x4xf32>
    %c8_104 = arith.constant 8 : index
    %c0_105 = arith.constant 0 : index
    %c0_106 = arith.constant 0 : index
    %106 = vector.load %arg8[%c8_104, %c0_105, %c0_106] : memref<9x4x4xf32, #tpu.memory_space<vmem>>, vector<1x4x4xf32>
    %107 = vector.shape_cast %106 : vector<1x4x4xf32> to vector<4x4xf32>
    %cst_107 = arith.constant dense<0.000000e+00> : vector<8x4xf32>
    %108 = tpu.matmul %73, %107, %cst_107 {dimension_numbers = #tpu.dot_dimension_numbers<[1], [0], [0], [1], [0, 0, 1, 1], [], []>} : vector<8x4xf32>, vector<4x4xf32>, vector<8x4xf32> -> vector<8x4xf32>
    %109 = arith.addf %105, %108 : vector<8x4xf32>
    %c0_108 = arith.constant 0 : index
    %c1_109 = arith.constant 1 : index
    %c0_110 = arith.constant 0 : index
    %c0_111 = arith.constant 0 : index
    %110 = vector.load %arg10[%c0_108, %c1_109, %c0_110, %c0_111] : memref<1x8x8x4xf32, #tpu.memory_space<vmem>>, vector<1x1x8x4xf32>
    %111 = vector.shape_cast %110 : vector<1x1x8x4xf32> to vector<8x4xf32>
    %112 = vector.shape_cast %109 : vector<8x4xf32> to vector<1x1x8x4xf32>
    tpu.vector_store %arg10[%c0_108, %c1_109, %c0_110, %c0_111], %112 {strides = array<i32>} : memref<1x8x8x4xf32, #tpu.memory_space<vmem>>, vector<1x1x8x4xf32>,
    %c0_112 = arith.constant 0 : index
    %c2_113 = arith.constant 2 : index
    %c0_114 = arith.constant 0 : index
    %c0_115 = arith.constant 0 : index
    %113 = vector.load %arg6[%c0_112, %c2_113, %c0_114, %c0_115] : memref<1x8x16x4xf32, #tpu.memory_space<vmem>>, vector<1x1x16x4xf32>
    %114 = vector.shape_cast %113 : vector<1x1x16x4xf32> to vector<16x4xf32>
    %c0_116 = arith.constant 0 : index
    %c2_117 = arith.constant 2 : index
    %c0_118 = arith.constant 0 : index
    %c0_119 = arith.constant 0 : index
    %115 = vector.load %arg7[%c0_116, %c2_117, %c0_118, %c0_119] : memref<1x8x8x4xf32, #tpu.memory_space<vmem>>, vector<1x1x8x4xf32>
    %116 = vector.shape_cast %115 : vector<1x1x8x4xf32> to vector<8x4xf32>
    %c0_120 = arith.constant 0 : index
    %c3_121 = arith.constant 3 : index
    %c0_122 = arith.constant 0 : index
    %c0_123 = arith.constant 0 : index
    %117 = vector.load %arg2[%c0_120, %c3_121, %c0_122, %c0_123] : memref<1x8x16x4xf32, #tpu.memory_space<vmem>>, vector<1x1x16x4xf32>
    %118 = vector.shape_cast %117 : vector<1x1x16x4xf32> to vector<16x4xf32>
    %c0_124 = arith.constant 0 : index
    %c3_125 = arith.constant 3 : index
    %c0_126 = arith.constant 0 : index
    %c0_127 = arith.constant 0 : index
    %119 = vector.load %arg4[%c0_124, %c3_125, %c0_126, %c0_127] : memref<1x8x8x4xf32, #tpu.memory_space<vmem>>, vector<1x1x8x4xf32>
    %120 = vector.shape_cast %119 : vector<1x1x8x4xf32> to vector<8x4xf32>
    %121 = vector.extract_strided_slice %65 {offsets = [0, 0], sizes = [8, 4], strides = [1, 1]} : vector<16x4xf32> to vector<8x4xf32>
    %122 = vector.extract_strided_slice %65 {offsets = [1, 0], sizes = [8, 4], strides = [1, 1]} : vector<16x4xf32> to vector<8x4xf32>
    %123 = vector.extract_strided_slice %114 {offsets = [0, 0], sizes = [8, 4], strides = [1, 1]} : vector<16x4xf32> to vector<8x4xf32>
    %124 = vector.extract_strided_slice %114 {offsets = [1, 0], sizes = [8, 4], strides = [1, 1]} : vector<16x4xf32> to vector<8x4xf32>
    %125 = vector.extract_strided_slice %118 {offsets = [0, 0], sizes = [8, 4], strides = [1, 1]} : vector<16x4xf32> to vector<8x4xf32>
    %126 = vector.extract_strided_slice %118 {offsets = [1, 0], sizes = [8, 4], strides = [1, 1]} : vector<16x4xf32> to vector<8x4xf32>
    %c0_128 = arith.constant 0 : index
    %c0_129 = arith.constant 0 : index
    %c0_130 = arith.constant 0 : index
    %127 = vector.load %arg8[%c0_128, %c0_129, %c0_130] : memref<9x4x4xf32, #tpu.memory_space<vmem>>, vector<1x4x4xf32>
    %128 = vector.shape_cast %127 : vector<1x4x4xf32> to vector<4x4xf32>
    %cst_131 = arith.constant dense<0.000000e+00> : vector<8x4xf32>
    %129 = tpu.matmul %121, %128, %cst_131 {dimension_numbers = #tpu.dot_dimension_numbers<[1], [0], [0], [1], [0, 0, 1, 1], [], []>} : vector<8x4xf32>, vector<4x4xf32>, vector<8x4xf32> -> vector<8x4xf32>
    %130 = arith.addf %2, %129 : vector<8x4xf32>
    %c1_132 = arith.constant 1 : index
    %c0_133 = arith.constant 0 : index
    %c0_134 = arith.constant 0 : index
    %131 = vector.load %arg8[%c1_132, %c0_133, %c0_134] : memref<9x4x4xf32, #tpu.memory_space<vmem>>, vector<1x4x4xf32>
    %132 = vector.shape_cast %131 : vector<1x4x4xf32> to vector<4x4xf32>
    %cst_135 = arith.constant dense<0.000000e+00> : vector<8x4xf32>
    %133 = tpu.matmul %67, %132, %cst_135 {dimension_numbers = #tpu.dot_dimension_numbers<[1], [0], [0], [1], [0, 0, 1, 1], [], []>} : vector<8x4xf32>, vector<4x4xf32>, vector<8x4xf32> -> vector<8x4xf32>
    %134 = arith.addf %130, %133 : vector<8x4xf32>
    %c2_136 = arith.constant 2 : index
    %c0_137 = arith.constant 0 : index
    %c0_138 = arith.constant 0 : index
    %135 = vector.load %arg8[%c2_136, %c0_137, %c0_138] : memref<9x4x4xf32, #tpu.memory_space<vmem>>, vector<1x4x4xf32>
    %136 = vector.shape_cast %135 : vector<1x4x4xf32> to vector<4x4xf32>
    %cst_139 = arith.constant dense<0.000000e+00> : vector<8x4xf32>
    %137 = tpu.matmul %122, %136, %cst_139 {dimension_numbers = #tpu.dot_dimension_numbers<[1], [0], [0], [1], [0, 0, 1, 1], [], []>} : vector<8x4xf32>, vector<4x4xf32>, vector<8x4xf32> -> vector<8x4xf32>
    %138 = arith.addf %134, %137 : vector<8x4xf32>
    %c3_140 = arith.constant 3 : index
    %c0_141 = arith.constant 0 : index
    %c0_142 = arith.constant 0 : index
    %139 = vector.load %arg8[%c3_140, %c0_141, %c0_142] : memref<9x4x4xf32, #tpu.memory_space<vmem>>, vector<1x4x4xf32>
    %140 = vector.shape_cast %139 : vector<1x4x4xf32> to vector<4x4xf32>
    %cst_143 = arith.constant dense<0.000000e+00> : vector<8x4xf32>
    %141 = tpu.matmul %123, %140, %cst_143 {dimension_numbers = #tpu.dot_dimension_numbers<[1], [0], [0], [1], [0, 0, 1, 1], [], []>} : vector<8x4xf32>, vector<4x4xf32>, vector<8x4xf32> -> vector<8x4xf32>
    %142 = arith.addf %138, %141 : vector<8x4xf32>
    %c4_144 = arith.constant 4 : index
    %c0_145 = arith.constant 0 : index
    %c0_146 = arith.constant 0 : index
    %143 = vector.load %arg8[%c4_144, %c0_145, %c0_146] : memref<9x4x4xf32, #tpu.memory_space<vmem>>, vector<1x4x4xf32>
    %144 = vector.shape_cast %143 : vector<1x4x4xf32> to vector<4x4xf32>
    %cst_147 = arith.constant dense<0.000000e+00> : vector<8x4xf32>
    %145 = tpu.matmul %116, %144, %cst_147 {dimension_numbers = #tpu.dot_dimension_numbers<[1], [0], [0], [1], [0, 0, 1, 1], [], []>} : vector<8x4xf32>, vector<4x4xf32>, vector<8x4xf32> -> vector<8x4xf32>
    %146 = arith.addf %142, %145 : vector<8x4xf32>
    %c5_148 = arith.constant 5 : index
    %c0_149 = arith.constant 0 : index
    %c0_150 = arith.constant 0 : index
    %147 = vector.load %arg8[%c5_148, %c0_149, %c0_150] : memref<9x4x4xf32, #tpu.memory_space<vmem>>, vector<1x4x4xf32>
    %148 = vector.shape_cast %147 : vector<1x4x4xf32> to vector<4x4xf32>
    %cst_151 = arith.constant dense<0.000000e+00> : vector<8x4xf32>
    %149 = tpu.matmul %124, %148, %cst_151 {dimension_numbers = #tpu.dot_dimension_numbers<[1], [0], [0], [1], [0, 0, 1, 1], [], []>} : vector<8x4xf32>, vector<4x4xf32>, vector<8x4xf32> -> vector<8x4xf32>
    %150 = arith.addf %146, %149 : vector<8x4xf32>
    %c6_152 = arith.constant 6 : index
    %c0_153 = arith.constant 0 : index
    %c0_154 = arith.constant 0 : index
    %151 = vector.load %arg8[%c6_152, %c0_153, %c0_154] : memref<9x4x4xf32, #tpu.memory_space<vmem>>, vector<1x4x4xf32>
    %152 = vector.shape_cast %151 : vector<1x4x4xf32> to vector<4x4xf32>
    %cst_155 = arith.constant dense<0.000000e+00> : vector<8x4xf32>
    %153 = tpu.matmul %125, %152, %cst_155 {dimension_numbers = #tpu.dot_dimension_numbers<[1], [0], [0], [1], [0, 0, 1, 1], [], []>} : vector<8x4xf32>, vector<4x4xf32>, vector<8x4xf32> -> vector<8x4xf32>
    %154 = arith.addf %150, %153 : vector<8x4xf32>
    %c7_156 = arith.constant 7 : index
    %c0_157 = arith.constant 0 : index
    %c0_158 = arith.constant 0 : index
    %155 = vector.load %arg8[%c7_156, %c0_157, %c0_158] : memref<9x4x4xf32, #tpu.memory_space<vmem>>, vector<1x4x4xf32>
    %156 = vector.shape_cast %155 : vector<1x4x4xf32> to vector<4x4xf32>
    %cst_159 = arith.constant dense<0.000000e+00> : vector<8x4xf32>
    %157 = tpu.matmul %120, %156, %cst_159 {dimension_numbers = #tpu.dot_dimension_numbers<[1], [0], [0], [1], [0, 0, 1, 1], [], []>} : vector<8x4xf32>, vector<4x4xf32>, vector<8x4xf32> -> vector<8x4xf32>
    %158 = arith.addf %154, %157 : vector<8x4xf32>
    %c8_160 = arith.constant 8 : index
    %c0_161 = arith.constant 0 : index
    %c0_162 = arith.constant 0 : index
    %159 = vector.load %arg8[%c8_160, %c0_161, %c0_162] : memref<9x4x4xf32, #tpu.memory_space<vmem>>, vector<1x4x4xf32>
    %160 = vector.shape_cast %159 : vector<1x4x4xf32> to vector<4x4xf32>
    %cst_163 = arith.constant dense<0.000000e+00> : vector<8x4xf32>
    %161 = tpu.matmul %126, %160, %cst_163 {dimension_numbers = #tpu.dot_dimension_numbers<[1], [0], [0], [1], [0, 0, 1, 1], [], []>} : vector<8x4xf32>, vector<4x4xf32>, vector<8x4xf32> -> vector<8x4xf32>
    %162 = arith.addf %158, %161 : vector<8x4xf32>
    %c0_164 = arith.constant 0 : index
    %c2_165 = arith.constant 2 : index
    %c0_166 = arith.constant 0 : index
    %c0_167 = arith.constant 0 : index
    %163 = vector.load %arg10[%c0_164, %c2_165, %c0_166, %c0_167] : memref<1x8x8x4xf32, #tpu.memory_space<vmem>>, vector<1x1x8x4xf32>
    %164 = vector.shape_cast %163 : vector<1x1x8x4xf32> to vector<8x4xf32>
    %165 = vector.shape_cast %162 : vector<8x4xf32> to vector<1x1x8x4xf32>
    tpu.vector_store %arg10[%c0_164, %c2_165, %c0_166, %c0_167], %165 {strides = array<i32>} : memref<1x8x8x4xf32, #tpu.memory_space<vmem>>, vector<1x1x8x4xf32>,
    %c0_168 = arith.constant 0 : index
    %c3_169 = arith.constant 3 : index
    %c0_170 = arith.constant 0 : index
    %c0_171 = arith.constant 0 : index
    %166 = vector.load %arg6[%c0_168, %c3_169, %c0_170, %c0_171] : memref<1x8x16x4xf32, #tpu.memory_space<vmem>>, vector<1x1x16x4xf32>
    %167 = vector.shape_cast %166 : vector<1x1x16x4xf32> to vector<16x4xf32>
    %c0_172 = arith.constant 0 : index
    %c3_173 = arith.constant 3 : index
    %c0_174 = arith.constant 0 : index
    %c0_175 = arith.constant 0 : index
    %168 = vector.load %arg7[%c0_172, %c3_173, %c0_174, %c0_175] : memref<1x8x8x4xf32, #tpu.memory_space<vmem>>, vector<1x1x8x4xf32>
    %169 = vector.shape_cast %168 : vector<1x1x8x4xf32> to vector<8x4xf32>
    %c0_176 = arith.constant 0 : index
    %c4_177 = arith.constant 4 : index
    %c0_178 = arith.constant 0 : index
    %c0_179 = arith.constant 0 : index
    %170 = vector.load %arg2[%c0_176, %c4_177, %c0_178, %c0_179] : memref<1x8x16x4xf32, #tpu.memory_space<vmem>>, vector<1x1x16x4xf32>
    %171 = vector.shape_cast %170 : vector<1x1x16x4xf32> to vector<16x4xf32>
    %c0_180 = arith.constant 0 : index
    %c4_181 = arith.constant 4 : index
    %c0_182 = arith.constant 0 : index
    %c0_183 = arith.constant 0 : index
    %172 = vector.load %arg4[%c0_180, %c4_181, %c0_182, %c0_183] : memref<1x8x8x4xf32, #tpu.memory_space<vmem>>, vector<1x1x8x4xf32>
    %173 = vector.shape_cast %172 : vector<1x1x8x4xf32> to vector<8x4xf32>
    %174 = vector.extract_strided_slice %118 {offsets = [0, 0], sizes = [8, 4], strides = [1, 1]} : vector<16x4xf32> to vector<8x4xf32>
    %175 = vector.extract_strided_slice %118 {offsets = [1, 0], sizes = [8, 4], strides = [1, 1]} : vector<16x4xf32> to vector<8x4xf32>
    %176 = vector.extract_strided_slice %167 {offsets = [0, 0], sizes = [8, 4], strides = [1, 1]} : vector<16x4xf32> to vector<8x4xf32>
    %177 = vector.extract_strided_slice %167 {offsets = [1, 0], sizes = [8, 4], strides = [1, 1]} : vector<16x4xf32> to vector<8x4xf32>
    %178 = vector.extract_strided_slice %171 {offsets = [0, 0], sizes = [8, 4], strides = [1, 1]} : vector<16x4xf32> to vector<8x4xf32>
    %179 = vector.extract_strided_slice %171 {offsets = [1, 0], sizes = [8, 4], strides = [1, 1]} : vector<16x4xf32> to vector<8x4xf32>
    %c0_184 = arith.constant 0 : index
    %c0_185 = arith.constant 0 : index
    %c0_186 = arith.constant 0 : index
    %180 = vector.load %arg8[%c0_184, %c0_185, %c0_186] : memref<9x4x4xf32, #tpu.memory_space<vmem>>, vector<1x4x4xf32>
    %181 = vector.shape_cast %180 : vector<1x4x4xf32> to vector<4x4xf32>
    %cst_187 = arith.constant dense<0.000000e+00> : vector<8x4xf32>
    %182 = tpu.matmul %174, %181, %cst_187 {dimension_numbers = #tpu.dot_dimension_numbers<[1], [0], [0], [1], [0, 0, 1, 1], [], []>} : vector<8x4xf32>, vector<4x4xf32>, vector<8x4xf32> -> vector<8x4xf32>
    %183 = arith.addf %2, %182 : vector<8x4xf32>
    %c1_188 = arith.constant 1 : index
    %c0_189 = arith.constant 0 : index
    %c0_190 = arith.constant 0 : index
    %184 = vector.load %arg8[%c1_188, %c0_189, %c0_190] : memref<9x4x4xf32, #tpu.memory_space<vmem>>, vector<1x4x4xf32>
    %185 = vector.shape_cast %184 : vector<1x4x4xf32> to vector<4x4xf32>
    %cst_191 = arith.constant dense<0.000000e+00> : vector<8x4xf32>
    %186 = tpu.matmul %120, %185, %cst_191 {dimension_numbers = #tpu.dot_dimension_numbers<[1], [0], [0], [1], [0, 0, 1, 1], [], []>} : vector<8x4xf32>, vector<4x4xf32>, vector<8x4xf32> -> vector<8x4xf32>
    %187 = arith.addf %183, %186 : vector<8x4xf32>
    %c2_192 = arith.constant 2 : index
    %c0_193 = arith.constant 0 : index
    %c0_194 = arith.constant 0 : index
    %188 = vector.load %arg8[%c2_192, %c0_193, %c0_194] : memref<9x4x4xf32, #tpu.memory_space<vmem>>, vector<1x4x4xf32>
    %189 = vector.shape_cast %188 : vector<1x4x4xf32> to vector<4x4xf32>
    %cst_195 = arith.constant dense<0.000000e+00> : vector<8x4xf32>
    %190 = tpu.matmul %175, %189, %cst_195 {dimension_numbers = #tpu.dot_dimension_numbers<[1], [0], [0], [1], [0, 0, 1, 1], [], []>} : vector<8x4xf32>, vector<4x4xf32>, vector<8x4xf32> -> vector<8x4xf32>
    %191 = arith.addf %187, %190 : vector<8x4xf32>
    %c3_196 = arith.constant 3 : index
    %c0_197 = arith.constant 0 : index
    %c0_198 = arith.constant 0 : index
    %192 = vector.load %arg8[%c3_196, %c0_197, %c0_198] : memref<9x4x4xf32, #tpu.memory_space<vmem>>, vector<1x4x4xf32>
    %193 = vector.shape_cast %192 : vector<1x4x4xf32> to vector<4x4xf32>
    %cst_199 = arith.constant dense<0.000000e+00> : vector<8x4xf32>
    %194 = tpu.matmul %176, %193, %cst_199 {dimension_numbers = #tpu.dot_dimension_numbers<[1], [0], [0], [1], [0, 0, 1, 1], [], []>} : vector<8x4xf32>, vector<4x4xf32>, vector<8x4xf32> -> vector<8x4xf32>
    %195 = arith.addf %191, %194 : vector<8x4xf32>
    %c4_200 = arith.constant 4 : index
    %c0_201 = arith.constant 0 : index
    %c0_202 = arith.constant 0 : index
    %196 = vector.load %arg8[%c4_200, %c0_201, %c0_202] : memref<9x4x4xf32, #tpu.memory_space<vmem>>, vector<1x4x4xf32>
    %197 = vector.shape_cast %196 : vector<1x4x4xf32> to vector<4x4xf32>
    %cst_203 = arith.constant dense<0.000000e+00> : vector<8x4xf32>
    %198 = tpu.matmul %169, %197, %cst_203 {dimension_numbers = #tpu.dot_dimension_numbers<[1], [0], [0], [1], [0, 0, 1, 1], [], []>} : vector<8x4xf32>, vector<4x4xf32>, vector<8x4xf32> -> vector<8x4xf32>
    %199 = arith.addf %195, %198 : vector<8x4xf32>
    %c5_204 = arith.constant 5 : index
    %c0_205 = arith.constant 0 : index
    %c0_206 = arith.constant 0 : index
    %200 = vector.load %arg8[%c5_204, %c0_205, %c0_206] : memref<9x4x4xf32, #tpu.memory_space<vmem>>, vector<1x4x4xf32>
    %201 = vector.shape_cast %200 : vector<1x4x4xf32> to vector<4x4xf32>
    %cst_207 = arith.constant dense<0.000000e+00> : vector<8x4xf32>
    %202 = tpu.matmul %177, %201, %cst_207 {dimension_numbers = #tpu.dot_dimension_numbers<[1], [0], [0], [1], [0, 0, 1, 1], [], []>} : vector<8x4xf32>, vector<4x4xf32>, vector<8x4xf32> -> vector<8x4xf32>
    %203 = arith.addf %199, %202 : vector<8x4xf32>
    %c6_208 = arith.constant 6 : index
    %c0_209 = arith.constant 0 : index
    %c0_210 = arith.constant 0 : index
    %204 = vector.load %arg8[%c6_208, %c0_209, %c0_210] : memref<9x4x4xf32, #tpu.memory_space<vmem>>, vector<1x4x4xf32>
    %205 = vector.shape_cast %204 : vector<1x4x4xf32> to vector<4x4xf32>
    %cst_211 = arith.constant dense<0.000000e+00> : vector<8x4xf32>
    %206 = tpu.matmul %178, %205, %cst_211 {dimension_numbers = #tpu.dot_dimension_numbers<[1], [0], [0], [1], [0, 0, 1, 1], [], []>} : vector<8x4xf32>, vector<4x4xf32>, vector<8x4xf32> -> vector<8x4xf32>
    %207 = arith.addf %203, %206 : vector<8x4xf32>
    %c7_212 = arith.constant 7 : index
    %c0_213 = arith.constant 0 : index
    %c0_214 = arith.constant 0 : index
    %208 = vector.load %arg8[%c7_212, %c0_213, %c0_214] : memref<9x4x4xf32, #tpu.memory_space<vmem>>, vector<1x4x4xf32>
    %209 = vector.shape_cast %208 : vector<1x4x4xf32> to vector<4x4xf32>
    %cst_215 = arith.constant dense<0.000000e+00> : vector<8x4xf32>
    %210 = tpu.matmul %173, %209, %cst_215 {dimension_numbers = #tpu.dot_dimension_numbers<[1], [0], [0], [1], [0, 0, 1, 1], [], []>} : vector<8x4xf32>, vector<4x4xf32>, vector<8x4xf32> -> vector<8x4xf32>
    %211 = arith.addf %207, %210 : vector<8x4xf32>
    %c8_216 = arith.constant 8 : index
    %c0_217 = arith.constant 0 : index
    %c0_218 = arith.constant 0 : index
    %212 = vector.load %arg8[%c8_216, %c0_217, %c0_218] : memref<9x4x4xf32, #tpu.memory_space<vmem>>, vector<1x4x4xf32>
    %213 = vector.shape_cast %212 : vector<1x4x4xf32> to vector<4x4xf32>
    %cst_219 = arith.constant dense<0.000000e+00> : vector<8x4xf32>
    %214 = tpu.matmul %179, %213, %cst_219 {dimension_numbers = #tpu.dot_dimension_numbers<[1], [0], [0], [1], [0, 0, 1, 1], [], []>} : vector<8x4xf32>, vector<4x4xf32>, vector<8x4xf32> -> vector<8x4xf32>
    %215 = arith.addf %211, %214 : vector<8x4xf32>
    %c0_220 = arith.constant 0 : index
    %c3_221 = arith.constant 3 : index
    %c0_222 = arith.constant 0 : index
    %c0_223 = arith.constant 0 : index
    %216 = vector.load %arg10[%c0_220, %c3_221, %c0_222, %c0_223] : memref<1x8x8x4xf32, #tpu.memory_space<vmem>>, vector<1x1x8x4xf32>
    %217 = vector.shape_cast %216 : vector<1x1x8x4xf32> to vector<8x4xf32>
    %218 = vector.shape_cast %215 : vector<8x4xf32> to vector<1x1x8x4xf32>
    tpu.vector_store %arg10[%c0_220, %c3_221, %c0_222, %c0_223], %218 {strides = array<i32>} : memref<1x8x8x4xf32, #tpu.memory_space<vmem>>, vector<1x1x8x4xf32>,
    %c0_224 = arith.constant 0 : index
    %c4_225 = arith.constant 4 : index
    %c0_226 = arith.constant 0 : index
    %c0_227 = arith.constant 0 : index
    %219 = vector.load %arg6[%c0_224, %c4_225, %c0_226, %c0_227] : memref<1x8x16x4xf32, #tpu.memory_space<vmem>>, vector<1x1x16x4xf32>
    %220 = vector.shape_cast %219 : vector<1x1x16x4xf32> to vector<16x4xf32>
    %c0_228 = arith.constant 0 : index
    %c4_229 = arith.constant 4 : index
    %c0_230 = arith.constant 0 : index
    %c0_231 = arith.constant 0 : index
    %221 = vector.load %arg7[%c0_228, %c4_229, %c0_230, %c0_231] : memref<1x8x8x4xf32, #tpu.memory_space<vmem>>, vector<1x1x8x4xf32>
    %222 = vector.shape_cast %221 : vector<1x1x8x4xf32> to vector<8x4xf32>
    %c0_232 = arith.constant 0 : index
    %c5_233 = arith.constant 5 : index
    %c0_234 = arith.constant 0 : index
    %c0_235 = arith.constant 0 : index
    %223 = vector.load %arg2[%c0_232, %c5_233, %c0_234, %c0_235] : memref<1x8x16x4xf32, #tpu.memory_space<vmem>>, vector<1x1x16x4xf32>
    %224 = vector.shape_cast %223 : vector<1x1x16x4xf32> to vector<16x4xf32>
    %c0_236 = arith.constant 0 : index
    %c5_237 = arith.constant 5 : index
    %c0_238 = arith.constant 0 : index
    %c0_239 = arith.constant 0 : index
    %225 = vector.load %arg4[%c0_236, %c5_237, %c0_238, %c0_239] : memref<1x8x8x4xf32, #tpu.memory_space<vmem>>, vector<1x1x8x4xf32>
    %226 = vector.shape_cast %225 : vector<1x1x8x4xf32> to vector<8x4xf32>
    %227 = vector.extract_strided_slice %171 {offsets = [0, 0], sizes = [8, 4], strides = [1, 1]} : vector<16x4xf32> to vector<8x4xf32>
    %228 = vector.extract_strided_slice %171 {offsets = [1, 0], sizes = [8, 4], strides = [1, 1]} : vector<16x4xf32> to vector<8x4xf32>
    %229 = vector.extract_strided_slice %220 {offsets = [0, 0], sizes = [8, 4], strides = [1, 1]} : vector<16x4xf32> to vector<8x4xf32>
    %230 = vector.extract_strided_slice %220 {offsets = [1, 0], sizes = [8, 4], strides = [1, 1]} : vector<16x4xf32> to vector<8x4xf32>
    %231 = vector.extract_strided_slice %224 {offsets = [0, 0], sizes = [8, 4], strides = [1, 1]} : vector<16x4xf32> to vector<8x4xf32>
    %232 = vector.extract_strided_slice %224 {offsets = [1, 0], sizes = [8, 4], strides = [1, 1]} : vector<16x4xf32> to vector<8x4xf32>
    %c0_240 = arith.constant 0 : index
    %c0_241 = arith.constant 0 : index
    %c0_242 = arith.constant 0 : index
    %233 = vector.load %arg8[%c0_240, %c0_241, %c0_242] : memref<9x4x4xf32, #tpu.memory_space<vmem>>, vector<1x4x4xf32>
    %234 = vector.shape_cast %233 : vector<1x4x4xf32> to vector<4x4xf32>
    %cst_243 = arith.constant dense<0.000000e+00> : vector<8x4xf32>
    %235 = tpu.matmul %227, %234, %cst_243 {dimension_numbers = #tpu.dot_dimension_numbers<[1], [0], [0], [1], [0, 0, 1, 1], [], []>} : vector<8x4xf32>, vector<4x4xf32>, vector<8x4xf32> -> vector<8x4xf32>
    %236 = arith.addf %2, %235 : vector<8x4xf32>
    %c1_244 = arith.constant 1 : index
    %c0_245 = arith.constant 0 : index
    %c0_246 = arith.constant 0 : index
    %237 = vector.load %arg8[%c1_244, %c0_245, %c0_246] : memref<9x4x4xf32, #tpu.memory_space<vmem>>, vector<1x4x4xf32>
    %238 = vector.shape_cast %237 : vector<1x4x4xf32> to vector<4x4xf32>
    %cst_247 = arith.constant dense<0.000000e+00> : vector<8x4xf32>
    %239 = tpu.matmul %173, %238, %cst_247 {dimension_numbers = #tpu.dot_dimension_numbers<[1], [0], [0], [1], [0, 0, 1, 1], [], []>} : vector<8x4xf32>, vector<4x4xf32>, vector<8x4xf32> -> vector<8x4xf32>
    %240 = arith.addf %236, %239 : vector<8x4xf32>
    %c2_248 = arith.constant 2 : index
    %c0_249 = arith.constant 0 : index
    %c0_250 = arith.constant 0 : index
    %241 = vector.load %arg8[%c2_248, %c0_249, %c0_250] : memref<9x4x4xf32, #tpu.memory_space<vmem>>, vector<1x4x4xf32>
    %242 = vector.shape_cast %241 : vector<1x4x4xf32> to vector<4x4xf32>
    %cst_251 = arith.constant dense<0.000000e+00> : vector<8x4xf32>
    %243 = tpu.matmul %228, %242, %cst_251 {dimension_numbers = #tpu.dot_dimension_numbers<[1], [0], [0], [1], [0, 0, 1, 1], [], []>} : vector<8x4xf32>, vector<4x4xf32>, vector<8x4xf32> -> vector<8x4xf32>
    %244 = arith.addf %240, %243 : vector<8x4xf32>
    %c3_252 = arith.constant 3 : index
    %c0_253 = arith.constant 0 : index
    %c0_254 = arith.constant 0 : index
    %245 = vector.load %arg8[%c3_252, %c0_253, %c0_254] : memref<9x4x4xf32, #tpu.memory_space<vmem>>, vector<1x4x4xf32>
    %246 = vector.shape_cast %245 : vector<1x4x4xf32> to vector<4x4xf32>
    %cst_255 = arith.constant dense<0.000000e+00> : vector<8x4xf32>
    %247 = tpu.matmul %229, %246, %cst_255 {dimension_numbers = #tpu.dot_dimension_numbers<[1], [0], [0], [1], [0, 0, 1, 1], [], []>} : vector<8x4xf32>, vector<4x4xf32>, vector<8x4xf32> -> vector<8x4xf32>
    %248 = arith.addf %244, %247 : vector<8x4xf32>
    %c4_256 = arith.constant 4 : index
    %c0_257 = arith.constant 0 : index
    %c0_258 = arith.constant 0 : index
    %249 = vector.load %arg8[%c4_256, %c0_257, %c0_258] : memref<9x4x4xf32, #tpu.memory_space<vmem>>, vector<1x4x4xf32>
    %250 = vector.shape_cast %249 : vector<1x4x4xf32> to vector<4x4xf32>
    %cst_259 = arith.constant dense<0.000000e+00> : vector<8x4xf32>
    %251 = tpu.matmul %222, %250, %cst_259 {dimension_numbers = #tpu.dot_dimension_numbers<[1], [0], [0], [1], [0, 0, 1, 1], [], []>} : vector<8x4xf32>, vector<4x4xf32>, vector<8x4xf32> -> vector<8x4xf32>
    %252 = arith.addf %248, %251 : vector<8x4xf32>
    %c5_260 = arith.constant 5 : index
    %c0_261 = arith.constant 0 : index
    %c0_262 = arith.constant 0 : index
    %253 = vector.load %arg8[%c5_260, %c0_261, %c0_262] : memref<9x4x4xf32, #tpu.memory_space<vmem>>, vector<1x4x4xf32>
    %254 = vector.shape_cast %253 : vector<1x4x4xf32> to vector<4x4xf32>
    %cst_263 = arith.constant dense<0.000000e+00> : vector<8x4xf32>
    %255 = tpu.matmul %230, %254, %cst_263 {dimension_numbers = #tpu.dot_dimension_numbers<[1], [0], [0], [1], [0, 0, 1, 1], [], []>} : vector<8x4xf32>, vector<4x4xf32>, vector<8x4xf32> -> vector<8x4xf32>
    %256 = arith.addf %252, %255 : vector<8x4xf32>
    %c6_264 = arith.constant 6 : index
    %c0_265 = arith.constant 0 : index
    %c0_266 = arith.constant 0 : index
    %257 = vector.load %arg8[%c6_264, %c0_265, %c0_266] : memref<9x4x4xf32, #tpu.memory_space<vmem>>, vector<1x4x4xf32>
    %258 = vector.shape_cast %257 : vector<1x4x4xf32> to vector<4x4xf32>
    %cst_267 = arith.constant dense<0.000000e+00> : vector<8x4xf32>
    %259 = tpu.matmul %231, %258, %cst_267 {dimension_numbers = #tpu.dot_dimension_numbers<[1], [0], [0], [1], [0, 0, 1, 1], [], []>} : vector<8x4xf32>, vector<4x4xf32>, vector<8x4xf32> -> vector<8x4xf32>
    %260 = arith.addf %256, %259 : vector<8x4xf32>
    %c7_268 = arith.constant 7 : index
    %c0_269 = arith.constant 0 : index
    %c0_270 = arith.constant 0 : index
    %261 = vector.load %arg8[%c7_268, %c0_269, %c0_270] : memref<9x4x4xf32, #tpu.memory_space<vmem>>, vector<1x4x4xf32>
    %262 = vector.shape_cast %261 : vector<1x4x4xf32> to vector<4x4xf32>
    %cst_271 = arith.constant dense<0.000000e+00> : vector<8x4xf32>
    %263 = tpu.matmul %226, %262, %cst_271 {dimension_numbers = #tpu.dot_dimension_numbers<[1], [0], [0], [1], [0, 0, 1, 1], [], []>} : vector<8x4xf32>, vector<4x4xf32>, vector<8x4xf32> -> vector<8x4xf32>
    %264 = arith.addf %260, %263 : vector<8x4xf32>
    %c8_272 = arith.constant 8 : index
    %c0_273 = arith.constant 0 : index
    %c0_274 = arith.constant 0 : index
    %265 = vector.load %arg8[%c8_272, %c0_273, %c0_274] : memref<9x4x4xf32, #tpu.memory_space<vmem>>, vector<1x4x4xf32>
    %266 = vector.shape_cast %265 : vector<1x4x4xf32> to vector<4x4xf32>
    %cst_275 = arith.constant dense<0.000000e+00> : vector<8x4xf32>
    %267 = tpu.matmul %232, %266, %cst_275 {dimension_numbers = #tpu.dot_dimension_numbers<[1], [0], [0], [1], [0, 0, 1, 1], [], []>} : vector<8x4xf32>, vector<4x4xf32>, vector<8x4xf32> -> vector<8x4xf32>
    %268 = arith.addf %264, %267 : vector<8x4xf32>
    %c0_276 = arith.constant 0 : index
    %c4_277 = arith.constant 4 : index
    %c0_278 = arith.constant 0 : index
    %c0_279 = arith.constant 0 : index
    %269 = vector.load %arg10[%c0_276, %c4_277, %c0_278, %c0_279] : memref<1x8x8x4xf32, #tpu.memory_space<vmem>>, vector<1x1x8x4xf32>
    %270 = vector.shape_cast %269 : vector<1x1x8x4xf32> to vector<8x4xf32>
    %271 = vector.shape_cast %268 : vector<8x4xf32> to vector<1x1x8x4xf32>
    tpu.vector_store %arg10[%c0_276, %c4_277, %c0_278, %c0_279], %271 {strides = array<i32>} : memref<1x8x8x4xf32, #tpu.memory_space<vmem>>, vector<1x1x8x4xf32>,
    %c0_280 = arith.constant 0 : index
    %c5_281 = arith.constant 5 : index
    %c0_282 = arith.constant 0 : index
    %c0_283 = arith.constant 0 : index
    %272 = vector.load %arg6[%c0_280, %c5_281, %c0_282, %c0_283] : memref<1x8x16x4xf32, #tpu.memory_space<vmem>>, vector<1x1x16x4xf32>
    %273 = vector.shape_cast %272 : vector<1x1x16x4xf32> to vector<16x4xf32>
    %c0_284 = arith.constant 0 : index
    %c5_285 = arith.constant 5 : index
    %c0_286 = arith.constant 0 : index
    %c0_287 = arith.constant 0 : index
    %274 = vector.load %arg7[%c0_284, %c5_285, %c0_286, %c0_287] : memref<1x8x8x4xf32, #tpu.memory_space<vmem>>, vector<1x1x8x4xf32>
    %275 = vector.shape_cast %274 : vector<1x1x8x4xf32> to vector<8x4xf32>
    %c0_288 = arith.constant 0 : index
    %c6_289 = arith.constant 6 : index
    %c0_290 = arith.constant 0 : index
    %c0_291 = arith.constant 0 : index
    %276 = vector.load %arg2[%c0_288, %c6_289, %c0_290, %c0_291] : memref<1x8x16x4xf32, #tpu.memory_space<vmem>>, vector<1x1x16x4xf32>
    %277 = vector.shape_cast %276 : vector<1x1x16x4xf32> to vector<16x4xf32>
    %c0_292 = arith.constant 0 : index
    %c6_293 = arith.constant 6 : index
    %c0_294 = arith.constant 0 : index
    %c0_295 = arith.constant 0 : index
    %278 = vector.load %arg4[%c0_292, %c6_293, %c0_294, %c0_295] : memref<1x8x8x4xf32, #tpu.memory_space<vmem>>, vector<1x1x8x4xf32>
    %279 = vector.shape_cast %278 : vector<1x1x8x4xf32> to vector<8x4xf32>
    %280 = vector.extract_strided_slice %224 {offsets = [0, 0], sizes = [8, 4], strides = [1, 1]} : vector<16x4xf32> to vector<8x4xf32>
    %281 = vector.extract_strided_slice %224 {offsets = [1, 0], sizes = [8, 4], strides = [1, 1]} : vector<16x4xf32> to vector<8x4xf32>
    %282 = vector.extract_strided_slice %273 {offsets = [0, 0], sizes = [8, 4], strides = [1, 1]} : vector<16x4xf32> to vector<8x4xf32>
    %283 = vector.extract_strided_slice %273 {offsets = [1, 0], sizes = [8, 4], strides = [1, 1]} : vector<16x4xf32> to vector<8x4xf32>
    %284 = vector.extract_strided_slice %277 {offsets = [0, 0], sizes = [8, 4], strides = [1, 1]} : vector<16x4xf32> to vector<8x4xf32>
    %285 = vector.extract_strided_slice %277 {offsets = [1, 0], sizes = [8, 4], strides = [1, 1]} : vector<16x4xf32> to vector<8x4xf32>
    %c0_296 = arith.constant 0 : index
    %c0_297 = arith.constant 0 : index
    %c0_298 = arith.constant 0 : index
    %286 = vector.load %arg8[%c0_296, %c0_297, %c0_298] : memref<9x4x4xf32, #tpu.memory_space<vmem>>, vector<1x4x4xf32>
    %287 = vector.shape_cast %286 : vector<1x4x4xf32> to vector<4x4xf32>
    %cst_299 = arith.constant dense<0.000000e+00> : vector<8x4xf32>
    %288 = tpu.matmul %280, %287, %cst_299 {dimension_numbers = #tpu.dot_dimension_numbers<[1], [0], [0], [1], [0, 0, 1, 1], [], []>} : vector<8x4xf32>, vector<4x4xf32>, vector<8x4xf32> -> vector<8x4xf32>
    %289 = arith.addf %2, %288 : vector<8x4xf32>
    %c1_300 = arith.constant 1 : index
    %c0_301 = arith.constant 0 : index
    %c0_302 = arith.constant 0 : index
    %290 = vector.load %arg8[%c1_300, %c0_301, %c0_302] : memref<9x4x4xf32, #tpu.memory_space<vmem>>, vector<1x4x4xf32>
    %291 = vector.shape_cast %290 : vector<1x4x4xf32> to vector<4x4xf32>
    %cst_303 = arith.constant dense<0.000000e+00> : vector<8x4xf32>
    %292 = tpu.matmul %226, %291, %cst_303 {dimension_numbers = #tpu.dot_dimension_numbers<[1], [0], [0], [1], [0, 0, 1, 1], [], []>} : vector<8x4xf32>, vector<4x4xf32>, vector<8x4xf32> -> vector<8x4xf32>
    %293 = arith.addf %289, %292 : vector<8x4xf32>
    %c2_304 = arith.constant 2 : index
    %c0_305 = arith.constant 0 : index
    %c0_306 = arith.constant 0 : index
    %294 = vector.load %arg8[%c2_304, %c0_305, %c0_306] : memref<9x4x4xf32, #tpu.memory_space<vmem>>, vector<1x4x4xf32>
    %295 = vector.shape_cast %294 : vector<1x4x4xf32> to vector<4x4xf32>
    %cst_307 = arith.constant dense<0.000000e+00> : vector<8x4xf32>
    %296 = tpu.matmul %281, %295, %cst_307 {dimension_numbers = #tpu.dot_dimension_numbers<[1], [0], [0], [1], [0, 0, 1, 1], [], []>} : vector<8x4xf32>, vector<4x4xf32>, vector<8x4xf32> -> vector<8x4xf32>
    %297 = arith.addf %293, %296 : vector<8x4xf32>
    %c3_308 = arith.constant 3 : index
    %c0_309 = arith.constant 0 : index
    %c0_310 = arith.constant 0 : index
    %298 = vector.load %arg8[%c3_308, %c0_309, %c0_310] : memref<9x4x4xf32, #tpu.memory_space<vmem>>, vector<1x4x4xf32>
    %299 = vector.shape_cast %298 : vector<1x4x4xf32> to vector<4x4xf32>
    %cst_311 = arith.constant dense<0.000000e+00> : vector<8x4xf32>
    %300 = tpu.matmul %282, %299, %cst_311 {dimension_numbers = #tpu.dot_dimension_numbers<[1], [0], [0], [1], [0, 0, 1, 1], [], []>} : vector<8x4xf32>, vector<4x4xf32>, vector<8x4xf32> -> vector<8x4xf32>
    %301 = arith.addf %297, %300 : vector<8x4xf32>
    %c4_312 = arith.constant 4 : index
    %c0_313 = arith.constant 0 : index
    %c0_314 = arith.constant 0 : index
    %302 = vector.load %arg8[%c4_312, %c0_313, %c0_314] : memref<9x4x4xf32, #tpu.memory_space<vmem>>, vector<1x4x4xf32>
    %303 = vector.shape_cast %302 : vector<1x4x4xf32> to vector<4x4xf32>
    %cst_315 = arith.constant dense<0.000000e+00> : vector<8x4xf32>
    %304 = tpu.matmul %275, %303, %cst_315 {dimension_numbers = #tpu.dot_dimension_numbers<[1], [0], [0], [1], [0, 0, 1, 1], [], []>} : vector<8x4xf32>, vector<4x4xf32>, vector<8x4xf32> -> vector<8x4xf32>
    %305 = arith.addf %301, %304 : vector<8x4xf32>
    %c5_316 = arith.constant 5 : index
    %c0_317 = arith.constant 0 : index
    %c0_318 = arith.constant 0 : index
    %306 = vector.load %arg8[%c5_316, %c0_317, %c0_318] : memref<9x4x4xf32, #tpu.memory_space<vmem>>, vector<1x4x4xf32>
    %307 = vector.shape_cast %306 : vector<1x4x4xf32> to vector<4x4xf32>
    %cst_319 = arith.constant dense<0.000000e+00> : vector<8x4xf32>
    %308 = tpu.matmul %283, %307, %cst_319 {dimension_numbers = #tpu.dot_dimension_numbers<[1], [0], [0], [1], [0, 0, 1, 1], [], []>} : vector<8x4xf32>, vector<4x4xf32>, vector<8x4xf32> -> vector<8x4xf32>
    %309 = arith.addf %305, %308 : vector<8x4xf32>
    %c6_320 = arith.constant 6 : index
    %c0_321 = arith.constant 0 : index
    %c0_322 = arith.constant 0 : index
    %310 = vector.load %arg8[%c6_320, %c0_321, %c0_322] : memref<9x4x4xf32, #tpu.memory_space<vmem>>, vector<1x4x4xf32>
    %311 = vector.shape_cast %310 : vector<1x4x4xf32> to vector<4x4xf32>
    %cst_323 = arith.constant dense<0.000000e+00> : vector<8x4xf32>
    %312 = tpu.matmul %284, %311, %cst_323 {dimension_numbers = #tpu.dot_dimension_numbers<[1], [0], [0], [1], [0, 0, 1, 1], [], []>} : vector<8x4xf32>, vector<4x4xf32>, vector<8x4xf32> -> vector<8x4xf32>
    %313 = arith.addf %309, %312 : vector<8x4xf32>
    %c7_324 = arith.constant 7 : index
    %c0_325 = arith.constant 0 : index
    %c0_326 = arith.constant 0 : index
    %314 = vector.load %arg8[%c7_324, %c0_325, %c0_326] : memref<9x4x4xf32, #tpu.memory_space<vmem>>, vector<1x4x4xf32>
    %315 = vector.shape_cast %314 : vector<1x4x4xf32> to vector<4x4xf32>
    %cst_327 = arith.constant dense<0.000000e+00> : vector<8x4xf32>
    %316 = tpu.matmul %279, %315, %cst_327 {dimension_numbers = #tpu.dot_dimension_numbers<[1], [0], [0], [1], [0, 0, 1, 1], [], []>} : vector<8x4xf32>, vector<4x4xf32>, vector<8x4xf32> -> vector<8x4xf32>
    %317 = arith.addf %313, %316 : vector<8x4xf32>
    %c8_328 = arith.constant 8 : index
    %c0_329 = arith.constant 0 : index
    %c0_330 = arith.constant 0 : index
    %318 = vector.load %arg8[%c8_328, %c0_329, %c0_330] : memref<9x4x4xf32, #tpu.memory_space<vmem>>, vector<1x4x4xf32>
    %319 = vector.shape_cast %318 : vector<1x4x4xf32> to vector<4x4xf32>
    %cst_331 = arith.constant dense<0.000000e+00> : vector<8x4xf32>
    %320 = tpu.matmul %285, %319, %cst_331 {dimension_numbers = #tpu.dot_dimension_numbers<[1], [0], [0], [1], [0, 0, 1, 1], [], []>} : vector<8x4xf32>, vector<4x4xf32>, vector<8x4xf32> -> vector<8x4xf32>
    %321 = arith.addf %317, %320 : vector<8x4xf32>
    %c0_332 = arith.constant 0 : index
    %c5_333 = arith.constant 5 : index
    %c0_334 = arith.constant 0 : index
    %c0_335 = arith.constant 0 : index
    %322 = vector.load %arg10[%c0_332, %c5_333, %c0_334, %c0_335] : memref<1x8x8x4xf32, #tpu.memory_space<vmem>>, vector<1x1x8x4xf32>
    %323 = vector.shape_cast %322 : vector<1x1x8x4xf32> to vector<8x4xf32>
    %324 = vector.shape_cast %321 : vector<8x4xf32> to vector<1x1x8x4xf32>
    tpu.vector_store %arg10[%c0_332, %c5_333, %c0_334, %c0_335], %324 {strides = array<i32>} : memref<1x8x8x4xf32, #tpu.memory_space<vmem>>, vector<1x1x8x4xf32>,
    %c0_336 = arith.constant 0 : index
    %c6_337 = arith.constant 6 : index
    %c0_338 = arith.constant 0 : index
    %c0_339 = arith.constant 0 : index
    %325 = vector.load %arg6[%c0_336, %c6_337, %c0_338, %c0_339] : memref<1x8x16x4xf32, #tpu.memory_space<vmem>>, vector<1x1x16x4xf32>
    %326 = vector.shape_cast %325 : vector<1x1x16x4xf32> to vector<16x4xf32>
    %c0_340 = arith.constant 0 : index
    %c6_341 = arith.constant 6 : index
    %c0_342 = arith.constant 0 : index
    %c0_343 = arith.constant 0 : index
    %327 = vector.load %arg7[%c0_340, %c6_341, %c0_342, %c0_343] : memref<1x8x8x4xf32, #tpu.memory_space<vmem>>, vector<1x1x8x4xf32>
    %328 = vector.shape_cast %327 : vector<1x1x8x4xf32> to vector<8x4xf32>
    %c0_344 = arith.constant 0 : index
    %c7_345 = arith.constant 7 : index
    %c0_346 = arith.constant 0 : index
    %c0_347 = arith.constant 0 : index
    %329 = vector.load %arg2[%c0_344, %c7_345, %c0_346, %c0_347] : memref<1x8x16x4xf32, #tpu.memory_space<vmem>>, vector<1x1x16x4xf32>
    %330 = vector.shape_cast %329 : vector<1x1x16x4xf32> to vector<16x4xf32>
    %c0_348 = arith.constant 0 : index
    %c7_349 = arith.constant 7 : index
    %c0_350 = arith.constant 0 : index
    %c0_351 = arith.constant 0 : index
    %331 = vector.load %arg4[%c0_348, %c7_349, %c0_350, %c0_351] : memref<1x8x8x4xf32, #tpu.memory_space<vmem>>, vector<1x1x8x4xf32>
    %332 = vector.shape_cast %331 : vector<1x1x8x4xf32> to vector<8x4xf32>
    %333 = vector.extract_strided_slice %277 {offsets = [0, 0], sizes = [8, 4], strides = [1, 1]} : vector<16x4xf32> to vector<8x4xf32>
    %334 = vector.extract_strided_slice %277 {offsets = [1, 0], sizes = [8, 4], strides = [1, 1]} : vector<16x4xf32> to vector<8x4xf32>
    %335 = vector.extract_strided_slice %326 {offsets = [0, 0], sizes = [8, 4], strides = [1, 1]} : vector<16x4xf32> to vector<8x4xf32>
    %336 = vector.extract_strided_slice %326 {offsets = [1, 0], sizes = [8, 4], strides = [1, 1]} : vector<16x4xf32> to vector<8x4xf32>
    %337 = vector.extract_strided_slice %330 {offsets = [0, 0], sizes = [8, 4], strides = [1, 1]} : vector<16x4xf32> to vector<8x4xf32>
    %338 = vector.extract_strided_slice %330 {offsets = [1, 0], sizes = [8, 4], strides = [1, 1]} : vector<16x4xf32> to vector<8x4xf32>
    %c0_352 = arith.constant 0 : index
    %c0_353 = arith.constant 0 : index
    %c0_354 = arith.constant 0 : index
    %339 = vector.load %arg8[%c0_352, %c0_353, %c0_354] : memref<9x4x4xf32, #tpu.memory_space<vmem>>, vector<1x4x4xf32>
    %340 = vector.shape_cast %339 : vector<1x4x4xf32> to vector<4x4xf32>
    %cst_355 = arith.constant dense<0.000000e+00> : vector<8x4xf32>
    %341 = tpu.matmul %333, %340, %cst_355 {dimension_numbers = #tpu.dot_dimension_numbers<[1], [0], [0], [1], [0, 0, 1, 1], [], []>} : vector<8x4xf32>, vector<4x4xf32>, vector<8x4xf32> -> vector<8x4xf32>
    %342 = arith.addf %2, %341 : vector<8x4xf32>
    %c1_356 = arith.constant 1 : index
    %c0_357 = arith.constant 0 : index
    %c0_358 = arith.constant 0 : index
    %343 = vector.load %arg8[%c1_356, %c0_357, %c0_358] : memref<9x4x4xf32, #tpu.memory_space<vmem>>, vector<1x4x4xf32>
    %344 = vector.shape_cast %343 : vector<1x4x4xf32> to vector<4x4xf32>
    %cst_359 = arith.constant dense<0.000000e+00> : vector<8x4xf32>
    %345 = tpu.matmul %279, %344, %cst_359 {dimension_numbers = #tpu.dot_dimension_numbers<[1], [0], [0], [1], [0, 0, 1, 1], [], []>} : vector<8x4xf32>, vector<4x4xf32>, vector<8x4xf32> -> vector<8x4xf32>
    %346 = arith.addf %342, %345 : vector<8x4xf32>
    %c2_360 = arith.constant 2 : index
    %c0_361 = arith.constant 0 : index
    %c0_362 = arith.constant 0 : index
    %347 = vector.load %arg8[%c2_360, %c0_361, %c0_362] : memref<9x4x4xf32, #tpu.memory_space<vmem>>, vector<1x4x4xf32>
    %348 = vector.shape_cast %347 : vector<1x4x4xf32> to vector<4x4xf32>
    %cst_363 = arith.constant dense<0.000000e+00> : vector<8x4xf32>
    %349 = tpu.matmul %334, %348, %cst_363 {dimension_numbers = #tpu.dot_dimension_numbers<[1], [0], [0], [1], [0, 0, 1, 1], [], []>} : vector<8x4xf32>, vector<4x4xf32>, vector<8x4xf32> -> vector<8x4xf32>
    %350 = arith.addf %346, %349 : vector<8x4xf32>
    %c3_364 = arith.constant 3 : index
    %c0_365 = arith.constant 0 : index
    %c0_366 = arith.constant 0 : index
    %351 = vector.load %arg8[%c3_364, %c0_365, %c0_366] : memref<9x4x4xf32, #tpu.memory_space<vmem>>, vector<1x4x4xf32>
    %352 = vector.shape_cast %351 : vector<1x4x4xf32> to vector<4x4xf32>
    %cst_367 = arith.constant dense<0.000000e+00> : vector<8x4xf32>
    %353 = tpu.matmul %335, %352, %cst_367 {dimension_numbers = #tpu.dot_dimension_numbers<[1], [0], [0], [1], [0, 0, 1, 1], [], []>} : vector<8x4xf32>, vector<4x4xf32>, vector<8x4xf32> -> vector<8x4xf32>
    %354 = arith.addf %350, %353 : vector<8x4xf32>
    %c4_368 = arith.constant 4 : index
    %c0_369 = arith.constant 0 : index
    %c0_370 = arith.constant 0 : index
    %355 = vector.load %arg8[%c4_368, %c0_369, %c0_370] : memref<9x4x4xf32, #tpu.memory_space<vmem>>, vector<1x4x4xf32>
    %356 = vector.shape_cast %355 : vector<1x4x4xf32> to vector<4x4xf32>
    %cst_371 = arith.constant dense<0.000000e+00> : vector<8x4xf32>
    %357 = tpu.matmul %328, %356, %cst_371 {dimension_numbers = #tpu.dot_dimension_numbers<[1], [0], [0], [1], [0, 0, 1, 1], [], []>} : vector<8x4xf32>, vector<4x4xf32>, vector<8x4xf32> -> vector<8x4xf32>
    %358 = arith.addf %354, %357 : vector<8x4xf32>
    %c5_372 = arith.constant 5 : index
    %c0_373 = arith.constant 0 : index
    %c0_374 = arith.constant 0 : index
    %359 = vector.load %arg8[%c5_372, %c0_373, %c0_374] : memref<9x4x4xf32, #tpu.memory_space<vmem>>, vector<1x4x4xf32>
    %360 = vector.shape_cast %359 : vector<1x4x4xf32> to vector<4x4xf32>
    %cst_375 = arith.constant dense<0.000000e+00> : vector<8x4xf32>
    %361 = tpu.matmul %336, %360, %cst_375 {dimension_numbers = #tpu.dot_dimension_numbers<[1], [0], [0], [1], [0, 0, 1, 1], [], []>} : vector<8x4xf32>, vector<4x4xf32>, vector<8x4xf32> -> vector<8x4xf32>
    %362 = arith.addf %358, %361 : vector<8x4xf32>
    %c6_376 = arith.constant 6 : index
    %c0_377 = arith.constant 0 : index
    %c0_378 = arith.constant 0 : index
    %363 = vector.load %arg8[%c6_376, %c0_377, %c0_378] : memref<9x4x4xf32, #tpu.memory_space<vmem>>, vector<1x4x4xf32>
    %364 = vector.shape_cast %363 : vector<1x4x4xf32> to vector<4x4xf32>
    %cst_379 = arith.constant dense<0.000000e+00> : vector<8x4xf32>
    %365 = tpu.matmul %337, %364, %cst_379 {dimension_numbers = #tpu.dot_dimension_numbers<[1], [0], [0], [1], [0, 0, 1, 1], [], []>} : vector<8x4xf32>, vector<4x4xf32>, vector<8x4xf32> -> vector<8x4xf32>
    %366 = arith.addf %362, %365 : vector<8x4xf32>
    %c7_380 = arith.constant 7 : index
    %c0_381 = arith.constant 0 : index
    %c0_382 = arith.constant 0 : index
    %367 = vector.load %arg8[%c7_380, %c0_381, %c0_382] : memref<9x4x4xf32, #tpu.memory_space<vmem>>, vector<1x4x4xf32>
    %368 = vector.shape_cast %367 : vector<1x4x4xf32> to vector<4x4xf32>
    %cst_383 = arith.constant dense<0.000000e+00> : vector<8x4xf32>
    %369 = tpu.matmul %332, %368, %cst_383 {dimension_numbers = #tpu.dot_dimension_numbers<[1], [0], [0], [1], [0, 0, 1, 1], [], []>} : vector<8x4xf32>, vector<4x4xf32>, vector<8x4xf32> -> vector<8x4xf32>
    %370 = arith.addf %366, %369 : vector<8x4xf32>
    %c8_384 = arith.constant 8 : index
    %c0_385 = arith.constant 0 : index
    %c0_386 = arith.constant 0 : index
    %371 = vector.load %arg8[%c8_384, %c0_385, %c0_386] : memref<9x4x4xf32, #tpu.memory_space<vmem>>, vector<1x4x4xf32>
    %372 = vector.shape_cast %371 : vector<1x4x4xf32> to vector<4x4xf32>
    %cst_387 = arith.constant dense<0.000000e+00> : vector<8x4xf32>
    %373 = tpu.matmul %338, %372, %cst_387 {dimension_numbers = #tpu.dot_dimension_numbers<[1], [0], [0], [1], [0, 0, 1, 1], [], []>} : vector<8x4xf32>, vector<4x4xf32>, vector<8x4xf32> -> vector<8x4xf32>
    %374 = arith.addf %370, %373 : vector<8x4xf32>
    %c0_388 = arith.constant 0 : index
    %c6_389 = arith.constant 6 : index
    %c0_390 = arith.constant 0 : index
    %c0_391 = arith.constant 0 : index
    %375 = vector.load %arg10[%c0_388, %c6_389, %c0_390, %c0_391] : memref<1x8x8x4xf32, #tpu.memory_space<vmem>>, vector<1x1x8x4xf32>
    %376 = vector.shape_cast %375 : vector<1x1x8x4xf32> to vector<8x4xf32>
    %377 = vector.shape_cast %374 : vector<8x4xf32> to vector<1x1x8x4xf32>
    tpu.vector_store %arg10[%c0_388, %c6_389, %c0_390, %c0_391], %377 {strides = array<i32>} : memref<1x8x8x4xf32, #tpu.memory_space<vmem>>, vector<1x1x8x4xf32>,
    %c0_392 = arith.constant 0 : index
    %c7_393 = arith.constant 7 : index
    %c0_394 = arith.constant 0 : index
    %c0_395 = arith.constant 0 : index
    %378 = vector.load %arg6[%c0_392, %c7_393, %c0_394, %c0_395] : memref<1x8x16x4xf32, #tpu.memory_space<vmem>>, vector<1x1x16x4xf32>
    %379 = vector.shape_cast %378 : vector<1x1x16x4xf32> to vector<16x4xf32>
    %c0_396 = arith.constant 0 : index
    %c7_397 = arith.constant 7 : index
    %c0_398 = arith.constant 0 : index
    %c0_399 = arith.constant 0 : index
    %380 = vector.load %arg7[%c0_396, %c7_397, %c0_398, %c0_399] : memref<1x8x8x4xf32, #tpu.memory_space<vmem>>, vector<1x1x8x4xf32>
    %381 = vector.shape_cast %380 : vector<1x1x8x4xf32> to vector<8x4xf32>
    %c0_400 = arith.constant 0 : index
    %c0_401 = arith.constant 0 : index
    %c0_402 = arith.constant 0 : index
    %c0_403 = arith.constant 0 : index
    %382 = vector.load %arg3[%c0_400, %c0_401, %c0_402, %c0_403] : memref<1x1x16x4xf32, #tpu.memory_space<vmem>>, vector<1x1x16x4xf32>
    %383 = vector.shape_cast %382 : vector<1x1x16x4xf32> to vector<16x4xf32>
    %c0_404 = arith.constant 0 : index
    %c0_405 = arith.constant 0 : index
    %c0_406 = arith.constant 0 : index
    %c0_407 = arith.constant 0 : index
    %384 = vector.load %arg5[%c0_404, %c0_405, %c0_406, %c0_407] : memref<1x1x8x4xf32, #tpu.memory_space<vmem>>, vector<1x1x8x4xf32>
    %385 = vector.shape_cast %384 : vector<1x1x8x4xf32> to vector<8x4xf32>
    %386 = vector.extract_strided_slice %330 {offsets = [0, 0], sizes = [8, 4], strides = [1, 1]} : vector<16x4xf32> to vector<8x4xf32>
    %387 = vector.extract_strided_slice %330 {offsets = [1, 0], sizes = [8, 4], strides = [1, 1]} : vector<16x4xf32> to vector<8x4xf32>
    %388 = vector.extract_strided_slice %379 {offsets = [0, 0], sizes = [8, 4], strides = [1, 1]} : vector<16x4xf32> to vector<8x4xf32>
    %389 = vector.extract_strided_slice %379 {offsets = [1, 0], sizes = [8, 4], strides = [1, 1]} : vector<16x4xf32> to vector<8x4xf32>
    %390 = vector.extract_strided_slice %383 {offsets = [0, 0], sizes = [8, 4], strides = [1, 1]} : vector<16x4xf32> to vector<8x4xf32>
    %391 = vector.extract_strided_slice %383 {offsets = [1, 0], sizes = [8, 4], strides = [1, 1]} : vector<16x4xf32> to vector<8x4xf32>
    %c0_408 = arith.constant 0 : index
    %c0_409 = arith.constant 0 : index
    %c0_410 = arith.constant 0 : index
    %392 = vector.load %arg8[%c0_408, %c0_409, %c0_410] : memref<9x4x4xf32, #tpu.memory_space<vmem>>, vector<1x4x4xf32>
    %393 = vector.shape_cast %392 : vector<1x4x4xf32> to vector<4x4xf32>
    %cst_411 = arith.constant dense<0.000000e+00> : vector<8x4xf32>
    %394 = tpu.matmul %386, %393, %cst_411 {dimension_numbers = #tpu.dot_dimension_numbers<[1], [0], [0], [1], [0, 0, 1, 1], [], []>} : vector<8x4xf32>, vector<4x4xf32>, vector<8x4xf32> -> vector<8x4xf32>
    %395 = arith.addf %2, %394 : vector<8x4xf32>
    %c1_412 = arith.constant 1 : index
    %c0_413 = arith.constant 0 : index
    %c0_414 = arith.constant 0 : index
    %396 = vector.load %arg8[%c1_412, %c0_413, %c0_414] : memref<9x4x4xf32, #tpu.memory_space<vmem>>, vector<1x4x4xf32>
    %397 = vector.shape_cast %396 : vector<1x4x4xf32> to vector<4x4xf32>
    %cst_415 = arith.constant dense<0.000000e+00> : vector<8x4xf32>
    %398 = tpu.matmul %332, %397, %cst_415 {dimension_numbers = #tpu.dot_dimension_numbers<[1], [0], [0], [1], [0, 0, 1, 1], [], []>} : vector<8x4xf32>, vector<4x4xf32>, vector<8x4xf32> -> vector<8x4xf32>
    %399 = arith.addf %395, %398 : vector<8x4xf32>
    %c2_416 = arith.constant 2 : index
    %c0_417 = arith.constant 0 : index
    %c0_418 = arith.constant 0 : index
    %400 = vector.load %arg8[%c2_416, %c0_417, %c0_418] : memref<9x4x4xf32, #tpu.memory_space<vmem>>, vector<1x4x4xf32>
    %401 = vector.shape_cast %400 : vector<1x4x4xf32> to vector<4x4xf32>
    %cst_419 = arith.constant dense<0.000000e+00> : vector<8x4xf32>
    %402 = tpu.matmul %387, %401, %cst_419 {dimension_numbers = #tpu.dot_dimension_numbers<[1], [0], [0], [1], [0, 0, 1, 1], [], []>} : vector<8x4xf32>, vector<4x4xf32>, vector<8x4xf32> -> vector<8x4xf32>
    %403 = arith.addf %399, %402 : vector<8x4xf32>
    %c3_420 = arith.constant 3 : index
    %c0_421 = arith.constant 0 : index
    %c0_422 = arith.constant 0 : index
    %404 = vector.load %arg8[%c3_420, %c0_421, %c0_422] : memref<9x4x4xf32, #tpu.memory_space<vmem>>, vector<1x4x4xf32>
    %405 = vector.shape_cast %404 : vector<1x4x4xf32> to vector<4x4xf32>
    %cst_423 = arith.constant dense<0.000000e+00> : vector<8x4xf32>
    %406 = tpu.matmul %388, %405, %cst_423 {dimension_numbers = #tpu.dot_dimension_numbers<[1], [0], [0], [1], [0, 0, 1, 1], [], []>} : vector<8x4xf32>, vector<4x4xf32>, vector<8x4xf32> -> vector<8x4xf32>
    %407 = arith.addf %403, %406 : vector<8x4xf32>
    %c4_424 = arith.constant 4 : index
    %c0_425 = arith.constant 0 : index
    %c0_426 = arith.constant 0 : index
    %408 = vector.load %arg8[%c4_424, %c0_425, %c0_426] : memref<9x4x4xf32, #tpu.memory_space<vmem>>, vector<1x4x4xf32>
    %409 = vector.shape_cast %408 : vector<1x4x4xf32> to vector<4x4xf32>
    %cst_427 = arith.constant dense<0.000000e+00> : vector<8x4xf32>
    %410 = tpu.matmul %381, %409, %cst_427 {dimension_numbers = #tpu.dot_dimension_numbers<[1], [0], [0], [1], [0, 0, 1, 1], [], []>} : vector<8x4xf32>, vector<4x4xf32>, vector<8x4xf32> -> vector<8x4xf32>
    %411 = arith.addf %407, %410 : vector<8x4xf32>
    %c5_428 = arith.constant 5 : index
    %c0_429 = arith.constant 0 : index
    %c0_430 = arith.constant 0 : index
    %412 = vector.load %arg8[%c5_428, %c0_429, %c0_430] : memref<9x4x4xf32, #tpu.memory_space<vmem>>, vector<1x4x4xf32>
    %413 = vector.shape_cast %412 : vector<1x4x4xf32> to vector<4x4xf32>
    %cst_431 = arith.constant dense<0.000000e+00> : vector<8x4xf32>
    %414 = tpu.matmul %389, %413, %cst_431 {dimension_numbers = #tpu.dot_dimension_numbers<[1], [0], [0], [1], [0, 0, 1, 1], [], []>} : vector<8x4xf32>, vector<4x4xf32>, vector<8x4xf32> -> vector<8x4xf32>
    %415 = arith.addf %411, %414 : vector<8x4xf32>
    %c6_432 = arith.constant 6 : index
    %c0_433 = arith.constant 0 : index
    %c0_434 = arith.constant 0 : index
    %416 = vector.load %arg8[%c6_432, %c0_433, %c0_434] : memref<9x4x4xf32, #tpu.memory_space<vmem>>, vector<1x4x4xf32>
    %417 = vector.shape_cast %416 : vector<1x4x4xf32> to vector<4x4xf32>
    %cst_435 = arith.constant dense<0.000000e+00> : vector<8x4xf32>
    %418 = tpu.matmul %390, %417, %cst_435 {dimension_numbers = #tpu.dot_dimension_numbers<[1], [0], [0], [1], [0, 0, 1, 1], [], []>} : vector<8x4xf32>, vector<4x4xf32>, vector<8x4xf32> -> vector<8x4xf32>
    %419 = arith.addf %415, %418 : vector<8x4xf32>
    %c7_436 = arith.constant 7 : index
    %c0_437 = arith.constant 0 : index
    %c0_438 = arith.constant 0 : index
    %420 = vector.load %arg8[%c7_436, %c0_437, %c0_438] : memref<9x4x4xf32, #tpu.memory_space<vmem>>, vector<1x4x4xf32>
    %421 = vector.shape_cast %420 : vector<1x4x4xf32> to vector<4x4xf32>
    %cst_439 = arith.constant dense<0.000000e+00> : vector<8x4xf32>
    %422 = tpu.matmul %385, %421, %cst_439 {dimension_numbers = #tpu.dot_dimension_numbers<[1], [0], [0], [1], [0, 0, 1, 1], [], []>} : vector<8x4xf32>, vector<4x4xf32>, vector<8x4xf32> -> vector<8x4xf32>
    %423 = arith.addf %419, %422 : vector<8x4xf32>
    %c8_440 = arith.constant 8 : index
    %c0_441 = arith.constant 0 : index
    %c0_442 = arith.constant 0 : index
    %424 = vector.load %arg8[%c8_440, %c0_441, %c0_442] : memref<9x4x4xf32, #tpu.memory_space<vmem>>, vector<1x4x4xf32>
    %425 = vector.shape_cast %424 : vector<1x4x4xf32> to vector<4x4xf32>
    %cst_443 = arith.constant dense<0.000000e+00> : vector<8x4xf32>
    %426 = tpu.matmul %391, %425, %cst_443 {dimension_numbers = #tpu.dot_dimension_numbers<[1], [0], [0], [1], [0, 0, 1, 1], [], []>} : vector<8x4xf32>, vector<4x4xf32>, vector<8x4xf32> -> vector<8x4xf32>
    %427 = arith.addf %423, %426 : vector<8x4xf32>
    %c0_444 = arith.constant 0 : index
    %c7_445 = arith.constant 7 : index
    %c0_446 = arith.constant 0 : index
    %c0_447 = arith.constant 0 : index
    %428 = vector.load %arg10[%c0_444, %c7_445, %c0_446, %c0_447] : memref<1x8x8x4xf32, #tpu.memory_space<vmem>>, vector<1x1x8x4xf32>
    %429 = vector.shape_cast %428 : vector<1x1x8x4xf32> to vector<8x4xf32>
    %430 = vector.shape_cast %427 : vector<8x4xf32> to vector<1x1x8x4xf32>
    tpu.vector_store %arg10[%c0_444, %c7_445, %c0_446, %c0_447], %430 {strides = array<i32>} : memref<1x8x8x4xf32, #tpu.memory_space<vmem>>, vector<1x1x8x4xf32>,
    return
  }
  func.func @transform_0(%arg0: i32, %arg1: i32) -> (i32, i32, i32, i32) {
    %c0_i32 = arith.constant 0 : i32
    %c0_i32_0 = arith.constant 0 : i32
    %c0_i32_1 = arith.constant 0 : i32
    return %arg0, %arg1, %c0_i32, %c0_i32_0 : i32, i32, i32, i32
  }
  func.func @transform_1(%arg0: i32, %arg1: i32) -> (i32, i32, i32, i32) {
    %c1_i32 = arith.constant 1 : i32
    %0 = arith.addi %arg1, %c1_i32 : i32
    %c8_i32 = arith.constant 8 : i32
    %1 = arith.muli %0, %c8_i32 : i32
    %c0_i32 = arith.constant 0 : i32
    %c0_i32_0 = arith.constant 0 : i32
    %c0_i32_1 = arith.constant 0 : i32
    return %arg0, %1, %c0_i32, %c0_i32_0 : i32, i32, i32, i32
  }
  func.func @transform_2(%arg0: i32, %arg1: i32) -> (i32, i32, i32, i32) {
    %c0_i32 = arith.constant 0 : i32
    %c0_i32_0 = arith.constant 0 : i32
    %c0_i32_1 = arith.constant 0 : i32
    return %arg0, %arg1, %c0_i32, %c0_i32_0 : i32, i32, i32, i32
  }
  func.func @transform_3(%arg0: i32, %arg1: i32) -> (i32, i32, i32, i32) {
    %c1_i32 = arith.constant 1 : i32
    %0 = arith.addi %arg1, %c1_i32 : i32
    %c8_i32 = arith.constant 8 : i32
    %1 = arith.muli %0, %c8_i32 : i32
    %c0_i32 = arith.constant 0 : i32
    %c0_i32_0 = arith.constant 0 : i32
    %c0_i32_1 = arith.constant 0 : i32
    return %arg0, %1, %c0_i32, %c0_i32_0 : i32, i32, i32, i32
  }
  func.func @transform_4(%arg0: i32, %arg1: i32) -> (i32, i32, i32, i32) {
    %c0_i32 = arith.constant 0 : i32
    %c0_i32_0 = arith.constant 0 : i32
    %c0_i32_1 = arith.constant 0 : i32
    return %arg0, %arg1, %c0_i32, %c0_i32_0 : i32, i32, i32, i32
  }
  func.func @transform_5(%arg0: i32, %arg1: i32) -> (i32, i32, i32, i32) {
    %c0_i32 = arith.constant 0 : i32
    %c0_i32_0 = arith.constant 0 : i32
    %c0_i32_1 = arith.constant 0 : i32
    return %arg0, %arg1, %c0_i32, %c0_i32_0 : i32, i32, i32, i32
  }
  func.func @transform_6(%arg0: i32, %arg1: i32) -> (i32, i32, i32) {
    %c0_i32 = arith.constant 0 : i32
    %c0_i32_0 = arith.constant 0 : i32
    %c0_i32_1 = arith.constant 0 : i32
    %c0_i32_2 = arith.constant 0 : i32
    return %c0_i32, %c0_i32_0, %c0_i32_1 : i32, i32, i32
  }
  func.func @transform_7(%arg0: i32, %arg1: i32) -> (i32, i32) {
    %c0_i32 = arith.constant 0 : i32
    %c0_i32_0 = arith.constant 0 : i32
    %c0_i32_1 = arith.constant 0 : i32
    return %c0_i32, %c0_i32_0 : i32, i32
  }
  func.func @transform_8(%arg0: i32, %arg1: i32) -> (i32, i32, i32, i32) {
    %c0_i32 = arith.constant 0 : i32
    %c0_i32_0 = arith.constant 0 : i32
    %c0_i32_1 = arith.constant 0 : i32
    return %arg0, %arg1, %c0_i32, %c0_i32_0 : i32, i32, i32, i32
  }
}

</mosaic_0001>

<llo_original>
// kernel: downsample_forward.1
$region0: #{downsample_forward.1}
  #allocation0 [shape = 'u32[]', space=smem, size = 0x4, offset = 0x4, fixed_abs, tag = 'smem constant byte address 0x4 - core index']
  #allocation1 [shape = 'u32[144,128]{1,0:T(1,128)}', space=vmem, size = 0x12000, scoped, tag = 'internal scratch']
  %s0 = inlined_call_operand.vmem [shape: f32[2,9,16,4], index: 0, kind: input, shape index: {}, may-alias: {0,1}]
  %s1 = inlined_call_operand.vmem [shape: f32[2,9,16,4], index: 1, kind: input, shape index: {}, may-alias: {0,1}]
  %s2 = inlined_call_operand.vmem [shape: f32[2,9,8,4], index: 2, kind: input, shape index: {}, may-alias: {2,3}]
  %s3 = inlined_call_operand.vmem [shape: f32[2,9,8,4], index: 3, kind: input, shape index: {}, may-alias: {2,3}]
  %s4 = inlined_call_operand.vmem [shape: f32[2,8,16,4], index: 4, kind: input, shape index: {}]
  %s5 = inlined_call_operand.vmem [shape: f32[2,8,8,4], index: 5, kind: input, shape index: {}]
  %s6 = inlined_call_operand.vmem [shape: f32[9,4,4], index: 6, kind: input, shape index: {}]
  %s7 = inlined_call_operand.vmem [shape: f32[1,4], index: 7, kind: input, shape index: {}]
  %s8 = inlined_call_operand.vmem [shape: f32[2,8,8,4], index: 8, kind: output, shape index: {}]
  %s9 = sld [smem:[#allocation0]]
  $region65: #{downsample_forward.1} parent=0
    _
  %s11 = ssub.s32 1, %s9
  %s12 = scalar_select 0, %s11, %s9
  loop: start=0, step=1, limit=4
  $region2: #{downsample_forward.1} parent=0 // loop_pre_header
    _
  $region3: #{downsample_forward.1} parent=0 // loop_header
    %s14 = sphi 0, %s18
    %p15 = scmp.ge.s32.totalorder %s14, 4
    %s21 = sphi 0, %s33
    %s22 = sphi 0, %s29
    %s23 = sphi 0, %s21
    %s24 = sphi 0, %s22
    %s25 = sphi 0, %s23
    %s26 = sphi 0, %s24
    %s38 = sphi 0, %s40
    %s41 = sphi 0, %s38
    %s42 = sphi 0, %s41
    %s58 = sphi 0, %s42
    %s70 = sphi 0, %s72
    %s73 = sphi 0, %s70
    %s74 = sphi 0, %s73
    %s90 = sphi 0, %s74
    %s98 = sphi 0, %s100
    %s101 = sphi 0, %s98
    %s102 = sphi 0, %s101
    %s118 = sphi 0, %s102
    %s130 = sphi 0, %s132
    %s133 = sphi 0, %s130
    %s134 = sphi 0, %s133
    %s150 = sphi 0, %s134
    %s158 = sphi 0, %s160
    %s161 = sphi 0, %s158
    %s162 = sphi 0, %s161
    %s178 = sphi 0, %s162
    %s186 = sphi 0, %s188
    %s189 = sphi 0, %s186
    %s190 = sphi 0, %s189
    %s206 = sphi 0, %s190
    %s210 = sphi 0, %s210
    %s212 = sphi 0, %s210
    %s213 = sphi 0, %s212
    %s227 = sphi 0, %s213
    %s231 = sphi 0, %s231
    %s233 = sphi 0, %s231
    %s234 = sphi 0, %s233
    %s248 = sphi 0, %s234
    %s256 = sphi 0, %s258
    %s259 = sphi 0, %s256
    %s260 = sphi 0, %s259
    %s276 = sphi 0, %s260
  $region4: #{downsample_forward.1} parent=0 // loop_header_branch
    %17 = sbr.rel (%p15) target = $region8
  $region5: #{downsample_forward.1} parent=0 // loop_body
    %s19 = ssub.s32 %s14, 1
    %s20 = ssub.s32 %s14, 2
    %s27 = sadd.s32 1, %s22
    %p28 = scmp.ge.s32.totalorder %s27, 1
    %s29 = scalar_select %p28, 0, %s27
    %s30 = sadd.s32 1, %s21
    %s31 = scalar_select %p28, %s30, %s21
    %p32 = scmp.ge.s32.totalorder %s31, 2
    %s33 = scalar_select %p32, 0, %s31
    %s34 = ssub.s32 %s21, %s33
    %s35 = ssub.s32 %s22, %s29
    %s36 = sor.u32 %s34, %s35
    %p37 = scmp.eq.s32.totalorder %s36, 0
    %s39 = sadd.s32 %s38, 1
    %s40 = scalar_select %p37, %s38, %s39
    %p43 = pneg %p37
    %p44 = scmp.eq.s32.totalorder %s14, 1
    %p45 = por %p43, %p44
    %p46 = scmp.ne.s32.totalorder %s38, %s41
    %p47 = scmp.eq.s32.totalorder %s14, 0
    %p48 = por %p46, %p47
    %p49 = scmp.ne.s32.totalorder %s38, %s41
    %p50 = scmp.eq.s32.totalorder %s19, 1
    %p51 = por %p49, %p50
    %p52 = scmp.ne.s32.totalorder %s41, %s42
    %p53 = scmp.eq.s32.totalorder %s19, 0
    %p54 = por %p52, %p53
    %p55 = scmp.ne.s32.totalorder %s41, %s42
    %p56 = scmp.eq.s32.totalorder %s20, 1
    %p57 = por %p55, %p56
    %p59 = scmp.ne.s32.totalorder %s42, %s58
    %p60 = scmp.eq.s32.totalorder %s20, 0
    %p61 = por %p59, %p60
    %s62 = sadd.s32 %s22, 1
    %s63 = smul.u32 %s62, 8
    %s64 = sadd.s32 %s29, 1
    %s65 = smul.u32 %s64, 8
    %s66 = ssub.s32 %s21, %s33
    %s67 = ssub.s32 %s63, %s65
    %s68 = sor.u32 %s66, %s67
    %p69 = scmp.eq.s32.totalorder %s68, 0
    %s71 = sadd.s32 %s70, 1
    %s72 = scalar_select %p69, %s70, %s71
    %p75 = pneg %p69
    %p76 = scmp.eq.s32.totalorder %s14, 1
    %p77 = por %p75, %p76
    %p78 = scmp.ne.s32.totalorder %s70, %s73
    %p79 = scmp.eq.s32.totalorder %s14, 0
    %p80 = por %p78, %p79
    %p81 = scmp.ne.s32.totalorder %s70, %s73
    %p82 = scmp.eq.s32.totalorder %s19, 1
    %p83 = por %p81, %p82
    %p84 = scmp.ne.s32.totalorder %s73, %s74
    %p85 = scmp.eq.s32.totalorder %s19, 0
    %p86 = por %p84, %p85
    %p87 = scmp.ne.s32.totalorder %s73, %s74
    %p88 = scmp.eq.s32.totalorder %s20, 1
    %p89 = por %p87, %p88
    %p91 = scmp.ne.s32.totalorder %s74, %s90
    %p92 = scmp.eq.s32.totalorder %s20, 0
    %p93 = por %p91, %p92
    %s94 = ssub.s32 %s21, %s33
    %s95 = ssub.s32 %s22, %s29
    %s96 = sor.u32 %s94, %s95
    %p97 = scmp.eq.s32.totalorder %s96, 0
    %s99 = sadd.s32 %s98, 1
    %s100 = scalar_select %p97, %s98, %s99
    %p103 = pneg %p97
    %p104 = scmp.eq.s32.totalorder %s14, 1
    %p105 = por %p103, %p104
    %p106 = scmp.ne.s32.totalorder %s98, %s101
    %p107 = scmp.eq.s32.totalorder %s14, 0
    %p108 = por %p106, %p107
    %p109 = scmp.ne.s32.totalorder %s98, %s101
    %p110 = scmp.eq.s32.totalorder %s19, 1
    %p111 = por %p109, %p110
    %p112 = scmp.ne.s32.totalorder %s101, %s102
    %p113 = scmp.eq.s32.totalorder %s19, 0
    %p114 = por %p112, %p113
    %p115 = scmp.ne.s32.totalorder %s101, %s102
    %p116 = scmp.eq.s32.totalorder %s20, 1
    %p117 = por %p115, %p116
    %p119 = scmp.ne.s32.totalorder %s102, %s118
    %p120 = scmp.eq.s32.totalorder %s20, 0
    %p121 = por %p119, %p120
    %s122 = sadd.s32 %s22, 1
    %s123 = smul.u32 %s122, 8
    %s124 = sadd.s32 %s29, 1
    %s125 = smul.u32 %s124, 8
    %s126 = ssub.s32 %s21, %s33
    %s127 = ssub.s32 %s123, %s125
    %s128 = sor.u32 %s126, %s127
    %p129 = scmp.eq.s32.totalorder %s128, 0
    %s131 = sadd.s32 %s130, 1
    %s132 = scalar_select %p129, %s130, %s131
    %p135 = pneg %p129
    %p136 = scmp.eq.s32.totalorder %s14, 1
    %p137 = por %p135, %p136
    %p138 = scmp.ne.s32.totalorder %s130, %s133
    %p139 = scmp.eq.s32.totalorder %s14, 0
    %p140 = por %p138, %p139
    %p141 = scmp.ne.s32.totalorder %s130, %s133
    %p142 = scmp.eq.s32.totalorder %s19, 1
    %p143 = por %p141, %p142
    %p144 = scmp.ne.s32.totalorder %s133, %s134
    %p145 = scmp.eq.s32.totalorder %s19, 0
    %p146 = por %p144, %p145
    %p147 = scmp.ne.s32.totalorder %s133, %s134
    %p148 = scmp.eq.s32.totalorder %s20, 1
    %p149 = por %p147, %p148
    %p151 = scmp.ne.s32.totalorder %s134, %s150
    %p152 = scmp.eq.s32.totalorder %s20, 0
    %p153 = por %p151, %p152
    %s154 = ssub.s32 %s21, %s33
    %s155 = ssub.s32 %s22, %s29
    %s156 = sor.u32 %s154, %s155
    %p157 = scmp.eq.s32.totalorder %s156, 0
    %s159 = sadd.s32 %s158, 1
    %s160 = scalar_select %p157, %s158, %s159
    %p163 = pneg %p157
    %p164 = scmp.eq.s32.totalorder %s14, 1
    %p165 = por %p163, %p164
    %p166 = scmp.ne.s32.totalorder %s158, %s161
    %p167 = scmp.eq.s32.totalorder %s14, 0
    %p168 = por %p166, %p167
    %p169 = scmp.ne.s32.totalorder %s158, %s161
    %p170 = scmp.eq.s32.totalorder %s19, 1
    %p171 = por %p169, %p170
    %p172 = scmp.ne.s32.totalorder %s161, %s162
    %p173 = scmp.eq.s32.totalorder %s19, 0
    %p174 = por %p172, %p173
    %p175 = scmp.ne.s32.totalorder %s161, %s162
    %p176 = scmp.eq.s32.totalorder %s20, 1
    %p177 = por %p175, %p176
    %p179 = scmp.ne.s32.totalorder %s162, %s178
    %p180 = scmp.eq.s32.totalorder %s20, 0
    %p181 = por %p179, %p180
    %s182 = ssub.s32 %s21, %s33
    %s183 = ssub.s32 %s22, %s29
    %s184 = sor.u32 %s182, %s183
    %p185 = scmp.eq.s32.totalorder %s184, 0
    %s187 = sadd.s32 %s186, 1
    %s188 = scalar_select %p185, %s186, %s187
    %p191 = pneg %p185
    %p192 = scmp.eq.s32.totalorder %s14, 1
    %p193 = por %p191, %p192
    %p194 = scmp.ne.s32.totalorder %s186, %s189
    %p195 = scmp.eq.s32.totalorder %s14, 0
    %p196 = por %p194, %p195
    %p197 = scmp.ne.s32.totalorder %s186, %s189
    %p198 = scmp.eq.s32.totalorder %s19, 1
    %p199 = por %p197, %p198
    %p200 = scmp.ne.s32.totalorder %s189, %s190
    %p201 = scmp.eq.s32.totalorder %s19, 0
    %p202 = por %p200, %p201
    %p203 = scmp.ne.s32.totalorder %s189, %s190
    %p204 = scmp.eq.s32.totalorder %s20, 1
    %p205 = por %p203, %p204
    %p207 = scmp.ne.s32.totalorder %s190, %s206
    %p208 = scmp.eq.s32.totalorder %s20, 0
    %p209 = por %p207, %p208
    %s211 = sadd.s32 %s210, 1
    %p214 = scmp.eq.s32.totalorder %s14, 1
    %p215 = scmp.ne.s32.totalorder %s210, %s212
    %p216 = scmp.eq.s32.totalorder %s14, 0
    %p217 = por %p215, %p216
    %p218 = scmp.ne.s32.totalorder %s210, %s212
    %p219 = scmp.eq.s32.totalorder %s19, 1
    %p220 = por %p218, %p219
    %p221 = scmp.ne.s32.totalorder %s212, %s213
    %p222 = scmp.eq.s32.totalorder %s19, 0
    %p223 = por %p221, %p222
    %p224 = scmp.ne.s32.totalorder %s212, %s213
    %p225 = scmp.eq.s32.totalorder %s20, 1
    %p226 = por %p224, %p225
    %p228 = scmp.ne.s32.totalorder %s213, %s227
    %p229 = scmp.eq.s32.totalorder %s20, 0
    %p230 = por %p228, %p229
    %s232 = sadd.s32 %s231, 1
    %p235 = scmp.eq.s32.totalorder %s14, 1
    %p236 = scmp.ne.s32.totalorder %s231, %s233
    %p237 = scmp.eq.s32.totalorder %s14, 0
    %p238 = por %p236, %p237
    %p239 = scmp.ne.s32.totalorder %s231, %s233
    %p240 = scmp.eq.s32.totalorder %s19, 1
    %p241 = por %p239, %p240
    %p242 = scmp.ne.s32.totalorder %s233, %s234
    %p243 = scmp.eq.s32.totalorder %s19, 0
    %p244 = por %p242, %p243
    %p245 = scmp.ne.s32.totalorder %s233, %s234
    %p246 = scmp.eq.s32.totalorder %s20, 1
    %p247 = por %p245, %p246
    %p249 = scmp.ne.s32.totalorder %s234, %s248
    %p250 = scmp.eq.s32.totalorder %s20, 0
    %p251 = por %p249, %p250
    %s252 = ssub.s32 %s21, %s33
    %s253 = ssub.s32 %s22, %s29
    %s254 = sor.u32 %s252, %s253
    %p255 = scmp.eq.s32.totalorder %s254, 0
    %s257 = sadd.s32 %s256, 1
    %s258 = scalar_select %p255, %s256, %s257
    %p261 = pneg %p255
    %p262 = scmp.eq.s32.totalorder %s14, 1
    %p263 = por %p261, %p262
    %p264 = scmp.ne.s32.totalorder %s256, %s259
    %p265 = scmp.eq.s32.totalorder %s14, 0
    %p266 = por %p264, %p265
    %p267 = scmp.ne.s32.totalorder %s256, %s259
    %p268 = scmp.eq.s32.totalorder %s19, 1
    %p269 = por %p267, %p268
    %p270 = scmp.ne.s32.totalorder %s259, %s260
    %p271 = scmp.eq.s32.totalorder %s19, 0
    %p272 = por %p270, %p271
    %p273 = scmp.ne.s32.totalorder %s259, %s260
    %p274 = scmp.eq.s32.totalorder %s20, 1
    %p275 = por %p273, %p274
    %p277 = scmp.ne.s32.totalorder %s260, %s276
    %p278 = scmp.eq.s32.totalorder %s20, 0
    %p279 = por %p277, %p278
    %p280 = scmp.le.s32.totalorder 1, %s14
    %p281 = scmp.lt.s32.totalorder %s14, 3
    %p282 = pnand %p280, %p281
    %p283 = pneg %p282
    // Predicated region
    $region9: #{downsample_forward.1} parent=5 // pred_check
      _
    $region10: #{downsample_forward.1} parent=5 // pred_check_branch
      %285 = sbr.rel (%p282) target = $region12
    $region11: #{downsample_forward.1} parent=5 // pred_region
      %s286 = ssub.s32 %s14, 1
      // Predicated region
      $region13: #{downsample_forward.1} parent=11 // pred_check
        %p287 = pneg %p223
      $region14: #{downsample_forward.1} parent=11 // pred_check_branch
        %289 = sbr.rel (%p287) target = $region16
      $region15: #{downsample_forward.1} parent=11 // pred_region
        _
      $region16: #{downsample_forward.1} parent=11 // pred_fallthru
        _
      // Predicated region
      $region17: #{downsample_forward.1} parent=11 // pred_check
        %p290 = pneg %p244
      $region18: #{downsample_forward.1} parent=11 // pred_check_branch
        %292 = sbr.rel (%p290) target = $region20
      $region19: #{downsample_forward.1} parent=11 // pred_region
        _
      $region20: #{downsample_forward.1} parent=11 // pred_fallthru
        _
    $region12: #{downsample_forward.1} parent=5 // pred_fallthru
      _
    %p293 = scmp.lt.s32.totalorder %s14, 2
    // Predicated region
    $region21: #{downsample_forward.1} parent=5 // pred_check
      %p294 = pneg %p293
    $region22: #{downsample_forward.1} parent=5 // pred_check_branch
      %296 = sbr.rel (%p294) target = $region24
    $region23: #{downsample_forward.1} parent=5 // pred_region
      // Predicated region
      $region25: #{downsample_forward.1} parent=23 // pred_check
        %p297 = pneg %p48
      $region26: #{downsample_forward.1} parent=23 // pred_check_branch
        %299 = sbr.rel (%p297) target = $region28
      $region27: #{downsample_forward.1} parent=23 // pred_region
        %s300 = smul.u32 8, %s22
        %s301 = ssub.s32 9, %s300
        %p302 = scmp.lt.s32.totalorder %s301, 8
        %s303 = scalar_select %p302, %s301, 8
        %s304 = smul.u32 128, %s303
        %s305 = smul.u32 %s304, 2
        %p306 = scmp.lt.s32.totalorder %s21, 1
        %s307 = scalar_select %p306, %s21, 1
        %p308 = scmp.lt.s32.totalorder %s300, 8
        %s309 = scalar_select %p308, %s300, 8
        %s310 = smul.addr %s309, 2
        %s311 = smul.addr %s307, 18
        %s312 = sadd.s32 %s310, %s311
        %s313 = smul.addr %s312, 8
        %s314 = scalar_lea.vmem %s0, %s313
        %s315 = smul.u32 8, %s22
        %s316 = ssub.s32 9, %s315
        %p317 = scmp.lt.s32.totalorder %s316, 8
        %s318 = scalar_select %p317, %s316, 8
        %s319 = smul.u32 128, %s318
        %s320 = smul.u32 %s319, 2
      $region28: #{downsample_forward.1} parent=23 // pred_fallthru
        _
      // Predicated region
      $region29: #{downsample_forward.1} parent=23 // pred_check
        %p321 = pneg %p80
      $region30: #{downsample_forward.1} parent=23 // pred_check_branch
        %323 = sbr.rel (%p321) target = $region32
      $region31: #{downsample_forward.1} parent=23 // pred_region
        %s324 = sadd.s32 %s22, 1
        %s325 = smul.u32 %s324, 8
        %p326 = scmp.lt.s32.totalorder %s21, 1
        %s327 = scalar_select %p326, %s21, 1
        %p328 = scmp.lt.s32.totalorder %s325, 8
        %s329 = scalar_select %p328, %s325, 8
        %s330 = smul.addr %s329, 2
        %s331 = smul.addr %s327, 18
        %s332 = sadd.s32 %s330, %s331
        %s333 = smul.addr %s332, 8
        %s334 = scalar_lea.vmem %s1, %s333
        %s335 = sadd.s32 %s22, 1
        %s336 = smul.u32 %s335, 8
      $region32: #{downsample_forward.1} parent=23 // pred_fallthru
        _
      // Predicated region
      $region33: #{downsample_forward.1} parent=23 // pred_check
        %p337 = pneg %p108
      $region34: #{downsample_forward.1} parent=23 // pred_check_branch
        %339 = sbr.rel (%p337) target = $region36
      $region35: #{downsample_forward.1} parent=23 // pred_region
        %s340 = smul.u32 8, %s22
        %s341 = ssub.s32 9, %s340
        %p342 = scmp.lt.s32.totalorder %s341, 8
        %s343 = scalar_select %p342, %s341, 8
        %s344 = smul.u32 128, %s343
        %p345 = scmp.lt.s32.totalorder %s21, 1
        %s346 = scalar_select %p345, %s21, 1
        %p347 = scmp.lt.s32.totalorder %s340, 8
        %s348 = scalar_select %p347, %s340, 8
        %s349 = smul.addr %s346, 9
        %s350 = sadd.s32 %s348, %s349
        %s351 = smul.addr %s350, 8
        %s352 = scalar_lea.vmem %s2, %s351
        %s353 = smul.u32 8, %s22
        %s354 = ssub.s32 9, %s353
        %p355 = scmp.lt.s32.totalorder %s354, 8
        %s356 = scalar_select %p355, %s354, 8
        %s357 = smul.u32 128, %s356
      $region36: #{downsample_forward.1} parent=23 // pred_fallthru
        _
      // Predicated region
      $region37: #{downsample_forward.1} parent=23 // pred_check
        %p358 = pneg %p140
      $region38: #{downsample_forward.1} parent=23 // pred_check_branch
        %360 = sbr.rel (%p358) target = $region40
      $region39: #{downsample_forward.1} parent=23 // pred_region
        %s361 = sadd.s32 %s22, 1
        %s362 = smul.u32 %s361, 8
        %p363 = scmp.lt.s32.totalorder %s21, 1
        %s364 = scalar_select %p363, %s21, 1
        %p365 = scmp.lt.s32.totalorder %s362, 8
        %s366 = scalar_select %p365, %s362, 8
        %s367 = smul.addr %s364, 9
        %s368 = sadd.s32 %s366, %s367
        %s369 = smul.addr %s368, 8
        %s370 = scalar_lea.vmem %s3, %s369
        %s371 = sadd.s32 %s22, 1
        %s372 = smul.u32 %s371, 8
      $region40: #{downsample_forward.1} parent=23 // pred_fallthru
        _
      // Predicated region
      $region41: #{downsample_forward.1} parent=23 // pred_check
        %p373 = pneg %p168
      $region42: #{downsample_forward.1} parent=23 // pred_check_branch
        %375 = sbr.rel (%p373) target = $region44
      $region43: #{downsample_forward.1} parent=23 // pred_region
        %s376 = smul.u32 8, %s22
        %p377 = scmp.lt.s32.totalorder %s21, 1
        %s378 = scalar_select %p377, %s21, 1
        %p379 = scmp.lt.s32.totalorder %s376, 7
        %s380 = scalar_select %p379, %s376, 7
        %s381 = smul.addr %s380, 2
        %s382 = smul.addr %s378, 16
        %s383 = sadd.s32 %s381, %s382
        %s384 = smul.addr %s383, 8
        %s385 = scalar_lea.vmem %s4, %s384
        %s386 = smul.u32 8, %s22
      $region44: #{downsample_forward.1} parent=23 // pred_fallthru
        _
      // Predicated region
      $region45: #{downsample_forward.1} parent=23 // pred_check
        %p387 = pneg %p196
      $region46: #{downsample_forward.1} parent=23 // pred_check_branch
        %389 = sbr.rel (%p387) target = $region48
      $region47: #{downsample_forward.1} parent=23 // pred_region
        %s390 = smul.u32 8, %s22
        %p391 = scmp.lt.s32.totalorder %s21, 1
        %s392 = scalar_select %p391, %s21, 1
        %p393 = scmp.lt.s32.totalorder %s390, 7
        %s394 = scalar_select %p393, %s390, 7
        %s395 = smul.addr %s392, 8
        %s396 = sadd.s32 %s394, %s395
        %s397 = smul.addr %s396, 8
        %s398 = scalar_lea.vmem %s5, %s397
        %s399 = smul.u32 8, %s22
      $region48: #{downsample_forward.1} parent=23 // pred_fallthru
        _
    $region24: #{downsample_forward.1} parent=5 // pred_fallthru
      _
    %p400 = scmp.le.s32.totalorder 1, %s14
    %p401 = scmp.lt.s32.totalorder %s14, 3
    %p402 = pnand %p400, %p401
    %p403 = pneg %p402
    // Predicated region
    $region49: #{downsample_forward.1} parent=5 // pred_check
      _
    $region50: #{downsample_forward.1} parent=5 // pred_check_branch
      %405 = sbr.rel (%p402) target = $region52
    $region51: #{downsample_forward.1} parent=5 // pred_region
      %s406 = ssub.s32 %s14, 1
      %s407 = smul.u32 8, %s24
      %s408 = ssub.s32 9, %s407
      %p409 = scmp.lt.s32.totalorder %s408, 8
      %s410 = scalar_select %p409, %s408, 8
      %s411 = smul.u32 128, %s410
      %s412 = smul.u32 %s411, 2
      %p413 = scmp.lt.s32.totalorder %s23, 1
      %s414 = scalar_select %p413, %s23, 1
      %p415 = scmp.lt.s32.totalorder %s407, 8
      %s416 = scalar_select %p415, %s407, 8
      %s417 = smul.addr %s416, 2
      %s418 = smul.addr %s414, 18
      %s419 = sadd.s32 %s417, %s418
      %s420 = smul.addr %s419, 8
      %s421 = scalar_lea.vmem %s0, %s420
      %p422 = pneg %p54
      %p423 = pneg %p51
      %s424 = sadd.s32 %s24, 1
      %s425 = smul.u32 %s424, 8
      %p426 = scmp.lt.s32.totalorder %s23, 1
      %s427 = scalar_select %p426, %s23, 1
      %p428 = scmp.lt.s32.totalorder %s425, 8
      %s429 = scalar_select %p428, %s425, 8
      %s430 = smul.addr %s429, 2
      %s431 = smul.addr %s427, 18
      %s432 = sadd.s32 %s430, %s431
      %s433 = smul.addr %s432, 8
      %s434 = scalar_lea.vmem %s1, %s433
      %p435 = pneg %p86
      %p436 = pneg %p83
      %s437 = smul.u32 8, %s24
      %s438 = ssub.s32 9, %s437
      %p439 = scmp.lt.s32.totalorder %s438, 8
      %s440 = scalar_select %p439, %s438, 8
      %s441 = smul.u32 128, %s440
      %p442 = scmp.lt.s32.totalorder %s23, 1
      %s443 = scalar_select %p442, %s23, 1
      %p444 = scmp.lt.s32.totalorder %s437, 8
      %s445 = scalar_select %p444, %s437, 8
      %s446 = smul.addr %s443, 9
      %s447 = sadd.s32 %s445, %s446
      %s448 = smul.addr %s447, 8
      %s449 = scalar_lea.vmem %s2, %s448
      %p450 = pneg %p114
      %p451 = pneg %p111
      %s452 = sadd.s32 %s24, 1
      %s453 = smul.u32 %s452, 8
      %p454 = scmp.lt.s32.totalorder %s23, 1
      %s455 = scalar_select %p454, %s23, 1
      %p456 = scmp.lt.s32.totalorder %s453, 8
      %s457 = scalar_select %p456, %s453, 8
      %s458 = smul.addr %s455, 9
      %s459 = sadd.s32 %s457, %s458
      %s460 = smul.addr %s459, 8
      %s461 = scalar_lea.vmem %s3, %s460
      %p462 = pneg %p146
      %p463 = pneg %p143
      %s464 = smul.u32 8, %s24
      %p465 = scmp.lt.s32.totalorder %s23, 1
      %s466 = scalar_select %p465, %s23, 1
      %p467 = scmp.lt.s32.totalorder %s464, 7
      %s468 = scalar_select %p467, %s464, 7
      %s469 = smul.addr %s468, 2
      %s470 = smul.addr %s466, 16
      %s471 = sadd.s32 %s469, %s470
      %s472 = smul.addr %s471, 8
      %s473 = scalar_lea.vmem %s4, %s472
      %p474 = pneg %p174
      %p475 = pneg %p171
      %s476 = smul.u32 8, %s24
      %p477 = scmp.lt.s32.totalorder %s23, 1
      %s478 = scalar_select %p477, %s23, 1
      %p479 = scmp.lt.s32.totalorder %s476, 7
      %s480 = scalar_select %p479, %s476, 7
      %s481 = smul.addr %s478, 8
      %s482 = sadd.s32 %s480, %s481
      %s483 = smul.addr %s482, 8
      %s484 = scalar_lea.vmem %s5, %s483
      %p485 = pneg %p202
      %p486 = pneg %p199
      %p487 = pneg %p223
      %p488 = pneg %p220
      %p489 = pneg %p244
      %p490 = pneg %p241
      %p491 = pneg %p272
      %p492 = pneg %p269
      %s493 = smul.u32 8, %s24
      %p494 = scmp.lt.s32.totalorder %s23, 1
      %s495 = scalar_select %p494, %s23, 1
      %p496 = scmp.lt.s32.totalorder %s493, 7
      %s497 = scalar_select %p496, %s493, 7
      %s498 = smul.addr %s495, 8
      %s499 = sadd.s32 %s497, %s498
      %s500 = smul.addr %s499, 8
      %s501 = scalar_lea.vmem %s8, %s500
      %s502 = smul.u32 8, %s24
      %s503 = ssub.s32 9, %s502
      %p504 = scmp.lt.s32.totalorder %s503, 8
      %s505 = scalar_select %p504, %s503, 8
      %s506 = smul.u32 128, %s505
      %s507 = smul.u32 %s506, 2
      %p508 = scmp.lt.s32.totalorder %s23, 1
      %s509 = scalar_select %p508, %s23, 1
      %p510 = scmp.lt.s32.totalorder %s502, 8
      %s511 = scalar_select %p510, %s502, 8
      %s512 = smul.addr %s511, 2
      %s513 = smul.addr %s509, 18
      %s514 = sadd.s32 %s512, %s513
      %s515 = smul.addr %s514, 8
      %s516 = scalar_lea.vmem %s0, %s515
      %s517 = smul.u32 8, %s24
      %s518 = ssub.s32 9, %s517
      %p519 = scmp.lt.s32.totalorder %s518, 8
      %s520 = scalar_select %p519, %s518, 8
      %s521 = smul.u32 128, %s520
      %s522 = smul.u32 %s521, 2
      %s523 = sadd.s32 %s24, 1
      %s524 = smul.u32 %s523, 8
      %p525 = scmp.lt.s32.totalorder %s23, 1
      %s526 = scalar_select %p525, %s23, 1
      %p527 = scmp.lt.s32.totalorder %s524, 8
      %s528 = scalar_select %p527, %s524, 8
      %s529 = smul.addr %s528, 2
      %s530 = smul.addr %s526, 18
      %s531 = sadd.s32 %s529, %s530
      %s532 = smul.addr %s531, 8
      %s533 = scalar_lea.vmem %s1, %s532
      %s534 = sadd.s32 %s24, 1
      %s535 = smul.u32 %s534, 8
      %s536 = smul.u32 8, %s24
      %s537 = ssub.s32 9, %s536
      %p538 = scmp.lt.s32.totalorder %s537, 8
      %s539 = scalar_select %p538, %s537, 8
      %s540 = smul.u32 128, %s539
      %p541 = scmp.lt.s32.totalorder %s23, 1
      %s542 = scalar_select %p541, %s23, 1
      %p543 = scmp.lt.s32.totalorder %s536, 8
      %s544 = scalar_select %p543, %s536, 8
      %s545 = smul.addr %s542, 9
      %s546 = sadd.s32 %s544, %s545
      %s547 = smul.addr %s546, 8
      %s548 = scalar_lea.vmem %s2, %s547
      %s549 = smul.u32 8, %s24
      %s550 = ssub.s32 9, %s549
      %p551 = scmp.lt.s32.totalorder %s550, 8
      %s552 = scalar_select %p551, %s550, 8
      %s553 = smul.u32 128, %s552
      %s554 = sadd.s32 %s24, 1
      %s555 = smul.u32 %s554, 8
      %p556 = scmp.lt.s32.totalorder %s23, 1
      %s557 = scalar_select %p556, %s23, 1
      %p558 = scmp.lt.s32.totalorder %s555, 8
      %s559 = scalar_select %p558, %s555, 8
      %s560 = smul.addr %s557, 9
      %s561 = sadd.s32 %s559, %s560
      %s562 = smul.addr %s561, 8
      %s563 = scalar_lea.vmem %s3, %s562
      %s564 = sadd.s32 %s24, 1
      %s565 = smul.u32 %s564, 8
      %s566 = smul.u32 8, %s24
      %p567 = scmp.lt.s32.totalorder %s23, 1
      %s568 = scalar_select %p567, %s23, 1
      %p569 = scmp.lt.s32.totalorder %s566, 7
      %s570 = scalar_select %p569, %s566, 7
      %s571 = smul.addr %s570, 2
      %s572 = smul.addr %s568, 16
      %s573 = sadd.s32 %s571, %s572
      %s574 = smul.addr %s573, 8
      %s575 = scalar_lea.vmem %s4, %s574
      %s576 = smul.u32 8, %s24
      %s577 = smul.u32 8, %s24
      %p578 = scmp.lt.s32.totalorder %s23, 1
      %s579 = scalar_select %p578, %s23, 1
      %p580 = scmp.lt.s32.totalorder %s577, 7
      %s581 = scalar_select %p580, %s577, 7
      %s582 = smul.addr %s579, 8
      %s583 = sadd.s32 %s581, %s582
      %s584 = smul.addr %s583, 8
      %s585 = scalar_lea.vmem %s5, %s584
      %s586 = smul.u32 8, %s24
      %s587 = smul.u32 8, %s24
      %p588 = scmp.lt.s32.totalorder %s23, 1
      %s589 = scalar_select %p588, %s23, 1
      %p590 = scmp.lt.s32.totalorder %s587, 7
      %s591 = scalar_select %p590, %s587, 7
      %s592 = smul.addr %s589, 8
      %s593 = sadd.s32 %s591, %s592
      %s594 = smul.addr %s593, 8
      %s595 = scalar_lea.vmem %s8, %s594
      %s596 = smul.u32 8, %s24
      %v597 = vld [vmem:[%s7] sm:$0x1]
      %v599 = vlaneseq
      %v600 = vshrl.u32 %v599, 7
      %v601 = vsub.s32 0, %v600
      %v602 = vrot.slane %v597, %v601
      %v604 = vld [vmem:[%s516] sm:$0xff]
      %v605 = vld [vmem:[%s516 + $0x8] sm:$0xff]
      %v606 = vld [vmem:[%s548] sm:$0xff]
      %v607 = vld [vmem:[%s575] sm:$0xff]
      %v608 = vld [vmem:[%s575 + $0x8] sm:$0xff]
      %v609 = vld [vmem:[%s585] sm:$0xff]
      %s610 = scalar_lea.vmem %s516, 16
      %v611 = vld [vmem:[%s610] sm:$0xff]
      %v612 = vld [vmem:[%s610 + $0x8] sm:$0xff]
      %s613 = scalar_lea.vmem %s548, 8
      %v614 = vld [vmem:[%s613] sm:$0xff]
      %v615 = vld [vmem:[%s6] sm:$0xf]
      %vm616 = vcmask 31744
      %v618 = vsel %vm616, %v604, 0
      %vm620 = vcmask 1043456
      %v622 = vsel %vm620, %v615, 0
      %624 = vmatprep.subr.mxu0 0.0
      %625 = vmatpush1.msra.mxu0 %v622
      %626 = vmatprep.subr.mxu0 0.0
      %627 = vmatpush1.msra.mxu0 0.0
      %628 = vmatprep.subr.mxu0 0.0
      %629 = vmatpush1.msra.mxu0 0.0
      %630 = vmatprep.subr.mxu0 0.0
      %631 = vmatpush1.msra.mxu0 0.0
      %632 = vmatprep.subr.mxu0 0.0
      %633 = vmatpush1.msra.mxu0 0.0
      %634 = vmatprep.subr.mxu0 0.0
      %635 = vmatpush1.msra.mxu0 0.0
      %636 = vmatprep.subr.mxu0 0.0
      %637 = vmatpush1.msra.mxu0 0.0
      %638 = vmatprep.subr.mxu0 0.0
      %639 = vmatpush1.msra.mxu0 0.0
      %640 = vmatprep.subr.mxu0 0.0
      %641 = vmatpush1.msra.mxu0 0.0
      %642 = vmatprep.subr.mxu0 0.0
      %643 = vmatpush1.msra.mxu0 0.0
      %644 = vmatprep.subr.mxu0 0.0
      %645 = vmatpush1.msra.mxu0 0.0
      %646 = vmatprep.subr.mxu0 0.0
      %647 = vmatpush1.msra.mxu0 0.0
      %648 = vmatprep.subr.mxu0 0.0
      %649 = vmatpush1.msra.mxu0 0.0
      %650 = vmatprep.subr.mxu0 0.0
      %651 = vmatpush1.msra.mxu0 0.0
      %652 = vmatprep.subr.mxu0 0.0
      %653 = vmatpush1.msra.mxu0 0.0
      %654 = vmatprep.subr.mxu0 0.0
      %655 = vmatpush1.msra.mxu0 0.0
      %656 = vmatprep.subr.mxu0 0.0
      %657 = vmatpush1.msra.mxu0 0.0
      %658 = vmatprep.subr.mxu0 0.0
      %659 = vmatpush1.msra.mxu0 0.0
      %660 = vmatprep.subr.mxu0 0.0
      %661 = vmatpush1.msra.mxu0 0.0
      %662 = vmatprep.subr.mxu0 0.0
      %663 = vmatpush1.msra.mxu0 0.0
      %664 = vmatprep.subr.mxu0 0.0
      %665 = vmatpush1.msra.mxu0 0.0
      %666 = vmatprep.subr.mxu0 0.0
      %667 = vmatpush1.msra.mxu0 0.0
      %668 = vmatprep.subr.mxu0 0.0
      %669 = vmatpush1.msra.mxu0 0.0
      %670 = vmatprep.subr.mxu0 0.0
      %671 = vmatpush1.msra.mxu0 0.0
      %672 = vmatprep.subr.mxu0 0.0
      %673 = vmatpush1.msra.mxu0 0.0
      %674 = vmatprep.subr.mxu0 0.0
      %675 = vmatpush1.msra.mxu0 0.0
      %676 = vmatprep.subr.mxu0 0.0
      %677 = vmatpush1.msra.mxu0 0.0
      %678 = vmatprep.subr.mxu0 0.0
      %679 = vmatpush1.msra.mxu0 0.0
      %680 = vmatprep.subr.mxu0 0.0
      %681 = vmatpush1.msra.mxu0 0.0
      %682 = vmatprep.subr.mxu0 0.0
      %683 = vmatpush1.msra.mxu0 0.0
      %684 = vmatprep.subr.mxu0 0.0
      %685 = vmatpush1.msra.mxu0 0.0
      %686 = vmatprep.subr.mxu0 0.0
      %687 = vmatpush1.msra.mxu0 0.0
      %688 = vmatprep.mubr.f32.mxu0 0.0
      %689 = vmatmul.mubr.f32.gmra.mrb[0].mxu0 %v618
      %v690 = vpop.f32.mrb[0].mxu0
      %v691 = vadd.f32 0.0, %v690
      %v692 = vpop.f32.mrb[0].mxu0
      %693 = vdwg.mxu0
      %v694 = vadd.f32 %v602, %v691
      %s695 = scalar_lea.vmem %s6, 4
      %v696 = vld [vmem:[%s695] sm:$0xf]
      %v698 = vsel %vm616, %v606, 0
      %v701 = vsel %vm620, %v696, 0
      %703 = vmatprep.subr.mxu0 0.0
      %704 = vmatpush1.msra.mxu0 %v701
      %705 = vmatprep.subr.mxu0 0.0
      %706 = vmatpush1.msra.mxu0 0.0
      %707 = vmatprep.subr.mxu0 0.0
      %708 = vmatpush1.msra.mxu0 0.0
      %709 = vmatprep.subr.mxu0 0.0
      %710 = vmatpush1.msra.mxu0 0.0
      %711 = vmatprep.subr.mxu0 0.0
      %712 = vmatpush1.msra.mxu0 0.0
      %713 = vmatprep.subr.mxu0 0.0
      %714 = vmatpush1.msra.mxu0 0.0
      %715 = vmatprep.subr.mxu0 0.0
      %716 = vmatpush1.msra.mxu0 0.0
      %717 = vmatprep.subr.mxu0 0.0
      %718 = vmatpush1.msra.mxu0 0.0
      %719 = vmatprep.subr.mxu0 0.0
      %720 = vmatpush1.msra.mxu0 0.0
      %721 = vmatprep.subr.mxu0 0.0
      %722 = vmatpush1.msra.mxu0 0.0
      %723 = vmatprep.subr.mxu0 0.0
      %724 = vmatpush1.msra.mxu0 0.0
      %725 = vmatprep.subr.mxu0 0.0
      %726 = vmatpush1.msra.mxu0 0.0
      %727 = vmatprep.subr.mxu0 0.0
      %728 = vmatpush1.msra.mxu0 0.0
      %729 = vmatprep.subr.mxu0 0.0
      %730 = vmatpush1.msra.mxu0 0.0
      %731 = vmatprep.subr.mxu0 0.0
      %732 = vmatpush1.msra.mxu0 0.0
      %733 = vmatprep.subr.mxu0 0.0
      %734 = vmatpush1.msra.mxu0 0.0
      %735 = vmatprep.subr.mxu0 0.0
      %736 = vmatpush1.msra.mxu0 0.0
      %737 = vmatprep.subr.mxu0 0.0
      %738 = vmatpush1.msra.mxu0 0.0
      %739 = vmatprep.subr.mxu0 0.0
      %740 = vmatpush1.msra.mxu0 0.0
      %741 = vmatprep.subr.mxu0 0.0
      %742 = vmatpush1.msra.mxu0 0.0
      %743 = vmatprep.subr.mxu0 0.0
      %744 = vmatpush1.msra.mxu0 0.0
      %745 = vmatprep.subr.mxu0 0.0
      %746 = vmatpush1.msra.mxu0 0.0
      %747 = vmatprep.subr.mxu0 0.0
      %748 = vmatpush1.msra.mxu0 0.0
      %749 = vmatprep.subr.mxu0 0.0
      %750 = vmatpush1.msra.mxu0 0.0
      %751 = vmatprep.subr.mxu0 0.0
      %752 = vmatpush1.msra.mxu0 0.0
      %753 = vmatprep.subr.mxu0 0.0
      %754 = vmatpush1.msra.mxu0 0.0
      %755 = vmatprep.subr.mxu0 0.0
      %756 = vmatpush1.msra.mxu0 0.0
      %757 = vmatprep.subr.mxu0 0.0
      %758 = vmatpush1.msra.mxu0 0.0
      %759 = vmatprep.subr.mxu0 0.0
      %760 = vmatpush1.msra.mxu0 0.0
      %761 = vmatprep.subr.mxu0 0.0
      %762 = vmatpush1.msra.mxu0 0.0
      %763 = vmatprep.subr.mxu0 0.0
      %764 = vmatpush1.msra.mxu0 0.0
      %765 = vmatprep.subr.mxu0 0.0
      %766 = vmatpush1.msra.mxu0 0.0
      %767 = vmatprep.mubr.f32.mxu0 0.0
      %768 = vmatmul.mubr.f32.gmra.mrb[0].mxu0 %v698
      %v769 = vpop.f32.mrb[0].mxu0
      %v770 = vadd.f32 0.0, %v769
      %v771 = vpop.f32.mrb[0].mxu0
      %772 = vdwg.mxu0
      %v773 = vadd.f32 %v694, %v770
      %s774 = scalar_lea.vmem %s6, 8
      %v775 = vld [vmem:[%s774] sm:$0xf]
      %vm777 = vcmask 1046528
      %v778 = vrot.slane %v604, 1
      %v779 = vrot.slane %v605, 1
      %v780 = vsel %vm777, %v778, %v779
      %v781 = vsel %vm616, %v780, 0
      %v784 = vsel %vm620, %v775, 0
      %786 = vmatprep.subr.mxu0 0.0
      %787 = vmatpush1.msra.mxu0 %v784
      %788 = vmatprep.subr.mxu0 0.0
      %789 = vmatpush1.msra.mxu0 0.0
      %790 = vmatprep.subr.mxu0 0.0
      %791 = vmatpush1.msra.mxu0 0.0
      %792 = vmatprep.subr.mxu0 0.0
      %793 = vmatpush1.msra.mxu0 0.0
      %794 = vmatprep.subr.mxu0 0.0
      %795 = vmatpush1.msra.mxu0 0.0
      %796 = vmatprep.subr.mxu0 0.0
      %797 = vmatpush1.msra.mxu0 0.0
      %798 = vmatprep.subr.mxu0 0.0
      %799 = vmatpush1.msra.mxu0 0.0
      %800 = vmatprep.subr.mxu0 0.0
      %801 = vmatpush1.msra.mxu0 0.0
      %802 = vmatprep.subr.mxu0 0.0
      %803 = vmatpush1.msra.mxu0 0.0
      %804 = vmatprep.subr.mxu0 0.0
      %805 = vmatpush1.msra.mxu0 0.0
      %806 = vmatprep.subr.mxu0 0.0
      %807 = vmatpush1.msra.mxu0 0.0
      %808 = vmatprep.subr.mxu0 0.0
      %809 = vmatpush1.msra.mxu0 0.0
      %810 = vmatprep.subr.mxu0 0.0
      %811 = vmatpush1.msra.mxu0 0.0
      %812 = vmatprep.subr.mxu0 0.0
      %813 = vmatpush1.msra.mxu0 0.0
      %814 = vmatprep.subr.mxu0 0.0
      %815 = vmatpush1.msra.mxu0 0.0
      %816 = vmatprep.subr.mxu0 0.0
      %817 = vmatpush1.msra.mxu0 0.0
      %818 = vmatprep.subr.mxu0 0.0
      %819 = vmatpush1.msra.mxu0 0.0
      %820 = vmatprep.subr.mxu0 0.0
      %821 = vmatpush1.msra.mxu0 0.0
      %822 = vmatprep.subr.mxu0 0.0
      %823 = vmatpush1.msra.mxu0 0.0
      %824 = vmatprep.subr.mxu0 0.0
      %825 = vmatpush1.msra.mxu0 0.0
      %826 = vmatprep.subr.mxu0 0.0
      %827 = vmatpush1.msra.mxu0 0.0
      %828 = vmatprep.subr.mxu0 0.0
      %829 = vmatpush1.msra.mxu0 0.0
      %830 = vmatprep.subr.mxu0 0.0
      %831 = vmatpush1.msra.mxu0 0.0
      %832 = vmatprep.subr.mxu0 0.0
      %833 = vmatpush1.msra.mxu0 0.0
      %834 = vmatprep.subr.mxu0 0.0
      %835 = vmatpush1.msra.mxu0 0.0
      %836 = vmatprep.subr.mxu0 0.0
      %837 = vmatpush1.msra.mxu0 0.0
      %838 = vmatprep.subr.mxu0 0.0
      %839 = vmatpush1.msra.mxu0 0.0
      %840 = vmatprep.subr.mxu0 0.0
      %841 = vmatpush1.msra.mxu0 0.0
      %842 = vmatprep.subr.mxu0 0.0
      %843 = vmatpush1.msra.mxu0 0.0
      %844 = vmatprep.subr.mxu0 0.0
      %845 = vmatpush1.msra.mxu0 0.0
      %846 = vmatprep.subr.mxu0 0.0
      %847 = vmatpush1.msra.mxu0 0.0
      %848 = vmatprep.subr.mxu0 0.0
      %849 = vmatpush1.msra.mxu0 0.0
      %850 = vmatprep.mubr.f32.mxu0 0.0
      %851 = vmatmul.mubr.f32.gmra.mrb[0].mxu0 %v781
      %v852 = vpop.f32.mrb[0].mxu0
      %v853 = vadd.f32 0.0, %v852
      %v854 = vpop.f32.mrb[0].mxu0
      %855 = vdwg.mxu0
      %v856 = vadd.f32 %v773, %v853
      %s857 = scalar_lea.vmem %s6, 12
      %v858 = vld [vmem:[%s857] sm:$0xf]
      %v860 = vsel %vm616, %v607, 0
      %v863 = vsel %vm620, %v858, 0
      %865 = vmatprep.subr.mxu0 0.0
      %866 = vmatpush1.msra.mxu0 %v863
      %867 = vmatprep.subr.mxu0 0.0
      %868 = vmatpush1.msra.mxu0 0.0
      %869 = vmatprep.subr.mxu0 0.0
      %870 = vmatpush1.msra.mxu0 0.0
      %871 = vmatprep.subr.mxu0 0.0
      %872 = vmatpush1.msra.mxu0 0.0
      %873 = vmatprep.subr.mxu0 0.0
      %874 = vmatpush1.msra.mxu0 0.0
      %875 = vmatprep.subr.mxu0 0.0
      %876 = vmatpush1.msra.mxu0 0.0
      %877 = vmatprep.subr.mxu0 0.0
      %878 = vmatpush1.msra.mxu0 0.0
      %879 = vmatprep.subr.mxu0 0.0
      %880 = vmatpush1.msra.mxu0 0.0
      %881 = vmatprep.subr.mxu0 0.0
      %882 = vmatpush1.msra.mxu0 0.0
      %883 = vmatprep.subr.mxu0 0.0
      %884 = vmatpush1.msra.mxu0 0.0
      %885 = vmatprep.subr.mxu0 0.0
      %886 = vmatpush1.msra.mxu0 0.0
      %887 = vmatprep.subr.mxu0 0.0
      %888 = vmatpush1.msra.mxu0 0.0
      %889 = vmatprep.subr.mxu0 0.0
      %890 = vmatpush1.msra.mxu0 0.0
      %891 = vmatprep.subr.mxu0 0.0
      %892 = vmatpush1.msra.mxu0 0.0
      %893 = vmatprep.subr.mxu0 0.0
      %894 = vmatpush1.msra.mxu0 0.0
      %895 = vmatprep.subr.mxu0 0.0
      %896 = vmatpush1.msra.mxu0 0.0
      %897 = vmatprep.subr.mxu0 0.0
      %898 = vmatpush1.msra.mxu0 0.0
      %899 = vmatprep.subr.mxu0 0.0
      %900 = vmatpush1.msra.mxu0 0.0
      %901 = vmatprep.subr.mxu0 0.0
      %902 = vmatpush1.msra.mxu0 0.0
      %903 = vmatprep.subr.mxu0 0.0
      %904 = vmatpush1.msra.mxu0 0.0
      %905 = vmatprep.subr.mxu0 0.0
      %906 = vmatpush1.msra.mxu0 0.0
      %907 = vmatprep.subr.mxu0 0.0
      %908 = vmatpush1.msra.mxu0 0.0
      %909 = vmatprep.subr.mxu0 0.0
      %910 = vmatpush1.msra.mxu0 0.0
      %911 = vmatprep.subr.mxu0 0.0
      %912 = vmatpush1.msra.mxu0 0.0
      %913 = vmatprep.subr.mxu0 0.0
      %914 = vmatpush1.msra.mxu0 0.0
      %915 = vmatprep.subr.mxu0 0.0
      %916 = vmatpush1.msra.mxu0 0.0
      %917 = vmatprep.subr.mxu0 0.0
      %918 = vmatpush1.msra.mxu0 0.0
      %919 = vmatprep.subr.mxu0 0.0
      %920 = vmatpush1.msra.mxu0 0.0
      %921 = vmatprep.subr.mxu0 0.0
      %922 = vmatpush1.msra.mxu0 0.0
      %923 = vmatprep.subr.mxu0 0.0
      %924 = vmatpush1.msra.mxu0 0.0
      %925 = vmatprep.subr.mxu0 0.0
      %926 = vmatpush1.msra.mxu0 0.0
      %927 = vmatprep.subr.mxu0 0.0
      %928 = vmatpush1.msra.mxu0 0.0
      %929 = vmatprep.mubr.f32.mxu0 0.0
      %930 = vmatmul.mubr.f32.gmra.mrb[0].mxu0 %v860
      %v931 = vpop.f32.mrb[0].mxu0
      %v932 = vadd.f32 0.0, %v931
      %v933 = vpop.f32.mrb[0].mxu0
      %934 = vdwg.mxu0
      %v935 = vadd.f32 %v856, %v932
      %s936 = scalar_lea.vmem %s6, 16
      %v937 = vld [vmem:[%s936] sm:$0xf]
      %v939 = vsel %vm616, %v609, 0
      %v942 = vsel %vm620, %v937, 0
      %944 = vmatprep.subr.mxu0 0.0
      %945 = vmatpush1.msra.mxu0 %v942
      %946 = vmatprep.subr.mxu0 0.0
      %947 = vmatpush1.msra.mxu0 0.0
      %948 = vmatprep.subr.mxu0 0.0
      %949 = vmatpush1.msra.mxu0 0.0
      %950 = vmatprep.subr.mxu0 0.0
      %951 = vmatpush1.msra.mxu0 0.0
      %952 = vmatprep.subr.mxu0 0.0
      %953 = vmatpush1.msra.mxu0 0.0
      %954 = vmatprep.subr.mxu0 0.0
      %955 = vmatpush1.msra.mxu0 0.0
      %956 = vmatprep.subr.mxu0 0.0
      %957 = vmatpush1.msra.mxu0 0.0
      %958 = vmatprep.subr.mxu0 0.0
      %959 = vmatpush1.msra.mxu0 0.0
      %960 = vmatprep.subr.mxu0 0.0
      %961 = vmatpush1.msra.mxu0 0.0
      %962 = vmatprep.subr.mxu0 0.0
      %963 = vmatpush1.msra.mxu0 0.0
      %964 = vmatprep.subr.mxu0 0.0
      %965 = vmatpush1.msra.mxu0 0.0
      %966 = vmatprep.subr.mxu0 0.0
      %967 = vmatpush1.msra.mxu0 0.0
      %968 = vmatprep.subr.mxu0 0.0
      %969 = vmatpush1.msra.mxu0 0.0
      %970 = vmatprep.subr.mxu0 0.0
      %971 = vmatpush1.msra.mxu0 0.0
      %972 = vmatprep.subr.mxu0 0.0
      %973 = vmatpush1.msra.mxu0 0.0
      %974 = vmatprep.subr.mxu0 0.0
      %975 = vmatpush1.msra.mxu0 0.0
      %976 = vmatprep.subr.mxu0 0.0
      %977 = vmatpush1.msra.mxu0 0.0
      %978 = vmatprep.subr.mxu0 0.0
      %979 = vmatpush1.msra.mxu0 0.0
      %980 = vmatprep.subr.mxu0 0.0
      %981 = vmatpush1.msra.mxu0 0.0
      %982 = vmatprep.subr.mxu0 0.0
      %983 = vmatpush1.msra.mxu0 0.0
      %984 = vmatprep.subr.mxu0 0.0
      %985 = vmatpush1.msra.mxu0 0.0
      %986 = vmatprep.subr.mxu0 0.0
      %987 = vmatpush1.msra.mxu0 0.0
      %988 = vmatprep.subr.mxu0 0.0
      %989 = vmatpush1.msra.mxu0 0.0
      %990 = vmatprep.subr.mxu0 0.0
      %991 = vmatpush1.msra.mxu0 0.0
      %992 = vmatprep.subr.mxu0 0.0
      %993 = vmatpush1.msra.mxu0 0.0
      %994 = vmatprep.subr.mxu0 0.0
      %995 = vmatpush1.msra.mxu0 0.0
      %996 = vmatprep.subr.mxu0 0.0
      %997 = vmatpush1.msra.mxu0 0.0
      %998 = vmatprep.subr.mxu0 0.0
      %999 = vmatpush1.msra.mxu0 0.0
      %1000 = vmatprep.subr.mxu0 0.0
      %1001 = vmatpush1.msra.mxu0 0.0
      %1002 = vmatprep.subr.mxu0 0.0
      %1003 = vmatpush1.msra.mxu0 0.0
      %1004 = vmatprep.subr.mxu0 0.0
      %1005 = vmatpush1.msra.mxu0 0.0
      %1006 = vmatprep.subr.mxu0 0.0
      %1007 = vmatpush1.msra.mxu0 0.0
      %1008 = vmatprep.mubr.f32.mxu0 0.0
      %1009 = vmatmul.mubr.f32.gmra.mrb[0].mxu0 %v939
      %v1010 = vpop.f32.mrb[0].mxu0
      %v1011 = vadd.f32 0.0, %v1010
      %v1012 = vpop.f32.mrb[0].mxu0
      %1013 = vdwg.mxu0
      %v1014 = vadd.f32 %v935, %v1011
      %s1015 = scalar_lea.vmem %s6, 20
      %v1016 = vld [vmem:[%s1015] sm:$0xf]
      %v1018 = vrot.slane %v607, 1
      %v1019 = vrot.slane %v608, 1
      %v1020 = vsel %vm777, %v1018, %v1019
      %v1021 = vsel %vm616, %v1020, 0
      %v1024 = vsel %vm620, %v1016, 0
      %1026 = vmatprep.subr.mxu0 0.0
      %1027 = vmatpush1.msra.mxu0 %v1024
      %1028 = vmatprep.subr.mxu0 0.0
      %1029 = vmatpush1.msra.mxu0 0.0
      %1030 = vmatprep.subr.mxu0 0.0
      %1031 = vmatpush1.msra.mxu0 0.0
      %1032 = vmatprep.subr.mxu0 0.0
      %1033 = vmatpush1.msra.mxu0 0.0
      %1034 = vmatprep.subr.mxu0 0.0
      %1035 = vmatpush1.msra.mxu0 0.0
      %1036 = vmatprep.subr.mxu0 0.0
      %1037 = vmatpush1.msra.mxu0 0.0
      %1038 = vmatprep.subr.mxu0 0.0
      %1039 = vmatpush1.msra.mxu0 0.0
      %1040 = vmatprep.subr.mxu0 0.0
      %1041 = vmatpush1.msra.mxu0 0.0
      %1042 = vmatprep.subr.mxu0 0.0
      %1043 = vmatpush1.msra.mxu0 0.0
      %1044 = vmatprep.subr.mxu0 0.0
      %1045 = vmatpush1.msra.mxu0 0.0
      %1046 = vmatprep.subr.mxu0 0.0
      %1047 = vmatpush1.msra.mxu0 0.0
      %1048 = vmatprep.subr.mxu0 0.0
      %1049 = vmatpush1.msra.mxu0 0.0
      %1050 = vmatprep.subr.mxu0 0.0
      %1051 = vmatpush1.msra.mxu0 0.0
      %1052 = vmatprep.subr.mxu0 0.0
      %1053 = vmatpush1.msra.mxu0 0.0
      %1054 = vmatprep.subr.mxu0 0.0
      %1055 = vmatpush1.msra.mxu0 0.0
      %1056 = vmatprep.subr.mxu0 0.0
      %1057 = vmatpush1.msra.mxu0 0.0
      %1058 = vmatprep.subr.mxu0 0.0
      %1059 = vmatpush1.msra.mxu0 0.0
      %1060 = vmatprep.subr.mxu0 0.0
      %1061 = vmatpush1.msra.mxu0 0.0
      %1062 = vmatprep.subr.mxu0 0.0
      %1063 = vmatpush1.msra.mxu0 0.0
      %1064 = vmatprep.subr.mxu0 0.0
      %1065 = vmatpush1.msra.mxu0 0.0
      %1066 = vmatprep.subr.mxu0 0.0
      %1067 = vmatpush1.msra.mxu0 0.0
      %1068 = vmatprep.subr.mxu0 0.0
      %1069 = vmatpush1.msra.mxu0 0.0
      %1070 = vmatprep.subr.mxu0 0.0
      %1071 = vmatpush1.msra.mxu0 0.0
      %1072 = vmatprep.subr.mxu0 0.0
      %1073 = vmatpush1.msra.mxu0 0.0
      %1074 = vmatprep.subr.mxu0 0.0
      %1075 = vmatpush1.msra.mxu0 0.0
      %1076 = vmatprep.subr.mxu0 0.0
      %1077 = vmatpush1.msra.mxu0 0.0
      %1078 = vmatprep.subr.mxu0 0.0
      %1079 = vmatpush1.msra.mxu0 0.0
      %1080 = vmatprep.subr.mxu0 0.0
      %1081 = vmatpush1.msra.mxu0 0.0
      %1082 = vmatprep.subr.mxu0 0.0
      %1083 = vmatpush1.msra.mxu0 0.0
      %1084 = vmatprep.subr.mxu0 0.0
      %1085 = vmatpush1.msra.mxu0 0.0
      %1086 = vmatprep.subr.mxu0 0.0
      %1087 = vmatpush1.msra.mxu0 0.0
      %1088 = vmatprep.subr.mxu0 0.0
      %1089 = vmatpush1.msra.mxu0 0.0
      %1090 = vmatprep.mubr.f32.mxu0 0.0
      %1091 = vmatmul.mubr.f32.gmra.mrb[0].mxu0 %v1021
      %v1092 = vpop.f32.mrb[0].mxu0
      %v1093 = vadd.f32 0.0, %v1092
      %v1094 = vpop.f32.mrb[0].mxu0
      %1095 = vdwg.mxu0
      %v1096 = vadd.f32 %v1014, %v1093
      %s1097 = scalar_lea.vmem %s6, 24
      %v1098 = vld [vmem:[%s1097] sm:$0xf]
      %v1100 = vsel %vm616, %v611, 0
      %v1103 = vsel %vm620, %v1098, 0
      %1105 = vmatprep.subr.mxu0 0.0
      %1106 = vmatpush1.msra.mxu0 %v1103
      %1107 = vmatprep.subr.mxu0 0.0
      %1108 = vmatpush1.msra.mxu0 0.0
      %1109 = vmatprep.subr.mxu0 0.0
      %1110 = vmatpush1.msra.mxu0 0.0
      %1111 = vmatprep.subr.mxu0 0.0
      %1112 = vmatpush1.msra.mxu0 0.0
      %1113 = vmatprep.subr.mxu0 0.0
      %1114 = vmatpush1.msra.mxu0 0.0
      %1115 = vmatprep.subr.mxu0 0.0
      %1116 = vmatpush1.msra.mxu0 0.0
      %1117 = vmatprep.subr.mxu0 0.0
      %1118 = vmatpush1.msra.mxu0 0.0
      %1119 = vmatprep.subr.mxu0 0.0
      %1120 = vmatpush1.msra.mxu0 0.0
      %1121 = vmatprep.subr.mxu0 0.0
      %1122 = vmatpush1.msra.mxu0 0.0
      %1123 = vmatprep.subr.mxu0 0.0
      %1124 = vmatpush1.msra.mxu0 0.0
      %1125 = vmatprep.subr.mxu0 0.0
      %1126 = vmatpush1.msra.mxu0 0.0
      %1127 = vmatprep.subr.mxu0 0.0
      %1128 = vmatpush1.msra.mxu0 0.0
      %1129 = vmatprep.subr.mxu0 0.0
      %1130 = vmatpush1.msra.mxu0 0.0
      %1131 = vmatprep.subr.mxu0 0.0
      %1132 = vmatpush1.msra.mxu0 0.0
      %1133 = vmatprep.subr.mxu0 0.0
      %1134 = vmatpush1.msra.mxu0 0.0
      %1135 = vmatprep.subr.mxu0 0.0
      %1136 = vmatpush1.msra.mxu0 0.0
      %1137 = vmatprep.subr.mxu0 0.0
      %1138 = vmatpush1.msra.mxu0 0.0
      %1139 = vmatprep.subr.mxu0 0.0
      %1140 = vmatpush1.msra.mxu0 0.0
      %1141 = vmatprep.subr.mxu0 0.0
      %1142 = vmatpush1.msra.mxu0 0.0
      %1143 = vmatprep.subr.mxu0 0.0
      %1144 = vmatpush1.msra.mxu0 0.0
      %1145 = vmatprep.subr.mxu0 0.0
      %1146 = vmatpush1.msra.mxu0 0.0
      %1147 = vmatprep.subr.mxu0 0.0
      %1148 = vmatpush1.msra.mxu0 0.0
      %1149 = vmatprep.subr.mxu0 0.0
      %1150 = vmatpush1.msra.mxu0 0.0
      %1151 = vmatprep.subr.mxu0 0.0
      %1152 = vmatpush1.msra.mxu0 0.0
      %1153 = vmatprep.subr.mxu0 0.0
      %1154 = vmatpush1.msra.mxu0 0.0
      %1155 = vmatprep.subr.mxu0 0.0
      %1156 = vmatpush1.msra.mxu0 0.0
      %1157 = vmatprep.subr.mxu0 0.0
      %1158 = vmatpush1.msra.mxu0 0.0
      %1159 = vmatprep.subr.mxu0 0.0
      %1160 = vmatpush1.msra.mxu0 0.0
      %1161 = vmatprep.subr.mxu0 0.0
      %1162 = vmatpush1.msra.mxu0 0.0
      %1163 = vmatprep.subr.mxu0 0.0
      %1164 = vmatpush1.msra.mxu0 0.0
      %1165 = vmatprep.subr.mxu0 0.0
      %1166 = vmatpush1.msra.mxu0 0.0
      %1167 = vmatprep.subr.mxu0 0.0
      %1168 = vmatpush1.msra.mxu0 0.0
      %1169 = vmatprep.mubr.f32.mxu0 0.0
      %1170 = vmatmul.mubr.f32.gmra.mrb[0].mxu0 %v1100
      %v1171 = vpop.f32.mrb[0].mxu0
      %v1172 = vadd.f32 0.0, %v1171
      %v1173 = vpop.f32.mrb[0].mxu0
      %1174 = vdwg.mxu0
      %v1175 = vadd.f32 %v1096, %v1172
      %s1176 = scalar_lea.vmem %s6, 28
      %v1177 = vld [vmem:[%s1176] sm:$0xf]
      %v1179 = vsel %vm616, %v614, 0
      %v1182 = vsel %vm620, %v1177, 0
      %1184 = vmatprep.subr.mxu0 0.0
      %1185 = vmatpush1.msra.mxu0 %v1182
      %1186 = vmatprep.subr.mxu0 0.0
      %1187 = vmatpush1.msra.mxu0 0.0
      %1188 = vmatprep.subr.mxu0 0.0
      %1189 = vmatpush1.msra.mxu0 0.0
      %1190 = vmatprep.subr.mxu0 0.0
      %1191 = vmatpush1.msra.mxu0 0.0
      %1192 = vmatprep.subr.mxu0 0.0
      %1193 = vmatpush1.msra.mxu0 0.0
      %1194 = vmatprep.subr.mxu0 0.0
      %1195 = vmatpush1.msra.mxu0 0.0
      %1196 = vmatprep.subr.mxu0 0.0
      %1197 = vmatpush1.msra.mxu0 0.0
      %1198 = vmatprep.subr.mxu0 0.0
      %1199 = vmatpush1.msra.mxu0 0.0
      %1200 = vmatprep.subr.mxu0 0.0
      %1201 = vmatpush1.msra.mxu0 0.0
      %1202 = vmatprep.subr.mxu0 0.0
      %1203 = vmatpush1.msra.mxu0 0.0
      %1204 = vmatprep.subr.mxu0 0.0
      %1205 = vmatpush1.msra.mxu0 0.0
      %1206 = vmatprep.subr.mxu0 0.0
      %1207 = vmatpush1.msra.mxu0 0.0
      %1208 = vmatprep.subr.mxu0 0.0
      %1209 = vmatpush1.msra.mxu0 0.0
      %1210 = vmatprep.subr.mxu0 0.0
      %1211 = vmatpush1.msra.mxu0 0.0
      %1212 = vmatprep.subr.mxu0 0.0
      %1213 = vmatpush1.msra.mxu0 0.0
      %1214 = vmatprep.subr.mxu0 0.0
      %1215 = vmatpush1.msra.mxu0 0.0
      %1216 = vmatprep.subr.mxu0 0.0
      %1217 = vmatpush1.msra.mxu0 0.0
      %1218 = vmatprep.subr.mxu0 0.0
      %1219 = vmatpush1.msra.mxu0 0.0
      %1220 = vmatprep.subr.mxu0 0.0
      %1221 = vmatpush1.msra.mxu0 0.0
      %1222 = vmatprep.subr.mxu0 0.0
      %1223 = vmatpush1.msra.mxu0 0.0
      %1224 = vmatprep.subr.mxu0 0.0
      %1225 = vmatpush1.msra.mxu0 0.0
      %1226 = vmatprep.subr.mxu0 0.0
      %1227 = vmatpush1.msra.mxu0 0.0
      %1228 = vmatprep.subr.mxu0 0.0
      %1229 = vmatpush1.msra.mxu0 0.0
      %1230 = vmatprep.subr.mxu0 0.0
      %1231 = vmatpush1.msra.mxu0 0.0
      %1232 = vmatprep.subr.mxu0 0.0
      %1233 = vmatpush1.msra.mxu0 0.0
      %1234 = vmatprep.subr.mxu0 0.0
      %1235 = vmatpush1.msra.mxu0 0.0
      %1236 = vmatprep.subr.mxu0 0.0
      %1237 = vmatpush1.msra.mxu0 0.0
      %1238 = vmatprep.subr.mxu0 0.0
      %1239 = vmatpush1.msra.mxu0 0.0
      %1240 = vmatprep.subr.mxu0 0.0
      %1241 = vmatpush1.msra.mxu0 0.0
      %1242 = vmatprep.subr.mxu0 0.0
      %1243 = vmatpush1.msra.mxu0 0.0
      %1244 = vmatprep.subr.mxu0 0.0
      %1245 = vmatpush1.msra.mxu0 0.0
      %1246 = vmatprep.subr.mxu0 0.0
      %1247 = vmatpush1.msra.mxu0 0.0
      %1248 = vmatprep.mubr.f32.mxu0 0.0
      %1249 = vmatmul.mubr.f32.gmra.mrb[0].mxu0 %v1179
      %v1250 = vpop.f32.mrb[0].mxu0
      %v1251 = vadd.f32 0.0, %v1250
      %v1252 = vpop.f32.mrb[0].mxu0
      %1253 = vdwg.mxu0
      %v1254 = vadd.f32 %v1175, %v1251
      %s1255 = scalar_lea.vmem %s6, 32
      %v1256 = vld [vmem:[%s1255] sm:$0xf]
      %v1258 = vrot.slane %v611, 1
      %v1259 = vrot.slane %v612, 1
      %v1260 = vsel %vm777, %v1258, %v1259
      %v1261 = vsel %vm616, %v1260, 0
      %v1264 = vsel %vm620, %v1256, 0
      %1266 = vmatprep.subr.mxu0 0.0
      %1267 = vmatpush1.msra.mxu0 %v1264
      %1268 = vmatprep.subr.mxu0 0.0
      %1269 = vmatpush1.msra.mxu0 0.0
      %1270 = vmatprep.subr.mxu0 0.0
      %1271 = vmatpush1.msra.mxu0 0.0
      %1272 = vmatprep.subr.mxu0 0.0
      %1273 = vmatpush1.msra.mxu0 0.0
      %1274 = vmatprep.subr.mxu0 0.0
      %1275 = vmatpush1.msra.mxu0 0.0
      %1276 = vmatprep.subr.mxu0 0.0
      %1277 = vmatpush1.msra.mxu0 0.0
      %1278 = vmatprep.subr.mxu0 0.0
      %1279 = vmatpush1.msra.mxu0 0.0
      %1280 = vmatprep.subr.mxu0 0.0
      %1281 = vmatpush1.msra.mxu0 0.0
      %1282 = vmatprep.subr.mxu0 0.0
      %1283 = vmatpush1.msra.mxu0 0.0
      %1284 = vmatprep.subr.mxu0 0.0
      %1285 = vmatpush1.msra.mxu0 0.0
      %1286 = vmatprep.subr.mxu0 0.0
      %1287 = vmatpush1.msra.mxu0 0.0
      %1288 = vmatprep.subr.mxu0 0.0
      %1289 = vmatpush1.msra.mxu0 0.0
      %1290 = vmatprep.subr.mxu0 0.0
      %1291 = vmatpush1.msra.mxu0 0.0
      %1292 = vmatprep.subr.mxu0 0.0
      %1293 = vmatpush1.msra.mxu0 0.0
      %1294 = vmatprep.subr.mxu0 0.0
      %1295 = vmatpush1.msra.mxu0 0.0
      %1296 = vmatprep.subr.mxu0 0.0
      %1297 = vmatpush1.msra.mxu0 0.0
      %1298 = vmatprep.subr.mxu0 0.0
      %1299 = vmatpush1.msra.mxu0 0.0
      %1300 = vmatprep.subr.mxu0 0.0
      %1301 = vmatpush1.msra.mxu0 0.0
      %1302 = vmatprep.subr.mxu0 0.0
      %1303 = vmatpush1.msra.mxu0 0.0
      %1304 = vmatprep.subr.mxu0 0.0
      %1305 = vmatpush1.msra.mxu0 0.0
      %1306 = vmatprep.subr.mxu0 0.0
      %1307 = vmatpush1.msra.mxu0 0.0
      %1308 = vmatprep.subr.mxu0 0.0
      %1309 = vmatpush1.msra.mxu0 0.0
      %1310 = vmatprep.subr.mxu0 0.0
      %1311 = vmatpush1.msra.mxu0 0.0
      %1312 = vmatprep.subr.mxu0 0.0
      %1313 = vmatpush1.msra.mxu0 0.0
      %1314 = vmatprep.subr.mxu0 0.0
      %1315 = vmatpush1.msra.mxu0 0.0
      %1316 = vmatprep.subr.mxu0 0.0
      %1317 = vmatpush1.msra.mxu0 0.0
      %1318 = vmatprep.subr.mxu0 0.0
      %1319 = vmatpush1.msra.mxu0 0.0
      %1320 = vmatprep.subr.mxu0 0.0
      %1321 = vmatpush1.msra.mxu0 0.0
      %1322 = vmatprep.subr.mxu0 0.0
      %1323 = vmatpush1.msra.mxu0 0.0
      %1324 = vmatprep.subr.mxu0 0.0
      %1325 = vmatpush1.msra.mxu0 0.0
      %1326 = vmatprep.subr.mxu0 0.0
      %1327 = vmatpush1.msra.mxu0 0.0
      %1328 = vmatprep.subr.mxu0 0.0
      %1329 = vmatpush1.msra.mxu0 0.0
      %1330 = vmatprep.mubr.f32.mxu0 0.0
      %1331 = vmatmul.mubr.f32.gmra.mrb[0].mxu0 %v1261
      %v1332 = vpop.f32.mrb[0].mxu0
      %v1333 = vadd.f32 0.0, %v1332
      %v1334 = vpop.f32.mrb[0].mxu0
      %1335 = vdwg.mxu0
      %v1336 = vadd.f32 %v1254, %v1333
      %1337 = vst.msk [vmem:[%s595] sm:$0xff] %vm616, %v1336
      %s1338 = scalar_lea.vmem %s575, 16
      %v1339 = vld [vmem:[%s1338] sm:$0xff]
      %v1340 = vld [vmem:[%s1338 + $0x8] sm:$0xff]
      %s1341 = scalar_lea.vmem %s585, 8
      %v1342 = vld [vmem:[%s1341] sm:$0xff]
      %s1343 = scalar_lea.vmem %s516, 32
      %v1344 = vld [vmem:[%s1343] sm:$0xff]
      %v1345 = vld [vmem:[%s1343 + $0x8] sm:$0xff]
      %s1346 = scalar_lea.vmem %s548, 16
      %v1347 = vld [vmem:[%s1346] sm:$0xff]
      %v1348 = vld [vmem:[%s6] sm:$0xf]
      %v1350 = vsel %vm620, %v1348, 0
      %1352 = vmatprep.subr.mxu0 0.0
      %1353 = vmatpush1.msra.mxu0 %v1350
      %1354 = vmatprep.subr.mxu0 0.0
      %1355 = vmatpush1.msra.mxu0 0.0
      %1356 = vmatprep.subr.mxu0 0.0
      %1357 = vmatpush1.msra.mxu0 0.0
      %1358 = vmatprep.subr.mxu0 0.0
      %1359 = vmatpush1.msra.mxu0 0.0
      %1360 = vmatprep.subr.mxu0 0.0
      %1361 = vmatpush1.msra.mxu0 0.0
      %1362 = vmatprep.subr.mxu0 0.0
      %1363 = vmatpush1.msra.mxu0 0.0
      %1364 = vmatprep.subr.mxu0 0.0
      %1365 = vmatpush1.msra.mxu0 0.0
      %1366 = vmatprep.subr.mxu0 0.0
      %1367 = vmatpush1.msra.mxu0 0.0
      %1368 = vmatprep.subr.mxu0 0.0
      %1369 = vmatpush1.msra.mxu0 0.0
      %1370 = vmatprep.subr.mxu0 0.0
      %1371 = vmatpush1.msra.mxu0 0.0
      %1372 = vmatprep.subr.mxu0 0.0
      %1373 = vmatpush1.msra.mxu0 0.0
      %1374 = vmatprep.subr.mxu0 0.0
      %1375 = vmatpush1.msra.mxu0 0.0
      %1376 = vmatprep.subr.mxu0 0.0
      %1377 = vmatpush1.msra.mxu0 0.0
      %1378 = vmatprep.subr.mxu0 0.0
      %1379 = vmatpush1.msra.mxu0 0.0
      %1380 = vmatprep.subr.mxu0 0.0
      %1381 = vmatpush1.msra.mxu0 0.0
      %1382 = vmatprep.subr.mxu0 0.0
      %1383 = vmatpush1.msra.mxu0 0.0
      %1384 = vmatprep.subr.mxu0 0.0
      %1385 = vmatpush1.msra.mxu0 0.0
      %1386 = vmatprep.subr.mxu0 0.0
      %1387 = vmatpush1.msra.mxu0 0.0
      %1388 = vmatprep.subr.mxu0 0.0
      %1389 = vmatpush1.msra.mxu0 0.0
      %1390 = vmatprep.subr.mxu0 0.0
      %1391 = vmatpush1.msra.mxu0 0.0
      %1392 = vmatprep.subr.mxu0 0.0
      %1393 = vmatpush1.msra.mxu0 0.0
      %1394 = vmatprep.subr.mxu0 0.0
      %1395 = vmatpush1.msra.mxu0 0.0
      %1396 = vmatprep.subr.mxu0 0.0
      %1397 = vmatpush1.msra.mxu0 0.0
      %1398 = vmatprep.subr.mxu0 0.0
      %1399 = vmatpush1.msra.mxu0 0.0
      %1400 = vmatprep.subr.mxu0 0.0
      %1401 = vmatpush1.msra.mxu0 0.0
      %1402 = vmatprep.subr.mxu0 0.0
      %1403 = vmatpush1.msra.mxu0 0.0
      %1404 = vmatprep.subr.mxu0 0.0
      %1405 = vmatpush1.msra.mxu0 0.0
      %1406 = vmatprep.subr.mxu0 0.0
      %1407 = vmatpush1.msra.mxu0 0.0
      %1408 = vmatprep.subr.mxu0 0.0
      %1409 = vmatpush1.msra.mxu0 0.0
      %1410 = vmatprep.subr.mxu0 0.0
      %1411 = vmatpush1.msra.mxu0 0.0
      %1412 = vmatprep.subr.mxu0 0.0
      %1413 = vmatpush1.msra.mxu0 0.0
      %1414 = vmatprep.subr.mxu0 0.0
      %1415 = vmatpush1.msra.mxu0 0.0
      %1416 = vmatprep.mubr.f32.mxu0 0.0
      %1417 = vmatmul.mubr.f32.gmra.mrb[0].mxu0 %v1100
      %v1418 = vpop.f32.mrb[0].mxu0
      %v1419 = vadd.f32 0.0, %v1418
      %v1420 = vpop.f32.mrb[0].mxu0
      %1421 = vdwg.mxu0
      %v1422 = vadd.f32 %v602, %v1419
      %v1423 = vld [vmem:[%s695] sm:$0xf]
      %v1425 = vsel %vm620, %v1423, 0
      %1427 = vmatprep.subr.mxu0 0.0
      %1428 = vmatpush1.msra.mxu0 %v1425
      %1429 = vmatprep.subr.mxu0 0.0
      %1430 = vmatpush1.msra.mxu0 0.0
      %1431 = vmatprep.subr.mxu0 0.0
      %1432 = vmatpush1.msra.mxu0 0.0
      %1433 = vmatprep.subr.mxu0 0.0
      %1434 = vmatpush1.msra.mxu0 0.0
      %1435 = vmatprep.subr.mxu0 0.0
      %1436 = vmatpush1.msra.mxu0 0.0
      %1437 = vmatprep.subr.mxu0 0.0
      %1438 = vmatpush1.msra.mxu0 0.0
      %1439 = vmatprep.subr.mxu0 0.0
      %1440 = vmatpush1.msra.mxu0 0.0
      %1441 = vmatprep.subr.mxu0 0.0
      %1442 = vmatpush1.msra.mxu0 0.0
      %1443 = vmatprep.subr.mxu0 0.0
      %1444 = vmatpush1.msra.mxu0 0.0
      %1445 = vmatprep.subr.mxu0 0.0
      %1446 = vmatpush1.msra.mxu0 0.0
      %1447 = vmatprep.subr.mxu0 0.0
      %1448 = vmatpush1.msra.mxu0 0.0
      %1449 = vmatprep.subr.mxu0 0.0
      %1450 = vmatpush1.msra.mxu0 0.0
      %1451 = vmatprep.subr.mxu0 0.0
      %1452 = vmatpush1.msra.mxu0 0.0
      %1453 = vmatprep.subr.mxu0 0.0
      %1454 = vmatpush1.msra.mxu0 0.0
      %1455 = vmatprep.subr.mxu0 0.0
      %1456 = vmatpush1.msra.mxu0 0.0
      %1457 = vmatprep.subr.mxu0 0.0
      %1458 = vmatpush1.msra.mxu0 0.0
      %1459 = vmatprep.subr.mxu0 0.0
      %1460 = vmatpush1.msra.mxu0 0.0
      %1461 = vmatprep.subr.mxu0 0.0
      %1462 = vmatpush1.msra.mxu0 0.0
      %1463 = vmatprep.subr.mxu0 0.0
      %1464 = vmatpush1.msra.mxu0 0.0
      %1465 = vmatprep.subr.mxu0 0.0
      %1466 = vmatpush1.msra.mxu0 0.0
      %1467 = vmatprep.subr.mxu0 0.0
      %1468 = vmatpush1.msra.mxu0 0.0
      %1469 = vmatprep.subr.mxu0 0.0
      %1470 = vmatpush1.msra.mxu0 0.0
      %1471 = vmatprep.subr.mxu0 0.0
      %1472 = vmatpush1.msra.mxu0 0.0
      %1473 = vmatprep.subr.mxu0 0.0
      %1474 = vmatpush1.msra.mxu0 0.0
      %1475 = vmatprep.subr.mxu0 0.0
      %1476 = vmatpush1.msra.mxu0 0.0
      %1477 = vmatprep.subr.mxu0 0.0
      %1478 = vmatpush1.msra.mxu0 0.0
      %1479 = vmatprep.subr.mxu0 0.0
      %1480 = vmatpush1.msra.mxu0 0.0
      %1481 = vmatprep.subr.mxu0 0.0
      %1482 = vmatpush1.msra.mxu0 0.0
      %1483 = vmatprep.subr.mxu0 0.0
      %1484 = vmatpush1.msra.mxu0 0.0
      %1485 = vmatprep.subr.mxu0 0.0
      %1486 = vmatpush1.msra.mxu0 0.0
      %1487 = vmatprep.subr.mxu0 0.0
      %1488 = vmatpush1.msra.mxu0 0.0
      %1489 = vmatprep.subr.mxu0 0.0
      %1490 = vmatpush1.msra.mxu0 0.0
      %1491 = vmatprep.mubr.f32.mxu0 0.0
      %1492 = vmatmul.mubr.f32.gmra.mrb[0].mxu0 %v1179
      %v1493 = vpop.f32.mrb[0].mxu0
      %v1494 = vadd.f32 0.0, %v1493
      %v1495 = vpop.f32.mrb[0].mxu0
      %1496 = vdwg.mxu0
      %v1497 = vadd.f32 %v1422, %v1494
      %v1498 = vld [vmem:[%s774] sm:$0xf]
      %v1500 = vsel %vm620, %v1498, 0
      %1502 = vmatprep.subr.mxu0 0.0
      %1503 = vmatpush1.msra.mxu0 %v1500
      %1504 = vmatprep.subr.mxu0 0.0
      %1505 = vmatpush1.msra.mxu0 0.0
      %1506 = vmatprep.subr.mxu0 0.0
      %1507 = vmatpush1.msra.mxu0 0.0
      %1508 = vmatprep.subr.mxu0 0.0
      %1509 = vmatpush1.msra.mxu0 0.0
      %1510 = vmatprep.subr.mxu0 0.0
      %1511 = vmatpush1.msra.mxu0 0.0
      %1512 = vmatprep.subr.mxu0 0.0
      %1513 = vmatpush1.msra.mxu0 0.0
      %1514 = vmatprep.subr.mxu0 0.0
      %1515 = vmatpush1.msra.mxu0 0.0
      %1516 = vmatprep.subr.mxu0 0.0
      %1517 = vmatpush1.msra.mxu0 0.0
      %1518 = vmatprep.subr.mxu0 0.0
      %1519 = vmatpush1.msra.mxu0 0.0
      %1520 = vmatprep.subr.mxu0 0.0
      %1521 = vmatpush1.msra.mxu0 0.0
      %1522 = vmatprep.subr.mxu0 0.0
      %1523 = vmatpush1.msra.mxu0 0.0
      %1524 = vmatprep.subr.mxu0 0.0
      %1525 = vmatpush1.msra.mxu0 0.0
      %1526 = vmatprep.subr.mxu0 0.0
      %1527 = vmatpush1.msra.mxu0 0.0
      %1528 = vmatprep.subr.mxu0 0.0
      %1529 = vmatpush1.msra.mxu0 0.0
      %1530 = vmatprep.subr.mxu0 0.0
      %1531 = vmatpush1.msra.mxu0 0.0
      %1532 = vmatprep.subr.mxu0 0.0
      %1533 = vmatpush1.msra.mxu0 0.0
      %1534 = vmatprep.subr.mxu0 0.0
      %1535 = vmatpush1.msra.mxu0 0.0
      %1536 = vmatprep.subr.mxu0 0.0
      %1537 = vmatpush1.msra.mxu0 0.0
      %1538 = vmatprep.subr.mxu0 0.0
      %1539 = vmatpush1.msra.mxu0 0.0
      %1540 = vmatprep.subr.mxu0 0.0
      %1541 = vmatpush1.msra.mxu0 0.0
      %1542 = vmatprep.subr.mxu0 0.0
      %1543 = vmatpush1.msra.mxu0 0.0
      %1544 = vmatprep.subr.mxu0 0.0
      %1545 = vmatpush1.msra.mxu0 0.0
      %1546 = vmatprep.subr.mxu0 0.0
      %1547 = vmatpush1.msra.mxu0 0.0
      %1548 = vmatprep.subr.mxu0 0.0
      %1549 = vmatpush1.msra.mxu0 0.0
      %1550 = vmatprep.subr.mxu0 0.0
      %1551 = vmatpush1.msra.mxu0 0.0
      %1552 = vmatprep.subr.mxu0 0.0
      %1553 = vmatpush1.msra.mxu0 0.0
      %1554 = vmatprep.subr.mxu0 0.0
      %1555 = vmatpush1.msra.mxu0 0.0
      %1556 = vmatprep.subr.mxu0 0.0
      %1557 = vmatpush1.msra.mxu0 0.0
      %1558 = vmatprep.subr.mxu0 0.0
      %1559 = vmatpush1.msra.mxu0 0.0
      %1560 = vmatprep.subr.mxu0 0.0
      %1561 = vmatpush1.msra.mxu0 0.0
      %1562 = vmatprep.subr.mxu0 0.0
      %1563 = vmatpush1.msra.mxu0 0.0
      %1564 = vmatprep.subr.mxu0 0.0
      %1565 = vmatpush1.msra.mxu0 0.0
      %1566 = vmatprep.mubr.f32.mxu0 0.0
      %1567 = vmatmul.mubr.f32.gmra.mrb[0].mxu0 %v1261
      %v1568 = vpop.f32.mrb[0].mxu0
      %v1569 = vadd.f32 0.0, %v1568
      %v1570 = vpop.f32.mrb[0].mxu0
      %1571 = vdwg.mxu0
      %v1572 = vadd.f32 %v1497, %v1569
      %v1573 = vld [vmem:[%s857] sm:$0xf]
      %v1575 = vsel %vm616, %v1339, 0
      %v1578 = vsel %vm620, %v1573, 0
      %1580 = vmatprep.subr.mxu0 0.0
      %1581 = vmatpush1.msra.mxu0 %v1578
      %1582 = vmatprep.subr.mxu0 0.0
      %1583 = vmatpush1.msra.mxu0 0.0
      %1584 = vmatprep.subr.mxu0 0.0
      %1585 = vmatpush1.msra.mxu0 0.0
      %1586 = vmatprep.subr.mxu0 0.0
      %1587 = vmatpush1.msra.mxu0 0.0
      %1588 = vmatprep.subr.mxu0 0.0
      %1589 = vmatpush1.msra.mxu0 0.0
      %1590 = vmatprep.subr.mxu0 0.0
      %1591 = vmatpush1.msra.mxu0 0.0
      %1592 = vmatprep.subr.mxu0 0.0
      %1593 = vmatpush1.msra.mxu0 0.0
      %1594 = vmatprep.subr.mxu0 0.0
      %1595 = vmatpush1.msra.mxu0 0.0
      %1596 = vmatprep.subr.mxu0 0.0
      %1597 = vmatpush1.msra.mxu0 0.0
      %1598 = vmatprep.subr.mxu0 0.0
      %1599 = vmatpush1.msra.mxu0 0.0
      %1600 = vmatprep.subr.mxu0 0.0
      %1601 = vmatpush1.msra.mxu0 0.0
      %1602 = vmatprep.subr.mxu0 0.0
      %1603 = vmatpush1.msra.mxu0 0.0
      %1604 = vmatprep.subr.mxu0 0.0
      %1605 = vmatpush1.msra.mxu0 0.0
      %1606 = vmatprep.subr.mxu0 0.0
      %1607 = vmatpush1.msra.mxu0 0.0
      %1608 = vmatprep.subr.mxu0 0.0
      %1609 = vmatpush1.msra.mxu0 0.0
      %1610 = vmatprep.subr.mxu0 0.0
      %1611 = vmatpush1.msra.mxu0 0.0
      %1612 = vmatprep.subr.mxu0 0.0
      %1613 = vmatpush1.msra.mxu0 0.0
      %1614 = vmatprep.subr.mxu0 0.0
      %1615 = vmatpush1.msra.mxu0 0.0
      %1616 = vmatprep.subr.mxu0 0.0
      %1617 = vmatpush1.msra.mxu0 0.0
      %1618 = vmatprep.subr.mxu0 0.0
      %1619 = vmatpush1.msra.mxu0 0.0
      %1620 = vmatprep.subr.mxu0 0.0
      %1621 = vmatpush1.msra.mxu0 0.0
      %1622 = vmatprep.subr.mxu0 0.0
      %1623 = vmatpush1.msra.mxu0 0.0
      %1624 = vmatprep.subr.mxu0 0.0
      %1625 = vmatpush1.msra.mxu0 0.0
      %1626 = vmatprep.subr.mxu0 0.0
      %1627 = vmatpush1.msra.mxu0 0.0
      %1628 = vmatprep.subr.mxu0 0.0
      %1629 = vmatpush1.msra.mxu0 0.0
      %1630 = vmatprep.subr.mxu0 0.0
      %1631 = vmatpush1.msra.mxu0 0.0
      %1632 = vmatprep.subr.mxu0 0.0
      %1633 = vmatpush1.msra.mxu0 0.0
      %1634 = vmatprep.subr.mxu0 0.0
      %1635 = vmatpush1.msra.mxu0 0.0
      %1636 = vmatprep.subr.mxu0 0.0
      %1637 = vmatpush1.msra.mxu0 0.0
      %1638 = vmatprep.subr.mxu0 0.0
      %1639 = vmatpush1.msra.mxu0 0.0
      %1640 = vmatprep.subr.mxu0 0.0
      %1641 = vmatpush1.msra.mxu0 0.0
      %1642 = vmatprep.subr.mxu0 0.0
      %1643 = vmatpush1.msra.mxu0 0.0
      %1644 = vmatprep.mubr.f32.mxu0 0.0
      %1645 = vmatmul.mubr.f32.gmra.mrb[0].mxu0 %v1575
      %v1646 = vpop.f32.mrb[0].mxu0
      %v1647 = vadd.f32 0.0, %v1646
      %v1648 = vpop.f32.mrb[0].mxu0
      %1649 = vdwg.mxu0
      %v1650 = vadd.f32 %v1572, %v1647
      %v1651 = vld [vmem:[%s936] sm:$0xf]
      %v1653 = vsel %vm616, %v1342, 0
      %v1656 = vsel %vm620, %v1651, 0
      %1658 = vmatprep.subr.mxu0 0.0
      %1659 = vmatpush1.msra.mxu0 %v1656
      %1660 = vmatprep.subr.mxu0 0.0
      %1661 = vmatpush1.msra.mxu0 0.0
      %1662 = vmatprep.subr.mxu0 0.0
      %1663 = vmatpush1.msra.mxu0 0.0
      %1664 = vmatprep.subr.mxu0 0.0
      %1665 = vmatpush1.msra.mxu0 0.0
      %1666 = vmatprep.subr.mxu0 0.0
      %1667 = vmatpush1.msra.mxu0 0.0
      %1668 = vmatprep.subr.mxu0 0.0
      %1669 = vmatpush1.msra.mxu0 0.0
      %1670 = vmatprep.subr.mxu0 0.0
      %1671 = vmatpush1.msra.mxu0 0.0
      %1672 = vmatprep.subr.mxu0 0.0
      %1673 = vmatpush1.msra.mxu0 0.0
      %1674 = vmatprep.subr.mxu0 0.0
      %1675 = vmatpush1.msra.mxu0 0.0
      %1676 = vmatprep.subr.mxu0 0.0
      %1677 = vmatpush1.msra.mxu0 0.0
      %1678 = vmatprep.subr.mxu0 0.0
      %1679 = vmatpush1.msra.mxu0 0.0
      %1680 = vmatprep.subr.mxu0 0.0
      %1681 = vmatpush1.msra.mxu0 0.0
      %1682 = vmatprep.subr.mxu0 0.0
      %1683 = vmatpush1.msra.mxu0 0.0
      %1684 = vmatprep.subr.mxu0 0.0
      %1685 = vmatpush1.msra.mxu0 0.0
      %1686 = vmatprep.subr.mxu0 0.0
      %1687 = vmatpush1.msra.mxu0 0.0
      %1688 = vmatprep.subr.mxu0 0.0
      %1689 = vmatpush1.msra.mxu0 0.0
      %1690 = vmatprep.subr.mxu0 0.0
      %1691 = vmatpush1.msra.mxu0 0.0
      %1692 = vmatprep.subr.mxu0 0.0
      %1693 = vmatpush1.msra.mxu0 0.0
      %1694 = vmatprep.subr.mxu0 0.0
      %1695 = vmatpush1.msra.mxu0 0.0
      %1696 = vmatprep.subr.mxu0 0.0
      %1697 = vmatpush1.msra.mxu0 0.0
      %1698 = vmatprep.subr.mxu0 0.0
      %1699 = vmatpush1.msra.mxu0 0.0
      %1700 = vmatprep.subr.mxu0 0.0
      %1701 = vmatpush1.msra.mxu0 0.0
      %1702 = vmatprep.subr.mxu0 0.0
      %1703 = vmatpush1.msra.mxu0 0.0
      %1704 = vmatprep.subr.mxu0 0.0
      %1705 = vmatpush1.msra.mxu0 0.0
      %1706 = vmatprep.subr.mxu0 0.0
      %1707 = vmatpush1.msra.mxu0 0.0
      %1708 = vmatprep.subr.mxu0 0.0
      %1709 = vmatpush1.msra.mxu0 0.0
      %1710 = vmatprep.subr.mxu0 0.0
      %1711 = vmatpush1.msra.mxu0 0.0
      %1712 = vmatprep.subr.mxu0 0.0
      %1713 = vmatpush1.msra.mxu0 0.0
      %1714 = vmatprep.subr.mxu0 0.0
      %1715 = vmatpush1.msra.mxu0 0.0
      %1716 = vmatprep.subr.mxu0 0.0
      %1717 = vmatpush1.msra.mxu0 0.0
      %1718 = vmatprep.subr.mxu0 0.0
      %1719 = vmatpush1.msra.mxu0 0.0
      %1720 = vmatprep.subr.mxu0 0.0
      %1721 = vmatpush1.msra.mxu0 0.0
      %1722 = vmatprep.mubr.f32.mxu0 0.0
      %1723 = vmatmul.mubr.f32.gmra.mrb[0].mxu0 %v1653
      %v1724 = vpop.f32.mrb[0].mxu0
      %v1725 = vadd.f32 0.0, %v1724
      %v1726 = vpop.f32.mrb[0].mxu0
      %1727 = vdwg.mxu0
      %v1728 = vadd.f32 %v1650, %v1725
      %v1729 = vld [vmem:[%s1015] sm:$0xf]
      %v1731 = vrot.slane %v1339, 1
      %v1732 = vrot.slane %v1340, 1
      %v1733 = vsel %vm777, %v1731, %v1732
      %v1734 = vsel %vm616, %v1733, 0
      %v1737 = vsel %vm620, %v1729, 0
      %1739 = vmatprep.subr.mxu0 0.0
      %1740 = vmatpush1.msra.mxu0 %v1737
      %1741 = vmatprep.subr.mxu0 0.0
      %1742 = vmatpush1.msra.mxu0 0.0
      %1743 = vmatprep.subr.mxu0 0.0
      %1744 = vmatpush1.msra.mxu0 0.0
      %1745 = vmatprep.subr.mxu0 0.0
      %1746 = vmatpush1.msra.mxu0 0.0
      %1747 = vmatprep.subr.mxu0 0.0
      %1748 = vmatpush1.msra.mxu0 0.0
      %1749 = vmatprep.subr.mxu0 0.0
      %1750 = vmatpush1.msra.mxu0 0.0
      %1751 = vmatprep.subr.mxu0 0.0
      %1752 = vmatpush1.msra.mxu0 0.0
      %1753 = vmatprep.subr.mxu0 0.0
      %1754 = vmatpush1.msra.mxu0 0.0
      %1755 = vmatprep.subr.mxu0 0.0
      %1756 = vmatpush1.msra.mxu0 0.0
      %1757 = vmatprep.subr.mxu0 0.0
      %1758 = vmatpush1.msra.mxu0 0.0
      %1759 = vmatprep.subr.mxu0 0.0
      %1760 = vmatpush1.msra.mxu0 0.0
      %1761 = vmatprep.subr.mxu0 0.0
      %1762 = vmatpush1.msra.mxu0 0.0
      %1763 = vmatprep.subr.mxu0 0.0
      %1764 = vmatpush1.msra.mxu0 0.0
      %1765 = vmatprep.subr.mxu0 0.0
      %1766 = vmatpush1.msra.mxu0 0.0
      %1767 = vmatprep.subr.mxu0 0.0
      %1768 = vmatpush1.msra.mxu0 0.0
      %1769 = vmatprep.subr.mxu0 0.0
      %1770 = vmatpush1.msra.mxu0 0.0
      %1771 = vmatprep.subr.mxu0 0.0
      %1772 = vmatpush1.msra.mxu0 0.0
      %1773 = vmatprep.subr.mxu0 0.0
      %1774 = vmatpush1.msra.mxu0 0.0
      %1775 = vmatprep.subr.mxu0 0.0
      %1776 = vmatpush1.msra.mxu0 0.0
      %1777 = vmatprep.subr.mxu0 0.0
      %1778 = vmatpush1.msra.mxu0 0.0
      %1779 = vmatprep.subr.mxu0 0.0
      %1780 = vmatpush1.msra.mxu0 0.0
      %1781 = vmatprep.subr.mxu0 0.0
      %1782 = vmatpush1.msra.mxu0 0.0
      %1783 = vmatprep.subr.mxu0 0.0
      %1784 = vmatpush1.msra.mxu0 0.0
      %1785 = vmatprep.subr.mxu0 0.0
      %1786 = vmatpush1.msra.mxu0 0.0
      %1787 = vmatprep.subr.mxu0 0.0
      %1788 = vmatpush1.msra.mxu0 0.0
      %1789 = vmatprep.subr.mxu0 0.0
      %1790 = vmatpush1.msra.mxu0 0.0
      %1791 = vmatprep.subr.mxu0 0.0
      %1792 = vmatpush1.msra.mxu0 0.0
      %1793 = vmatprep.subr.mxu0 0.0
      %1794 = vmatpush1.msra.mxu0 0.0
      %1795 = vmatprep.subr.mxu0 0.0
      %1796 = vmatpush1.msra.mxu0 0.0
      %1797 = vmatprep.subr.mxu0 0.0
      %1798 = vmatpush1.msra.mxu0 0.0
      %1799 = vmatprep.subr.mxu0 0.0
      %1800 = vmatpush1.msra.mxu0 0.0
      %1801 = vmatprep.subr.mxu0 0.0
      %1802 = vmatpush1.msra.mxu0 0.0
      %1803 = vmatprep.mubr.f32.mxu0 0.0
      %1804 = vmatmul.mubr.f32.gmra.mrb[0].mxu0 %v1734
      %v1805 = vpop.f32.mrb[0].mxu0
      %v1806 = vadd.f32 0.0, %v1805
      %v1807 = vpop.f32.mrb[0].mxu0
      %1808 = vdwg.mxu0
      %v1809 = vadd.f32 %v1728, %v1806
      %v1810 = vld [vmem:[%s1097] sm:$0xf]
      %v1812 = vsel %vm616, %v1344, 0
      %v1815 = vsel %vm620, %v1810, 0
      %1817 = vmatprep.subr.mxu0 0.0
      %1818 = vmatpush1.msra.mxu0 %v1815
      %1819 = vmatprep.subr.mxu0 0.0
      %1820 = vmatpush1.msra.mxu0 0.0
      %1821 = vmatprep.subr.mxu0 0.0
      %1822 = vmatpush1.msra.mxu0 0.0
      %1823 = vmatprep.subr.mxu0 0.0
      %1824 = vmatpush1.msra.mxu0 0.0
      %1825 = vmatprep.subr.mxu0 0.0
      %1826 = vmatpush1.msra.mxu0 0.0
      %1827 = vmatprep.subr.mxu0 0.0
      %1828 = vmatpush1.msra.mxu0 0.0
      %1829 = vmatprep.subr.mxu0 0.0
      %1830 = vmatpush1.msra.mxu0 0.0
      %1831 = vmatprep.subr.mxu0 0.0
      %1832 = vmatpush1.msra.mxu0 0.0
      %1833 = vmatprep.subr.mxu0 0.0
      %1834 = vmatpush1.msra.mxu0 0.0
      %1835 = vmatprep.subr.mxu0 0.0
      %1836 = vmatpush1.msra.mxu0 0.0
      %1837 = vmatprep.subr.mxu0 0.0
      %1838 = vmatpush1.msra.mxu0 0.0
      %1839 = vmatprep.subr.mxu0 0.0
      %1840 = vmatpush1.msra.mxu0 0.0
      %1841 = vmatprep.subr.mxu0 0.0
      %1842 = vmatpush1.msra.mxu0 0.0
      %1843 = vmatprep.subr.mxu0 0.0
      %1844 = vmatpush1.msra.mxu0 0.0
      %1845 = vmatprep.subr.mxu0 0.0
      %1846 = vmatpush1.msra.mxu0 0.0
      %1847 = vmatprep.subr.mxu0 0.0
      %1848 = vmatpush1.msra.mxu0 0.0
      %1849 = vmatprep.subr.mxu0 0.0
      %1850 = vmatpush1.msra.mxu0 0.0
      %1851 = vmatprep.subr.mxu0 0.0
      %1852 = vmatpush1.msra.mxu0 0.0
      %1853 = vmatprep.subr.mxu0 0.0
      %1854 = vmatpush1.msra.mxu0 0.0
      %1855 = vmatprep.subr.mxu0 0.0
      %1856 = vmatpush1.msra.mxu0 0.0
      %1857 = vmatprep.subr.mxu0 0.0
      %1858 = vmatpush1.msra.mxu0 0.0
      %1859 = vmatprep.subr.mxu0 0.0
      %1860 = vmatpush1.msra.mxu0 0.0
      %1861 = vmatprep.subr.mxu0 0.0
      %1862 = vmatpush1.msra.mxu0 0.0
      %1863 = vmatprep.subr.mxu0 0.0
      %1864 = vmatpush1.msra.mxu0 0.0
      %1865 = vmatprep.subr.mxu0 0.0
      %1866 = vmatpush1.msra.mxu0 0.0
      %1867 = vmatprep.subr.mxu0 0.0
      %1868 = vmatpush1.msra.mxu0 0.0
      %1869 = vmatprep.subr.mxu0 0.0
      %1870 = vmatpush1.msra.mxu0 0.0
      %1871 = vmatprep.subr.mxu0 0.0
      %1872 = vmatpush1.msra.mxu0 0.0
      %1873 = vmatprep.subr.mxu0 0.0
      %1874 = vmatpush1.msra.mxu0 0.0
      %1875 = vmatprep.subr.mxu0 0.0
      %1876 = vmatpush1.msra.mxu0 0.0
      %1877 = vmatprep.subr.mxu0 0.0
      %1878 = vmatpush1.msra.mxu0 0.0
      %1879 = vmatprep.subr.mxu0 0.0
      %1880 = vmatpush1.msra.mxu0 0.0
      %1881 = vmatprep.mubr.f32.mxu0 0.0
      %1882 = vmatmul.mubr.f32.gmra.mrb[0].mxu0 %v1812
      %v1883 = vpop.f32.mrb[0].mxu0
      %v1884 = vadd.f32 0.0, %v1883
      %v1885 = vpop.f32.mrb[0].mxu0
      %1886 = vdwg.mxu0
      %v1887 = vadd.f32 %v1809, %v1884
      %v1888 = vld [vmem:[%s1176] sm:$0xf]
      %v1890 = vsel %vm616, %v1347, 0
      %v1893 = vsel %vm620, %v1888, 0
      %1895 = vmatprep.subr.mxu0 0.0
      %1896 = vmatpush1.msra.mxu0 %v1893
      %1897 = vmatprep.subr.mxu0 0.0
      %1898 = vmatpush1.msra.mxu0 0.0
      %1899 = vmatprep.subr.mxu0 0.0
      %1900 = vmatpush1.msra.mxu0 0.0
      %1901 = vmatprep.subr.mxu0 0.0
      %1902 = vmatpush1.msra.mxu0 0.0
      %1903 = vmatprep.subr.mxu0 0.0
      %1904 = vmatpush1.msra.mxu0 0.0
      %1905 = vmatprep.subr.mxu0 0.0
      %1906 = vmatpush1.msra.mxu0 0.0
      %1907 = vmatprep.subr.mxu0 0.0
      %1908 = vmatpush1.msra.mxu0 0.0
      %1909 = vmatprep.subr.mxu0 0.0
      %1910 = vmatpush1.msra.mxu0 0.0
      %1911 = vmatprep.subr.mxu0 0.0
      %1912 = vmatpush1.msra.mxu0 0.0
      %1913 = vmatprep.subr.mxu0 0.0
      %1914 = vmatpush1.msra.mxu0 0.0
      %1915 = vmatprep.subr.mxu0 0.0
      %1916 = vmatpush1.msra.mxu0 0.0
      %1917 = vmatprep.subr.mxu0 0.0
      %1918 = vmatpush1.msra.mxu0 0.0
      %1919 = vmatprep.subr.mxu0 0.0
      %1920 = vmatpush1.msra.mxu0 0.0
      %1921 = vmatprep.subr.mxu0 0.0
      %1922 = vmatpush1.msra.mxu0 0.0
      %1923 = vmatprep.subr.mxu0 0.0
      %1924 = vmatpush1.msra.mxu0 0.0
      %1925 = vmatprep.subr.mxu0 0.0
      %1926 = vmatpush1.msra.mxu0 0.0
      %1927 = vmatprep.subr.mxu0 0.0
      %1928 = vmatpush1.msra.mxu0 0.0
      %1929 = vmatprep.subr.mxu0 0.0
      %1930 = vmatpush1.msra.mxu0 0.0
      %1931 = vmatprep.subr.mxu0 0.0
      %1932 = vmatpush1.msra.mxu0 0.0
      %1933 = vmatprep.subr.mxu0 0.0
      %1934 = vmatpush1.msra.mxu0 0.0
      %1935 = vmatprep.subr.mxu0 0.0
      %1936 = vmatpush1.msra.mxu0 0.0
      %1937 = vmatprep.subr.mxu0 0.0
      %1938 = vmatpush1.msra.mxu0 0.0
      %1939 = vmatprep.subr.mxu0 0.0
      %1940 = vmatpush1.msra.mxu0 0.0
      %1941 = vmatprep.subr.mxu0 0.0
      %1942 = vmatpush1.msra.mxu0 0.0
      %1943 = vmatprep.subr.mxu0 0.0
      %1944 = vmatpush1.msra.mxu0 0.0
      %1945 = vmatprep.subr.mxu0 0.0
      %1946 = vmatpush1.msra.mxu0 0.0
      %1947 = vmatprep.subr.mxu0 0.0
      %1948 = vmatpush1.msra.mxu0 0.0
      %1949 = vmatprep.subr.mxu0 0.0
      %1950 = vmatpush1.msra.mxu0 0.0
      %1951 = vmatprep.subr.mxu0 0.0
      %1952 = vmatpush1.msra.mxu0 0.0
      %1953 = vmatprep.subr.mxu0 0.0
      %1954 = vmatpush1.msra.mxu0 0.0
      %1955 = vmatprep.subr.mxu0 0.0
      %1956 = vmatpush1.msra.mxu0 0.0
      %1957 = vmatprep.subr.mxu0 0.0
      %1958 = vmatpush1.msra.mxu0 0.0
      %1959 = vmatprep.mubr.f32.mxu0 0.0
      %1960 = vmatmul.mubr.f32.gmra.mrb[0].mxu0 %v1890
      %v1961 = vpop.f32.mrb[0].mxu0
      %v1962 = vadd.f32 0.0, %v1961
      %v1963 = vpop.f32.mrb[0].mxu0
      %1964 = vdwg.mxu0
      %v1965 = vadd.f32 %v1887, %v1962
      %v1966 = vld [vmem:[%s1255] sm:$0xf]
      %v1968 = vrot.slane %v1344, 1
      %v1969 = vrot.slane %v1345, 1
      %v1970 = vsel %vm777, %v1968, %v1969
      %v1971 = vsel %vm616, %v1970, 0
      %v1974 = vsel %vm620, %v1966, 0
      %1976 = vmatprep.subr.mxu0 0.0
      %1977 = vmatpush1.msra.mxu0 %v1974
      %1978 = vmatprep.subr.mxu0 0.0
      %1979 = vmatpush1.msra.mxu0 0.0
      %1980 = vmatprep.subr.mxu0 0.0
      %1981 = vmatpush1.msra.mxu0 0.0
      %1982 = vmatprep.subr.mxu0 0.0
      %1983 = vmatpush1.msra.mxu0 0.0
      %1984 = vmatprep.subr.mxu0 0.0
      %1985 = vmatpush1.msra.mxu0 0.0
      %1986 = vmatprep.subr.mxu0 0.0
      %1987 = vmatpush1.msra.mxu0 0.0
      %1988 = vmatprep.subr.mxu0 0.0
      %1989 = vmatpush1.msra.mxu0 0.0
      %1990 = vmatprep.subr.mxu0 0.0
      %1991 = vmatpush1.msra.mxu0 0.0
      %1992 = vmatprep.subr.mxu0 0.0
      %1993 = vmatpush1.msra.mxu0 0.0
      %1994 = vmatprep.subr.mxu0 0.0
      %1995 = vmatpush1.msra.mxu0 0.0
      %1996 = vmatprep.subr.mxu0 0.0
      %1997 = vmatpush1.msra.mxu0 0.0
      %1998 = vmatprep.subr.mxu0 0.0
      %1999 = vmatpush1.msra.mxu0 0.0
      %2000 = vmatprep.subr.mxu0 0.0
      %2001 = vmatpush1.msra.mxu0 0.0
      %2002 = vmatprep.subr.mxu0 0.0
      %2003 = vmatpush1.msra.mxu0 0.0
      %2004 = vmatprep.subr.mxu0 0.0
      %2005 = vmatpush1.msra.mxu0 0.0
      %2006 = vmatprep.subr.mxu0 0.0
      %2007 = vmatpush1.msra.mxu0 0.0
      %2008 = vmatprep.subr.mxu0 0.0
      %2009 = vmatpush1.msra.mxu0 0.0
      %2010 = vmatprep.subr.mxu0 0.0
      %2011 = vmatpush1.msra.mxu0 0.0
      %2012 = vmatprep.subr.mxu0 0.0
      %2013 = vmatpush1.msra.mxu0 0.0
      %2014 = vmatprep.subr.mxu0 0.0
      %2015 = vmatpush1.msra.mxu0 0.0
      %2016 = vmatprep.subr.mxu0 0.0
      %2017 = vmatpush1.msra.mxu0 0.0
      %2018 = vmatprep.subr.mxu0 0.0
      %2019 = vmatpush1.msra.mxu0 0.0
      %2020 = vmatprep.subr.mxu0 0.0
      %2021 = vmatpush1.msra.mxu0 0.0
      %2022 = vmatprep.subr.mxu0 0.0
      %2023 = vmatpush1.msra.mxu0 0.0
      %2024 = vmatprep.subr.mxu0 0.0
      %2025 = vmatpush1.msra.mxu0 0.0
      %2026 = vmatprep.subr.mxu0 0.0
      %2027 = vmatpush1.msra.mxu0 0.0
      %2028 = vmatprep.subr.mxu0 0.0
      %2029 = vmatpush1.msra.mxu0 0.0
      %2030 = vmatprep.subr.mxu0 0.0
      %2031 = vmatpush1.msra.mxu0 0.0
      %2032 = vmatprep.subr.mxu0 0.0
      %2033 = vmatpush1.msra.mxu0 0.0
      %2034 = vmatprep.subr.mxu0 0.0
      %2035 = vmatpush1.msra.mxu0 0.0
      %2036 = vmatprep.subr.mxu0 0.0
      %2037 = vmatpush1.msra.mxu0 0.0
      %2038 = vmatprep.subr.mxu0 0.0
      %2039 = vmatpush1.msra.mxu0 0.0
      %2040 = vmatprep.mubr.f32.mxu0 0.0
      %2041 = vmatmul.mubr.f32.gmra.mrb[0].mxu0 %v1971
      %v2042 = vpop.f32.mrb[0].mxu0
      %v2043 = vadd.f32 0.0, %v2042
      %v2044 = vpop.f32.mrb[0].mxu0
      %2045 = vdwg.mxu0
      %v2046 = vadd.f32 %v1965, %v2043
      %s2047 = scalar_lea.vmem %s595, 8
      %2048 = vst.msk [vmem:[%s2047] sm:$0xff] %vm616, %v2046
      %s2049 = scalar_lea.vmem %s575, 32
      %v2050 = vld [vmem:[%s2049] sm:$0xff]
      %v2051 = vld [vmem:[%s2049 + $0x8] sm:$0xff]
      %s2052 = scalar_lea.vmem %s585, 16
      %v2053 = vld [vmem:[%s2052] sm:$0xff]
      %s2054 = scalar_lea.vmem %s516, 48
      %v2055 = vld [vmem:[%s2054] sm:$0xff]
      %v2056 = vld [vmem:[%s2054 + $0x8] sm:$0xff]
      %s2057 = scalar_lea.vmem %s548, 24
      %v2058 = vld [vmem:[%s2057] sm:$0xff]
      %v2059 = vld [vmem:[%s6] sm:$0xf]
      %v2061 = vsel %vm620, %v2059, 0
      %2063 = vmatprep.subr.mxu0 0.0
      %2064 = vmatpush1.msra.mxu0 %v2061
      %2065 = vmatprep.subr.mxu0 0.0
      %2066 = vmatpush1.msra.mxu0 0.0
      %2067 = vmatprep.subr.mxu0 0.0
      %2068 = vmatpush1.msra.mxu0 0.0
      %2069 = vmatprep.subr.mxu0 0.0
      %2070 = vmatpush1.msra.mxu0 0.0
      %2071 = vmatprep.subr.mxu0 0.0
      %2072 = vmatpush1.msra.mxu0 0.0
      %2073 = vmatprep.subr.mxu0 0.0
      %2074 = vmatpush1.msra.mxu0 0.0
      %2075 = vmatprep.subr.mxu0 0.0
      %2076 = vmatpush1.msra.mxu0 0.0
      %2077 = vmatprep.subr.mxu0 0.0
      %2078 = vmatpush1.msra.mxu0 0.0
      %2079 = vmatprep.subr.mxu0 0.0
      %2080 = vmatpush1.msra.mxu0 0.0
      %2081 = vmatprep.subr.mxu0 0.0
      %2082 = vmatpush1.msra.mxu0 0.0
      %2083 = vmatprep.subr.mxu0 0.0
      %2084 = vmatpush1.msra.mxu0 0.0
      %2085 = vmatprep.subr.mxu0 0.0
      %2086 = vmatpush1.msra.mxu0 0.0
      %2087 = vmatprep.subr.mxu0 0.0
      %2088 = vmatpush1.msra.mxu0 0.0
      %2089 = vmatprep.subr.mxu0 0.0
      %2090 = vmatpush1.msra.mxu0 0.0
      %2091 = vmatprep.subr.mxu0 0.0
      %2092 = vmatpush1.msra.mxu0 0.0
      %2093 = vmatprep.subr.mxu0 0.0
      %2094 = vmatpush1.msra.mxu0 0.0
      %2095 = vmatprep.subr.mxu0 0.0
      %2096 = vmatpush1.msra.mxu0 0.0
      %2097 = vmatprep.subr.mxu0 0.0
      %2098 = vmatpush1.msra.mxu0 0.0
      %2099 = vmatprep.subr.mxu0 0.0
      %2100 = vmatpush1.msra.mxu0 0.0
      %2101 = vmatprep.subr.mxu0 0.0
      %2102 = vmatpush1.msra.mxu0 0.0
      %2103 = vmatprep.subr.mxu0 0.0
      %2104 = vmatpush1.msra.mxu0 0.0
      %2105 = vmatprep.subr.mxu0 0.0
      %2106 = vmatpush1.msra.mxu0 0.0
      %2107 = vmatprep.subr.mxu0 0.0
      %2108 = vmatpush1.msra.mxu0 0.0
      %2109 = vmatprep.subr.mxu0 0.0
      %2110 = vmatpush1.msra.mxu0 0.0
      %2111 = vmatprep.subr.mxu0 0.0
      %2112 = vmatpush1.msra.mxu0 0.0
      %2113 = vmatprep.subr.mxu0 0.0
      %2114 = vmatpush1.msra.mxu0 0.0
      %2115 = vmatprep.subr.mxu0 0.0
      %2116 = vmatpush1.msra.mxu0 0.0
      %2117 = vmatprep.subr.mxu0 0.0
      %2118 = vmatpush1.msra.mxu0 0.0
      %2119 = vmatprep.subr.mxu0 0.0
      %2120 = vmatpush1.msra.mxu0 0.0
      %2121 = vmatprep.subr.mxu0 0.0
      %2122 = vmatpush1.msra.mxu0 0.0
      %2123 = vmatprep.subr.mxu0 0.0
      %2124 = vmatpush1.msra.mxu0 0.0
      %2125 = vmatprep.subr.mxu0 0.0
      %2126 = vmatpush1.msra.mxu0 0.0
      %2127 = vmatprep.mubr.f32.mxu0 0.0
      %2128 = vmatmul.mubr.f32.gmra.mrb[0].mxu0 %v1812
      %v2129 = vpop.f32.mrb[0].mxu0
      %v2130 = vadd.f32 0.0, %v2129
      %v2131 = vpop.f32.mrb[0].mxu0
      %2132 = vdwg.mxu0
      %v2133 = vadd.f32 %v602, %v2130
      %v2134 = vld [vmem:[%s695] sm:$0xf]
      %v2136 = vsel %vm620, %v2134, 0
      %2138 = vmatprep.subr.mxu0 0.0
      %2139 = vmatpush1.msra.mxu0 %v2136
      %2140 = vmatprep.subr.mxu0 0.0
      %2141 = vmatpush1.msra.mxu0 0.0
      %2142 = vmatprep.subr.mxu0 0.0
      %2143 = vmatpush1.msra.mxu0 0.0
      %2144 = vmatprep.subr.mxu0 0.0
      %2145 = vmatpush1.msra.mxu0 0.0
      %2146 = vmatprep.subr.mxu0 0.0
      %2147 = vmatpush1.msra.mxu0 0.0
      %2148 = vmatprep.subr.mxu0 0.0
      %2149 = vmatpush1.msra.mxu0 0.0
      %2150 = vmatprep.subr.mxu0 0.0
      %2151 = vmatpush1.msra.mxu0 0.0
      %2152 = vmatprep.subr.mxu0 0.0
      %2153 = vmatpush1.msra.mxu0 0.0
      %2154 = vmatprep.subr.mxu0 0.0
      %2155 = vmatpush1.msra.mxu0 0.0
      %2156 = vmatprep.subr.mxu0 0.0
      %2157 = vmatpush1.msra.mxu0 0.0
      %2158 = vmatprep.subr.mxu0 0.0
      %2159 = vmatpush1.msra.mxu0 0.0
      %2160 = vmatprep.subr.mxu0 0.0
      %2161 = vmatpush1.msra.mxu0 0.0
      %2162 = vmatprep.subr.mxu0 0.0
      %2163 = vmatpush1.msra.mxu0 0.0
      %2164 = vmatprep.subr.mxu0 0.0
      %2165 = vmatpush1.msra.mxu0 0.0
      %2166 = vmatprep.subr.mxu0 0.0
      %2167 = vmatpush1.msra.mxu0 0.0
      %2168 = vmatprep.subr.mxu0 0.0
      %2169 = vmatpush1.msra.mxu0 0.0
      %2170 = vmatprep.subr.mxu0 0.0
      %2171 = vmatpush1.msra.mxu0 0.0
      %2172 = vmatprep.subr.mxu0 0.0
      %2173 = vmatpush1.msra.mxu0 0.0
      %2174 = vmatprep.subr.mxu0 0.0
      %2175 = vmatpush1.msra.mxu0 0.0
      %2176 = vmatprep.subr.mxu0 0.0
      %2177 = vmatpush1.msra.mxu0 0.0
      %2178 = vmatprep.subr.mxu0 0.0
      %2179 = vmatpush1.msra.mxu0 0.0
      %2180 = vmatprep.subr.mxu0 0.0
      %2181 = vmatpush1.msra.mxu0 0.0
      %2182 = vmatprep.subr.mxu0 0.0
      %2183 = vmatpush1.msra.mxu0 0.0
      %2184 = vmatprep.subr.mxu0 0.0
      %2185 = vmatpush1.msra.mxu0 0.0
      %2186 = vmatprep.subr.mxu0 0.0
      %2187 = vmatpush1.msra.mxu0 0.0
      %2188 = vmatprep.subr.mxu0 0.0
      %2189 = vmatpush1.msra.mxu0 0.0
      %2190 = vmatprep.subr.mxu0 0.0
      %2191 = vmatpush1.msra.mxu0 0.0
      %2192 = vmatprep.subr.mxu0 0.0
      %2193 = vmatpush1.msra.mxu0 0.0
      %2194 = vmatprep.subr.mxu0 0.0
      %2195 = vmatpush1.msra.mxu0 0.0
      %2196 = vmatprep.subr.mxu0 0.0
      %2197 = vmatpush1.msra.mxu0 0.0
      %2198 = vmatprep.subr.mxu0 0.0
      %2199 = vmatpush1.msra.mxu0 0.0
      %2200 = vmatprep.subr.mxu0 0.0
      %2201 = vmatpush1.msra.mxu0 0.0
      %2202 = vmatprep.mubr.f32.mxu0 0.0
      %2203 = vmatmul.mubr.f32.gmra.mrb[0].mxu0 %v1890
      %v2204 = vpop.f32.mrb[0].mxu0
      %v2205 = vadd.f32 0.0, %v2204
      %v2206 = vpop.f32.mrb[0].mxu0
      %2207 = vdwg.mxu0
      %v2208 = vadd.f32 %v2133, %v2205
      %v2209 = vld [vmem:[%s774] sm:$0xf]
      %v2211 = vsel %vm620, %v2209, 0
      %2213 = vmatprep.subr.mxu0 0.0
      %2214 = vmatpush1.msra.mxu0 %v2211
      %2215 = vmatprep.subr.mxu0 0.0
      %2216 = vmatpush1.msra.mxu0 0.0
      %2217 = vmatprep.subr.mxu0 0.0
      %2218 = vmatpush1.msra.mxu0 0.0
      %2219 = vmatprep.subr.mxu0 0.0
      %2220 = vmatpush1.msra.mxu0 0.0
      %2221 = vmatprep.subr.mxu0 0.0
      %2222 = vmatpush1.msra.mxu0 0.0
      %2223 = vmatprep.subr.mxu0 0.0
      %2224 = vmatpush1.msra.mxu0 0.0
      %2225 = vmatprep.subr.mxu0 0.0
      %2226 = vmatpush1.msra.mxu0 0.0
      %2227 = vmatprep.subr.mxu0 0.0
      %2228 = vmatpush1.msra.mxu0 0.0
      %2229 = vmatprep.subr.mxu0 0.0
      %2230 = vmatpush1.msra.mxu0 0.0
      %2231 = vmatprep.subr.mxu0 0.0
      %2232 = vmatpush1.msra.mxu0 0.0
      %2233 = vmatprep.subr.mxu0 0.0
      %2234 = vmatpush1.msra.mxu0 0.0
      %2235 = vmatprep.subr.mxu0 0.0
      %2236 = vmatpush1.msra.mxu0 0.0
      %2237 = vmatprep.subr.mxu0 0.0
      %2238 = vmatpush1.msra.mxu0 0.0
      %2239 = vmatprep.subr.mxu0 0.0
      %2240 = vmatpush1.msra.mxu0 0.0
      %2241 = vmatprep.subr.mxu0 0.0
      %2242 = vmatpush1.msra.mxu0 0.0
      %2243 = vmatprep.subr.mxu0 0.0
      %2244 = vmatpush1.msra.mxu0 0.0
      %2245 = vmatprep.subr.mxu0 0.0
      %2246 = vmatpush1.msra.mxu0 0.0
      %2247 = vmatprep.subr.mxu0 0.0
      %2248 = vmatpush1.msra.mxu0 0.0
      %2249 = vmatprep.subr.mxu0 0.0
      %2250 = vmatpush1.msra.mxu0 0.0
      %2251 = vmatprep.subr.mxu0 0.0
      %2252 = vmatpush1.msra.mxu0 0.0
      %2253 = vmatprep.subr.mxu0 0.0
      %2254 = vmatpush1.msra.mxu0 0.0
      %2255 = vmatprep.subr.mxu0 0.0
      %2256 = vmatpush1.msra.mxu0 0.0
      %2257 = vmatprep.subr.mxu0 0.0
      %2258 = vmatpush1.msra.mxu0 0.0
      %2259 = vmatprep.subr.mxu0 0.0
      %2260 = vmatpush1.msra.mxu0 0.0
      %2261 = vmatprep.subr.mxu0 0.0
      %2262 = vmatpush1.msra.mxu0 0.0
      %2263 = vmatprep.subr.mxu0 0.0
      %2264 = vmatpush1.msra.mxu0 0.0
      %2265 = vmatprep.subr.mxu0 0.0
      %2266 = vmatpush1.msra.mxu0 0.0
      %2267 = vmatprep.subr.mxu0 0.0
      %2268 = vmatpush1.msra.mxu0 0.0
      %2269 = vmatprep.subr.mxu0 0.0
      %2270 = vmatpush1.msra.mxu0 0.0
      %2271 = vmatprep.subr.mxu0 0.0
      %2272 = vmatpush1.msra.mxu0 0.0
      %2273 = vmatprep.subr.mxu0 0.0
      %2274 = vmatpush1.msra.mxu0 0.0
      %2275 = vmatprep.subr.mxu0 0.0
      %2276 = vmatpush1.msra.mxu0 0.0
      %2277 = vmatprep.mubr.f32.mxu0 0.0
      %2278 = vmatmul.mubr.f32.gmra.mrb[0].mxu0 %v1971
      %v2279 = vpop.f32.mrb[0].mxu0
      %v2280 = vadd.f32 0.0, %v2279
      %v2281 = vpop.f32.mrb[0].mxu0
      %2282 = vdwg.mxu0
      %v2283 = vadd.f32 %v2208, %v2280
      %v2284 = vld [vmem:[%s857] sm:$0xf]
      %v2286 = vsel %vm616, %v2050, 0
      %v2289 = vsel %vm620, %v2284, 0
      %2291 = vmatprep.subr.mxu0 0.0
      %2292 = vmatpush1.msra.mxu0 %v2289
      %2293 = vmatprep.subr.mxu0 0.0
      %2294 = vmatpush1.msra.mxu0 0.0
      %2295 = vmatprep.subr.mxu0 0.0
      %2296 = vmatpush1.msra.mxu0 0.0
      %2297 = vmatprep.subr.mxu0 0.0
      %2298 = vmatpush1.msra.mxu0 0.0
      %2299 = vmatprep.subr.mxu0 0.0
      %2300 = vmatpush1.msra.mxu0 0.0
      %2301 = vmatprep.subr.mxu0 0.0
      %2302 = vmatpush1.msra.mxu0 0.0
      %2303 = vmatprep.subr.mxu0 0.0
      %2304 = vmatpush1.msra.mxu0 0.0
      %2305 = vmatprep.subr.mxu0 0.0
      %2306 = vmatpush1.msra.mxu0 0.0
      %2307 = vmatprep.subr.mxu0 0.0
      %2308 = vmatpush1.msra.mxu0 0.0
      %2309 = vmatprep.subr.mxu0 0.0
      %2310 = vmatpush1.msra.mxu0 0.0
      %2311 = vmatprep.subr.mxu0 0.0
      %2312 = vmatpush1.msra.mxu0 0.0
      %2313 = vmatprep.subr.mxu0 0.0
      %2314 = vmatpush1.msra.mxu0 0.0
      %2315 = vmatprep.subr.mxu0 0.0
      %2316 = vmatpush1.msra.mxu0 0.0
      %2317 = vmatprep.subr.mxu0 0.0
      %2318 = vmatpush1.msra.mxu0 0.0
      %2319 = vmatprep.subr.mxu0 0.0
      %2320 = vmatpush1.msra.mxu0 0.0
      %2321 = vmatprep.subr.mxu0 0.0
      %2322 = vmatpush1.msra.mxu0 0.0
      %2323 = vmatprep.subr.mxu0 0.0
      %2324 = vmatpush1.msra.mxu0 0.0
      %2325 = vmatprep.subr.mxu0 0.0
      %2326 = vmatpush1.msra.mxu0 0.0
      %2327 = vmatprep.subr.mxu0 0.0
      %2328 = vmatpush1.msra.mxu0 0.0
      %2329 = vmatprep.subr.mxu0 0.0
      %2330 = vmatpush1.msra.mxu0 0.0
      %2331 = vmatprep.subr.mxu0 0.0
      %2332 = vmatpush1.msra.mxu0 0.0
      %2333 = vmatprep.subr.mxu0 0.0
      %2334 = vmatpush1.msra.mxu0 0.0
      %2335 = vmatprep.subr.mxu0 0.0
      %2336 = vmatpush1.msra.mxu0 0.0
      %2337 = vmatprep.subr.mxu0 0.0
      %2338 = vmatpush1.msra.mxu0 0.0
      %2339 = vmatprep.subr.mxu0 0.0
      %2340 = vmatpush1.msra.mxu0 0.0
      %2341 = vmatprep.subr.mxu0 0.0
      %2342 = vmatpush1.msra.mxu0 0.0
      %2343 = vmatprep.subr.mxu0 0.0
      %2344 = vmatpush1.msra.mxu0 0.0
      %2345 = vmatprep.subr.mxu0 0.0
      %2346 = vmatpush1.msra.mxu0 0.0
      %2347 = vmatprep.subr.mxu0 0.0
      %2348 = vmatpush1.msra.mxu0 0.0
      %2349 = vmatprep.subr.mxu0 0.0
      %2350 = vmatpush1.msra.mxu0 0.0
      %2351 = vmatprep.subr.mxu0 0.0
      %2352 = vmatpush1.msra.mxu0 0.0
      %2353 = vmatprep.subr.mxu0 0.0
      %2354 = vmatpush1.msra.mxu0 0.0
      %2355 = vmatprep.mubr.f32.mxu0 0.0
      %2356 = vmatmul.mubr.f32.gmra.mrb[0].mxu0 %v2286
      %v2357 = vpop.f32.mrb[0].mxu0
      %v2358 = vadd.f32 0.0, %v2357
      %v2359 = vpop.f32.mrb[0].mxu0
      %2360 = vdwg.mxu0
      %v2361 = vadd.f32 %v2283, %v2358
      %v2362 = vld [vmem:[%s936] sm:$0xf]
      %v2364 = vsel %vm616, %v2053, 0
      %v2367 = vsel %vm620, %v2362, 0
      %2369 = vmatprep.subr.mxu0 0.0
      %2370 = vmatpush1.msra.mxu0 %v2367
      %2371 = vmatprep.subr.mxu0 0.0
      %2372 = vmatpush1.msra.mxu0 0.0
      %2373 = vmatprep.subr.mxu0 0.0
      %2374 = vmatpush1.msra.mxu0 0.0
      %2375 = vmatprep.subr.mxu0 0.0
      %2376 = vmatpush1.msra.mxu0 0.0
      %2377 = vmatprep.subr.mxu0 0.0
      %2378 = vmatpush1.msra.mxu0 0.0
      %2379 = vmatprep.subr.mxu0 0.0
      %2380 = vmatpush1.msra.mxu0 0.0
      %2381 = vmatprep.subr.mxu0 0.0
      %2382 = vmatpush1.msra.mxu0 0.0
      %2383 = vmatprep.subr.mxu0 0.0
      %2384 = vmatpush1.msra.mxu0 0.0
      %2385 = vmatprep.subr.mxu0 0.0
      %2386 = vmatpush1.msra.mxu0 0.0
      %2387 = vmatprep.subr.mxu0 0.0
      %2388 = vmatpush1.msra.mxu0 0.0
      %2389 = vmatprep.subr.mxu0 0.0
      %2390 = vmatpush1.msra.mxu0 0.0
      %2391 = vmatprep.subr.mxu0 0.0
      %2392 = vmatpush1.msra.mxu0 0.0
      %2393 = vmatprep.subr.mxu0 0.0
      %2394 = vmatpush1.msra.mxu0 0.0
      %2395 = vmatprep.subr.mxu0 0.0
      %2396 = vmatpush1.msra.mxu0 0.0
      %2397 = vmatprep.subr.mxu0 0.0
      %2398 = vmatpush1.msra.mxu0 0.0
      %2399 = vmatprep.subr.mxu0 0.0
      %2400 = vmatpush1.msra.mxu0 0.0
      %2401 = vmatprep.subr.mxu0 0.0
      %2402 = vmatpush1.msra.mxu0 0.0
      %2403 = vmatprep.subr.mxu0 0.0
      %2404 = vmatpush1.msra.mxu0 0.0
      %2405 = vmatprep.subr.mxu0 0.0
      %2406 = vmatpush1.msra.mxu0 0.0
      %2407 = vmatprep.subr.mxu0 0.0
      %2408 = vmatpush1.msra.mxu0 0.0
      %2409 = vmatprep.subr.mxu0 0.0
      %2410 = vmatpush1.msra.mxu0 0.0
      %2411 = vmatprep.subr.mxu0 0.0
      %2412 = vmatpush1.msra.mxu0 0.0
      %2413 = vmatprep.subr.mxu0 0.0
      %2414 = vmatpush1.msra.mxu0 0.0
      %2415 = vmatprep.subr.mxu0 0.0
      %2416 = vmatpush1.msra.mxu0 0.0
      %2417 = vmatprep.subr.mxu0 0.0
      %2418 = vmatpush1.msra.mxu0 0.0
      %2419 = vmatprep.subr.mxu0 0.0
      %2420 = vmatpush1.msra.mxu0 0.0
      %2421 = vmatprep.subr.mxu0 0.0
      %2422 = vmatpush1.msra.mxu0 0.0
      %2423 = vmatprep.subr.mxu0 0.0
      %2424 = vmatpush1.msra.mxu0 0.0
      %2425 = vmatprep.subr.mxu0 0.0
      %2426 = vmatpush1.msra.mxu0 0.0
      %2427 = vmatprep.subr.mxu0 0.0
      %2428 = vmatpush1.msra.mxu0 0.0
      %2429 = vmatprep.subr.mxu0 0.0
      %2430 = vmatpush1.msra.mxu0 0.0
      %2431 = vmatprep.subr.mxu0 0.0
      %2432 = vmatpush1.msra.mxu0 0.0
      %2433 = vmatprep.mubr.f32.mxu0 0.0
      %2434 = vmatmul.mubr.f32.gmra.mrb[0].mxu0 %v2364
      %v2435 = vpop.f32.mrb[0].mxu0
      %v2436 = vadd.f32 0.0, %v2435
      %v2437 = vpop.f32.mrb[0].mxu0
      %2438 = vdwg.mxu0
      %v2439 = vadd.f32 %v2361, %v2436
      %v2440 = vld [vmem:[%s1015] sm:$0xf]
      %v2442 = vrot.slane %v2050, 1
      %v2443 = vrot.slane %v2051, 1
      %v2444 = vsel %vm777, %v2442, %v2443
      %v2445 = vsel %vm616, %v2444, 0
      %v2448 = vsel %vm620, %v2440, 0
      %2450 = vmatprep.subr.mxu0 0.0
      %2451 = vmatpush1.msra.mxu0 %v2448
      %2452 = vmatprep.subr.mxu0 0.0
      %2453 = vmatpush1.msra.mxu0 0.0
      %2454 = vmatprep.subr.mxu0 0.0
      %2455 = vmatpush1.msra.mxu0 0.0
      %2456 = vmatprep.subr.mxu0 0.0
      %2457 = vmatpush1.msra.mxu0 0.0
      %2458 = vmatprep.subr.mxu0 0.0
      %2459 = vmatpush1.msra.mxu0 0.0
      %2460 = vmatprep.subr.mxu0 0.0
      %2461 = vmatpush1.msra.mxu0 0.0
      %2462 = vmatprep.subr.mxu0 0.0
      %2463 = vmatpush1.msra.mxu0 0.0
      %2464 = vmatprep.subr.mxu0 0.0
      %2465 = vmatpush1.msra.mxu0 0.0
      %2466 = vmatprep.subr.mxu0 0.0
      %2467 = vmatpush1.msra.mxu0 0.0
      %2468 = vmatprep.subr.mxu0 0.0
      %2469 = vmatpush1.msra.mxu0 0.0
      %2470 = vmatprep.subr.mxu0 0.0
      %2471 = vmatpush1.msra.mxu0 0.0
      %2472 = vmatprep.subr.mxu0 0.0
      %2473 = vmatpush1.msra.mxu0 0.0
      %2474 = vmatprep.subr.mxu0 0.0
      %2475 = vmatpush1.msra.mxu0 0.0
      %2476 = vmatprep.subr.mxu0 0.0
      %2477 = vmatpush1.msra.mxu0 0.0
      %2478 = vmatprep.subr.mxu0 0.0
      %2479 = vmatpush1.msra.mxu0 0.0
      %2480 = vmatprep.subr.mxu0 0.0
      %2481 = vmatpush1.msra.mxu0 0.0
      %2482 = vmatprep.subr.mxu0 0.0
      %2483 = vmatpush1.msra.mxu0 0.0
      %2484 = vmatprep.subr.mxu0 0.0
      %2485 = vmatpush1.msra.mxu0 0.0
      %2486 = vmatprep.subr.mxu0 0.0
      %2487 = vmatpush1.msra.mxu0 0.0
      %2488 = vmatprep.subr.mxu0 0.0
      %2489 = vmatpush1.msra.mxu0 0.0
      %2490 = vmatprep.subr.mxu0 0.0
      %2491 = vmatpush1.msra.mxu0 0.0
      %2492 = vmatprep.subr.mxu0 0.0
      %2493 = vmatpush1.msra.mxu0 0.0
      %2494 = vmatprep.subr.mxu0 0.0
      %2495 = vmatpush1.msra.mxu0 0.0
      %2496 = vmatprep.subr.mxu0 0.0
      %2497 = vmatpush1.msra.mxu0 0.0
      %2498 = vmatprep.subr.mxu0 0.0
      %2499 = vmatpush1.msra.mxu0 0.0
      %2500 = vmatprep.subr.mxu0 0.0
      %2501 = vmatpush1.msra.mxu0 0.0
      %2502 = vmatprep.subr.mxu0 0.0
      %2503 = vmatpush1.msra.mxu0 0.0
      %2504 = vmatprep.subr.mxu0 0.0
      %2505 = vmatpush1.msra.mxu0 0.0
      %2506 = vmatprep.subr.mxu0 0.0
      %2507 = vmatpush1.msra.mxu0 0.0
      %2508 = vmatprep.subr.mxu0 0.0
      %2509 = vmatpush1.msra.mxu0 0.0
      %2510 = vmatprep.subr.mxu0 0.0
      %2511 = vmatpush1.msra.mxu0 0.0
      %2512 = vmatprep.subr.mxu0 0.0
      %2513 = vmatpush1.msra.mxu0 0.0
      %2514 = vmatprep.mubr.f32.mxu0 0.0
      %2515 = vmatmul.mubr.f32.gmra.mrb[0].mxu0 %v2445
      %v2516 = vpop.f32.mrb[0].mxu0
      %v2517 = vadd.f32 0.0, %v2516
      %v2518 = vpop.f32.mrb[0].mxu0
      %2519 = vdwg.mxu0
      %v2520 = vadd.f32 %v2439, %v2517
      %v2521 = vld [vmem:[%s1097] sm:$0xf]
      %v2523 = vsel %vm616, %v2055, 0
      %v2526 = vsel %vm620, %v2521, 0
      %2528 = vmatprep.subr.mxu0 0.0
      %2529 = vmatpush1.msra.mxu0 %v2526
      %2530 = vmatprep.subr.mxu0 0.0
      %2531 = vmatpush1.msra.mxu0 0.0
      %2532 = vmatprep.subr.mxu0 0.0
      %2533 = vmatpush1.msra.mxu0 0.0
      %2534 = vmatprep.subr.mxu0 0.0
      %2535 = vmatpush1.msra.mxu0 0.0
      %2536 = vmatprep.subr.mxu0 0.0
      %2537 = vmatpush1.msra.mxu0 0.0
      %2538 = vmatprep.subr.mxu0 0.0
      %2539 = vmatpush1.msra.mxu0 0.0
      %2540 = vmatprep.subr.mxu0 0.0
      %2541 = vmatpush1.msra.mxu0 0.0
      %2542 = vmatprep.subr.mxu0 0.0
      %2543 = vmatpush1.msra.mxu0 0.0
      %2544 = vmatprep.subr.mxu0 0.0
      %2545 = vmatpush1.msra.mxu0 0.0
      %2546 = vmatprep.subr.mxu0 0.0
      %2547 = vmatpush1.msra.mxu0 0.0
      %2548 = vmatprep.subr.mxu0 0.0
      %2549 = vmatpush1.msra.mxu0 0.0
      %2550 = vmatprep.subr.mxu0 0.0
      %2551 = vmatpush1.msra.mxu0 0.0
      %2552 = vmatprep.subr.mxu0 0.0
      %2553 = vmatpush1.msra.mxu0 0.0
      %2554 = vmatprep.subr.mxu0 0.0
      %2555 = vmatpush1.msra.mxu0 0.0
      %2556 = vmatprep.subr.mxu0 0.0
      %2557 = vmatpush1.msra.mxu0 0.0
      %2558 = vmatprep.subr.mxu0 0.0
      %2559 = vmatpush1.msra.mxu0 0.0
      %2560 = vmatprep.subr.mxu0 0.0
      %2561 = vmatpush1.msra.mxu0 0.0
      %2562 = vmatprep.subr.mxu0 0.0
      %2563 = vmatpush1.msra.mxu0 0.0
      %2564 = vmatprep.subr.mxu0 0.0
      %2565 = vmatpush1.msra.mxu0 0.0
      %2566 = vmatprep.subr.mxu0 0.0
      %2567 = vmatpush1.msra.mxu0 0.0
      %2568 = vmatprep.subr.mxu0 0.0
      %2569 = vmatpush1.msra.mxu0 0.0
      %2570 = vmatprep.subr.mxu0 0.0
      %2571 = vmatpush1.msra.mxu0 0.0
      %2572 = vmatprep.subr.mxu0 0.0
      %2573 = vmatpush1.msra.mxu0 0.0
      %2574 = vmatprep.subr.mxu0 0.0
      %2575 = vmatpush1.msra.mxu0 0.0
      %2576 = vmatprep.subr.mxu0 0.0
      %2577 = vmatpush1.msra.mxu0 0.0
      %2578 = vmatprep.subr.mxu0 0.0
      %2579 = vmatpush1.msra.mxu0 0.0
      %2580 = vmatprep.subr.mxu0 0.0
      %2581 = vmatpush1.msra.mxu0 0.0
      %2582 = vmatprep.subr.mxu0 0.0
      %2583 = vmatpush1.msra.mxu0 0.0
      %2584 = vmatprep.subr.mxu0 0.0
      %2585 = vmatpush1.msra.mxu0 0.0
      %2586 = vmatprep.subr.mxu0 0.0
      %2587 = vmatpush1.msra.mxu0 0.0
      %2588 = vmatprep.subr.mxu0 0.0
      %2589 = vmatpush1.msra.mxu0 0.0
      %2590 = vmatprep.subr.mxu0 0.0
      %2591 = vmatpush1.msra.mxu0 0.0
      %2592 = vmatprep.mubr.f32.mxu0 0.0
      %2593 = vmatmul.mubr.f32.gmra.mrb[0].mxu0 %v2523
      %v2594 = vpop.f32.mrb[0].mxu0
      %v2595 = vadd.f32 0.0, %v2594
      %v2596 = vpop.f32.mrb[0].mxu0
      %2597 = vdwg.mxu0
      %v2598 = vadd.f32 %v2520, %v2595
      %v2599 = vld [vmem:[%s1176] sm:$0xf]
      %v2601 = vsel %vm616, %v2058, 0
      %v2604 = vsel %vm620, %v2599, 0
      %2606 = vmatprep.subr.mxu0 0.0
      %2607 = vmatpush1.msra.mxu0 %v2604
      %2608 = vmatprep.subr.mxu0 0.0
      %2609 = vmatpush1.msra.mxu0 0.0
      %2610 = vmatprep.subr.mxu0 0.0
      %2611 = vmatpush1.msra.mxu0 0.0
      %2612 = vmatprep.subr.mxu0 0.0
      %2613 = vmatpush1.msra.mxu0 0.0
      %2614 = vmatprep.subr.mxu0 0.0
      %2615 = vmatpush1.msra.mxu0 0.0
      %2616 = vmatprep.subr.mxu0 0.0
      %2617 = vmatpush1.msra.mxu0 0.0
      %2618 = vmatprep.subr.mxu0 0.0
      %2619 = vmatpush1.msra.mxu0 0.0
      %2620 = vmatprep.subr.mxu0 0.0
      %2621 = vmatpush1.msra.mxu0 0.0
      %2622 = vmatprep.subr.mxu0 0.0
      %2623 = vmatpush1.msra.mxu0 0.0
      %2624 = vmatprep.subr.mxu0 0.0
      %2625 = vmatpush1.msra.mxu0 0.0
      %2626 = vmatprep.subr.mxu0 0.0
      %2627 = vmatpush1.msra.mxu0 0.0
      %2628 = vmatprep.subr.mxu0 0.0
      %2629 = vmatpush1.msra.mxu0 0.0
      %2630 = vmatprep.subr.mxu0 0.0
      %2631 = vmatpush1.msra.mxu0 0.0
      %2632 = vmatprep.subr.mxu0 0.0
      %2633 = vmatpush1.msra.mxu0 0.0
      %2634 = vmatprep.subr.mxu0 0.0
      %2635 = vmatpush1.msra.mxu0 0.0
      %2636 = vmatprep.subr.mxu0 0.0
      %2637 = vmatpush1.msra.mxu0 0.0
      %2638 = vmatprep.subr.mxu0 0.0
      %2639 = vmatpush1.msra.mxu0 0.0
      %2640 = vmatprep.subr.mxu0 0.0
      %2641 = vmatpush1.msra.mxu0 0.0
      %2642 = vmatprep.subr.mxu0 0.0
      %2643 = vmatpush1.msra.mxu0 0.0
      %2644 = vmatprep.subr.mxu0 0.0
      %2645 = vmatpush1.msra.mxu0 0.0
      %2646 = vmatprep.subr.mxu0 0.0
      %2647 = vmatpush1.msra.mxu0 0.0
      %2648 = vmatprep.subr.mxu0 0.0
      %2649 = vmatpush1.msra.mxu0 0.0
      %2650 = vmatprep.subr.mxu0 0.0
      %2651 = vmatpush1.msra.mxu0 0.0
      %2652 = vmatprep.subr.mxu0 0.0
      %2653 = vmatpush1.msra.mxu0 0.0
      %2654 = vmatprep.subr.mxu0 0.0
      %2655 = vmatpush1.msra.mxu0 0.0
      %2656 = vmatprep.subr.mxu0 0.0
      %2657 = vmatpush1.msra.mxu0 0.0
      %2658 = vmatprep.subr.mxu0 0.0
      %2659 = vmatpush1.msra.mxu0 0.0
      %2660 = vmatprep.subr.mxu0 0.0
      %2661 = vmatpush1.msra.mxu0 0.0
      %2662 = vmatprep.subr.mxu0 0.0
      %2663 = vmatpush1.msra.mxu0 0.0
      %2664 = vmatprep.subr.mxu0 0.0
      %2665 = vmatpush1.msra.mxu0 0.0
      %2666 = vmatprep.subr.mxu0 0.0
      %2667 = vmatpush1.msra.mxu0 0.0
      %2668 = vmatprep.subr.mxu0 0.0
      %2669 = vmatpush1.msra.mxu0 0.0
      %2670 = vmatprep.mubr.f32.mxu0 0.0
      %2671 = vmatmul.mubr.f32.gmra.mrb[0].mxu0 %v2601
      %v2672 = vpop.f32.mrb[0].mxu0
      %v2673 = vadd.f32 0.0, %v2672
      %v2674 = vpop.f32.mrb[0].mxu0
      %2675 = vdwg.mxu0
      %v2676 = vadd.f32 %v2598, %v2673
      %v2677 = vld [vmem:[%s1255] sm:$0xf]
      %v2679 = vrot.slane %v2055, 1
      %v2680 = vrot.slane %v2056, 1
      %v2681 = vsel %vm777, %v2679, %v2680
      %v2682 = vsel %vm616, %v2681, 0
      %v2685 = vsel %vm620, %v2677, 0
      %2687 = vmatprep.subr.mxu0 0.0
      %2688 = vmatpush1.msra.mxu0 %v2685
      %2689 = vmatprep.subr.mxu0 0.0
      %2690 = vmatpush1.msra.mxu0 0.0
      %2691 = vmatprep.subr.mxu0 0.0
      %2692 = vmatpush1.msra.mxu0 0.0
      %2693 = vmatprep.subr.mxu0 0.0
      %2694 = vmatpush1.msra.mxu0 0.0
      %2695 = vmatprep.subr.mxu0 0.0
      %2696 = vmatpush1.msra.mxu0 0.0
      %2697 = vmatprep.subr.mxu0 0.0
      %2698 = vmatpush1.msra.mxu0 0.0
      %2699 = vmatprep.subr.mxu0 0.0
      %2700 = vmatpush1.msra.mxu0 0.0
      %2701 = vmatprep.subr.mxu0 0.0
      %2702 = vmatpush1.msra.mxu0 0.0
      %2703 = vmatprep.subr.mxu0 0.0
      %2704 = vmatpush1.msra.mxu0 0.0
      %2705 = vmatprep.subr.mxu0 0.0
      %2706 = vmatpush1.msra.mxu0 0.0
      %2707 = vmatprep.subr.mxu0 0.0
      %2708 = vmatpush1.msra.mxu0 0.0
      %2709 = vmatprep.subr.mxu0 0.0
      %2710 = vmatpush1.msra.mxu0 0.0
      %2711 = vmatprep.subr.mxu0 0.0
      %2712 = vmatpush1.msra.mxu0 0.0
      %2713 = vmatprep.subr.mxu0 0.0
      %2714 = vmatpush1.msra.mxu0 0.0
      %2715 = vmatprep.subr.mxu0 0.0
      %2716 = vmatpush1.msra.mxu0 0.0
      %2717 = vmatprep.subr.mxu0 0.0
      %2718 = vmatpush1.msra.mxu0 0.0
      %2719 = vmatprep.subr.mxu0 0.0
      %2720 = vmatpush1.msra.mxu0 0.0
      %2721 = vmatprep.subr.mxu0 0.0
      %2722 = vmatpush1.msra.mxu0 0.0
      %2723 = vmatprep.subr.mxu0 0.0
      %2724 = vmatpush1.msra.mxu0 0.0
      %2725 = vmatprep.subr.mxu0 0.0
      %2726 = vmatpush1.msra.mxu0 0.0
      %2727 = vmatprep.subr.mxu0 0.0
      %2728 = vmatpush1.msra.mxu0 0.0
      %2729 = vmatprep.subr.mxu0 0.0
      %2730 = vmatpush1.msra.mxu0 0.0
      %2731 = vmatprep.subr.mxu0 0.0
      %2732 = vmatpush1.msra.mxu0 0.0
      %2733 = vmatprep.subr.mxu0 0.0
      %2734 = vmatpush1.msra.mxu0 0.0
      %2735 = vmatprep.subr.mxu0 0.0
      %2736 = vmatpush1.msra.mxu0 0.0
      %2737 = vmatprep.subr.mxu0 0.0
      %2738 = vmatpush1.msra.mxu0 0.0
      %2739 = vmatprep.subr.mxu0 0.0
      %2740 = vmatpush1.msra.mxu0 0.0
      %2741 = vmatprep.subr.mxu0 0.0
      %2742 = vmatpush1.msra.mxu0 0.0
      %2743 = vmatprep.subr.mxu0 0.0
      %2744 = vmatpush1.msra.mxu0 0.0
      %2745 = vmatprep.subr.mxu0 0.0
      %2746 = vmatpush1.msra.mxu0 0.0
      %2747 = vmatprep.subr.mxu0 0.0
      %2748 = vmatpush1.msra.mxu0 0.0
      %2749 = vmatprep.subr.mxu0 0.0
      %2750 = vmatpush1.msra.mxu0 0.0
      %2751 = vmatprep.mubr.f32.mxu0 0.0
      %2752 = vmatmul.mubr.f32.gmra.mrb[0].mxu0 %v2682
      %v2753 = vpop.f32.mrb[0].mxu0
      %v2754 = vadd.f32 0.0, %v2753
      %v2755 = vpop.f32.mrb[0].mxu0
      %2756 = vdwg.mxu0
      %v2757 = vadd.f32 %v2676, %v2754
      %s2758 = scalar_lea.vmem %s595, 16
      %2759 = vst.msk [vmem:[%s2758] sm:$0xff] %vm616, %v2757
      %s2760 = scalar_lea.vmem %s575, 48
      %v2761 = vld [vmem:[%s2760] sm:$0xff]
      %v2762 = vld [vmem:[%s2760 + $0x8] sm:$0xff]
      %s2763 = scalar_lea.vmem %s585, 24
      %v2764 = vld [vmem:[%s2763] sm:$0xff]
      %s2765 = scalar_lea.vmem %s516, 64
      %v2766 = vld [vmem:[%s2765] sm:$0xff]
      %v2767 = vld [vmem:[%s2765 + $0x8] sm:$0xff]
      %s2768 = scalar_lea.vmem %s548, 32
      %v2769 = vld [vmem:[%s2768] sm:$0xff]
      %v2770 = vld [vmem:[%s6] sm:$0xf]
      %v2772 = vsel %vm620, %v2770, 0
      %2774 = vmatprep.subr.mxu0 0.0
      %2775 = vmatpush1.msra.mxu0 %v2772
      %2776 = vmatprep.subr.mxu0 0.0
      %2777 = vmatpush1.msra.mxu0 0.0
      %2778 = vmatprep.subr.mxu0 0.0
      %2779 = vmatpush1.msra.mxu0 0.0
      %2780 = vmatprep.subr.mxu0 0.0
      %2781 = vmatpush1.msra.mxu0 0.0
      %2782 = vmatprep.subr.mxu0 0.0
      %2783 = vmatpush1.msra.mxu0 0.0
      %2784 = vmatprep.subr.mxu0 0.0
      %2785 = vmatpush1.msra.mxu0 0.0
      %2786 = vmatprep.subr.mxu0 0.0
      %2787 = vmatpush1.msra.mxu0 0.0
      %2788 = vmatprep.subr.mxu0 0.0
      %2789 = vmatpush1.msra.mxu0 0.0
      %2790 = vmatprep.subr.mxu0 0.0
      %2791 = vmatpush1.msra.mxu0 0.0
      %2792 = vmatprep.subr.mxu0 0.0
      %2793 = vmatpush1.msra.mxu0 0.0
      %2794 = vmatprep.subr.mxu0 0.0
      %2795 = vmatpush1.msra.mxu0 0.0
      %2796 = vmatprep.subr.mxu0 0.0
      %2797 = vmatpush1.msra.mxu0 0.0
      %2798 = vmatprep.subr.mxu0 0.0
      %2799 = vmatpush1.msra.mxu0 0.0
      %2800 = vmatprep.subr.mxu0 0.0
      %2801 = vmatpush1.msra.mxu0 0.0
      %2802 = vmatprep.subr.mxu0 0.0
      %2803 = vmatpush1.msra.mxu0 0.0
      %2804 = vmatprep.subr.mxu0 0.0
      %2805 = vmatpush1.msra.mxu0 0.0
      %2806 = vmatprep.subr.mxu0 0.0
      %2807 = vmatpush1.msra.mxu0 0.0
      %2808 = vmatprep.subr.mxu0 0.0
      %2809 = vmatpush1.msra.mxu0 0.0
      %2810 = vmatprep.subr.mxu0 0.0
      %2811 = vmatpush1.msra.mxu0 0.0
      %2812 = vmatprep.subr.mxu0 0.0
      %2813 = vmatpush1.msra.mxu0 0.0
      %2814 = vmatprep.subr.mxu0 0.0
      %2815 = vmatpush1.msra.mxu0 0.0
      %2816 = vmatprep.subr.mxu0 0.0
      %2817 = vmatpush1.msra.mxu0 0.0
      %2818 = vmatprep.subr.mxu0 0.0
      %2819 = vmatpush1.msra.mxu0 0.0
      %2820 = vmatprep.subr.mxu0 0.0
      %2821 = vmatpush1.msra.mxu0 0.0
      %2822 = vmatprep.subr.mxu0 0.0
      %2823 = vmatpush1.msra.mxu0 0.0
      %2824 = vmatprep.subr.mxu0 0.0
      %2825 = vmatpush1.msra.mxu0 0.0
      %2826 = vmatprep.subr.mxu0 0.0
      %2827 = vmatpush1.msra.mxu0 0.0
      %2828 = vmatprep.subr.mxu0 0.0
      %2829 = vmatpush1.msra.mxu0 0.0
      %2830 = vmatprep.subr.mxu0 0.0
      %2831 = vmatpush1.msra.mxu0 0.0
      %2832 = vmatprep.subr.mxu0 0.0
      %2833 = vmatpush1.msra.mxu0 0.0
      %2834 = vmatprep.subr.mxu0 0.0
      %2835 = vmatpush1.msra.mxu0 0.0
      %2836 = vmatprep.subr.mxu0 0.0
      %2837 = vmatpush1.msra.mxu0 0.0
      %2838 = vmatprep.mubr.f32.mxu0 0.0
      %2839 = vmatmul.mubr.f32.gmra.mrb[0].mxu0 %v2523
      %v2840 = vpop.f32.mrb[0].mxu0
      %v2841 = vadd.f32 0.0, %v2840
      %v2842 = vpop.f32.mrb[0].mxu0
      %2843 = vdwg.mxu0
      %v2844 = vadd.f32 %v602, %v2841
      %v2845 = vld [vmem:[%s695] sm:$0xf]
      %v2847 = vsel %vm620, %v2845, 0
      %2849 = vmatprep.subr.mxu0 0.0
      %2850 = vmatpush1.msra.mxu0 %v2847
      %2851 = vmatprep.subr.mxu0 0.0
      %2852 = vmatpush1.msra.mxu0 0.0
      %2853 = vmatprep.subr.mxu0 0.0
      %2854 = vmatpush1.msra.mxu0 0.0
      %2855 = vmatprep.subr.mxu0 0.0
      %2856 = vmatpush1.msra.mxu0 0.0
      %2857 = vmatprep.subr.mxu0 0.0
      %2858 = vmatpush1.msra.mxu0 0.0
      %2859 = vmatprep.subr.mxu0 0.0
      %2860 = vmatpush1.msra.mxu0 0.0
      %2861 = vmatprep.subr.mxu0 0.0
      %2862 = vmatpush1.msra.mxu0 0.0
      %2863 = vmatprep.subr.mxu0 0.0
      %2864 = vmatpush1.msra.mxu0 0.0
      %2865 = vmatprep.subr.mxu0 0.0
      %2866 = vmatpush1.msra.mxu0 0.0
      %2867 = vmatprep.subr.mxu0 0.0
      %2868 = vmatpush1.msra.mxu0 0.0
      %2869 = vmatprep.subr.mxu0 0.0
      %2870 = vmatpush1.msra.mxu0 0.0
      %2871 = vmatprep.subr.mxu0 0.0
      %2872 = vmatpush1.msra.mxu0 0.0
      %2873 = vmatprep.subr.mxu0 0.0
      %2874 = vmatpush1.msra.mxu0 0.0
      %2875 = vmatprep.subr.mxu0 0.0
      %2876 = vmatpush1.msra.mxu0 0.0
      %2877 = vmatprep.subr.mxu0 0.0
      %2878 = vmatpush1.msra.mxu0 0.0
      %2879 = vmatprep.subr.mxu0 0.0
      %2880 = vmatpush1.msra.mxu0 0.0
      %2881 = vmatprep.subr.mxu0 0.0
      %2882 = vmatpush1.msra.mxu0 0.0
      %2883 = vmatprep.subr.mxu0 0.0
      %2884 = vmatpush1.msra.mxu0 0.0
      %2885 = vmatprep.subr.mxu0 0.0
      %2886 = vmatpush1.msra.mxu0 0.0
      %2887 = vmatprep.subr.mxu0 0.0
      %2888 = vmatpush1.msra.mxu0 0.0
      %2889 = vmatprep.subr.mxu0 0.0
      %2890 = vmatpush1.msra.mxu0 0.0
      %2891 = vmatprep.subr.mxu0 0.0
      %2892 = vmatpush1.msra.mxu0 0.0
      %2893 = vmatprep.subr.mxu0 0.0
      %2894 = vmatpush1.msra.mxu0 0.0
      %2895 = vmatprep.subr.mxu0 0.0
      %2896 = vmatpush1.msra.mxu0 0.0
      %2897 = vmatprep.subr.mxu0 0.0
      %2898 = vmatpush1.msra.mxu0 0.0
      %2899 = vmatprep.subr.mxu0 0.0
      %2900 = vmatpush1.msra.mxu0 0.0
      %2901 = vmatprep.subr.mxu0 0.0
      %2902 = vmatpush1.msra.mxu0 0.0
      %2903 = vmatprep.subr.mxu0 0.0
      %2904 = vmatpush1.msra.mxu0 0.0
      %2905 = vmatprep.subr.mxu0 0.0
      %2906 = vmatpush1.msra.mxu0 0.0
      %2907 = vmatprep.subr.mxu0 0.0
      %2908 = vmatpush1.msra.mxu0 0.0
      %2909 = vmatprep.subr.mxu0 0.0
      %2910 = vmatpush1.msra.mxu0 0.0
      %2911 = vmatprep.subr.mxu0 0.0
      %2912 = vmatpush1.msra.mxu0 0.0
      %2913 = vmatprep.mubr.f32.mxu0 0.0
      %2914 = vmatmul.mubr.f32.gmra.mrb[0].mxu0 %v2601
      %v2915 = vpop.f32.mrb[0].mxu0
      %v2916 = vadd.f32 0.0, %v2915
      %v2917 = vpop.f32.mrb[0].mxu0
      %2918 = vdwg.mxu0
      %v2919 = vadd.f32 %v2844, %v2916
      %v2920 = vld [vmem:[%s774] sm:$0xf]
      %v2922 = vsel %vm620, %v2920, 0
      %2924 = vmatprep.subr.mxu0 0.0
      %2925 = vmatpush1.msra.mxu0 %v2922
      %2926 = vmatprep.subr.mxu0 0.0
      %2927 = vmatpush1.msra.mxu0 0.0
      %2928 = vmatprep.subr.mxu0 0.0
      %2929 = vmatpush1.msra.mxu0 0.0
      %2930 = vmatprep.subr.mxu0 0.0
      %2931 = vmatpush1.msra.mxu0 0.0
      %2932 = vmatprep.subr.mxu0 0.0
      %2933 = vmatpush1.msra.mxu0 0.0
      %2934 = vmatprep.subr.mxu0 0.0
      %2935 = vmatpush1.msra.mxu0 0.0
      %2936 = vmatprep.subr.mxu0 0.0
      %2937 = vmatpush1.msra.mxu0 0.0
      %2938 = vmatprep.subr.mxu0 0.0
      %2939 = vmatpush1.msra.mxu0 0.0
      %2940 = vmatprep.subr.mxu0 0.0
      %2941 = vmatpush1.msra.mxu0 0.0
      %2942 = vmatprep.subr.mxu0 0.0
      %2943 = vmatpush1.msra.mxu0 0.0
      %2944 = vmatprep.subr.mxu0 0.0
      %2945 = vmatpush1.msra.mxu0 0.0
      %2946 = vmatprep.subr.mxu0 0.0
      %2947 = vmatpush1.msra.mxu0 0.0
      %2948 = vmatprep.subr.mxu0 0.0
      %2949 = vmatpush1.msra.mxu0 0.0
      %2950 = vmatprep.subr.mxu0 0.0
      %2951 = vmatpush1.msra.mxu0 0.0
      %2952 = vmatprep.subr.mxu0 0.0
      %2953 = vmatpush1.msra.mxu0 0.0
      %2954 = vmatprep.subr.mxu0 0.0
      %2955 = vmatpush1.msra.mxu0 0.0
      %2956 = vmatprep.subr.mxu0 0.0
      %2957 = vmatpush1.msra.mxu0 0.0
      %2958 = vmatprep.subr.mxu0 0.0
      %2959 = vmatpush1.msra.mxu0 0.0
      %2960 = vmatprep.subr.mxu0 0.0
      %2961 = vmatpush1.msra.mxu0 0.0
      %2962 = vmatprep.subr.mxu0 0.0
      %2963 = vmatpush1.msra.mxu0 0.0
      %2964 = vmatprep.subr.mxu0 0.0
      %2965 = vmatpush1.msra.mxu0 0.0
      %2966 = vmatprep.subr.mxu0 0.0
      %2967 = vmatpush1.msra.mxu0 0.0
      %2968 = vmatprep.subr.mxu0 0.0
      %2969 = vmatpush1.msra.mxu0 0.0
      %2970 = vmatprep.subr.mxu0 0.0
      %2971 = vmatpush1.msra.mxu0 0.0
      %2972 = vmatprep.subr.mxu0 0.0
      %2973 = vmatpush1.msra.mxu0 0.0
      %2974 = vmatprep.subr.mxu0 0.0
      %2975 = vmatpush1.msra.mxu0 0.0
      %2976 = vmatprep.subr.mxu0 0.0
      %2977 = vmatpush1.msra.mxu0 0.0
      %2978 = vmatprep.subr.mxu0 0.0
      %2979 = vmatpush1.msra.mxu0 0.0
      %2980 = vmatprep.subr.mxu0 0.0
      %2981 = vmatpush1.msra.mxu0 0.0
      %2982 = vmatprep.subr.mxu0 0.0
      %2983 = vmatpush1.msra.mxu0 0.0
      %2984 = vmatprep.subr.mxu0 0.0
      %2985 = vmatpush1.msra.mxu0 0.0
      %2986 = vmatprep.subr.mxu0 0.0
      %2987 = vmatpush1.msra.mxu0 0.0
      %2988 = vmatprep.mubr.f32.mxu0 0.0
      %2989 = vmatmul.mubr.f32.gmra.mrb[0].mxu0 %v2682
      %v2990 = vpop.f32.mrb[0].mxu0
      %v2991 = vadd.f32 0.0, %v2990
      %v2992 = vpop.f32.mrb[0].mxu0
      %2993 = vdwg.mxu0
      %v2994 = vadd.f32 %v2919, %v2991
      %v2995 = vld [vmem:[%s857] sm:$0xf]
      %v2997 = vsel %vm616, %v2761, 0
      %v3000 = vsel %vm620, %v2995, 0
      %3002 = vmatprep.subr.mxu0 0.0
      %3003 = vmatpush1.msra.mxu0 %v3000
      %3004 = vmatprep.subr.mxu0 0.0
      %3005 = vmatpush1.msra.mxu0 0.0
      %3006 = vmatprep.subr.mxu0 0.0
      %3007 = vmatpush1.msra.mxu0 0.0
      %3008 = vmatprep.subr.mxu0 0.0
      %3009 = vmatpush1.msra.mxu0 0.0
      %3010 = vmatprep.subr.mxu0 0.0
      %3011 = vmatpush1.msra.mxu0 0.0
      %3012 = vmatprep.subr.mxu0 0.0
      %3013 = vmatpush1.msra.mxu0 0.0
      %3014 = vmatprep.subr.mxu0 0.0
      %3015 = vmatpush1.msra.mxu0 0.0
      %3016 = vmatprep.subr.mxu0 0.0
      %3017 = vmatpush1.msra.mxu0 0.0
      %3018 = vmatprep.subr.mxu0 0.0
      %3019 = vmatpush1.msra.mxu0 0.0
      %3020 = vmatprep.subr.mxu0 0.0
      %3021 = vmatpush1.msra.mxu0 0.0
      %3022 = vmatprep.subr.mxu0 0.0
      %3023 = vmatpush1.msra.mxu0 0.0
      %3024 = vmatprep.subr.mxu0 0.0
      %3025 = vmatpush1.msra.mxu0 0.0
      %3026 = vmatprep.subr.mxu0 0.0
      %3027 = vmatpush1.msra.mxu0 0.0
      %3028 = vmatprep.subr.mxu0 0.0
      %3029 = vmatpush1.msra.mxu0 0.0
      %3030 = vmatprep.subr.mxu0 0.0
      %3031 = vmatpush1.msra.mxu0 0.0
      %3032 = vmatprep.subr.mxu0 0.0
      %3033 = vmatpush1.msra.mxu0 0.0
      %3034 = vmatprep.subr.mxu0 0.0
      %3035 = vmatpush1.msra.mxu0 0.0
      %3036 = vmatprep.subr.mxu0 0.0
      %3037 = vmatpush1.msra.mxu0 0.0
      %3038 = vmatprep.subr.mxu0 0.0
      %3039 = vmatpush1.msra.mxu0 0.0
      %3040 = vmatprep.subr.mxu0 0.0
      %3041 = vmatpush1.msra.mxu0 0.0
      %3042 = vmatprep.subr.mxu0 0.0
      %3043 = vmatpush1.msra.mxu0 0.0
      %3044 = vmatprep.subr.mxu0 0.0
      %3045 = vmatpush1.msra.mxu0 0.0
      %3046 = vmatprep.subr.mxu0 0.0
      %3047 = vmatpush1.msra.mxu0 0.0
      %3048 = vmatprep.subr.mxu0 0.0
      %3049 = vmatpush1.msra.mxu0 0.0
      %3050 = vmatprep.subr.mxu0 0.0
      %3051 = vmatpush1.msra.mxu0 0.0
      %3052 = vmatprep.subr.mxu0 0.0
      %3053 = vmatpush1.msra.mxu0 0.0
      %3054 = vmatprep.subr.mxu0 0.0
      %3055 = vmatpush1.msra.mxu0 0.0
      %3056 = vmatprep.subr.mxu0 0.0
      %3057 = vmatpush1.msra.mxu0 0.0
      %3058 = vmatprep.subr.mxu0 0.0
      %3059 = vmatpush1.msra.mxu0 0.0
      %3060 = vmatprep.subr.mxu0 0.0
      %3061 = vmatpush1.msra.mxu0 0.0
      %3062 = vmatprep.subr.mxu0 0.0
      %3063 = vmatpush1.msra.mxu0 0.0
      %3064 = vmatprep.subr.mxu0 0.0
      %3065 = vmatpush1.msra.mxu0 0.0
      %3066 = vmatprep.mubr.f32.mxu0 0.0
      %3067 = vmatmul.mubr.f32.gmra.mrb[0].mxu0 %v2997
      %v3068 = vpop.f32.mrb[0].mxu0
      %v3069 = vadd.f32 0.0, %v3068
      %v3070 = vpop.f32.mrb[0].mxu0
      %3071 = vdwg.mxu0
      %v3072 = vadd.f32 %v2994, %v3069
      %v3073 = vld [vmem:[%s936] sm:$0xf]
      %v3075 = vsel %vm616, %v2764, 0
      %v3078 = vsel %vm620, %v3073, 0
      %3080 = vmatprep.subr.mxu0 0.0
      %3081 = vmatpush1.msra.mxu0 %v3078
      %3082 = vmatprep.subr.mxu0 0.0
      %3083 = vmatpush1.msra.mxu0 0.0
      %3084 = vmatprep.subr.mxu0 0.0
      %3085 = vmatpush1.msra.mxu0 0.0
      %3086 = vmatprep.subr.mxu0 0.0
      %3087 = vmatpush1.msra.mxu0 0.0
      %3088 = vmatprep.subr.mxu0 0.0
      %3089 = vmatpush1.msra.mxu0 0.0
      %3090 = vmatprep.subr.mxu0 0.0
      %3091 = vmatpush1.msra.mxu0 0.0
      %3092 = vmatprep.subr.mxu0 0.0
      %3093 = vmatpush1.msra.mxu0 0.0
      %3094 = vmatprep.subr.mxu0 0.0
      %3095 = vmatpush1.msra.mxu0 0.0
      %3096 = vmatprep.subr.mxu0 0.0
      %3097 = vmatpush1.msra.mxu0 0.0
      %3098 = vmatprep.subr.mxu0 0.0
      %3099 = vmatpush1.msra.mxu0 0.0
      %3100 = vmatprep.subr.mxu0 0.0
      %3101 = vmatpush1.msra.mxu0 0.0
      %3102 = vmatprep.subr.mxu0 0.0
      %3103 = vmatpush1.msra.mxu0 0.0
      %3104 = vmatprep.subr.mxu0 0.0
      %3105 = vmatpush1.msra.mxu0 0.0
      %3106 = vmatprep.subr.mxu0 0.0
      %3107 = vmatpush1.msra.mxu0 0.0
      %3108 = vmatprep.subr.mxu0 0.0
      %3109 = vmatpush1.msra.mxu0 0.0
      %3110 = vmatprep.subr.mxu0 0.0
      %3111 = vmatpush1.msra.mxu0 0.0
      %3112 = vmatprep.subr.mxu0 0.0
      %3113 = vmatpush1.msra.mxu0 0.0
      %3114 = vmatprep.subr.mxu0 0.0
      %3115 = vmatpush1.msra.mxu0 0.0
      %3116 = vmatprep.subr.mxu0 0.0
      %3117 = vmatpush1.msra.mxu0 0.0
      %3118 = vmatprep.subr.mxu0 0.0
      %3119 = vmatpush1.msra.mxu0 0.0
      %3120 = vmatprep.subr.mxu0 0.0
      %3121 = vmatpush1.msra.mxu0 0.0
      %3122 = vmatprep.subr.mxu0 0.0
      %3123 = vmatpush1.msra.mxu0 0.0
      %3124 = vmatprep.subr.mxu0 0.0
      %3125 = vmatpush1.msra.mxu0 0.0
      %3126 = vmatprep.subr.mxu0 0.0
      %3127 = vmatpush1.msra.mxu0 0.0
      %3128 = vmatprep.subr.mxu0 0.0
      %3129 = vmatpush1.msra.mxu0 0.0
      %3130 = vmatprep.subr.mxu0 0.0
      %3131 = vmatpush1.msra.mxu0 0.0
      %3132 = vmatprep.subr.mxu0 0.0
      %3133 = vmatpush1.msra.mxu0 0.0
      %3134 = vmatprep.subr.mxu0 0.0
      %3135 = vmatpush1.msra.mxu0 0.0
      %3136 = vmatprep.subr.mxu0 0.0
      %3137 = vmatpush1.msra.mxu0 0.0
      %3138 = vmatprep.subr.mxu0 0.0
      %3139 = vmatpush1.msra.mxu0 0.0
      %3140 = vmatprep.subr.mxu0 0.0
      %3141 = vmatpush1.msra.mxu0 0.0
      %3142 = vmatprep.subr.mxu0 0.0
      %3143 = vmatpush1.msra.mxu0 0.0
      %3144 = vmatprep.mubr.f32.mxu0 0.0
      %3145 = vmatmul.mubr.f32.gmra.mrb[0].mxu0 %v3075
      %v3146 = vpop.f32.mrb[0].mxu0
      %v3147 = vadd.f32 0.0, %v3146
      %v3148 = vpop.f32.mrb[0].mxu0
      %3149 = vdwg.mxu0
      %v3150 = vadd.f32 %v3072, %v3147
      %v3151 = vld [vmem:[%s1015] sm:$0xf]
      %v3153 = vrot.slane %v2761, 1
      %v3154 = vrot.slane %v2762, 1
      %v3155 = vsel %vm777, %v3153, %v3154
      %v3156 = vsel %vm616, %v3155, 0
      %v3159 = vsel %vm620, %v3151, 0
      %3161 = vmatprep.subr.mxu0 0.0
      %3162 = vmatpush1.msra.mxu0 %v3159
      %3163 = vmatprep.subr.mxu0 0.0
      %3164 = vmatpush1.msra.mxu0 0.0
      %3165 = vmatprep.subr.mxu0 0.0
      %3166 = vmatpush1.msra.mxu0 0.0
      %3167 = vmatprep.subr.mxu0 0.0
      %3168 = vmatpush1.msra.mxu0 0.0
      %3169 = vmatprep.subr.mxu0 0.0
      %3170 = vmatpush1.msra.mxu0 0.0
      %3171 = vmatprep.subr.mxu0 0.0
      %3172 = vmatpush1.msra.mxu0 0.0
      %3173 = vmatprep.subr.mxu0 0.0
      %3174 = vmatpush1.msra.mxu0 0.0
      %3175 = vmatprep.subr.mxu0 0.0
      %3176 = vmatpush1.msra.mxu0 0.0
      %3177 = vmatprep.subr.mxu0 0.0
      %3178 = vmatpush1.msra.mxu0 0.0
      %3179 = vmatprep.subr.mxu0 0.0
      %3180 = vmatpush1.msra.mxu0 0.0
      %3181 = vmatprep.subr.mxu0 0.0
      %3182 = vmatpush1.msra.mxu0 0.0
      %3183 = vmatprep.subr.mxu0 0.0
      %3184 = vmatpush1.msra.mxu0 0.0
      %3185 = vmatprep.subr.mxu0 0.0
      %3186 = vmatpush1.msra.mxu0 0.0
      %3187 = vmatprep.subr.mxu0 0.0
      %3188 = vmatpush1.msra.mxu0 0.0
      %3189 = vmatprep.subr.mxu0 0.0
      %3190 = vmatpush1.msra.mxu0 0.0
      %3191 = vmatprep.subr.mxu0 0.0
      %3192 = vmatpush1.msra.mxu0 0.0
      %3193 = vmatprep.subr.mxu0 0.0
      %3194 = vmatpush1.msra.mxu0 0.0
      %3195 = vmatprep.subr.mxu0 0.0
      %3196 = vmatpush1.msra.mxu0 0.0
      %3197 = vmatprep.subr.mxu0 0.0
      %3198 = vmatpush1.msra.mxu0 0.0
      %3199 = vmatprep.subr.mxu0 0.0
      %3200 = vmatpush1.msra.mxu0 0.0
      %3201 = vmatprep.subr.mxu0 0.0
      %3202 = vmatpush1.msra.mxu0 0.0
      %3203 = vmatprep.subr.mxu0 0.0
      %3204 = vmatpush1.msra.mxu0 0.0
      %3205 = vmatprep.subr.mxu0 0.0
      %3206 = vmatpush1.msra.mxu0 0.0
      %3207 = vmatprep.subr.mxu0 0.0
      %3208 = vmatpush1.msra.mxu0 0.0
      %3209 = vmatprep.subr.mxu0 0.0
      %3210 = vmatpush1.msra.mxu0 0.0
      %3211 = vmatprep.subr.mxu0 0.0
      %3212 = vmatpush1.msra.mxu0 0.0
      %3213 = vmatprep.subr.mxu0 0.0
      %3214 = vmatpush1.msra.mxu0 0.0
      %3215 = vmatprep.subr.mxu0 0.0
      %3216 = vmatpush1.msra.mxu0 0.0
      %3217 = vmatprep.subr.mxu0 0.0
      %3218 = vmatpush1.msra.mxu0 0.0
      %3219 = vmatprep.subr.mxu0 0.0
      %3220 = vmatpush1.msra.mxu0 0.0
      %3221 = vmatprep.subr.mxu0 0.0
      %3222 = vmatpush1.msra.mxu0 0.0
      %3223 = vmatprep.subr.mxu0 0.0
      %3224 = vmatpush1.msra.mxu0 0.0
      %3225 = vmatprep.mubr.f32.mxu0 0.0
      %3226 = vmatmul.mubr.f32.gmra.mrb[0].mxu0 %v3156
      %v3227 = vpop.f32.mrb[0].mxu0
      %v3228 = vadd.f32 0.0, %v3227
      %v3229 = vpop.f32.mrb[0].mxu0
      %3230 = vdwg.mxu0
      %v3231 = vadd.f32 %v3150, %v3228
      %v3232 = vld [vmem:[%s1097] sm:$0xf]
      %v3234 = vsel %vm616, %v2766, 0
      %v3237 = vsel %vm620, %v3232, 0
      %3239 = vmatprep.subr.mxu0 0.0
      %3240 = vmatpush1.msra.mxu0 %v3237
      %3241 = vmatprep.subr.mxu0 0.0
      %3242 = vmatpush1.msra.mxu0 0.0
      %3243 = vmatprep.subr.mxu0 0.0
      %3244 = vmatpush1.msra.mxu0 0.0
      %3245 = vmatprep.subr.mxu0 0.0
      %3246 = vmatpush1.msra.mxu0 0.0
      %3247 = vmatprep.subr.mxu0 0.0
      %3248 = vmatpush1.msra.mxu0 0.0
      %3249 = vmatprep.subr.mxu0 0.0
      %3250 = vmatpush1.msra.mxu0 0.0
      %3251 = vmatprep.subr.mxu0 0.0
      %3252 = vmatpush1.msra.mxu0 0.0
      %3253 = vmatprep.subr.mxu0 0.0
      %3254 = vmatpush1.msra.mxu0 0.0
      %3255 = vmatprep.subr.mxu0 0.0
      %3256 = vmatpush1.msra.mxu0 0.0
      %3257 = vmatprep.subr.mxu0 0.0
      %3258 = vmatpush1.msra.mxu0 0.0
      %3259 = vmatprep.subr.mxu0 0.0
      %3260 = vmatpush1.msra.mxu0 0.0
      %3261 = vmatprep.subr.mxu0 0.0
      %3262 = vmatpush1.msra.mxu0 0.0
      %3263 = vmatprep.subr.mxu0 0.0
      %3264 = vmatpush1.msra.mxu0 0.0
      %3265 = vmatprep.subr.mxu0 0.0
      %3266 = vmatpush1.msra.mxu0 0.0
      %3267 = vmatprep.subr.mxu0 0.0
      %3268 = vmatpush1.msra.mxu0 0.0
      %3269 = vmatprep.subr.mxu0 0.0
      %3270 = vmatpush1.msra.mxu0 0.0
      %3271 = vmatprep.subr.mxu0 0.0
      %3272 = vmatpush1.msra.mxu0 0.0
      %3273 = vmatprep.subr.mxu0 0.0
      %3274 = vmatpush1.msra.mxu0 0.0
      %3275 = vmatprep.subr.mxu0 0.0
      %3276 = vmatpush1.msra.mxu0 0.0
      %3277 = vmatprep.subr.mxu0 0.0
      %3278 = vmatpush1.msra.mxu0 0.0
      %3279 = vmatprep.subr.mxu0 0.0
      %3280 = vmatpush1.msra.mxu0 0.0
      %3281 = vmatprep.subr.mxu0 0.0
      %3282 = vmatpush1.msra.mxu0 0.0
      %3283 = vmatprep.subr.mxu0 0.0
      %3284 = vmatpush1.msra.mxu0 0.0
      %3285 = vmatprep.subr.mxu0 0.0
      %3286 = vmatpush1.msra.mxu0 0.0
      %3287 = vmatprep.subr.mxu0 0.0
      %3288 = vmatpush1.msra.mxu0 0.0
      %3289 = vmatprep.subr.mxu0 0.0
      %3290 = vmatpush1.msra.mxu0 0.0
      %3291 = vmatprep.subr.mxu0 0.0
      %3292 = vmatpush1.msra.mxu0 0.0
      %3293 = vmatprep.subr.mxu0 0.0
      %3294 = vmatpush1.msra.mxu0 0.0
      %3295 = vmatprep.subr.mxu0 0.0
      %3296 = vmatpush1.msra.mxu0 0.0
      %3297 = vmatprep.subr.mxu0 0.0
      %3298 = vmatpush1.msra.mxu0 0.0
      %3299 = vmatprep.subr.mxu0 0.0
      %3300 = vmatpush1.msra.mxu0 0.0
      %3301 = vmatprep.subr.mxu0 0.0
      %3302 = vmatpush1.msra.mxu0 0.0
      %3303 = vmatprep.mubr.f32.mxu0 0.0
      %3304 = vmatmul.mubr.f32.gmra.mrb[0].mxu0 %v3234
      %v3305 = vpop.f32.mrb[0].mxu0
      %v3306 = vadd.f32 0.0, %v3305
      %v3307 = vpop.f32.mrb[0].mxu0
      %3308 = vdwg.mxu0
      %v3309 = vadd.f32 %v3231, %v3306
      %v3310 = vld [vmem:[%s1176] sm:$0xf]
      %v3312 = vsel %vm616, %v2769, 0
      %v3315 = vsel %vm620, %v3310, 0
      %3317 = vmatprep.subr.mxu0 0.0
      %3318 = vmatpush1.msra.mxu0 %v3315
      %3319 = vmatprep.subr.mxu0 0.0
      %3320 = vmatpush1.msra.mxu0 0.0
      %3321 = vmatprep.subr.mxu0 0.0
      %3322 = vmatpush1.msra.mxu0 0.0
      %3323 = vmatprep.subr.mxu0 0.0
      %3324 = vmatpush1.msra.mxu0 0.0
      %3325 = vmatprep.subr.mxu0 0.0
      %3326 = vmatpush1.msra.mxu0 0.0
      %3327 = vmatprep.subr.mxu0 0.0
      %3328 = vmatpush1.msra.mxu0 0.0
      %3329 = vmatprep.subr.mxu0 0.0
      %3330 = vmatpush1.msra.mxu0 0.0
      %3331 = vmatprep.subr.mxu0 0.0
      %3332 = vmatpush1.msra.mxu0 0.0
      %3333 = vmatprep.subr.mxu0 0.0
      %3334 = vmatpush1.msra.mxu0 0.0
      %3335 = vmatprep.subr.mxu0 0.0
      %3336 = vmatpush1.msra.mxu0 0.0
      %3337 = vmatprep.subr.mxu0 0.0
      %3338 = vmatpush1.msra.mxu0 0.0
      %3339 = vmatprep.subr.mxu0 0.0
      %3340 = vmatpush1.msra.mxu0 0.0
      %3341 = vmatprep.subr.mxu0 0.0
      %3342 = vmatpush1.msra.mxu0 0.0
      %3343 = vmatprep.subr.mxu0 0.0
      %3344 = vmatpush1.msra.mxu0 0.0
      %3345 = vmatprep.subr.mxu0 0.0
      %3346 = vmatpush1.msra.mxu0 0.0
      %3347 = vmatprep.subr.mxu0 0.0
      %3348 = vmatpush1.msra.mxu0 0.0
      %3349 = vmatprep.subr.mxu0 0.0
      %3350 = vmatpush1.msra.mxu0 0.0
      %3351 = vmatprep.subr.mxu0 0.0
      %3352 = vmatpush1.msra.mxu0 0.0
      %3353 = vmatprep.subr.mxu0 0.0
      %3354 = vmatpush1.msra.mxu0 0.0
      %3355 = vmatprep.subr.mxu0 0.0
      %3356 = vmatpush1.msra.mxu0 0.0
      %3357 = vmatprep.subr.mxu0 0.0
      %3358 = vmatpush1.msra.mxu0 0.0
      %3359 = vmatprep.subr.mxu0 0.0
      %3360 = vmatpush1.msra.mxu0 0.0
      %3361 = vmatprep.subr.mxu0 0.0
      %3362 = vmatpush1.msra.mxu0 0.0
      %3363 = vmatprep.subr.mxu0 0.0
      %3364 = vmatpush1.msra.mxu0 0.0
      %3365 = vmatprep.subr.mxu0 0.0
      %3366 = vmatpush1.msra.mxu0 0.0
      %3367 = vmatprep.subr.mxu0 0.0
      %3368 = vmatpush1.msra.mxu0 0.0
      %3369 = vmatprep.subr.mxu0 0.0
      %3370 = vmatpush1.msra.mxu0 0.0
      %3371 = vmatprep.subr.mxu0 0.0
      %3372 = vmatpush1.msra.mxu0 0.0
      %3373 = vmatprep.subr.mxu0 0.0
      %3374 = vmatpush1.msra.mxu0 0.0
      %3375 = vmatprep.subr.mxu0 0.0
      %3376 = vmatpush1.msra.mxu0 0.0
      %3377 = vmatprep.subr.mxu0 0.0
      %3378 = vmatpush1.msra.mxu0 0.0
      %3379 = vmatprep.subr.mxu0 0.0
      %3380 = vmatpush1.msra.mxu0 0.0
      %3381 = vmatprep.mubr.f32.mxu0 0.0
      %3382 = vmatmul.mubr.f32.gmra.mrb[0].mxu0 %v3312
      %v3383 = vpop.f32.mrb[0].mxu0
      %v3384 = vadd.f32 0.0, %v3383
      %v3385 = vpop.f32.mrb[0].mxu0
      %3386 = vdwg.mxu0
      %v3387 = vadd.f32 %v3309, %v3384
      %v3388 = vld [vmem:[%s1255] sm:$0xf]
      %v3390 = vrot.slane %v2766, 1
      %v3391 = vrot.slane %v2767, 1
      %v3392 = vsel %vm777, %v3390, %v3391
      %v3393 = vsel %vm616, %v3392, 0
      %v3396 = vsel %vm620, %v3388, 0
      %3398 = vmatprep.subr.mxu0 0.0
      %3399 = vmatpush1.msra.mxu0 %v3396
      %3400 = vmatprep.subr.mxu0 0.0
      %3401 = vmatpush1.msra.mxu0 0.0
      %3402 = vmatprep.subr.mxu0 0.0
      %3403 = vmatpush1.msra.mxu0 0.0
      %3404 = vmatprep.subr.mxu0 0.0
      %3405 = vmatpush1.msra.mxu0 0.0
      %3406 = vmatprep.subr.mxu0 0.0
      %3407 = vmatpush1.msra.mxu0 0.0
      %3408 = vmatprep.subr.mxu0 0.0
      %3409 = vmatpush1.msra.mxu0 0.0
      %3410 = vmatprep.subr.mxu0 0.0
      %3411 = vmatpush1.msra.mxu0 0.0
      %3412 = vmatprep.subr.mxu0 0.0
      %3413 = vmatpush1.msra.mxu0 0.0
      %3414 = vmatprep.subr.mxu0 0.0
      %3415 = vmatpush1.msra.mxu0 0.0
      %3416 = vmatprep.subr.mxu0 0.0
      %3417 = vmatpush1.msra.mxu0 0.0
      %3418 = vmatprep.subr.mxu0 0.0
      %3419 = vmatpush1.msra.mxu0 0.0
      %3420 = vmatprep.subr.mxu0 0.0
      %3421 = vmatpush1.msra.mxu0 0.0
      %3422 = vmatprep.subr.mxu0 0.0
      %3423 = vmatpush1.msra.mxu0 0.0
      %3424 = vmatprep.subr.mxu0 0.0
      %3425 = vmatpush1.msra.mxu0 0.0
      %3426 = vmatprep.subr.mxu0 0.0
      %3427 = vmatpush1.msra.mxu0 0.0
      %3428 = vmatprep.subr.mxu0 0.0
      %3429 = vmatpush1.msra.mxu0 0.0
      %3430 = vmatprep.subr.mxu0 0.0
      %3431 = vmatpush1.msra.mxu0 0.0
      %3432 = vmatprep.subr.mxu0 0.0
      %3433 = vmatpush1.msra.mxu0 0.0
      %3434 = vmatprep.subr.mxu0 0.0
      %3435 = vmatpush1.msra.mxu0 0.0
      %3436 = vmatprep.subr.mxu0 0.0
      %3437 = vmatpush1.msra.mxu0 0.0
      %3438 = vmatprep.subr.mxu0 0.0
      %3439 = vmatpush1.msra.mxu0 0.0
      %3440 = vmatprep.subr.mxu0 0.0
      %3441 = vmatpush1.msra.mxu0 0.0
      %3442 = vmatprep.subr.mxu0 0.0
      %3443 = vmatpush1.msra.mxu0 0.0
      %3444 = vmatprep.subr.mxu0 0.0
      %3445 = vmatpush1.msra.mxu0 0.0
      %3446 = vmatprep.subr.mxu0 0.0
      %3447 = vmatpush1.msra.mxu0 0.0
      %3448 = vmatprep.subr.mxu0 0.0
      %3449 = vmatpush1.msra.mxu0 0.0
      %3450 = vmatprep.subr.mxu0 0.0
      %3451 = vmatpush1.msra.mxu0 0.0
      %3452 = vmatprep.subr.mxu0 0.0
      %3453 = vmatpush1.msra.mxu0 0.0
      %3454 = vmatprep.subr.mxu0 0.0
      %3455 = vmatpush1.msra.mxu0 0.0
      %3456 = vmatprep.subr.mxu0 0.0
      %3457 = vmatpush1.msra.mxu0 0.0
      %3458 = vmatprep.subr.mxu0 0.0
      %3459 = vmatpush1.msra.mxu0 0.0
      %3460 = vmatprep.subr.mxu0 0.0
      %3461 = vmatpush1.msra.mxu0 0.0
      %3462 = vmatprep.mubr.f32.mxu0 0.0
      %3463 = vmatmul.mubr.f32.gmra.mrb[0].mxu0 %v3393
      %v3464 = vpop.f32.mrb[0].mxu0
      %v3465 = vadd.f32 0.0, %v3464
      %v3466 = vpop.f32.mrb[0].mxu0
      %3467 = vdwg.mxu0
      %v3468 = vadd.f32 %v3387, %v3465
      %s3469 = scalar_lea.vmem %s595, 24
      %3470 = vst.msk [vmem:[%s3469] sm:$0xff] %vm616, %v3468
      %s3471 = scalar_lea.vmem %s575, 64
      %v3472 = vld [vmem:[%s3471] sm:$0xff]
      %v3473 = vld [vmem:[%s3471 + $0x8] sm:$0xff]
      %s3474 = scalar_lea.vmem %s585, 32
      %v3475 = vld [vmem:[%s3474] sm:$0xff]
      %s3476 = scalar_lea.vmem %s516, 80
      %v3477 = vld [vmem:[%s3476] sm:$0xff]
      %v3478 = vld [vmem:[%s3476 + $0x8] sm:$0xff]
      %s3479 = scalar_lea.vmem %s548, 40
      %v3480 = vld [vmem:[%s3479] sm:$0xff]
      %v3481 = vld [vmem:[%s6] sm:$0xf]
      %v3483 = vsel %vm620, %v3481, 0
      %3485 = vmatprep.subr.mxu0 0.0
      %3486 = vmatpush1.msra.mxu0 %v3483
      %3487 = vmatprep.subr.mxu0 0.0
      %3488 = vmatpush1.msra.mxu0 0.0
      %3489 = vmatprep.subr.mxu0 0.0
      %3490 = vmatpush1.msra.mxu0 0.0
      %3491 = vmatprep.subr.mxu0 0.0
      %3492 = vmatpush1.msra.mxu0 0.0
      %3493 = vmatprep.subr.mxu0 0.0
      %3494 = vmatpush1.msra.mxu0 0.0
      %3495 = vmatprep.subr.mxu0 0.0
      %3496 = vmatpush1.msra.mxu0 0.0
      %3497 = vmatprep.subr.mxu0 0.0
      %3498 = vmatpush1.msra.mxu0 0.0
      %3499 = vmatprep.subr.mxu0 0.0
      %3500 = vmatpush1.msra.mxu0 0.0
      %3501 = vmatprep.subr.mxu0 0.0
      %3502 = vmatpush1.msra.mxu0 0.0
      %3503 = vmatprep.subr.mxu0 0.0
      %3504 = vmatpush1.msra.mxu0 0.0
      %3505 = vmatprep.subr.mxu0 0.0
      %3506 = vmatpush1.msra.mxu0 0.0
      %3507 = vmatprep.subr.mxu0 0.0
      %3508 = vmatpush1.msra.mxu0 0.0
      %3509 = vmatprep.subr.mxu0 0.0
      %3510 = vmatpush1.msra.mxu0 0.0
      %3511 = vmatprep.subr.mxu0 0.0
      %3512 = vmatpush1.msra.mxu0 0.0
      %3513 = vmatprep.subr.mxu0 0.0
      %3514 = vmatpush1.msra.mxu0 0.0
      %3515 = vmatprep.subr.mxu0 0.0
      %3516 = vmatpush1.msra.mxu0 0.0
      %3517 = vmatprep.subr.mxu0 0.0
      %3518 = vmatpush1.msra.mxu0 0.0
      %3519 = vmatprep.subr.mxu0 0.0
      %3520 = vmatpush1.msra.mxu0 0.0
      %3521 = vmatprep.subr.mxu0 0.0
      %3522 = vmatpush1.msra.mxu0 0.0
      %3523 = vmatprep.subr.mxu0 0.0
      %3524 = vmatpush1.msra.mxu0 0.0
      %3525 = vmatprep.subr.mxu0 0.0
      %3526 = vmatpush1.msra.mxu0 0.0
      %3527 = vmatprep.subr.mxu0 0.0
      %3528 = vmatpush1.msra.mxu0 0.0
      %3529 = vmatprep.subr.mxu0 0.0
      %3530 = vmatpush1.msra.mxu0 0.0
      %3531 = vmatprep.subr.mxu0 0.0
      %3532 = vmatpush1.msra.mxu0 0.0
      %3533 = vmatprep.subr.mxu0 0.0
      %3534 = vmatpush1.msra.mxu0 0.0
      %3535 = vmatprep.subr.mxu0 0.0
      %3536 = vmatpush1.msra.mxu0 0.0
      %3537 = vmatprep.subr.mxu0 0.0
      %3538 = vmatpush1.msra.mxu0 0.0
      %3539 = vmatprep.subr.mxu0 0.0
      %3540 = vmatpush1.msra.mxu0 0.0
      %3541 = vmatprep.subr.mxu0 0.0
      %3542 = vmatpush1.msra.mxu0 0.0
      %3543 = vmatprep.subr.mxu0 0.0
      %3544 = vmatpush1.msra.mxu0 0.0
      %3545 = vmatprep.subr.mxu0 0.0
      %3546 = vmatpush1.msra.mxu0 0.0
      %3547 = vmatprep.subr.mxu0 0.0
      %3548 = vmatpush1.msra.mxu0 0.0
      %3549 = vmatprep.mubr.f32.mxu0 0.0
      %3550 = vmatmul.mubr.f32.gmra.mrb[0].mxu0 %v3234
      %v3551 = vpop.f32.mrb[0].mxu0
      %v3552 = vadd.f32 0.0, %v3551
      %v3553 = vpop.f32.mrb[0].mxu0
      %3554 = vdwg.mxu0
      %v3555 = vadd.f32 %v602, %v3552
      %v3556 = vld [vmem:[%s695] sm:$0xf]
      %v3558 = vsel %vm620, %v3556, 0
      %3560 = vmatprep.subr.mxu0 0.0
      %3561 = vmatpush1.msra.mxu0 %v3558
      %3562 = vmatprep.subr.mxu0 0.0
      %3563 = vmatpush1.msra.mxu0 0.0
      %3564 = vmatprep.subr.mxu0 0.0
      %3565 = vmatpush1.msra.mxu0 0.0
      %3566 = vmatprep.subr.mxu0 0.0
      %3567 = vmatpush1.msra.mxu0 0.0
      %3568 = vmatprep.subr.mxu0 0.0
      %3569 = vmatpush1.msra.mxu0 0.0
      %3570 = vmatprep.subr.mxu0 0.0
      %3571 = vmatpush1.msra.mxu0 0.0
      %3572 = vmatprep.subr.mxu0 0.0
      %3573 = vmatpush1.msra.mxu0 0.0
      %3574 = vmatprep.subr.mxu0 0.0
      %3575 = vmatpush1.msra.mxu0 0.0
      %3576 = vmatprep.subr.mxu0 0.0
      %3577 = vmatpush1.msra.mxu0 0.0
      %3578 = vmatprep.subr.mxu0 0.0
      %3579 = vmatpush1.msra.mxu0 0.0
      %3580 = vmatprep.subr.mxu0 0.0
      %3581 = vmatpush1.msra.mxu0 0.0
      %3582 = vmatprep.subr.mxu0 0.0
      %3583 = vmatpush1.msra.mxu0 0.0
      %3584 = vmatprep.subr.mxu0 0.0
      %3585 = vmatpush1.msra.mxu0 0.0
      %3586 = vmatprep.subr.mxu0 0.0
      %3587 = vmatpush1.msra.mxu0 0.0
      %3588 = vmatprep.subr.mxu0 0.0
      %3589 = vmatpush1.msra.mxu0 0.0
      %3590 = vmatprep.subr.mxu0 0.0
      %3591 = vmatpush1.msra.mxu0 0.0
      %3592 = vmatprep.subr.mxu0 0.0
      %3593 = vmatpush1.msra.mxu0 0.0
      %3594 = vmatprep.subr.mxu0 0.0
      %3595 = vmatpush1.msra.mxu0 0.0
      %3596 = vmatprep.subr.mxu0 0.0
      %3597 = vmatpush1.msra.mxu0 0.0
      %3598 = vmatprep.subr.mxu0 0.0
      %3599 = vmatpush1.msra.mxu0 0.0
      %3600 = vmatprep.subr.mxu0 0.0
      %3601 = vmatpush1.msra.mxu0 0.0
      %3602 = vmatprep.subr.mxu0 0.0
      %3603 = vmatpush1.msra.mxu0 0.0
      %3604 = vmatprep.subr.mxu0 0.0
      %3605 = vmatpush1.msra.mxu0 0.0
      %3606 = vmatprep.subr.mxu0 0.0
      %3607 = vmatpush1.msra.mxu0 0.0
      %3608 = vmatprep.subr.mxu0 0.0
      %3609 = vmatpush1.msra.mxu0 0.0
      %3610 = vmatprep.subr.mxu0 0.0
      %3611 = vmatpush1.msra.mxu0 0.0
      %3612 = vmatprep.subr.mxu0 0.0
      %3613 = vmatpush1.msra.mxu0 0.0
      %3614 = vmatprep.subr.mxu0 0.0
      %3615 = vmatpush1.msra.mxu0 0.0
      %3616 = vmatprep.subr.mxu0 0.0
      %3617 = vmatpush1.msra.mxu0 0.0
      %3618 = vmatprep.subr.mxu0 0.0
      %3619 = vmatpush1.msra.mxu0 0.0
      %3620 = vmatprep.subr.mxu0 0.0
      %3621 = vmatpush1.msra.mxu0 0.0
      %3622 = vmatprep.subr.mxu0 0.0
      %3623 = vmatpush1.msra.mxu0 0.0
      %3624 = vmatprep.mubr.f32.mxu0 0.0
      %3625 = vmatmul.mubr.f32.gmra.mrb[0].mxu0 %v3312
      %v3626 = vpop.f32.mrb[0].mxu0
      %v3627 = vadd.f32 0.0, %v3626
      %v3628 = vpop.f32.mrb[0].mxu0
      %3629 = vdwg.mxu0
      %v3630 = vadd.f32 %v3555, %v3627
      %v3631 = vld [vmem:[%s774] sm:$0xf]
      %v3633 = vsel %vm620, %v3631, 0
      %3635 = vmatprep.subr.mxu0 0.0
      %3636 = vmatpush1.msra.mxu0 %v3633
      %3637 = vmatprep.subr.mxu0 0.0
      %3638 = vmatpush1.msra.mxu0 0.0
      %3639 = vmatprep.subr.mxu0 0.0
      %3640 = vmatpush1.msra.mxu0 0.0
      %3641 = vmatprep.subr.mxu0 0.0
      %3642 = vmatpush1.msra.mxu0 0.0
      %3643 = vmatprep.subr.mxu0 0.0
      %3644 = vmatpush1.msra.mxu0 0.0
      %3645 = vmatprep.subr.mxu0 0.0
      %3646 = vmatpush1.msra.mxu0 0.0
      %3647 = vmatprep.subr.mxu0 0.0
      %3648 = vmatpush1.msra.mxu0 0.0
      %3649 = vmatprep.subr.mxu0 0.0
      %3650 = vmatpush1.msra.mxu0 0.0
      %3651 = vmatprep.subr.mxu0 0.0
      %3652 = vmatpush1.msra.mxu0 0.0
      %3653 = vmatprep.subr.mxu0 0.0
      %3654 = vmatpush1.msra.mxu0 0.0
      %3655 = vmatprep.subr.mxu0 0.0
      %3656 = vmatpush1.msra.mxu0 0.0
      %3657 = vmatprep.subr.mxu0 0.0
      %3658 = vmatpush1.msra.mxu0 0.0
      %3659 = vmatprep.subr.mxu0 0.0
      %3660 = vmatpush1.msra.mxu0 0.0
      %3661 = vmatprep.subr.mxu0 0.0
      %3662 = vmatpush1.msra.mxu0 0.0
      %3663 = vmatprep.subr.mxu0 0.0
      %3664 = vmatpush1.msra.mxu0 0.0
      %3665 = vmatprep.subr.mxu0 0.0
      %3666 = vmatpush1.msra.mxu0 0.0
      %3667 = vmatprep.subr.mxu0 0.0
      %3668 = vmatpush1.msra.mxu0 0.0
      %3669 = vmatprep.subr.mxu0 0.0
      %3670 = vmatpush1.msra.mxu0 0.0
      %3671 = vmatprep.subr.mxu0 0.0
      %3672 = vmatpush1.msra.mxu0 0.0
      %3673 = vmatprep.subr.mxu0 0.0
      %3674 = vmatpush1.msra.mxu0 0.0
      %3675 = vmatprep.subr.mxu0 0.0
      %3676 = vmatpush1.msra.mxu0 0.0
      %3677 = vmatprep.subr.mxu0 0.0
      %3678 = vmatpush1.msra.mxu0 0.0
      %3679 = vmatprep.subr.mxu0 0.0
      %3680 = vmatpush1.msra.mxu0 0.0
      %3681 = vmatprep.subr.mxu0 0.0
      %3682 = vmatpush1.msra.mxu0 0.0
      %3683 = vmatprep.subr.mxu0 0.0
      %3684 = vmatpush1.msra.mxu0 0.0
      %3685 = vmatprep.subr.mxu0 0.0
      %3686 = vmatpush1.msra.mxu0 0.0
      %3687 = vmatprep.subr.mxu0 0.0
      %3688 = vmatpush1.msra.mxu0 0.0
      %3689 = vmatprep.subr.mxu0 0.0
      %3690 = vmatpush1.msra.mxu0 0.0
      %3691 = vmatprep.subr.mxu0 0.0
      %3692 = vmatpush1.msra.mxu0 0.0
      %3693 = vmatprep.subr.mxu0 0.0
      %3694 = vmatpush1.msra.mxu0 0.0
      %3695 = vmatprep.subr.mxu0 0.0
      %3696 = vmatpush1.msra.mxu0 0.0
      %3697 = vmatprep.subr.mxu0 0.0
      %3698 = vmatpush1.msra.mxu0 0.0
      %3699 = vmatprep.mubr.f32.mxu0 0.0
      %3700 = vmatmul.mubr.f32.gmra.mrb[0].mxu0 %v3393
      %v3701 = vpop.f32.mrb[0].mxu0
      %v3702 = vadd.f32 0.0, %v3701
      %v3703 = vpop.f32.mrb[0].mxu0
      %3704 = vdwg.mxu0
      %v3705 = vadd.f32 %v3630, %v3702
      %v3706 = vld [vmem:[%s857] sm:$0xf]
      %v3708 = vsel %vm616, %v3472, 0
      %v3711 = vsel %vm620, %v3706, 0
      %3713 = vmatprep.subr.mxu0 0.0
      %3714 = vmatpush1.msra.mxu0 %v3711
      %3715 = vmatprep.subr.mxu0 0.0
      %3716 = vmatpush1.msra.mxu0 0.0
      %3717 = vmatprep.subr.mxu0 0.0
      %3718 = vmatpush1.msra.mxu0 0.0
      %3719 = vmatprep.subr.mxu0 0.0
      %3720 = vmatpush1.msra.mxu0 0.0
      %3721 = vmatprep.subr.mxu0 0.0
      %3722 = vmatpush1.msra.mxu0 0.0
      %3723 = vmatprep.subr.mxu0 0.0
      %3724 = vmatpush1.msra.mxu0 0.0
      %3725 = vmatprep.subr.mxu0 0.0
      %3726 = vmatpush1.msra.mxu0 0.0
      %3727 = vmatprep.subr.mxu0 0.0
      %3728 = vmatpush1.msra.mxu0 0.0
      %3729 = vmatprep.subr.mxu0 0.0
      %3730 = vmatpush1.msra.mxu0 0.0
      %3731 = vmatprep.subr.mxu0 0.0
      %3732 = vmatpush1.msra.mxu0 0.0
      %3733 = vmatprep.subr.mxu0 0.0
      %3734 = vmatpush1.msra.mxu0 0.0
      %3735 = vmatprep.subr.mxu0 0.0
      %3736 = vmatpush1.msra.mxu0 0.0
      %3737 = vmatprep.subr.mxu0 0.0
      %3738 = vmatpush1.msra.mxu0 0.0
      %3739 = vmatprep.subr.mxu0 0.0
      %3740 = vmatpush1.msra.mxu0 0.0
      %3741 = vmatprep.subr.mxu0 0.0
      %3742 = vmatpush1.msra.mxu0 0.0
      %3743 = vmatprep.subr.mxu0 0.0
      %3744 = vmatpush1.msra.mxu0 0.0
      %3745 = vmatprep.subr.mxu0 0.0
      %3746 = vmatpush1.msra.mxu0 0.0
      %3747 = vmatprep.subr.mxu0 0.0
      %3748 = vmatpush1.msra.mxu0 0.0
      %3749 = vmatprep.subr.mxu0 0.0
      %3750 = vmatpush1.msra.mxu0 0.0
      %3751 = vmatprep.subr.mxu0 0.0
      %3752 = vmatpush1.msra.mxu0 0.0
      %3753 = vmatprep.subr.mxu0 0.0
      %3754 = vmatpush1.msra.mxu0 0.0
      %3755 = vmatprep.subr.mxu0 0.0
      %3756 = vmatpush1.msra.mxu0 0.0
      %3757 = vmatprep.subr.mxu0 0.0
      %3758 = vmatpush1.msra.mxu0 0.0
      %3759 = vmatprep.subr.mxu0 0.0
      %3760 = vmatpush1.msra.mxu0 0.0
      %3761 = vmatprep.subr.mxu0 0.0
      %3762 = vmatpush1.msra.mxu0 0.0
      %3763 = vmatprep.subr.mxu0 0.0
      %3764 = vmatpush1.msra.mxu0 0.0
      %3765 = vmatprep.subr.mxu0 0.0
      %3766 = vmatpush1.msra.mxu0 0.0
      %3767 = vmatprep.subr.mxu0 0.0
      %3768 = vmatpush1.msra.mxu0 0.0
      %3769 = vmatprep.subr.mxu0 0.0
      %3770 = vmatpush1.msra.mxu0 0.0
      %3771 = vmatprep.subr.mxu0 0.0
      %3772 = vmatpush1.msra.mxu0 0.0
      %3773 = vmatprep.subr.mxu0 0.0
      %3774 = vmatpush1.msra.mxu0 0.0
      %3775 = vmatprep.subr.mxu0 0.0
      %3776 = vmatpush1.msra.mxu0 0.0
      %3777 = vmatprep.mubr.f32.mxu0 0.0
      %3778 = vmatmul.mubr.f32.gmra.mrb[0].mxu0 %v3708
      %v3779 = vpop.f32.mrb[0].mxu0
      %v3780 = vadd.f32 0.0, %v3779
      %v3781 = vpop.f32.mrb[0].mxu0
      %3782 = vdwg.mxu0
      %v3783 = vadd.f32 %v3705, %v3780
      %v3784 = vld [vmem:[%s936] sm:$0xf]
      %v3786 = vsel %vm616, %v3475, 0
      %v3789 = vsel %vm620, %v3784, 0
      %3791 = vmatprep.subr.mxu0 0.0
      %3792 = vmatpush1.msra.mxu0 %v3789
      %3793 = vmatprep.subr.mxu0 0.0
      %3794 = vmatpush1.msra.mxu0 0.0
      %3795 = vmatprep.subr.mxu0 0.0
      %3796 = vmatpush1.msra.mxu0 0.0
      %3797 = vmatprep.subr.mxu0 0.0
      %3798 = vmatpush1.msra.mxu0 0.0
      %3799 = vmatprep.subr.mxu0 0.0
      %3800 = vmatpush1.msra.mxu0 0.0
      %3801 = vmatprep.subr.mxu0 0.0
      %3802 = vmatpush1.msra.mxu0 0.0
      %3803 = vmatprep.subr.mxu0 0.0
      %3804 = vmatpush1.msra.mxu0 0.0
      %3805 = vmatprep.subr.mxu0 0.0
      %3806 = vmatpush1.msra.mxu0 0.0
      %3807 = vmatprep.subr.mxu0 0.0
      %3808 = vmatpush1.msra.mxu0 0.0
      %3809 = vmatprep.subr.mxu0 0.0
      %3810 = vmatpush1.msra.mxu0 0.0
      %3811 = vmatprep.subr.mxu0 0.0
      %3812 = vmatpush1.msra.mxu0 0.0
      %3813 = vmatprep.subr.mxu0 0.0
      %3814 = vmatpush1.msra.mxu0 0.0
      %3815 = vmatprep.subr.mxu0 0.0
      %3816 = vmatpush1.msra.mxu0 0.0
      %3817 = vmatprep.subr.mxu0 0.0
      %3818 = vmatpush1.msra.mxu0 0.0
      %3819 = vmatprep.subr.mxu0 0.0
      %3820 = vmatpush1.msra.mxu0 0.0
      %3821 = vmatprep.subr.mxu0 0.0
      %3822 = vmatpush1.msra.mxu0 0.0
      %3823 = vmatprep.subr.mxu0 0.0
      %3824 = vmatpush1.msra.mxu0 0.0
      %3825 = vmatprep.subr.mxu0 0.0
      %3826 = vmatpush1.msra.mxu0 0.0
      %3827 = vmatprep.subr.mxu0 0.0
      %3828 = vmatpush1.msra.mxu0 0.0
      %3829 = vmatprep.subr.mxu0 0.0
      %3830 = vmatpush1.msra.mxu0 0.0
      %3831 = vmatprep.subr.mxu0 0.0
      %3832 = vmatpush1.msra.mxu0 0.0
      %3833 = vmatprep.subr.mxu0 0.0
      %3834 = vmatpush1.msra.mxu0 0.0
      %3835 = vmatprep.subr.mxu0 0.0
      %3836 = vmatpush1.msra.mxu0 0.0
      %3837 = vmatprep.subr.mxu0 0.0
      %3838 = vmatpush1.msra.mxu0 0.0
      %3839 = vmatprep.subr.mxu0 0.0
      %3840 = vmatpush1.msra.mxu0 0.0
      %3841 = vmatprep.subr.mxu0 0.0
      %3842 = vmatpush1.msra.mxu0 0.0
      %3843 = vmatprep.subr.mxu0 0.0
      %3844 = vmatpush1.msra.mxu0 0.0
      %3845 = vmatprep.subr.mxu0 0.0
      %3846 = vmatpush1.msra.mxu0 0.0
      %3847 = vmatprep.subr.mxu0 0.0
      %3848 = vmatpush1.msra.mxu0 0.0
      %3849 = vmatprep.subr.mxu0 0.0
      %3850 = vmatpush1.msra.mxu0 0.0
      %3851 = vmatprep.subr.mxu0 0.0
      %3852 = vmatpush1.msra.mxu0 0.0
      %3853 = vmatprep.subr.mxu0 0.0
      %3854 = vmatpush1.msra.mxu0 0.0
      %3855 = vmatprep.mubr.f32.mxu0 0.0
      %3856 = vmatmul.mubr.f32.gmra.mrb[0].mxu0 %v3786
      %v3857 = vpop.f32.mrb[0].mxu0
      %v3858 = vadd.f32 0.0, %v3857
      %v3859 = vpop.f32.mrb[0].mxu0
      %3860 = vdwg.mxu0
      %v3861 = vadd.f32 %v3783, %v3858
      %v3862 = vld [vmem:[%s1015] sm:$0xf]
      %v3864 = vrot.slane %v3472, 1
      %v3865 = vrot.slane %v3473, 1
      %v3866 = vsel %vm777, %v3864, %v3865
      %v3867 = vsel %vm616, %v3866, 0
      %v3870 = vsel %vm620, %v3862, 0
      %3872 = vmatprep.subr.mxu0 0.0
      %3873 = vmatpush1.msra.mxu0 %v3870
      %3874 = vmatprep.subr.mxu0 0.0
      %3875 = vmatpush1.msra.mxu0 0.0
      %3876 = vmatprep.subr.mxu0 0.0
      %3877 = vmatpush1.msra.mxu0 0.0
      %3878 = vmatprep.subr.mxu0 0.0
      %3879 = vmatpush1.msra.mxu0 0.0
      %3880 = vmatprep.subr.mxu0 0.0
      %3881 = vmatpush1.msra.mxu0 0.0
      %3882 = vmatprep.subr.mxu0 0.0
      %3883 = vmatpush1.msra.mxu0 0.0
      %3884 = vmatprep.subr.mxu0 0.0
      %3885 = vmatpush1.msra.mxu0 0.0
      %3886 = vmatprep.subr.mxu0 0.0
      %3887 = vmatpush1.msra.mxu0 0.0
      %3888 = vmatprep.subr.mxu0 0.0
      %3889 = vmatpush1.msra.mxu0 0.0
      %3890 = vmatprep.subr.mxu0 0.0
      %3891 = vmatpush1.msra.mxu0 0.0
      %3892 = vmatprep.subr.mxu0 0.0
      %3893 = vmatpush1.msra.mxu0 0.0
      %3894 = vmatprep.subr.mxu0 0.0
      %3895 = vmatpush1.msra.mxu0 0.0
      %3896 = vmatprep.subr.mxu0 0.0
      %3897 = vmatpush1.msra.mxu0 0.0
      %3898 = vmatprep.subr.mxu0 0.0
      %3899 = vmatpush1.msra.mxu0 0.0
      %3900 = vmatprep.subr.mxu0 0.0
      %3901 = vmatpush1.msra.mxu0 0.0
      %3902 = vmatprep.subr.mxu0 0.0
      %3903 = vmatpush1.msra.mxu0 0.0
      %3904 = vmatprep.subr.mxu0 0.0
      %3905 = vmatpush1.msra.mxu0 0.0
      %3906 = vmatprep.subr.mxu0 0.0
      %3907 = vmatpush1.msra.mxu0 0.0
      %3908 = vmatprep.subr.mxu0 0.0
      %3909 = vmatpush1.msra.mxu0 0.0
      %3910 = vmatprep.subr.mxu0 0.0
      %3911 = vmatpush1.msra.mxu0 0.0
      %3912 = vmatprep.subr.mxu0 0.0
      %3913 = vmatpush1.msra.mxu0 0.0
      %3914 = vmatprep.subr.mxu0 0.0
      %3915 = vmatpush1.msra.mxu0 0.0
      %3916 = vmatprep.subr.mxu0 0.0
      %3917 = vmatpush1.msra.mxu0 0.0
      %3918 = vmatprep.subr.mxu0 0.0
      %3919 = vmatpush1.msra.mxu0 0.0
      %3920 = vmatprep.subr.mxu0 0.0
      %3921 = vmatpush1.msra.mxu0 0.0
      %3922 = vmatprep.subr.mxu0 0.0
      %3923 = vmatpush1.msra.mxu0 0.0
      %3924 = vmatprep.subr.mxu0 0.0
      %3925 = vmatpush1.msra.mxu0 0.0
      %3926 = vmatprep.subr.mxu0 0.0
      %3927 = vmatpush1.msra.mxu0 0.0
      %3928 = vmatprep.subr.mxu0 0.0
      %3929 = vmatpush1.msra.mxu0 0.0
      %3930 = vmatprep.subr.mxu0 0.0
      %3931 = vmatpush1.msra.mxu0 0.0
      %3932 = vmatprep.subr.mxu0 0.0
      %3933 = vmatpush1.msra.mxu0 0.0
      %3934 = vmatprep.subr.mxu0 0.0
      %3935 = vmatpush1.msra.mxu0 0.0
      %3936 = vmatprep.mubr.f32.mxu0 0.0
      %3937 = vmatmul.mubr.f32.gmra.mrb[0].mxu0 %v3867
      %v3938 = vpop.f32.mrb[0].mxu0
      %v3939 = vadd.f32 0.0, %v3938
      %v3940 = vpop.f32.mrb[0].mxu0
      %3941 = vdwg.mxu0
      %v3942 = vadd.f32 %v3861, %v3939
      %v3943 = vld [vmem:[%s1097] sm:$0xf]
      %v3945 = vsel %vm616, %v3477, 0
      %v3948 = vsel %vm620, %v3943, 0
      %3950 = vmatprep.subr.mxu0 0.0
      %3951 = vmatpush1.msra.mxu0 %v3948
      %3952 = vmatprep.subr.mxu0 0.0
      %3953 = vmatpush1.msra.mxu0 0.0
      %3954 = vmatprep.subr.mxu0 0.0
      %3955 = vmatpush1.msra.mxu0 0.0
      %3956 = vmatprep.subr.mxu0 0.0
      %3957 = vmatpush1.msra.mxu0 0.0
      %3958 = vmatprep.subr.mxu0 0.0
      %3959 = vmatpush1.msra.mxu0 0.0
      %3960 = vmatprep.subr.mxu0 0.0
      %3961 = vmatpush1.msra.mxu0 0.0
      %3962 = vmatprep.subr.mxu0 0.0
      %3963 = vmatpush1.msra.mxu0 0.0
      %3964 = vmatprep.subr.mxu0 0.0
      %3965 = vmatpush1.msra.mxu0 0.0
      %3966 = vmatprep.subr.mxu0 0.0
      %3967 = vmatpush1.msra.mxu0 0.0
      %3968 = vmatprep.subr.mxu0 0.0
      %3969 = vmatpush1.msra.mxu0 0.0
      %3970 = vmatprep.subr.mxu0 0.0
      %3971 = vmatpush1.msra.mxu0 0.0
      %3972 = vmatprep.subr.mxu0 0.0
      %3973 = vmatpush1.msra.mxu0 0.0
      %3974 = vmatprep.subr.mxu0 0.0
      %3975 = vmatpush1.msra.mxu0 0.0
      %3976 = vmatprep.subr.mxu0 0.0
      %3977 = vmatpush1.msra.mxu0 0.0
      %3978 = vmatprep.subr.mxu0 0.0
      %3979 = vmatpush1.msra.mxu0 0.0
      %3980 = vmatprep.subr.mxu0 0.0
      %3981 = vmatpush1.msra.mxu0 0.0
      %3982 = vmatprep.subr.mxu0 0.0
      %3983 = vmatpush1.msra.mxu0 0.0
      %3984 = vmatprep.subr.mxu0 0.0
      %3985 = vmatpush1.msra.mxu0 0.0
      %3986 = vmatprep.subr.mxu0 0.0
      %3987 = vmatpush1.msra.mxu0 0.0
      %3988 = vmatprep.subr.mxu0 0.0
      %3989 = vmatpush1.msra.mxu0 0.0
      %3990 = vmatprep.subr.mxu0 0.0
      %3991 = vmatpush1.msra.mxu0 0.0
      %3992 = vmatprep.subr.mxu0 0.0
      %3993 = vmatpush1.msra.mxu0 0.0
      %3994 = vmatprep.subr.mxu0 0.0
      %3995 = vmatpush1.msra.mxu0 0.0
      %3996 = vmatprep.subr.mxu0 0.0
      %3997 = vmatpush1.msra.mxu0 0.0
      %3998 = vmatprep.subr.mxu0 0.0
      %3999 = vmatpush1.msra.mxu0 0.0
      %4000 = vmatprep.subr.mxu0 0.0
      %4001 = vmatpush1.msra.mxu0 0.0
      %4002 = vmatprep.subr.mxu0 0.0
      %4003 = vmatpush1.msra.mxu0 0.0
      %4004 = vmatprep.subr.mxu0 0.0
      %4005 = vmatpush1.msra.mxu0 0.0
      %4006 = vmatprep.subr.mxu0 0.0
      %4007 = vmatpush1.msra.mxu0 0.0
      %4008 = vmatprep.subr.mxu0 0.0
      %4009 = vmatpush1.msra.mxu0 0.0
      %4010 = vmatprep.subr.mxu0 0.0
      %4011 = vmatpush1.msra.mxu0 0.0
      %4012 = vmatprep.subr.mxu0 0.0
      %4013 = vmatpush1.msra.mxu0 0.0
      %4014 = vmatprep.mubr.f32.mxu0 0.0
      %4015 = vmatmul.mubr.f32.gmra.mrb[0].mxu0 %v3945
      %v4016 = vpop.f32.mrb[0].mxu0
      %v4017 = vadd.f32 0.0, %v4016
      %v4018 = vpop.f32.mrb[0].mxu0
      %4019 = vdwg.mxu0
      %v4020 = vadd.f32 %v3942, %v4017
      %v4021 = vld [vmem:[%s1176] sm:$0xf]
      %v4023 = vsel %vm616, %v3480, 0
      %v4026 = vsel %vm620, %v4021, 0
      %4028 = vmatprep.subr.mxu0 0.0
      %4029 = vmatpush1.msra.mxu0 %v4026
      %4030 = vmatprep.subr.mxu0 0.0
      %4031 = vmatpush1.msra.mxu0 0.0
      %4032 = vmatprep.subr.mxu0 0.0
      %4033 = vmatpush1.msra.mxu0 0.0
      %4034 = vmatprep.subr.mxu0 0.0
      %4035 = vmatpush1.msra.mxu0 0.0
      %4036 = vmatprep.subr.mxu0 0.0
      %4037 = vmatpush1.msra.mxu0 0.0
      %4038 = vmatprep.subr.mxu0 0.0
      %4039 = vmatpush1.msra.mxu0 0.0
      %4040 = vmatprep.subr.mxu0 0.0
      %4041 = vmatpush1.msra.mxu0 0.0
      %4042 = vmatprep.subr.mxu0 0.0
      %4043 = vmatpush1.msra.mxu0 0.0
      %4044 = vmatprep.subr.mxu0 0.0
      %4045 = vmatpush1.msra.mxu0 0.0
      %4046 = vmatprep.subr.mxu0 0.0
      %4047 = vmatpush1.msra.mxu0 0.0
      %4048 = vmatprep.subr.mxu0 0.0
      %4049 = vmatpush1.msra.mxu0 0.0
      %4050 = vmatprep.subr.mxu0 0.0
      %4051 = vmatpush1.msra.mxu0 0.0
      %4052 = vmatprep.subr.mxu0 0.0
      %4053 = vmatpush1.msra.mxu0 0.0
      %4054 = vmatprep.subr.mxu0 0.0
      %4055 = vmatpush1.msra.mxu0 0.0
      %4056 = vmatprep.subr.mxu0 0.0
      %4057 = vmatpush1.msra.mxu0 0.0
      %4058 = vmatprep.subr.mxu0 0.0
      %4059 = vmatpush1.msra.mxu0 0.0
      %4060 = vmatprep.subr.mxu0 0.0
      %4061 = vmatpush1.msra.mxu0 0.0
      %4062 = vmatprep.subr.mxu0 0.0
      %4063 = vmatpush1.msra.mxu0 0.0
      %4064 = vmatprep.subr.mxu0 0.0
      %4065 = vmatpush1.msra.mxu0 0.0
      %4066 = vmatprep.subr.mxu0 0.0
      %4067 = vmatpush1.msra.mxu0 0.0
      %4068 = vmatprep.subr.mxu0 0.0
      %4069 = vmatpush1.msra.mxu0 0.0
      %4070 = vmatprep.subr.mxu0 0.0
      %4071 = vmatpush1.msra.mxu0 0.0
      %4072 = vmatprep.subr.mxu0 0.0
      %4073 = vmatpush1.msra.mxu0 0.0
      %4074 = vmatprep.subr.mxu0 0.0
      %4075 = vmatpush1.msra.mxu0 0.0
      %4076 = vmatprep.subr.mxu0 0.0
      %4077 = vmatpush1.msra.mxu0 0.0
      %4078 = vmatprep.subr.mxu0 0.0
      %4079 = vmatpush1.msra.mxu0 0.0
      %4080 = vmatprep.subr.mxu0 0.0
      %4081 = vmatpush1.msra.mxu0 0.0
      %4082 = vmatprep.subr.mxu0 0.0
      %4083 = vmatpush1.msra.mxu0 0.0
      %4084 = vmatprep.subr.mxu0 0.0
      %4085 = vmatpush1.msra.mxu0 0.0
      %4086 = vmatprep.subr.mxu0 0.0
      %4087 = vmatpush1.msra.mxu0 0.0
      %4088 = vmatprep.subr.mxu0 0.0
      %4089 = vmatpush1.msra.mxu0 0.0
      %4090 = vmatprep.subr.mxu0 0.0
      %4091 = vmatpush1.msra.mxu0 0.0
      %4092 = vmatprep.mubr.f32.mxu0 0.0
      %4093 = vmatmul.mubr.f32.gmra.mrb[0].mxu0 %v4023
      %v4094 = vpop.f32.mrb[0].mxu0
      %v4095 = vadd.f32 0.0, %v4094
      %v4096 = vpop.f32.mrb[0].mxu0
      %4097 = vdwg.mxu0
      %v4098 = vadd.f32 %v4020, %v4095
      %v4099 = vld [vmem:[%s1255] sm:$0xf]
      %v4101 = vrot.slane %v3477, 1
      %v4102 = vrot.slane %v3478, 1
      %v4103 = vsel %vm777, %v4101, %v4102
      %v4104 = vsel %vm616, %v4103, 0
      %v4107 = vsel %vm620, %v4099, 0
      %4109 = vmatprep.subr.mxu0 0.0
      %4110 = vmatpush1.msra.mxu0 %v4107
      %4111 = vmatprep.subr.mxu0 0.0
      %4112 = vmatpush1.msra.mxu0 0.0
      %4113 = vmatprep.subr.mxu0 0.0
      %4114 = vmatpush1.msra.mxu0 0.0
      %4115 = vmatprep.subr.mxu0 0.0
      %4116 = vmatpush1.msra.mxu0 0.0
      %4117 = vmatprep.subr.mxu0 0.0
      %4118 = vmatpush1.msra.mxu0 0.0
      %4119 = vmatprep.subr.mxu0 0.0
      %4120 = vmatpush1.msra.mxu0 0.0
      %4121 = vmatprep.subr.mxu0 0.0
      %4122 = vmatpush1.msra.mxu0 0.0
      %4123 = vmatprep.subr.mxu0 0.0
      %4124 = vmatpush1.msra.mxu0 0.0
      %4125 = vmatprep.subr.mxu0 0.0
      %4126 = vmatpush1.msra.mxu0 0.0
      %4127 = vmatprep.subr.mxu0 0.0
      %4128 = vmatpush1.msra.mxu0 0.0
      %4129 = vmatprep.subr.mxu0 0.0
      %4130 = vmatpush1.msra.mxu0 0.0
      %4131 = vmatprep.subr.mxu0 0.0
      %4132 = vmatpush1.msra.mxu0 0.0
      %4133 = vmatprep.subr.mxu0 0.0
      %4134 = vmatpush1.msra.mxu0 0.0
      %4135 = vmatprep.subr.mxu0 0.0
      %4136 = vmatpush1.msra.mxu0 0.0
      %4137 = vmatprep.subr.mxu0 0.0
      %4138 = vmatpush1.msra.mxu0 0.0
      %4139 = vmatprep.subr.mxu0 0.0
      %4140 = vmatpush1.msra.mxu0 0.0
      %4141 = vmatprep.subr.mxu0 0.0
      %4142 = vmatpush1.msra.mxu0 0.0
      %4143 = vmatprep.subr.mxu0 0.0
      %4144 = vmatpush1.msra.mxu0 0.0
      %4145 = vmatprep.subr.mxu0 0.0
      %4146 = vmatpush1.msra.mxu0 0.0
      %4147 = vmatprep.subr.mxu0 0.0
      %4148 = vmatpush1.msra.mxu0 0.0
      %4149 = vmatprep.subr.mxu0 0.0
      %4150 = vmatpush1.msra.mxu0 0.0
      %4151 = vmatprep.subr.mxu0 0.0
      %4152 = vmatpush1.msra.mxu0 0.0
      %4153 = vmatprep.subr.mxu0 0.0
      %4154 = vmatpush1.msra.mxu0 0.0
      %4155 = vmatprep.subr.mxu0 0.0
      %4156 = vmatpush1.msra.mxu0 0.0
      %4157 = vmatprep.subr.mxu0 0.0
      %4158 = vmatpush1.msra.mxu0 0.0
      %4159 = vmatprep.subr.mxu0 0.0
      %4160 = vmatpush1.msra.mxu0 0.0
      %4161 = vmatprep.subr.mxu0 0.0
      %4162 = vmatpush1.msra.mxu0 0.0
      %4163 = vmatprep.subr.mxu0 0.0
      %4164 = vmatpush1.msra.mxu0 0.0
      %4165 = vmatprep.subr.mxu0 0.0
      %4166 = vmatpush1.msra.mxu0 0.0
      %4167 = vmatprep.subr.mxu0 0.0
      %4168 = vmatpush1.msra.mxu0 0.0
      %4169 = vmatprep.subr.mxu0 0.0
      %4170 = vmatpush1.msra.mxu0 0.0
      %4171 = vmatprep.subr.mxu0 0.0
      %4172 = vmatpush1.msra.mxu0 0.0
      %4173 = vmatprep.mubr.f32.mxu0 0.0
      %4174 = vmatmul.mubr.f32.gmra.mrb[0].mxu0 %v4104
      %v4175 = vpop.f32.mrb[0].mxu0
      %v4176 = vadd.f32 0.0, %v4175
      %v4177 = vpop.f32.mrb[0].mxu0
      %4178 = vdwg.mxu0
      %v4179 = vadd.f32 %v4098, %v4176
      %s4180 = scalar_lea.vmem %s595, 32
      %4181 = vst.msk [vmem:[%s4180] sm:$0xff] %vm616, %v4179
      %s4182 = scalar_lea.vmem %s575, 80
      %v4183 = vld [vmem:[%s4182] sm:$0xff]
      %v4184 = vld [vmem:[%s4182 + $0x8] sm:$0xff]
      %s4185 = scalar_lea.vmem %s585, 40
      %v4186 = vld [vmem:[%s4185] sm:$0xff]
      %s4187 = scalar_lea.vmem %s516, 96
      %v4188 = vld [vmem:[%s4187] sm:$0xff]
      %v4189 = vld [vmem:[%s4187 + $0x8] sm:$0xff]
      %s4190 = scalar_lea.vmem %s548, 48
      %v4191 = vld [vmem:[%s4190] sm:$0xff]
      %v4192 = vld [vmem:[%s6] sm:$0xf]
      %v4194 = vsel %vm620, %v4192, 0
      %4196 = vmatprep.subr.mxu0 0.0
      %4197 = vmatpush1.msra.mxu0 %v4194
      %4198 = vmatprep.subr.mxu0 0.0
      %4199 = vmatpush1.msra.mxu0 0.0
      %4200 = vmatprep.subr.mxu0 0.0
      %4201 = vmatpush1.msra.mxu0 0.0
      %4202 = vmatprep.subr.mxu0 0.0
      %4203 = vmatpush1.msra.mxu0 0.0
      %4204 = vmatprep.subr.mxu0 0.0
      %4205 = vmatpush1.msra.mxu0 0.0
      %4206 = vmatprep.subr.mxu0 0.0
      %4207 = vmatpush1.msra.mxu0 0.0
      %4208 = vmatprep.subr.mxu0 0.0
      %4209 = vmatpush1.msra.mxu0 0.0
      %4210 = vmatprep.subr.mxu0 0.0
      %4211 = vmatpush1.msra.mxu0 0.0
      %4212 = vmatprep.subr.mxu0 0.0
      %4213 = vmatpush1.msra.mxu0 0.0
      %4214 = vmatprep.subr.mxu0 0.0
      %4215 = vmatpush1.msra.mxu0 0.0
      %4216 = vmatprep.subr.mxu0 0.0
      %4217 = vmatpush1.msra.mxu0 0.0
      %4218 = vmatprep.subr.mxu0 0.0
      %4219 = vmatpush1.msra.mxu0 0.0
      %4220 = vmatprep.subr.mxu0 0.0
      %4221 = vmatpush1.msra.mxu0 0.0
      %4222 = vmatprep.subr.mxu0 0.0
      %4223 = vmatpush1.msra.mxu0 0.0
      %4224 = vmatprep.subr.mxu0 0.0
      %4225 = vmatpush1.msra.mxu0 0.0
      %4226 = vmatprep.subr.mxu0 0.0
      %4227 = vmatpush1.msra.mxu0 0.0
      %4228 = vmatprep.subr.mxu0 0.0
      %4229 = vmatpush1.msra.mxu0 0.0
      %4230 = vmatprep.subr.mxu0 0.0
      %4231 = vmatpush1.msra.mxu0 0.0
      %4232 = vmatprep.subr.mxu0 0.0
      %4233 = vmatpush1.msra.mxu0 0.0
      %4234 = vmatprep.subr.mxu0 0.0
      %4235 = vmatpush1.msra.mxu0 0.0
      %4236 = vmatprep.subr.mxu0 0.0
      %4237 = vmatpush1.msra.mxu0 0.0
      %4238 = vmatprep.subr.mxu0 0.0
      %4239 = vmatpush1.msra.mxu0 0.0
      %4240 = vmatprep.subr.mxu0 0.0
      %4241 = vmatpush1.msra.mxu0 0.0
      %4242 = vmatprep.subr.mxu0 0.0
      %4243 = vmatpush1.msra.mxu0 0.0
      %4244 = vmatprep.subr.mxu0 0.0
      %4245 = vmatpush1.msra.mxu0 0.0
      %4246 = vmatprep.subr.mxu0 0.0
      %4247 = vmatpush1.msra.mxu0 0.0
      %4248 = vmatprep.subr.mxu0 0.0
      %4249 = vmatpush1.msra.mxu0 0.0
      %4250 = vmatprep.subr.mxu0 0.0
      %4251 = vmatpush1.msra.mxu0 0.0
      %4252 = vmatprep.subr.mxu0 0.0
      %4253 = vmatpush1.msra.mxu0 0.0
      %4254 = vmatprep.subr.mxu0 0.0
      %4255 = vmatpush1.msra.mxu0 0.0
      %4256 = vmatprep.subr.mxu0 0.0
      %4257 = vmatpush1.msra.mxu0 0.0
      %4258 = vmatprep.subr.mxu0 0.0
      %4259 = vmatpush1.msra.mxu0 0.0
      %4260 = vmatprep.mubr.f32.mxu0 0.0
      %4261 = vmatmul.mubr.f32.gmra.mrb[0].mxu0 %v3945
      %v4262 = vpop.f32.mrb[0].mxu0
      %v4263 = vadd.f32 0.0, %v4262
      %v4264 = vpop.f32.mrb[0].mxu0
      %4265 = vdwg.mxu0
      %v4266 = vadd.f32 %v602, %v4263
      %v4267 = vld [vmem:[%s695] sm:$0xf]
      %v4269 = vsel %vm620, %v4267, 0
      %4271 = vmatprep.subr.mxu0 0.0
      %4272 = vmatpush1.msra.mxu0 %v4269
      %4273 = vmatprep.subr.mxu0 0.0
      %4274 = vmatpush1.msra.mxu0 0.0
      %4275 = vmatprep.subr.mxu0 0.0
      %4276 = vmatpush1.msra.mxu0 0.0
      %4277 = vmatprep.subr.mxu0 0.0
      %4278 = vmatpush1.msra.mxu0 0.0
      %4279 = vmatprep.subr.mxu0 0.0
      %4280 = vmatpush1.msra.mxu0 0.0
      %4281 = vmatprep.subr.mxu0 0.0
      %4282 = vmatpush1.msra.mxu0 0.0
      %4283 = vmatprep.subr.mxu0 0.0
      %4284 = vmatpush1.msra.mxu0 0.0
      %4285 = vmatprep.subr.mxu0 0.0
      %4286 = vmatpush1.msra.mxu0 0.0
      %4287 = vmatprep.subr.mxu0 0.0
      %4288 = vmatpush1.msra.mxu0 0.0
      %4289 = vmatprep.subr.mxu0 0.0
      %4290 = vmatpush1.msra.mxu0 0.0
      %4291 = vmatprep.subr.mxu0 0.0
      %4292 = vmatpush1.msra.mxu0 0.0
      %4293 = vmatprep.subr.mxu0 0.0
      %4294 = vmatpush1.msra.mxu0 0.0
      %4295 = vmatprep.subr.mxu0 0.0
      %4296 = vmatpush1.msra.mxu0 0.0
      %4297 = vmatprep.subr.mxu0 0.0
      %4298 = vmatpush1.msra.mxu0 0.0
      %4299 = vmatprep.subr.mxu0 0.0
      %4300 = vmatpush1.msra.mxu0 0.0
      %4301 = vmatprep.subr.mxu0 0.0
      %4302 = vmatpush1.msra.mxu0 0.0
      %4303 = vmatprep.subr.mxu0 0.0
      %4304 = vmatpush1.msra.mxu0 0.0
      %4305 = vmatprep.subr.mxu0 0.0
      %4306 = vmatpush1.msra.mxu0 0.0
      %4307 = vmatprep.subr.mxu0 0.0
      %4308 = vmatpush1.msra.mxu0 0.0
      %4309 = vmatprep.subr.mxu0 0.0
      %4310 = vmatpush1.msra.mxu0 0.0
      %4311 = vmatprep.subr.mxu0 0.0
      %4312 = vmatpush1.msra.mxu0 0.0
      %4313 = vmatprep.subr.mxu0 0.0
      %4314 = vmatpush1.msra.mxu0 0.0
      %4315 = vmatprep.subr.mxu0 0.0
      %4316 = vmatpush1.msra.mxu0 0.0
      %4317 = vmatprep.subr.mxu0 0.0
      %4318 = vmatpush1.msra.mxu0 0.0
      %4319 = vmatprep.subr.mxu0 0.0
      %4320 = vmatpush1.msra.mxu0 0.0
      %4321 = vmatprep.subr.mxu0 0.0
      %4322 = vmatpush1.msra.mxu0 0.0
      %4323 = vmatprep.subr.mxu0 0.0
      %4324 = vmatpush1.msra.mxu0 0.0
      %4325 = vmatprep.subr.mxu0 0.0
      %4326 = vmatpush1.msra.mxu0 0.0
      %4327 = vmatprep.subr.mxu0 0.0
      %4328 = vmatpush1.msra.mxu0 0.0
      %4329 = vmatprep.subr.mxu0 0.0
      %4330 = vmatpush1.msra.mxu0 0.0
      %4331 = vmatprep.subr.mxu0 0.0
      %4332 = vmatpush1.msra.mxu0 0.0
      %4333 = vmatprep.subr.mxu0 0.0
      %4334 = vmatpush1.msra.mxu0 0.0
      %4335 = vmatprep.mubr.f32.mxu0 0.0
      %4336 = vmatmul.mubr.f32.gmra.mrb[0].mxu0 %v4023
      %v4337 = vpop.f32.mrb[0].mxu0
      %v4338 = vadd.f32 0.0, %v4337
      %v4339 = vpop.f32.mrb[0].mxu0
      %4340 = vdwg.mxu0
      %v4341 = vadd.f32 %v4266, %v4338
      %v4342 = vld [vmem:[%s774] sm:$0xf]
      %v4344 = vsel %vm620, %v4342, 0
      %4346 = vmatprep.subr.mxu0 0.0
      %4347 = vmatpush1.msra.mxu0 %v4344
      %4348 = vmatprep.subr.mxu0 0.0
      %4349 = vmatpush1.msra.mxu0 0.0
      %4350 = vmatprep.subr.mxu0 0.0
      %4351 = vmatpush1.msra.mxu0 0.0
      %4352 = vmatprep.subr.mxu0 0.0
      %4353 = vmatpush1.msra.mxu0 0.0
      %4354 = vmatprep.subr.mxu0 0.0
      %4355 = vmatpush1.msra.mxu0 0.0
      %4356 = vmatprep.subr.mxu0 0.0
      %4357 = vmatpush1.msra.mxu0 0.0
      %4358 = vmatprep.subr.mxu0 0.0
      %4359 = vmatpush1.msra.mxu0 0.0
      %4360 = vmatprep.subr.mxu0 0.0
      %4361 = vmatpush1.msra.mxu0 0.0
      %4362 = vmatprep.subr.mxu0 0.0
      %4363 = vmatpush1.msra.mxu0 0.0
      %4364 = vmatprep.subr.mxu0 0.0
      %4365 = vmatpush1.msra.mxu0 0.0
      %4366 = vmatprep.subr.mxu0 0.0
      %4367 = vmatpush1.msra.mxu0 0.0
      %4368 = vmatprep.subr.mxu0 0.0
      %4369 = vmatpush1.msra.mxu0 0.0
      %4370 = vmatprep.subr.mxu0 0.0
      %4371 = vmatpush1.msra.mxu0 0.0
      %4372 = vmatprep.subr.mxu0 0.0
      %4373 = vmatpush1.msra.mxu0 0.0
      %4374 = vmatprep.subr.mxu0 0.0
      %4375 = vmatpush1.msra.mxu0 0.0
      %4376 = vmatprep.subr.mxu0 0.0
      %4377 = vmatpush1.msra.mxu0 0.0
      %4378 = vmatprep.subr.mxu0 0.0
      %4379 = vmatpush1.msra.mxu0 0.0
      %4380 = vmatprep.subr.mxu0 0.0
      %4381 = vmatpush1.msra.mxu0 0.0
      %4382 = vmatprep.subr.mxu0 0.0
      %4383 = vmatpush1.msra.mxu0 0.0
      %4384 = vmatprep.subr.mxu0 0.0
      %4385 = vmatpush1.msra.mxu0 0.0
      %4386 = vmatprep.subr.mxu0 0.0
      %4387 = vmatpush1.msra.mxu0 0.0
      %4388 = vmatprep.subr.mxu0 0.0
      %4389 = vmatpush1.msra.mxu0 0.0
      %4390 = vmatprep.subr.mxu0 0.0
      %4391 = vmatpush1.msra.mxu0 0.0
      %4392 = vmatprep.subr.mxu0 0.0
      %4393 = vmatpush1.msra.mxu0 0.0
      %4394 = vmatprep.subr.mxu0 0.0
      %4395 = vmatpush1.msra.mxu0 0.0
      %4396 = vmatprep.subr.mxu0 0.0
      %4397 = vmatpush1.msra.mxu0 0.0
      %4398 = vmatprep.subr.mxu0 0.0
      %4399 = vmatpush1.msra.mxu0 0.0
      %4400 = vmatprep.subr.mxu0 0.0
      %4401 = vmatpush1.msra.mxu0 0.0
      %4402 = vmatprep.subr.mxu0 0.0
      %4403 = vmatpush1.msra.mxu0 0.0
      %4404 = vmatprep.subr.mxu0 0.0
      %4405 = vmatpush1.msra.mxu0 0.0
      %4406 = vmatprep.subr.mxu0 0.0
      %4407 = vmatpush1.msra.mxu0 0.0
      %4408 = vmatprep.subr.mxu0 0.0
      %4409 = vmatpush1.msra.mxu0 0.0
      %4410 = vmatprep.mubr.f32.mxu0 0.0
      %4411 = vmatmul.mubr.f32.gmra.mrb[0].mxu0 %v4104
      %v4412 = vpop.f32.mrb[0].mxu0
      %v4413 = vadd.f32 0.0, %v4412
      %v4414 = vpop.f32.mrb[0].mxu0
      %4415 = vdwg.mxu0
      %v4416 = vadd.f32 %v4341, %v4413
      %v4417 = vld [vmem:[%s857] sm:$0xf]
      %v4419 = vsel %vm616, %v4183, 0
      %v4422 = vsel %vm620, %v4417, 0
      %4424 = vmatprep.subr.mxu0 0.0
      %4425 = vmatpush1.msra.mxu0 %v4422
      %4426 = vmatprep.subr.mxu0 0.0
      %4427 = vmatpush1.msra.mxu0 0.0
      %4428 = vmatprep.subr.mxu0 0.0
      %4429 = vmatpush1.msra.mxu0 0.0
      %4430 = vmatprep.subr.mxu0 0.0
      %4431 = vmatpush1.msra.mxu0 0.0
      %4432 = vmatprep.subr.mxu0 0.0
      %4433 = vmatpush1.msra.mxu0 0.0
      %4434 = vmatprep.subr.mxu0 0.0
      %4435 = vmatpush1.msra.mxu0 0.0
      %4436 = vmatprep.subr.mxu0 0.0
      %4437 = vmatpush1.msra.mxu0 0.0
      %4438 = vmatprep.subr.mxu0 0.0
      %4439 = vmatpush1.msra.mxu0 0.0
      %4440 = vmatprep.subr.mxu0 0.0
      %4441 = vmatpush1.msra.mxu0 0.0
      %4442 = vmatprep.subr.mxu0 0.0
      %4443 = vmatpush1.msra.mxu0 0.0
      %4444 = vmatprep.subr.mxu0 0.0
      %4445 = vmatpush1.msra.mxu0 0.0
      %4446 = vmatprep.subr.mxu0 0.0
      %4447 = vmatpush1.msra.mxu0 0.0
      %4448 = vmatprep.subr.mxu0 0.0
      %4449 = vmatpush1.msra.mxu0 0.0
      %4450 = vmatprep.subr.mxu0 0.0
      %4451 = vmatpush1.msra.mxu0 0.0
      %4452 = vmatprep.subr.mxu0 0.0
      %4453 = vmatpush1.msra.mxu0 0.0
      %4454 = vmatprep.subr.mxu0 0.0
      %4455 = vmatpush1.msra.mxu0 0.0
      %4456 = vmatprep.subr.mxu0 0.0
      %4457 = vmatpush1.msra.mxu0 0.0
      %4458 = vmatprep.subr.mxu0 0.0
      %4459 = vmatpush1.msra.mxu0 0.0
      %4460 = vmatprep.subr.mxu0 0.0
      %4461 = vmatpush1.msra.mxu0 0.0
      %4462 = vmatprep.subr.mxu0 0.0
      %4463 = vmatpush1.msra.mxu0 0.0
      %4464 = vmatprep.subr.mxu0 0.0
      %4465 = vmatpush1.msra.mxu0 0.0
      %4466 = vmatprep.subr.mxu0 0.0
      %4467 = vmatpush1.msra.mxu0 0.0
      %4468 = vmatprep.subr.mxu0 0.0
      %4469 = vmatpush1.msra.mxu0 0.0
      %4470 = vmatprep.subr.mxu0 0.0
      %4471 = vmatpush1.msra.mxu0 0.0
      %4472 = vmatprep.subr.mxu0 0.0
      %4473 = vmatpush1.msra.mxu0 0.0
      %4474 = vmatprep.subr.mxu0 0.0
      %4475 = vmatpush1.msra.mxu0 0.0
      %4476 = vmatprep.subr.mxu0 0.0
      %4477 = vmatpush1.msra.mxu0 0.0
      %4478 = vmatprep.subr.mxu0 0.0
      %4479 = vmatpush1.msra.mxu0 0.0
      %4480 = vmatprep.subr.mxu0 0.0
      %4481 = vmatpush1.msra.mxu0 0.0
      %4482 = vmatprep.subr.mxu0 0.0
      %4483 = vmatpush1.msra.mxu0 0.0
      %4484 = vmatprep.subr.mxu0 0.0
      %4485 = vmatpush1.msra.mxu0 0.0
      %4486 = vmatprep.subr.mxu0 0.0
      %4487 = vmatpush1.msra.mxu0 0.0
      %4488 = vmatprep.mubr.f32.mxu0 0.0
      %4489 = vmatmul.mubr.f32.gmra.mrb[0].mxu0 %v4419
      %v4490 = vpop.f32.mrb[0].mxu0
      %v4491 = vadd.f32 0.0, %v4490
      %v4492 = vpop.f32.mrb[0].mxu0
      %4493 = vdwg.mxu0
      %v4494 = vadd.f32 %v4416, %v4491
      %v4495 = vld [vmem:[%s936] sm:$0xf]
      %v4497 = vsel %vm616, %v4186, 0
      %v4500 = vsel %vm620, %v4495, 0
      %4502 = vmatprep.subr.mxu0 0.0
      %4503 = vmatpush1.msra.mxu0 %v4500
      %4504 = vmatprep.subr.mxu0 0.0
      %4505 = vmatpush1.msra.mxu0 0.0
      %4506 = vmatprep.subr.mxu0 0.0
      %4507 = vmatpush1.msra.mxu0 0.0
      %4508 = vmatprep.subr.mxu0 0.0
      %4509 = vmatpush1.msra.mxu0 0.0
      %4510 = vmatprep.subr.mxu0 0.0
      %4511 = vmatpush1.msra.mxu0 0.0
      %4512 = vmatprep.subr.mxu0 0.0
      %4513 = vmatpush1.msra.mxu0 0.0
      %4514 = vmatprep.subr.mxu0 0.0
      %4515 = vmatpush1.msra.mxu0 0.0
      %4516 = vmatprep.subr.mxu0 0.0
      %4517 = vmatpush1.msra.mxu0 0.0
      %4518 = vmatprep.subr.mxu0 0.0
      %4519 = vmatpush1.msra.mxu0 0.0
      %4520 = vmatprep.subr.mxu0 0.0
      %4521 = vmatpush1.msra.mxu0 0.0
      %4522 = vmatprep.subr.mxu0 0.0
      %4523 = vmatpush1.msra.mxu0 0.0
      %4524 = vmatprep.subr.mxu0 0.0
      %4525 = vmatpush1.msra.mxu0 0.0
      %4526 = vmatprep.subr.mxu0 0.0
      %4527 = vmatpush1.msra.mxu0 0.0
      %4528 = vmatprep.subr.mxu0 0.0
      %4529 = vmatpush1.msra.mxu0 0.0
      %4530 = vmatprep.subr.mxu0 0.0
      %4531 = vmatpush1.msra.mxu0 0.0
      %4532 = vmatprep.subr.mxu0 0.0
      %4533 = vmatpush1.msra.mxu0 0.0
      %4534 = vmatprep.subr.mxu0 0.0
      %4535 = vmatpush1.msra.mxu0 0.0
      %4536 = vmatprep.subr.mxu0 0.0
      %4537 = vmatpush1.msra.mxu0 0.0
      %4538 = vmatprep.subr.mxu0 0.0
      %4539 = vmatpush1.msra.mxu0 0.0
      %4540 = vmatprep.subr.mxu0 0.0
      %4541 = vmatpush1.msra.mxu0 0.0
      %4542 = vmatprep.subr.mxu0 0.0
      %4543 = vmatpush1.msra.mxu0 0.0
      %4544 = vmatprep.subr.mxu0 0.0
      %4545 = vmatpush1.msra.mxu0 0.0
      %4546 = vmatprep.subr.mxu0 0.0
      %4547 = vmatpush1.msra.mxu0 0.0
      %4548 = vmatprep.subr.mxu0 0.0
      %4549 = vmatpush1.msra.mxu0 0.0
      %4550 = vmatprep.subr.mxu0 0.0
      %4551 = vmatpush1.msra.mxu0 0.0
      %4552 = vmatprep.subr.mxu0 0.0
      %4553 = vmatpush1.msra.mxu0 0.0
      %4554 = vmatprep.subr.mxu0 0.0
      %4555 = vmatpush1.msra.mxu0 0.0
      %4556 = vmatprep.subr.mxu0 0.0
      %4557 = vmatpush1.msra.mxu0 0.0
      %4558 = vmatprep.subr.mxu0 0.0
      %4559 = vmatpush1.msra.mxu0 0.0
      %4560 = vmatprep.subr.mxu0 0.0
      %4561 = vmatpush1.msra.mxu0 0.0
      %4562 = vmatprep.subr.mxu0 0.0
      %4563 = vmatpush1.msra.mxu0 0.0
      %4564 = vmatprep.subr.mxu0 0.0
      %4565 = vmatpush1.msra.mxu0 0.0
      %4566 = vmatprep.mubr.f32.mxu0 0.0
      %4567 = vmatmul.mubr.f32.gmra.mrb[0].mxu0 %v4497
      %v4568 = vpop.f32.mrb[0].mxu0
      %v4569 = vadd.f32 0.0, %v4568
      %v4570 = vpop.f32.mrb[0].mxu0
      %4571 = vdwg.mxu0
      %v4572 = vadd.f32 %v4494, %v4569
      %v4573 = vld [vmem:[%s1015] sm:$0xf]
      %v4575 = vrot.slane %v4183, 1
      %v4576 = vrot.slane %v4184, 1
      %v4577 = vsel %vm777, %v4575, %v4576
      %v4578 = vsel %vm616, %v4577, 0
      %v4581 = vsel %vm620, %v4573, 0
      %4583 = vmatprep.subr.mxu0 0.0
      %4584 = vmatpush1.msra.mxu0 %v4581
      %4585 = vmatprep.subr.mxu0 0.0
      %4586 = vmatpush1.msra.mxu0 0.0
      %4587 = vmatprep.subr.mxu0 0.0
      %4588 = vmatpush1.msra.mxu0 0.0
      %4589 = vmatprep.subr.mxu0 0.0
      %4590 = vmatpush1.msra.mxu0 0.0
      %4591 = vmatprep.subr.mxu0 0.0
      %4592 = vmatpush1.msra.mxu0 0.0
      %4593 = vmatprep.subr.mxu0 0.0
      %4594 = vmatpush1.msra.mxu0 0.0
      %4595 = vmatprep.subr.mxu0 0.0
      %4596 = vmatpush1.msra.mxu0 0.0
      %4597 = vmatprep.subr.mxu0 0.0
      %4598 = vmatpush1.msra.mxu0 0.0
      %4599 = vmatprep.subr.mxu0 0.0
      %4600 = vmatpush1.msra.mxu0 0.0
      %4601 = vmatprep.subr.mxu0 0.0
      %4602 = vmatpush1.msra.mxu0 0.0
      %4603 = vmatprep.subr.mxu0 0.0
      %4604 = vmatpush1.msra.mxu0 0.0
      %4605 = vmatprep.subr.mxu0 0.0
      %4606 = vmatpush1.msra.mxu0 0.0
      %4607 = vmatprep.subr.mxu0 0.0
      %4608 = vmatpush1.msra.mxu0 0.0
      %4609 = vmatprep.subr.mxu0 0.0
      %4610 = vmatpush1.msra.mxu0 0.0
      %4611 = vmatprep.subr.mxu0 0.0
      %4612 = vmatpush1.msra.mxu0 0.0
      %4613 = vmatprep.subr.mxu0 0.0
      %4614 = vmatpush1.msra.mxu0 0.0
      %4615 = vmatprep.subr.mxu0 0.0
      %4616 = vmatpush1.msra.mxu0 0.0
      %4617 = vmatprep.subr.mxu0 0.0
      %4618 = vmatpush1.msra.mxu0 0.0
      %4619 = vmatprep.subr.mxu0 0.0
      %4620 = vmatpush1.msra.mxu0 0.0
      %4621 = vmatprep.subr.mxu0 0.0
      %4622 = vmatpush1.msra.mxu0 0.0
      %4623 = vmatprep.subr.mxu0 0.0
      %4624 = vmatpush1.msra.mxu0 0.0
      %4625 = vmatprep.subr.mxu0 0.0
      %4626 = vmatpush1.msra.mxu0 0.0
      %4627 = vmatprep.subr.mxu0 0.0
      %4628 = vmatpush1.msra.mxu0 0.0
      %4629 = vmatprep.subr.mxu0 0.0
      %4630 = vmatpush1.msra.mxu0 0.0
      %4631 = vmatprep.subr.mxu0 0.0
      %4632 = vmatpush1.msra.mxu0 0.0
      %4633 = vmatprep.subr.mxu0 0.0
      %4634 = vmatpush1.msra.mxu0 0.0
      %4635 = vmatprep.subr.mxu0 0.0
      %4636 = vmatpush1.msra.mxu0 0.0
      %4637 = vmatprep.subr.mxu0 0.0
      %4638 = vmatpush1.msra.mxu0 0.0
      %4639 = vmatprep.subr.mxu0 0.0
      %4640 = vmatpush1.msra.mxu0 0.0
      %4641 = vmatprep.subr.mxu0 0.0
      %4642 = vmatpush1.msra.mxu0 0.0
      %4643 = vmatprep.subr.mxu0 0.0
      %4644 = vmatpush1.msra.mxu0 0.0
      %4645 = vmatprep.subr.mxu0 0.0
      %4646 = vmatpush1.msra.mxu0 0.0
      %4647 = vmatprep.mubr.f32.mxu0 0.0
      %4648 = vmatmul.mubr.f32.gmra.mrb[0].mxu0 %v4578
      %v4649 = vpop.f32.mrb[0].mxu0
      %v4650 = vadd.f32 0.0, %v4649
      %v4651 = vpop.f32.mrb[0].mxu0
      %4652 = vdwg.mxu0
      %v4653 = vadd.f32 %v4572, %v4650
      %v4654 = vld [vmem:[%s1097] sm:$0xf]
      %v4656 = vsel %vm616, %v4188, 0
      %v4659 = vsel %vm620, %v4654, 0
      %4661 = vmatprep.subr.mxu0 0.0
      %4662 = vmatpush1.msra.mxu0 %v4659
      %4663 = vmatprep.subr.mxu0 0.0
      %4664 = vmatpush1.msra.mxu0 0.0
      %4665 = vmatprep.subr.mxu0 0.0
      %4666 = vmatpush1.msra.mxu0 0.0
      %4667 = vmatprep.subr.mxu0 0.0
      %4668 = vmatpush1.msra.mxu0 0.0
      %4669 = vmatprep.subr.mxu0 0.0
      %4670 = vmatpush1.msra.mxu0 0.0
      %4671 = vmatprep.subr.mxu0 0.0
      %4672 = vmatpush1.msra.mxu0 0.0
      %4673 = vmatprep.subr.mxu0 0.0
      %4674 = vmatpush1.msra.mxu0 0.0
      %4675 = vmatprep.subr.mxu0 0.0
      %4676 = vmatpush1.msra.mxu0 0.0
      %4677 = vmatprep.subr.mxu0 0.0
      %4678 = vmatpush1.msra.mxu0 0.0
      %4679 = vmatprep.subr.mxu0 0.0
      %4680 = vmatpush1.msra.mxu0 0.0
      %4681 = vmatprep.subr.mxu0 0.0
      %4682 = vmatpush1.msra.mxu0 0.0
      %4683 = vmatprep.subr.mxu0 0.0
      %4684 = vmatpush1.msra.mxu0 0.0
      %4685 = vmatprep.subr.mxu0 0.0
      %4686 = vmatpush1.msra.mxu0 0.0
      %4687 = vmatprep.subr.mxu0 0.0
      %4688 = vmatpush1.msra.mxu0 0.0
      %4689 = vmatprep.subr.mxu0 0.0
      %4690 = vmatpush1.msra.mxu0 0.0
      %4691 = vmatprep.subr.mxu0 0.0
      %4692 = vmatpush1.msra.mxu0 0.0
      %4693 = vmatprep.subr.mxu0 0.0
      %4694 = vmatpush1.msra.mxu0 0.0
      %4695 = vmatprep.subr.mxu0 0.0
      %4696 = vmatpush1.msra.mxu0 0.0
      %4697 = vmatprep.subr.mxu0 0.0
      %4698 = vmatpush1.msra.mxu0 0.0
      %4699 = vmatprep.subr.mxu0 0.0
      %4700 = vmatpush1.msra.mxu0 0.0
      %4701 = vmatprep.subr.mxu0 0.0
      %4702 = vmatpush1.msra.mxu0 0.0
      %4703 = vmatprep.subr.mxu0 0.0
      %4704 = vmatpush1.msra.mxu0 0.0
      %4705 = vmatprep.subr.mxu0 0.0
      %4706 = vmatpush1.msra.mxu0 0.0
      %4707 = vmatprep.subr.mxu0 0.0
      %4708 = vmatpush1.msra.mxu0 0.0
      %4709 = vmatprep.subr.mxu0 0.0
      %4710 = vmatpush1.msra.mxu0 0.0
      %4711 = vmatprep.subr.mxu0 0.0
      %4712 = vmatpush1.msra.mxu0 0.0
      %4713 = vmatprep.subr.mxu0 0.0
      %4714 = vmatpush1.msra.mxu0 0.0
      %4715 = vmatprep.subr.mxu0 0.0
      %4716 = vmatpush1.msra.mxu0 0.0
      %4717 = vmatprep.subr.mxu0 0.0
      %4718 = vmatpush1.msra.mxu0 0.0
      %4719 = vmatprep.subr.mxu0 0.0
      %4720 = vmatpush1.msra.mxu0 0.0
      %4721 = vmatprep.subr.mxu0 0.0
      %4722 = vmatpush1.msra.mxu0 0.0
      %4723 = vmatprep.subr.mxu0 0.0
      %4724 = vmatpush1.msra.mxu0 0.0
      %4725 = vmatprep.mubr.f32.mxu0 0.0
      %4726 = vmatmul.mubr.f32.gmra.mrb[0].mxu0 %v4656
      %v4727 = vpop.f32.mrb[0].mxu0
      %v4728 = vadd.f32 0.0, %v4727
      %v4729 = vpop.f32.mrb[0].mxu0
      %4730 = vdwg.mxu0
      %v4731 = vadd.f32 %v4653, %v4728
      %v4732 = vld [vmem:[%s1176] sm:$0xf]
      %v4734 = vsel %vm616, %v4191, 0
      %v4737 = vsel %vm620, %v4732, 0
      %4739 = vmatprep.subr.mxu0 0.0
      %4740 = vmatpush1.msra.mxu0 %v4737
      %4741 = vmatprep.subr.mxu0 0.0
      %4742 = vmatpush1.msra.mxu0 0.0
      %4743 = vmatprep.subr.mxu0 0.0
      %4744 = vmatpush1.msra.mxu0 0.0
      %4745 = vmatprep.subr.mxu0 0.0
      %4746 = vmatpush1.msra.mxu0 0.0
      %4747 = vmatprep.subr.mxu0 0.0
      %4748 = vmatpush1.msra.mxu0 0.0
      %4749 = vmatprep.subr.mxu0 0.0
      %4750 = vmatpush1.msra.mxu0 0.0
      %4751 = vmatprep.subr.mxu0 0.0
      %4752 = vmatpush1.msra.mxu0 0.0
      %4753 = vmatprep.subr.mxu0 0.0
      %4754 = vmatpush1.msra.mxu0 0.0
      %4755 = vmatprep.subr.mxu0 0.0
      %4756 = vmatpush1.msra.mxu0 0.0
      %4757 = vmatprep.subr.mxu0 0.0
      %4758 = vmatpush1.msra.mxu0 0.0
      %4759 = vmatprep.subr.mxu0 0.0
      %4760 = vmatpush1.msra.mxu0 0.0
      %4761 = vmatprep.subr.mxu0 0.0
      %4762 = vmatpush1.msra.mxu0 0.0
      %4763 = vmatprep.subr.mxu0 0.0
      %4764 = vmatpush1.msra.mxu0 0.0
      %4765 = vmatprep.subr.mxu0 0.0
      %4766 = vmatpush1.msra.mxu0 0.0
      %4767 = vmatprep.subr.mxu0 0.0
      %4768 = vmatpush1.msra.mxu0 0.0
      %4769 = vmatprep.subr.mxu0 0.0
      %4770 = vmatpush1.msra.mxu0 0.0
      %4771 = vmatprep.subr.mxu0 0.0
      %4772 = vmatpush1.msra.mxu0 0.0
      %4773 = vmatprep.subr.mxu0 0.0
      %4774 = vmatpush1.msra.mxu0 0.0
      %4775 = vmatprep.subr.mxu0 0.0
      %4776 = vmatpush1.msra.mxu0 0.0
      %4777 = vmatprep.subr.mxu0 0.0
      %4778 = vmatpush1.msra.mxu0 0.0
      %4779 = vmatprep.subr.mxu0 0.0
      %4780 = vmatpush1.msra.mxu0 0.0
      %4781 = vmatprep.subr.mxu0 0.0
      %4782 = vmatpush1.msra.mxu0 0.0
      %4783 = vmatprep.subr.mxu0 0.0
      %4784 = vmatpush1.msra.mxu0 0.0
      %4785 = vmatprep.subr.mxu0 0.0
      %4786 = vmatpush1.msra.mxu0 0.0
      %4787 = vmatprep.subr.mxu0 0.0
      %4788 = vmatpush1.msra.mxu0 0.0
      %4789 = vmatprep.subr.mxu0 0.0
      %4790 = vmatpush1.msra.mxu0 0.0
      %4791 = vmatprep.subr.mxu0 0.0
      %4792 = vmatpush1.msra.mxu0 0.0
      %4793 = vmatprep.subr.mxu0 0.0
      %4794 = vmatpush1.msra.mxu0 0.0
      %4795 = vmatprep.subr.mxu0 0.0
      %4796 = vmatpush1.msra.mxu0 0.0
      %4797 = vmatprep.subr.mxu0 0.0
      %4798 = vmatpush1.msra.mxu0 0.0
      %4799 = vmatprep.subr.mxu0 0.0
      %4800 = vmatpush1.msra.mxu0 0.0
      %4801 = vmatprep.subr.mxu0 0.0
      %4802 = vmatpush1.msra.mxu0 0.0
      %4803 = vmatprep.mubr.f32.mxu0 0.0
      %4804 = vmatmul.mubr.f32.gmra.mrb[0].mxu0 %v4734
      %v4805 = vpop.f32.mrb[0].mxu0
      %v4806 = vadd.f32 0.0, %v4805
      %v4807 = vpop.f32.mrb[0].mxu0
      %4808 = vdwg.mxu0
      %v4809 = vadd.f32 %v4731, %v4806
      %v4810 = vld [vmem:[%s1255] sm:$0xf]
      %v4812 = vrot.slane %v4188, 1
      %v4813 = vrot.slane %v4189, 1
      %v4814 = vsel %vm777, %v4812, %v4813
      %v4815 = vsel %vm616, %v4814, 0
      %v4818 = vsel %vm620, %v4810, 0
      %4820 = vmatprep.subr.mxu0 0.0
      %4821 = vmatpush1.msra.mxu0 %v4818
      %4822 = vmatprep.subr.mxu0 0.0
      %4823 = vmatpush1.msra.mxu0 0.0
      %4824 = vmatprep.subr.mxu0 0.0
      %4825 = vmatpush1.msra.mxu0 0.0
      %4826 = vmatprep.subr.mxu0 0.0
      %4827 = vmatpush1.msra.mxu0 0.0
      %4828 = vmatprep.subr.mxu0 0.0
      %4829 = vmatpush1.msra.mxu0 0.0
      %4830 = vmatprep.subr.mxu0 0.0
      %4831 = vmatpush1.msra.mxu0 0.0
      %4832 = vmatprep.subr.mxu0 0.0
      %4833 = vmatpush1.msra.mxu0 0.0
      %4834 = vmatprep.subr.mxu0 0.0
      %4835 = vmatpush1.msra.mxu0 0.0
      %4836 = vmatprep.subr.mxu0 0.0
      %4837 = vmatpush1.msra.mxu0 0.0
      %4838 = vmatprep.subr.mxu0 0.0
      %4839 = vmatpush1.msra.mxu0 0.0
      %4840 = vmatprep.subr.mxu0 0.0
      %4841 = vmatpush1.msra.mxu0 0.0
      %4842 = vmatprep.subr.mxu0 0.0
      %4843 = vmatpush1.msra.mxu0 0.0
      %4844 = vmatprep.subr.mxu0 0.0
      %4845 = vmatpush1.msra.mxu0 0.0
      %4846 = vmatprep.subr.mxu0 0.0
      %4847 = vmatpush1.msra.mxu0 0.0
      %4848 = vmatprep.subr.mxu0 0.0
      %4849 = vmatpush1.msra.mxu0 0.0
      %4850 = vmatprep.subr.mxu0 0.0
      %4851 = vmatpush1.msra.mxu0 0.0
      %4852 = vmatprep.subr.mxu0 0.0
      %4853 = vmatpush1.msra.mxu0 0.0
      %4854 = vmatprep.subr.mxu0 0.0
      %4855 = vmatpush1.msra.mxu0 0.0
      %4856 = vmatprep.subr.mxu0 0.0
      %4857 = vmatpush1.msra.mxu0 0.0
      %4858 = vmatprep.subr.mxu0 0.0
      %4859 = vmatpush1.msra.mxu0 0.0
      %4860 = vmatprep.subr.mxu0 0.0
      %4861 = vmatpush1.msra.mxu0 0.0
      %4862 = vmatprep.subr.mxu0 0.0
      %4863 = vmatpush1.msra.mxu0 0.0
      %4864 = vmatprep.subr.mxu0 0.0
      %4865 = vmatpush1.msra.mxu0 0.0
      %4866 = vmatprep.subr.mxu0 0.0
      %4867 = vmatpush1.msra.mxu0 0.0
      %4868 = vmatprep.subr.mxu0 0.0
      %4869 = vmatpush1.msra.mxu0 0.0
      %4870 = vmatprep.subr.mxu0 0.0
      %4871 = vmatpush1.msra.mxu0 0.0
      %4872 = vmatprep.subr.mxu0 0.0
      %4873 = vmatpush1.msra.mxu0 0.0
      %4874 = vmatprep.subr.mxu0 0.0
      %4875 = vmatpush1.msra.mxu0 0.0
      %4876 = vmatprep.subr.mxu0 0.0
      %4877 = vmatpush1.msra.mxu0 0.0
      %4878 = vmatprep.subr.mxu0 0.0
      %4879 = vmatpush1.msra.mxu0 0.0
      %4880 = vmatprep.subr.mxu0 0.0
      %4881 = vmatpush1.msra.mxu0 0.0
      %4882 = vmatprep.subr.mxu0 0.0
      %4883 = vmatpush1.msra.mxu0 0.0
      %4884 = vmatprep.mubr.f32.mxu0 0.0
      %4885 = vmatmul.mubr.f32.gmra.mrb[0].mxu0 %v4815
      %v4886 = vpop.f32.mrb[0].mxu0
      %v4887 = vadd.f32 0.0, %v4886
      %v4888 = vpop.f32.mrb[0].mxu0
      %4889 = vdwg.mxu0
      %v4890 = vadd.f32 %v4809, %v4887
      %s4891 = scalar_lea.vmem %s595, 40
      %4892 = vst.msk [vmem:[%s4891] sm:$0xff] %vm616, %v4890
      %s4893 = scalar_lea.vmem %s575, 96
      %v4894 = vld [vmem:[%s4893] sm:$0xff]
      %v4895 = vld [vmem:[%s4893 + $0x8] sm:$0xff]
      %s4896 = scalar_lea.vmem %s585, 48
      %v4897 = vld [vmem:[%s4896] sm:$0xff]
      %s4898 = scalar_lea.vmem %s516, 112
      %v4899 = vld [vmem:[%s4898] sm:$0xff]
      %v4900 = vld [vmem:[%s4898 + $0x8] sm:$0xff]
      %s4901 = scalar_lea.vmem %s548, 56
      %v4902 = vld [vmem:[%s4901] sm:$0xff]
      %v4903 = vld [vmem:[%s6] sm:$0xf]
      %v4905 = vsel %vm620, %v4903, 0
      %4907 = vmatprep.subr.mxu0 0.0
      %4908 = vmatpush1.msra.mxu0 %v4905
      %4909 = vmatprep.subr.mxu0 0.0
      %4910 = vmatpush1.msra.mxu0 0.0
      %4911 = vmatprep.subr.mxu0 0.0
      %4912 = vmatpush1.msra.mxu0 0.0
      %4913 = vmatprep.subr.mxu0 0.0
      %4914 = vmatpush1.msra.mxu0 0.0
      %4915 = vmatprep.subr.mxu0 0.0
      %4916 = vmatpush1.msra.mxu0 0.0
      %4917 = vmatprep.subr.mxu0 0.0
      %4918 = vmatpush1.msra.mxu0 0.0
      %4919 = vmatprep.subr.mxu0 0.0
      %4920 = vmatpush1.msra.mxu0 0.0
      %4921 = vmatprep.subr.mxu0 0.0
      %4922 = vmatpush1.msra.mxu0 0.0
      %4923 = vmatprep.subr.mxu0 0.0
      %4924 = vmatpush1.msra.mxu0 0.0
      %4925 = vmatprep.subr.mxu0 0.0
      %4926 = vmatpush1.msra.mxu0 0.0
      %4927 = vmatprep.subr.mxu0 0.0
      %4928 = vmatpush1.msra.mxu0 0.0
      %4929 = vmatprep.subr.mxu0 0.0
      %4930 = vmatpush1.msra.mxu0 0.0
      %4931 = vmatprep.subr.mxu0 0.0
      %4932 = vmatpush1.msra.mxu0 0.0
      %4933 = vmatprep.subr.mxu0 0.0
      %4934 = vmatpush1.msra.mxu0 0.0
      %4935 = vmatprep.subr.mxu0 0.0
      %4936 = vmatpush1.msra.mxu0 0.0
      %4937 = vmatprep.subr.mxu0 0.0
      %4938 = vmatpush1.msra.mxu0 0.0
      %4939 = vmatprep.subr.mxu0 0.0
      %4940 = vmatpush1.msra.mxu0 0.0
      %4941 = vmatprep.subr.mxu0 0.0
      %4942 = vmatpush1.msra.mxu0 0.0
      %4943 = vmatprep.subr.mxu0 0.0
      %4944 = vmatpush1.msra.mxu0 0.0
      %4945 = vmatprep.subr.mxu0 0.0
      %4946 = vmatpush1.msra.mxu0 0.0
      %4947 = vmatprep.subr.mxu0 0.0
      %4948 = vmatpush1.msra.mxu0 0.0
      %4949 = vmatprep.subr.mxu0 0.0
      %4950 = vmatpush1.msra.mxu0 0.0
      %4951 = vmatprep.subr.mxu0 0.0
      %4952 = vmatpush1.msra.mxu0 0.0
      %4953 = vmatprep.subr.mxu0 0.0
      %4954 = vmatpush1.msra.mxu0 0.0
      %4955 = vmatprep.subr.mxu0 0.0
      %4956 = vmatpush1.msra.mxu0 0.0
      %4957 = vmatprep.subr.mxu0 0.0
      %4958 = vmatpush1.msra.mxu0 0.0
      %4959 = vmatprep.subr.mxu0 0.0
      %4960 = vmatpush1.msra.mxu0 0.0
      %4961 = vmatprep.subr.mxu0 0.0
      %4962 = vmatpush1.msra.mxu0 0.0
      %4963 = vmatprep.subr.mxu0 0.0
      %4964 = vmatpush1.msra.mxu0 0.0
      %4965 = vmatprep.subr.mxu0 0.0
      %4966 = vmatpush1.msra.mxu0 0.0
      %4967 = vmatprep.subr.mxu0 0.0
      %4968 = vmatpush1.msra.mxu0 0.0
      %4969 = vmatprep.subr.mxu0 0.0
      %4970 = vmatpush1.msra.mxu0 0.0
      %4971 = vmatprep.mubr.f32.mxu0 0.0
      %4972 = vmatmul.mubr.f32.gmra.mrb[0].mxu0 %v4656
      %v4973 = vpop.f32.mrb[0].mxu0
      %v4974 = vadd.f32 0.0, %v4973
      %v4975 = vpop.f32.mrb[0].mxu0
      %4976 = vdwg.mxu0
      %v4977 = vadd.f32 %v602, %v4974
      %v4978 = vld [vmem:[%s695] sm:$0xf]
      %v4980 = vsel %vm620, %v4978, 0
      %4982 = vmatprep.subr.mxu0 0.0
      %4983 = vmatpush1.msra.mxu0 %v4980
      %4984 = vmatprep.subr.mxu0 0.0
      %4985 = vmatpush1.msra.mxu0 0.0
      %4986 = vmatprep.subr.mxu0 0.0
      %4987 = vmatpush1.msra.mxu0 0.0
      %4988 = vmatprep.subr.mxu0 0.0
      %4989 = vmatpush1.msra.mxu0 0.0
      %4990 = vmatprep.subr.mxu0 0.0
      %4991 = vmatpush1.msra.mxu0 0.0
      %4992 = vmatprep.subr.mxu0 0.0
      %4993 = vmatpush1.msra.mxu0 0.0
      %4994 = vmatprep.subr.mxu0 0.0
      %4995 = vmatpush1.msra.mxu0 0.0
      %4996 = vmatprep.subr.mxu0 0.0
      %4997 = vmatpush1.msra.mxu0 0.0
      %4998 = vmatprep.subr.mxu0 0.0
      %4999 = vmatpush1.msra.mxu0 0.0
      %5000 = vmatprep.subr.mxu0 0.0
      %5001 = vmatpush1.msra.mxu0 0.0
      %5002 = vmatprep.subr.mxu0 0.0
      %5003 = vmatpush1.msra.mxu0 0.0
      %5004 = vmatprep.subr.mxu0 0.0
      %5005 = vmatpush1.msra.mxu0 0.0
      %5006 = vmatprep.subr.mxu0 0.0
      %5007 = vmatpush1.msra.mxu0 0.0
      %5008 = vmatprep.subr.mxu0 0.0
      %5009 = vmatpush1.msra.mxu0 0.0
      %5010 = vmatprep.subr.mxu0 0.0
      %5011 = vmatpush1.msra.mxu0 0.0
      %5012 = vmatprep.subr.mxu0 0.0
      %5013 = vmatpush1.msra.mxu0 0.0
      %5014 = vmatprep.subr.mxu0 0.0
      %5015 = vmatpush1.msra.mxu0 0.0
      %5016 = vmatprep.subr.mxu0 0.0
      %5017 = vmatpush1.msra.mxu0 0.0
      %5018 = vmatprep.subr.mxu0 0.0
      %5019 = vmatpush1.msra.mxu0 0.0
      %5020 = vmatprep.subr.mxu0 0.0
      %5021 = vmatpush1.msra.mxu0 0.0
      %5022 = vmatprep.subr.mxu0 0.0
      %5023 = vmatpush1.msra.mxu0 0.0
      %5024 = vmatprep.subr.mxu0 0.0
      %5025 = vmatpush1.msra.mxu0 0.0
      %5026 = vmatprep.subr.mxu0 0.0
      %5027 = vmatpush1.msra.mxu0 0.0
      %5028 = vmatprep.subr.mxu0 0.0
      %5029 = vmatpush1.msra.mxu0 0.0
      %5030 = vmatprep.subr.mxu0 0.0
      %5031 = vmatpush1.msra.mxu0 0.0
      %5032 = vmatprep.subr.mxu0 0.0
      %5033 = vmatpush1.msra.mxu0 0.0
      %5034 = vmatprep.subr.mxu0 0.0
      %5035 = vmatpush1.msra.mxu0 0.0
      %5036 = vmatprep.subr.mxu0 0.0
      %5037 = vmatpush1.msra.mxu0 0.0
      %5038 = vmatprep.subr.mxu0 0.0
      %5039 = vmatpush1.msra.mxu0 0.0
      %5040 = vmatprep.subr.mxu0 0.0
      %5041 = vmatpush1.msra.mxu0 0.0
      %5042 = vmatprep.subr.mxu0 0.0
      %5043 = vmatpush1.msra.mxu0 0.0
      %5044 = vmatprep.subr.mxu0 0.0
      %5045 = vmatpush1.msra.mxu0 0.0
      %5046 = vmatprep.mubr.f32.mxu0 0.0
      %5047 = vmatmul.mubr.f32.gmra.mrb[0].mxu0 %v4734
      %v5048 = vpop.f32.mrb[0].mxu0
      %v5049 = vadd.f32 0.0, %v5048
      %v5050 = vpop.f32.mrb[0].mxu0
      %5051 = vdwg.mxu0
      %v5052 = vadd.f32 %v4977, %v5049
      %v5053 = vld [vmem:[%s774] sm:$0xf]
      %v5055 = vsel %vm620, %v5053, 0
      %5057 = vmatprep.subr.mxu0 0.0
      %5058 = vmatpush1.msra.mxu0 %v5055
      %5059 = vmatprep.subr.mxu0 0.0
      %5060 = vmatpush1.msra.mxu0 0.0
      %5061 = vmatprep.subr.mxu0 0.0
      %5062 = vmatpush1.msra.mxu0 0.0
      %5063 = vmatprep.subr.mxu0 0.0
      %5064 = vmatpush1.msra.mxu0 0.0
      %5065 = vmatprep.subr.mxu0 0.0
      %5066 = vmatpush1.msra.mxu0 0.0
      %5067 = vmatprep.subr.mxu0 0.0
      %5068 = vmatpush1.msra.mxu0 0.0
      %5069 = vmatprep.subr.mxu0 0.0
      %5070 = vmatpush1.msra.mxu0 0.0
      %5071 = vmatprep.subr.mxu0 0.0
      %5072 = vmatpush1.msra.mxu0 0.0
      %5073 = vmatprep.subr.mxu0 0.0
      %5074 = vmatpush1.msra.mxu0 0.0
      %5075 = vmatprep.subr.mxu0 0.0
      %5076 = vmatpush1.msra.mxu0 0.0
      %5077 = vmatprep.subr.mxu0 0.0
      %5078 = vmatpush1.msra.mxu0 0.0
      %5079 = vmatprep.subr.mxu0 0.0
      %5080 = vmatpush1.msra.mxu0 0.0
      %5081 = vmatprep.subr.mxu0 0.0
      %5082 = vmatpush1.msra.mxu0 0.0
      %5083 = vmatprep.subr.mxu0 0.0
      %5084 = vmatpush1.msra.mxu0 0.0
      %5085 = vmatprep.subr.mxu0 0.0
      %5086 = vmatpush1.msra.mxu0 0.0
      %5087 = vmatprep.subr.mxu0 0.0
      %5088 = vmatpush1.msra.mxu0 0.0
      %5089 = vmatprep.subr.mxu0 0.0
      %5090 = vmatpush1.msra.mxu0 0.0
      %5091 = vmatprep.subr.mxu0 0.0
      %5092 = vmatpush1.msra.mxu0 0.0
      %5093 = vmatprep.subr.mxu0 0.0
      %5094 = vmatpush1.msra.mxu0 0.0
      %5095 = vmatprep.subr.mxu0 0.0
      %5096 = vmatpush1.msra.mxu0 0.0
      %5097 = vmatprep.subr.mxu0 0.0
      %5098 = vmatpush1.msra.mxu0 0.0
      %5099 = vmatprep.subr.mxu0 0.0
      %5100 = vmatpush1.msra.mxu0 0.0
      %5101 = vmatprep.subr.mxu0 0.0
      %5102 = vmatpush1.msra.mxu0 0.0
      %5103 = vmatprep.subr.mxu0 0.0
      %5104 = vmatpush1.msra.mxu0 0.0
      %5105 = vmatprep.subr.mxu0 0.0
      %5106 = vmatpush1.msra.mxu0 0.0
      %5107 = vmatprep.subr.mxu0 0.0
      %5108 = vmatpush1.msra.mxu0 0.0
      %5109 = vmatprep.subr.mxu0 0.0
      %5110 = vmatpush1.msra.mxu0 0.0
      %5111 = vmatprep.subr.mxu0 0.0
      %5112 = vmatpush1.msra.mxu0 0.0
      %5113 = vmatprep.subr.mxu0 0.0
      %5114 = vmatpush1.msra.mxu0 0.0
      %5115 = vmatprep.subr.mxu0 0.0
      %5116 = vmatpush1.msra.mxu0 0.0
      %5117 = vmatprep.subr.mxu0 0.0
      %5118 = vmatpush1.msra.mxu0 0.0
      %5119 = vmatprep.subr.mxu0 0.0
      %5120 = vmatpush1.msra.mxu0 0.0
      %5121 = vmatprep.mubr.f32.mxu0 0.0
      %5122 = vmatmul.mubr.f32.gmra.mrb[0].mxu0 %v4815
      %v5123 = vpop.f32.mrb[0].mxu0
      %v5124 = vadd.f32 0.0, %v5123
      %v5125 = vpop.f32.mrb[0].mxu0
      %5126 = vdwg.mxu0
      %v5127 = vadd.f32 %v5052, %v5124
      %v5128 = vld [vmem:[%s857] sm:$0xf]
      %v5130 = vsel %vm616, %v4894, 0
      %v5133 = vsel %vm620, %v5128, 0
      %5135 = vmatprep.subr.mxu0 0.0
      %5136 = vmatpush1.msra.mxu0 %v5133
      %5137 = vmatprep.subr.mxu0 0.0
      %5138 = vmatpush1.msra.mxu0 0.0
      %5139 = vmatprep.subr.mxu0 0.0
      %5140 = vmatpush1.msra.mxu0 0.0
      %5141 = vmatprep.subr.mxu0 0.0
      %5142 = vmatpush1.msra.mxu0 0.0
      %5143 = vmatprep.subr.mxu0 0.0
      %5144 = vmatpush1.msra.mxu0 0.0
      %5145 = vmatprep.subr.mxu0 0.0
      %5146 = vmatpush1.msra.mxu0 0.0
      %5147 = vmatprep.subr.mxu0 0.0
      %5148 = vmatpush1.msra.mxu0 0.0
      %5149 = vmatprep.subr.mxu0 0.0
      %5150 = vmatpush1.msra.mxu0 0.0
      %5151 = vmatprep.subr.mxu0 0.0
      %5152 = vmatpush1.msra.mxu0 0.0
      %5153 = vmatprep.subr.mxu0 0.0
      %5154 = vmatpush1.msra.mxu0 0.0
      %5155 = vmatprep.subr.mxu0 0.0
      %5156 = vmatpush1.msra.mxu0 0.0
      %5157 = vmatprep.subr.mxu0 0.0
      %5158 = vmatpush1.msra.mxu0 0.0
      %5159 = vmatprep.subr.mxu0 0.0
      %5160 = vmatpush1.msra.mxu0 0.0
      %5161 = vmatprep.subr.mxu0 0.0
      %5162 = vmatpush1.msra.mxu0 0.0
      %5163 = vmatprep.subr.mxu0 0.0
      %5164 = vmatpush1.msra.mxu0 0.0
      %5165 = vmatprep.subr.mxu0 0.0
      %5166 = vmatpush1.msra.mxu0 0.0
      %5167 = vmatprep.subr.mxu0 0.0
      %5168 = vmatpush1.msra.mxu0 0.0
      %5169 = vmatprep.subr.mxu0 0.0
      %5170 = vmatpush1.msra.mxu0 0.0
      %5171 = vmatprep.subr.mxu0 0.0
      %5172 = vmatpush1.msra.mxu0 0.0
      %5173 = vmatprep.subr.mxu0 0.0
      %5174 = vmatpush1.msra.mxu0 0.0
      %5175 = vmatprep.subr.mxu0 0.0
      %5176 = vmatpush1.msra.mxu0 0.0
      %5177 = vmatprep.subr.mxu0 0.0
      %5178 = vmatpush1.msra.mxu0 0.0
      %5179 = vmatprep.subr.mxu0 0.0
      %5180 = vmatpush1.msra.mxu0 0.0
      %5181 = vmatprep.subr.mxu0 0.0
      %5182 = vmatpush1.msra.mxu0 0.0
      %5183 = vmatprep.subr.mxu0 0.0
      %5184 = vmatpush1.msra.mxu0 0.0
      %5185 = vmatprep.subr.mxu0 0.0
      %5186 = vmatpush1.msra.mxu0 0.0
      %5187 = vmatprep.subr.mxu0 0.0
      %5188 = vmatpush1.msra.mxu0 0.0
      %5189 = vmatprep.subr.mxu0 0.0
      %5190 = vmatpush1.msra.mxu0 0.0
      %5191 = vmatprep.subr.mxu0 0.0
      %5192 = vmatpush1.msra.mxu0 0.0
      %5193 = vmatprep.subr.mxu0 0.0
      %5194 = vmatpush1.msra.mxu0 0.0
      %5195 = vmatprep.subr.mxu0 0.0
      %5196 = vmatpush1.msra.mxu0 0.0
      %5197 = vmatprep.subr.mxu0 0.0
      %5198 = vmatpush1.msra.mxu0 0.0
      %5199 = vmatprep.mubr.f32.mxu0 0.0
      %5200 = vmatmul.mubr.f32.gmra.mrb[0].mxu0 %v5130
      %v5201 = vpop.f32.mrb[0].mxu0
      %v5202 = vadd.f32 0.0, %v5201
      %v5203 = vpop.f32.mrb[0].mxu0
      %5204 = vdwg.mxu0
      %v5205 = vadd.f32 %v5127, %v5202
      %v5206 = vld [vmem:[%s936] sm:$0xf]
      %v5208 = vsel %vm616, %v4897, 0
      %v5211 = vsel %vm620, %v5206, 0
      %5213 = vmatprep.subr.mxu0 0.0
      %5214 = vmatpush1.msra.mxu0 %v5211
      %5215 = vmatprep.subr.mxu0 0.0
      %5216 = vmatpush1.msra.mxu0 0.0
      %5217 = vmatprep.subr.mxu0 0.0
      %5218 = vmatpush1.msra.mxu0 0.0
      %5219 = vmatprep.subr.mxu0 0.0
      %5220 = vmatpush1.msra.mxu0 0.0
      %5221 = vmatprep.subr.mxu0 0.0
      %5222 = vmatpush1.msra.mxu0 0.0
      %5223 = vmatprep.subr.mxu0 0.0
      %5224 = vmatpush1.msra.mxu0 0.0
      %5225 = vmatprep.subr.mxu0 0.0
      %5226 = vmatpush1.msra.mxu0 0.0
      %5227 = vmatprep.subr.mxu0 0.0
      %5228 = vmatpush1.msra.mxu0 0.0
      %5229 = vmatprep.subr.mxu0 0.0
      %5230 = vmatpush1.msra.mxu0 0.0
      %5231 = vmatprep.subr.mxu0 0.0
      %5232 = vmatpush1.msra.mxu0 0.0
      %5233 = vmatprep.subr.mxu0 0.0
      %5234 = vmatpush1.msra.mxu0 0.0
      %5235 = vmatprep.subr.mxu0 0.0
      %5236 = vmatpush1.msra.mxu0 0.0
      %5237 = vmatprep.subr.mxu0 0.0
      %5238 = vmatpush1.msra.mxu0 0.0
      %5239 = vmatprep.subr.mxu0 0.0
      %5240 = vmatpush1.msra.mxu0 0.0
      %5241 = vmatprep.subr.mxu0 0.0
      %5242 = vmatpush1.msra.mxu0 0.0
      %5243 = vmatprep.subr.mxu0 0.0
      %5244 = vmatpush1.msra.mxu0 0.0
      %5245 = vmatprep.subr.mxu0 0.0
      %5246 = vmatpush1.msra.mxu0 0.0
      %5247 = vmatprep.subr.mxu0 0.0
      %5248 = vmatpush1.msra.mxu0 0.0
      %5249 = vmatprep.subr.mxu0 0.0
      %5250 = vmatpush1.msra.mxu0 0.0
      %5251 = vmatprep.subr.mxu0 0.0
      %5252 = vmatpush1.msra.mxu0 0.0
      %5253 = vmatprep.subr.mxu0 0.0
      %5254 = vmatpush1.msra.mxu0 0.0
      %5255 = vmatprep.subr.mxu0 0.0
      %5256 = vmatpush1.msra.mxu0 0.0
      %5257 = vmatprep.subr.mxu0 0.0
      %5258 = vmatpush1.msra.mxu0 0.0
      %5259 = vmatprep.subr.mxu0 0.0
      %5260 = vmatpush1.msra.mxu0 0.0
      %5261 = vmatprep.subr.mxu0 0.0
      %5262 = vmatpush1.msra.mxu0 0.0
      %5263 = vmatprep.subr.mxu0 0.0
      %5264 = vmatpush1.msra.mxu0 0.0
      %5265 = vmatprep.subr.mxu0 0.0
      %5266 = vmatpush1.msra.mxu0 0.0
      %5267 = vmatprep.subr.mxu0 0.0
      %5268 = vmatpush1.msra.mxu0 0.0
      %5269 = vmatprep.subr.mxu0 0.0
      %5270 = vmatpush1.msra.mxu0 0.0
      %5271 = vmatprep.subr.mxu0 0.0
      %5272 = vmatpush1.msra.mxu0 0.0
      %5273 = vmatprep.subr.mxu0 0.0
      %5274 = vmatpush1.msra.mxu0 0.0
      %5275 = vmatprep.subr.mxu0 0.0
      %5276 = vmatpush1.msra.mxu0 0.0
      %5277 = vmatprep.mubr.f32.mxu0 0.0
      %5278 = vmatmul.mubr.f32.gmra.mrb[0].mxu0 %v5208
      %v5279 = vpop.f32.mrb[0].mxu0
      %v5280 = vadd.f32 0.0, %v5279
      %v5281 = vpop.f32.mrb[0].mxu0
      %5282 = vdwg.mxu0
      %v5283 = vadd.f32 %v5205, %v5280
      %v5284 = vld [vmem:[%s1015] sm:$0xf]
      %v5286 = vrot.slane %v4894, 1
      %v5287 = vrot.slane %v4895, 1
      %v5288 = vsel %vm777, %v5286, %v5287
      %v5289 = vsel %vm616, %v5288, 0
      %v5292 = vsel %vm620, %v5284, 0
      %5294 = vmatprep.subr.mxu0 0.0
      %5295 = vmatpush1.msra.mxu0 %v5292
      %5296 = vmatprep.subr.mxu0 0.0
      %5297 = vmatpush1.msra.mxu0 0.0
      %5298 = vmatprep.subr.mxu0 0.0
      %5299 = vmatpush1.msra.mxu0 0.0
      %5300 = vmatprep.subr.mxu0 0.0
      %5301 = vmatpush1.msra.mxu0 0.0
      %5302 = vmatprep.subr.mxu0 0.0
      %5303 = vmatpush1.msra.mxu0 0.0
      %5304 = vmatprep.subr.mxu0 0.0
      %5305 = vmatpush1.msra.mxu0 0.0
      %5306 = vmatprep.subr.mxu0 0.0
      %5307 = vmatpush1.msra.mxu0 0.0
      %5308 = vmatprep.subr.mxu0 0.0
      %5309 = vmatpush1.msra.mxu0 0.0
      %5310 = vmatprep.subr.mxu0 0.0
      %5311 = vmatpush1.msra.mxu0 0.0
      %5312 = vmatprep.subr.mxu0 0.0
      %5313 = vmatpush1.msra.mxu0 0.0
      %5314 = vmatprep.subr.mxu0 0.0
      %5315 = vmatpush1.msra.mxu0 0.0
      %5316 = vmatprep.subr.mxu0 0.0
      %5317 = vmatpush1.msra.mxu0 0.0
      %5318 = vmatprep.subr.mxu0 0.0
      %5319 = vmatpush1.msra.mxu0 0.0
      %5320 = vmatprep.subr.mxu0 0.0
      %5321 = vmatpush1.msra.mxu0 0.0
      %5322 = vmatprep.subr.mxu0 0.0
      %5323 = vmatpush1.msra.mxu0 0.0
      %5324 = vmatprep.subr.mxu0 0.0
      %5325 = vmatpush1.msra.mxu0 0.0
      %5326 = vmatprep.subr.mxu0 0.0
      %5327 = vmatpush1.msra.mxu0 0.0
      %5328 = vmatprep.subr.mxu0 0.0
      %5329 = vmatpush1.msra.mxu0 0.0
      %5330 = vmatprep.subr.mxu0 0.0
      %5331 = vmatpush1.msra.mxu0 0.0
      %5332 = vmatprep.subr.mxu0 0.0
      %5333 = vmatpush1.msra.mxu0 0.0
      %5334 = vmatprep.subr.mxu0 0.0
      %5335 = vmatpush1.msra.mxu0 0.0
      %5336 = vmatprep.subr.mxu0 0.0
      %5337 = vmatpush1.msra.mxu0 0.0
      %5338 = vmatprep.subr.mxu0 0.0
      %5339 = vmatpush1.msra.mxu0 0.0
      %5340 = vmatprep.subr.mxu0 0.0
      %5341 = vmatpush1.msra.mxu0 0.0
      %5342 = vmatprep.subr.mxu0 0.0
      %5343 = vmatpush1.msra.mxu0 0.0
      %5344 = vmatprep.subr.mxu0 0.0
      %5345 = vmatpush1.msra.mxu0 0.0
      %5346 = vmatprep.subr.mxu0 0.0
      %5347 = vmatpush1.msra.mxu0 0.0
      %5348 = vmatprep.subr.mxu0 0.0
      %5349 = vmatpush1.msra.mxu0 0.0
      %5350 = vmatprep.subr.mxu0 0.0
      %5351 = vmatpush1.msra.mxu0 0.0
      %5352 = vmatprep.subr.mxu0 0.0
      %5353 = vmatpush1.msra.mxu0 0.0
      %5354 = vmatprep.subr.mxu0 0.0
      %5355 = vmatpush1.msra.mxu0 0.0
      %5356 = vmatprep.subr.mxu0 0.0
      %5357 = vmatpush1.msra.mxu0 0.0
      %5358 = vmatprep.mubr.f32.mxu0 0.0
      %5359 = vmatmul.mubr.f32.gmra.mrb[0].mxu0 %v5289
      %v5360 = vpop.f32.mrb[0].mxu0
      %v5361 = vadd.f32 0.0, %v5360
      %v5362 = vpop.f32.mrb[0].mxu0
      %5363 = vdwg.mxu0
      %v5364 = vadd.f32 %v5283, %v5361
      %v5365 = vld [vmem:[%s1097] sm:$0xf]
      %v5367 = vsel %vm616, %v4899, 0
      %v5370 = vsel %vm620, %v5365, 0
      %5372 = vmatprep.subr.mxu0 0.0
      %5373 = vmatpush1.msra.mxu0 %v5370
      %5374 = vmatprep.subr.mxu0 0.0
      %5375 = vmatpush1.msra.mxu0 0.0
      %5376 = vmatprep.subr.mxu0 0.0
      %5377 = vmatpush1.msra.mxu0 0.0
      %5378 = vmatprep.subr.mxu0 0.0
      %5379 = vmatpush1.msra.mxu0 0.0
      %5380 = vmatprep.subr.mxu0 0.0
      %5381 = vmatpush1.msra.mxu0 0.0
      %5382 = vmatprep.subr.mxu0 0.0
      %5383 = vmatpush1.msra.mxu0 0.0
      %5384 = vmatprep.subr.mxu0 0.0
      %5385 = vmatpush1.msra.mxu0 0.0
      %5386 = vmatprep.subr.mxu0 0.0
      %5387 = vmatpush1.msra.mxu0 0.0
      %5388 = vmatprep.subr.mxu0 0.0
      %5389 = vmatpush1.msra.mxu0 0.0
      %5390 = vmatprep.subr.mxu0 0.0
      %5391 = vmatpush1.msra.mxu0 0.0
      %5392 = vmatprep.subr.mxu0 0.0
      %5393 = vmatpush1.msra.mxu0 0.0
      %5394 = vmatprep.subr.mxu0 0.0
      %5395 = vmatpush1.msra.mxu0 0.0
      %5396 = vmatprep.subr.mxu0 0.0
      %5397 = vmatpush1.msra.mxu0 0.0
      %5398 = vmatprep.subr.mxu0 0.0
      %5399 = vmatpush1.msra.mxu0 0.0
      %5400 = vmatprep.subr.mxu0 0.0
      %5401 = vmatpush1.msra.mxu0 0.0
      %5402 = vmatprep.subr.mxu0 0.0
      %5403 = vmatpush1.msra.mxu0 0.0
      %5404 = vmatprep.subr.mxu0 0.0
      %5405 = vmatpush1.msra.mxu0 0.0
      %5406 = vmatprep.subr.mxu0 0.0
      %5407 = vmatpush1.msra.mxu0 0.0
      %5408 = vmatprep.subr.mxu0 0.0
      %5409 = vmatpush1.msra.mxu0 0.0
      %5410 = vmatprep.subr.mxu0 0.0
      %5411 = vmatpush1.msra.mxu0 0.0
      %5412 = vmatprep.subr.mxu0 0.0
      %5413 = vmatpush1.msra.mxu0 0.0
      %5414 = vmatprep.subr.mxu0 0.0
      %5415 = vmatpush1.msra.mxu0 0.0
      %5416 = vmatprep.subr.mxu0 0.0
      %5417 = vmatpush1.msra.mxu0 0.0
      %5418 = vmatprep.subr.mxu0 0.0
      %5419 = vmatpush1.msra.mxu0 0.0
      %5420 = vmatprep.subr.mxu0 0.0
      %5421 = vmatpush1.msra.mxu0 0.0
      %5422 = vmatprep.subr.mxu0 0.0
      %5423 = vmatpush1.msra.mxu0 0.0
      %5424 = vmatprep.subr.mxu0 0.0
      %5425 = vmatpush1.msra.mxu0 0.0
      %5426 = vmatprep.subr.mxu0 0.0
      %5427 = vmatpush1.msra.mxu0 0.0
      %5428 = vmatprep.subr.mxu0 0.0
      %5429 = vmatpush1.msra.mxu0 0.0
      %5430 = vmatprep.subr.mxu0 0.0
      %5431 = vmatpush1.msra.mxu0 0.0
      %5432 = vmatprep.subr.mxu0 0.0
      %5433 = vmatpush1.msra.mxu0 0.0
      %5434 = vmatprep.subr.mxu0 0.0
      %5435 = vmatpush1.msra.mxu0 0.0
      %5436 = vmatprep.mubr.f32.mxu0 0.0
      %5437 = vmatmul.mubr.f32.gmra.mrb[0].mxu0 %v5367
      %v5438 = vpop.f32.mrb[0].mxu0
      %v5439 = vadd.f32 0.0, %v5438
      %v5440 = vpop.f32.mrb[0].mxu0
      %5441 = vdwg.mxu0
      %v5442 = vadd.f32 %v5364, %v5439
      %v5443 = vld [vmem:[%s1176] sm:$0xf]
      %v5445 = vsel %vm616, %v4902, 0
      %v5448 = vsel %vm620, %v5443, 0
      %5450 = vmatprep.subr.mxu0 0.0
      %5451 = vmatpush1.msra.mxu0 %v5448
      %5452 = vmatprep.subr.mxu0 0.0
      %5453 = vmatpush1.msra.mxu0 0.0
      %5454 = vmatprep.subr.mxu0 0.0
      %5455 = vmatpush1.msra.mxu0 0.0
      %5456 = vmatprep.subr.mxu0 0.0
      %5457 = vmatpush1.msra.mxu0 0.0
      %5458 = vmatprep.subr.mxu0 0.0
      %5459 = vmatpush1.msra.mxu0 0.0
      %5460 = vmatprep.subr.mxu0 0.0
      %5461 = vmatpush1.msra.mxu0 0.0
      %5462 = vmatprep.subr.mxu0 0.0
      %5463 = vmatpush1.msra.mxu0 0.0
      %5464 = vmatprep.subr.mxu0 0.0
      %5465 = vmatpush1.msra.mxu0 0.0
      %5466 = vmatprep.subr.mxu0 0.0
      %5467 = vmatpush1.msra.mxu0 0.0
      %5468 = vmatprep.subr.mxu0 0.0
      %5469 = vmatpush1.msra.mxu0 0.0
      %5470 = vmatprep.subr.mxu0 0.0
      %5471 = vmatpush1.msra.mxu0 0.0
      %5472 = vmatprep.subr.mxu0 0.0
      %5473 = vmatpush1.msra.mxu0 0.0
      %5474 = vmatprep.subr.mxu0 0.0
      %5475 = vmatpush1.msra.mxu0 0.0
      %5476 = vmatprep.subr.mxu0 0.0
      %5477 = vmatpush1.msra.mxu0 0.0
      %5478 = vmatprep.subr.mxu0 0.0
      %5479 = vmatpush1.msra.mxu0 0.0
      %5480 = vmatprep.subr.mxu0 0.0
      %5481 = vmatpush1.msra.mxu0 0.0
      %5482 = vmatprep.subr.mxu0 0.0
      %5483 = vmatpush1.msra.mxu0 0.0
      %5484 = vmatprep.subr.mxu0 0.0
      %5485 = vmatpush1.msra.mxu0 0.0
      %5486 = vmatprep.subr.mxu0 0.0
      %5487 = vmatpush1.msra.mxu0 0.0
      %5488 = vmatprep.subr.mxu0 0.0
      %5489 = vmatpush1.msra.mxu0 0.0
      %5490 = vmatprep.subr.mxu0 0.0
      %5491 = vmatpush1.msra.mxu0 0.0
      %5492 = vmatprep.subr.mxu0 0.0
      %5493 = vmatpush1.msra.mxu0 0.0
      %5494 = vmatprep.subr.mxu0 0.0
      %5495 = vmatpush1.msra.mxu0 0.0
      %5496 = vmatprep.subr.mxu0 0.0
      %5497 = vmatpush1.msra.mxu0 0.0
      %5498 = vmatprep.subr.mxu0 0.0
      %5499 = vmatpush1.msra.mxu0 0.0
      %5500 = vmatprep.subr.mxu0 0.0
      %5501 = vmatpush1.msra.mxu0 0.0
      %5502 = vmatprep.subr.mxu0 0.0
      %5503 = vmatpush1.msra.mxu0 0.0
      %5504 = vmatprep.subr.mxu0 0.0
      %5505 = vmatpush1.msra.mxu0 0.0
      %5506 = vmatprep.subr.mxu0 0.0
      %5507 = vmatpush1.msra.mxu0 0.0
      %5508 = vmatprep.subr.mxu0 0.0
      %5509 = vmatpush1.msra.mxu0 0.0
      %5510 = vmatprep.subr.mxu0 0.0
      %5511 = vmatpush1.msra.mxu0 0.0
      %5512 = vmatprep.subr.mxu0 0.0
      %5513 = vmatpush1.msra.mxu0 0.0
      %5514 = vmatprep.mubr.f32.mxu0 0.0
      %5515 = vmatmul.mubr.f32.gmra.mrb[0].mxu0 %v5445
      %v5516 = vpop.f32.mrb[0].mxu0
      %v5517 = vadd.f32 0.0, %v5516
      %v5518 = vpop.f32.mrb[0].mxu0
      %5519 = vdwg.mxu0
      %v5520 = vadd.f32 %v5442, %v5517
      %v5521 = vld [vmem:[%s1255] sm:$0xf]
      %v5523 = vrot.slane %v4899, 1
      %v5524 = vrot.slane %v4900, 1
      %v5525 = vsel %vm777, %v5523, %v5524
      %v5526 = vsel %vm616, %v5525, 0
      %v5529 = vsel %vm620, %v5521, 0
      %5531 = vmatprep.subr.mxu0 0.0
      %5532 = vmatpush1.msra.mxu0 %v5529
      %5533 = vmatprep.subr.mxu0 0.0
      %5534 = vmatpush1.msra.mxu0 0.0
      %5535 = vmatprep.subr.mxu0 0.0
      %5536 = vmatpush1.msra.mxu0 0.0
      %5537 = vmatprep.subr.mxu0 0.0
      %5538 = vmatpush1.msra.mxu0 0.0
      %5539 = vmatprep.subr.mxu0 0.0
      %5540 = vmatpush1.msra.mxu0 0.0
      %5541 = vmatprep.subr.mxu0 0.0
      %5542 = vmatpush1.msra.mxu0 0.0
      %5543 = vmatprep.subr.mxu0 0.0
      %5544 = vmatpush1.msra.mxu0 0.0
      %5545 = vmatprep.subr.mxu0 0.0
      %5546 = vmatpush1.msra.mxu0 0.0
      %5547 = vmatprep.subr.mxu0 0.0
      %5548 = vmatpush1.msra.mxu0 0.0
      %5549 = vmatprep.subr.mxu0 0.0
      %5550 = vmatpush1.msra.mxu0 0.0
      %5551 = vmatprep.subr.mxu0 0.0
      %5552 = vmatpush1.msra.mxu0 0.0
      %5553 = vmatprep.subr.mxu0 0.0
      %5554 = vmatpush1.msra.mxu0 0.0
      %5555 = vmatprep.subr.mxu0 0.0
      %5556 = vmatpush1.msra.mxu0 0.0
      %5557 = vmatprep.subr.mxu0 0.0
      %5558 = vmatpush1.msra.mxu0 0.0
      %5559 = vmatprep.subr.mxu0 0.0
      %5560 = vmatpush1.msra.mxu0 0.0
      %5561 = vmatprep.subr.mxu0 0.0
      %5562 = vmatpush1.msra.mxu0 0.0
      %5563 = vmatprep.subr.mxu0 0.0
      %5564 = vmatpush1.msra.mxu0 0.0
      %5565 = vmatprep.subr.mxu0 0.0
      %5566 = vmatpush1.msra.mxu0 0.0
      %5567 = vmatprep.subr.mxu0 0.0
      %5568 = vmatpush1.msra.mxu0 0.0
      %5569 = vmatprep.subr.mxu0 0.0
      %5570 = vmatpush1.msra.mxu0 0.0
      %5571 = vmatprep.subr.mxu0 0.0
      %5572 = vmatpush1.msra.mxu0 0.0
      %5573 = vmatprep.subr.mxu0 0.0
      %5574 = vmatpush1.msra.mxu0 0.0
      %5575 = vmatprep.subr.mxu0 0.0
      %5576 = vmatpush1.msra.mxu0 0.0
      %5577 = vmatprep.subr.mxu0 0.0
      %5578 = vmatpush1.msra.mxu0 0.0
      %5579 = vmatprep.subr.mxu0 0.0
      %5580 = vmatpush1.msra.mxu0 0.0
      %5581 = vmatprep.subr.mxu0 0.0
      %5582 = vmatpush1.msra.mxu0 0.0
      %5583 = vmatprep.subr.mxu0 0.0
      %5584 = vmatpush1.msra.mxu0 0.0
      %5585 = vmatprep.subr.mxu0 0.0
      %5586 = vmatpush1.msra.mxu0 0.0
      %5587 = vmatprep.subr.mxu0 0.0
      %5588 = vmatpush1.msra.mxu0 0.0
      %5589 = vmatprep.subr.mxu0 0.0
      %5590 = vmatpush1.msra.mxu0 0.0
      %5591 = vmatprep.subr.mxu0 0.0
      %5592 = vmatpush1.msra.mxu0 0.0
      %5593 = vmatprep.subr.mxu0 0.0
      %5594 = vmatpush1.msra.mxu0 0.0
      %5595 = vmatprep.mubr.f32.mxu0 0.0
      %5596 = vmatmul.mubr.f32.gmra.mrb[0].mxu0 %v5526
      %v5597 = vpop.f32.mrb[0].mxu0
      %v5598 = vadd.f32 0.0, %v5597
      %v5599 = vpop.f32.mrb[0].mxu0
      %5600 = vdwg.mxu0
      %v5601 = vadd.f32 %v5520, %v5598
      %s5602 = scalar_lea.vmem %s595, 48
      %5603 = vst.msk [vmem:[%s5602] sm:$0xff] %vm616, %v5601
      %s5604 = scalar_lea.vmem %s575, 112
      %v5605 = vld [vmem:[%s5604] sm:$0xff]
      %v5606 = vld [vmem:[%s5604 + $0x8] sm:$0xff]
      %s5607 = scalar_lea.vmem %s585, 56
      %v5608 = vld [vmem:[%s5607] sm:$0xff]
      %v5609 = vld [vmem:[%s533] sm:$0xff]
      %v5610 = vld [vmem:[%s533 + $0x8] sm:$0xff]
      %v5611 = vld [vmem:[%s563] sm:$0xff]
      %v5612 = vld [vmem:[%s6] sm:$0xf]
      %v5614 = vsel %vm620, %v5612, 0
      %5616 = vmatprep.subr.mxu0 0.0
      %5617 = vmatpush1.msra.mxu0 %v5614
      %5618 = vmatprep.subr.mxu0 0.0
      %5619 = vmatpush1.msra.mxu0 0.0
      %5620 = vmatprep.subr.mxu0 0.0
      %5621 = vmatpush1.msra.mxu0 0.0
      %5622 = vmatprep.subr.mxu0 0.0
      %5623 = vmatpush1.msra.mxu0 0.0
      %5624 = vmatprep.subr.mxu0 0.0
      %5625 = vmatpush1.msra.mxu0 0.0
      %5626 = vmatprep.subr.mxu0 0.0
      %5627 = vmatpush1.msra.mxu0 0.0
      %5628 = vmatprep.subr.mxu0 0.0
      %5629 = vmatpush1.msra.mxu0 0.0
      %5630 = vmatprep.subr.mxu0 0.0
      %5631 = vmatpush1.msra.mxu0 0.0
      %5632 = vmatprep.subr.mxu0 0.0
      %5633 = vmatpush1.msra.mxu0 0.0
      %5634 = vmatprep.subr.mxu0 0.0
      %5635 = vmatpush1.msra.mxu0 0.0
      %5636 = vmatprep.subr.mxu0 0.0
      %5637 = vmatpush1.msra.mxu0 0.0
      %5638 = vmatprep.subr.mxu0 0.0
      %5639 = vmatpush1.msra.mxu0 0.0
      %5640 = vmatprep.subr.mxu0 0.0
      %5641 = vmatpush1.msra.mxu0 0.0
      %5642 = vmatprep.subr.mxu0 0.0
      %5643 = vmatpush1.msra.mxu0 0.0
      %5644 = vmatprep.subr.mxu0 0.0
      %5645 = vmatpush1.msra.mxu0 0.0
      %5646 = vmatprep.subr.mxu0 0.0
      %5647 = vmatpush1.msra.mxu0 0.0
      %5648 = vmatprep.subr.mxu0 0.0
      %5649 = vmatpush1.msra.mxu0 0.0
      %5650 = vmatprep.subr.mxu0 0.0
      %5651 = vmatpush1.msra.mxu0 0.0
      %5652 = vmatprep.subr.mxu0 0.0
      %5653 = vmatpush1.msra.mxu0 0.0
      %5654 = vmatprep.subr.mxu0 0.0
      %5655 = vmatpush1.msra.mxu0 0.0
      %5656 = vmatprep.subr.mxu0 0.0
      %5657 = vmatpush1.msra.mxu0 0.0
      %5658 = vmatprep.subr.mxu0 0.0
      %5659 = vmatpush1.msra.mxu0 0.0
      %5660 = vmatprep.subr.mxu0 0.0
      %5661 = vmatpush1.msra.mxu0 0.0
      %5662 = vmatprep.subr.mxu0 0.0
      %5663 = vmatpush1.msra.mxu0 0.0
      %5664 = vmatprep.subr.mxu0 0.0
      %5665 = vmatpush1.msra.mxu0 0.0
      %5666 = vmatprep.subr.mxu0 0.0
      %5667 = vmatpush1.msra.mxu0 0.0
      %5668 = vmatprep.subr.mxu0 0.0
      %5669 = vmatpush1.msra.mxu0 0.0
      %5670 = vmatprep.subr.mxu0 0.0
      %5671 = vmatpush1.msra.mxu0 0.0
      %5672 = vmatprep.subr.mxu0 0.0
      %5673 = vmatpush1.msra.mxu0 0.0
      %5674 = vmatprep.subr.mxu0 0.0
      %5675 = vmatpush1.msra.mxu0 0.0
      %5676 = vmatprep.subr.mxu0 0.0
      %5677 = vmatpush1.msra.mxu0 0.0
      %5678 = vmatprep.subr.mxu0 0.0
      %5679 = vmatpush1.msra.mxu0 0.0
      %5680 = vmatprep.mubr.f32.mxu0 0.0
      %5681 = vmatmul.mubr.f32.gmra.mrb[0].mxu0 %v5367
      %v5682 = vpop.f32.mrb[0].mxu0
      %v5683 = vadd.f32 0.0, %v5682
      %v5684 = vpop.f32.mrb[0].mxu0
      %5685 = vdwg.mxu0
      %v5686 = vadd.f32 %v602, %v5683
      %v5687 = vld [vmem:[%s695] sm:$0xf]
      %v5689 = vsel %vm620, %v5687, 0
      %5691 = vmatprep.subr.mxu0 0.0
      %5692 = vmatpush1.msra.mxu0 %v5689
      %5693 = vmatprep.subr.mxu0 0.0
      %5694 = vmatpush1.msra.mxu0 0.0
      %5695 = vmatprep.subr.mxu0 0.0
      %5696 = vmatpush1.msra.mxu0 0.0
      %5697 = vmatprep.subr.mxu0 0.0
      %5698 = vmatpush1.msra.mxu0 0.0
      %5699 = vmatprep.subr.mxu0 0.0
      %5700 = vmatpush1.msra.mxu0 0.0
      %5701 = vmatprep.subr.mxu0 0.0
      %5702 = vmatpush1.msra.mxu0 0.0
      %5703 = vmatprep.subr.mxu0 0.0
      %5704 = vmatpush1.msra.mxu0 0.0
      %5705 = vmatprep.subr.mxu0 0.0
      %5706 = vmatpush1.msra.mxu0 0.0
      %5707 = vmatprep.subr.mxu0 0.0
      %5708 = vmatpush1.msra.mxu0 0.0
      %5709 = vmatprep.subr.mxu0 0.0
      %5710 = vmatpush1.msra.mxu0 0.0
      %5711 = vmatprep.subr.mxu0 0.0
      %5712 = vmatpush1.msra.mxu0 0.0
      %5713 = vmatprep.subr.mxu0 0.0
      %5714 = vmatpush1.msra.mxu0 0.0
      %5715 = vmatprep.subr.mxu0 0.0
      %5716 = vmatpush1.msra.mxu0 0.0
      %5717 = vmatprep.subr.mxu0 0.0
      %5718 = vmatpush1.msra.mxu0 0.0
      %5719 = vmatprep.subr.mxu0 0.0
      %5720 = vmatpush1.msra.mxu0 0.0
      %5721 = vmatprep.subr.mxu0 0.0
      %5722 = vmatpush1.msra.mxu0 0.0
      %5723 = vmatprep.subr.mxu0 0.0
      %5724 = vmatpush1.msra.mxu0 0.0
      %5725 = vmatprep.subr.mxu0 0.0
      %5726 = vmatpush1.msra.mxu0 0.0
      %5727 = vmatprep.subr.mxu0 0.0
      %5728 = vmatpush1.msra.mxu0 0.0
      %5729 = vmatprep.subr.mxu0 0.0
      %5730 = vmatpush1.msra.mxu0 0.0
      %5731 = vmatprep.subr.mxu0 0.0
      %5732 = vmatpush1.msra.mxu0 0.0
      %5733 = vmatprep.subr.mxu0 0.0
      %5734 = vmatpush1.msra.mxu0 0.0
      %5735 = vmatprep.subr.mxu0 0.0
      %5736 = vmatpush1.msra.mxu0 0.0
      %5737 = vmatprep.subr.mxu0 0.0
      %5738 = vmatpush1.msra.mxu0 0.0
      %5739 = vmatprep.subr.mxu0 0.0
      %5740 = vmatpush1.msra.mxu0 0.0
      %5741 = vmatprep.subr.mxu0 0.0
      %5742 = vmatpush1.msra.mxu0 0.0
      %5743 = vmatprep.subr.mxu0 0.0
      %5744 = vmatpush1.msra.mxu0 0.0
      %5745 = vmatprep.subr.mxu0 0.0
      %5746 = vmatpush1.msra.mxu0 0.0
      %5747 = vmatprep.subr.mxu0 0.0
      %5748 = vmatpush1.msra.mxu0 0.0
      %5749 = vmatprep.subr.mxu0 0.0
      %5750 = vmatpush1.msra.mxu0 0.0
      %5751 = vmatprep.subr.mxu0 0.0
      %5752 = vmatpush1.msra.mxu0 0.0
      %5753 = vmatprep.subr.mxu0 0.0
      %5754 = vmatpush1.msra.mxu0 0.0
      %5755 = vmatprep.mubr.f32.mxu0 0.0
      %5756 = vmatmul.mubr.f32.gmra.mrb[0].mxu0 %v5445
      %v5757 = vpop.f32.mrb[0].mxu0
      %v5758 = vadd.f32 0.0, %v5757
      %v5759 = vpop.f32.mrb[0].mxu0
      %5760 = vdwg.mxu0
      %v5761 = vadd.f32 %v5686, %v5758
      %v5762 = vld [vmem:[%s774] sm:$0xf]
      %v5764 = vsel %vm620, %v5762, 0
      %5766 = vmatprep.subr.mxu0 0.0
      %5767 = vmatpush1.msra.mxu0 %v5764
      %5768 = vmatprep.subr.mxu0 0.0
      %5769 = vmatpush1.msra.mxu0 0.0
      %5770 = vmatprep.subr.mxu0 0.0
      %5771 = vmatpush1.msra.mxu0 0.0
      %5772 = vmatprep.subr.mxu0 0.0
      %5773 = vmatpush1.msra.mxu0 0.0
      %5774 = vmatprep.subr.mxu0 0.0
      %5775 = vmatpush1.msra.mxu0 0.0
      %5776 = vmatprep.subr.mxu0 0.0
      %5777 = vmatpush1.msra.mxu0 0.0
      %5778 = vmatprep.subr.mxu0 0.0
      %5779 = vmatpush1.msra.mxu0 0.0
      %5780 = vmatprep.subr.mxu0 0.0
      %5781 = vmatpush1.msra.mxu0 0.0
      %5782 = vmatprep.subr.mxu0 0.0
      %5783 = vmatpush1.msra.mxu0 0.0
      %5784 = vmatprep.subr.mxu0 0.0
      %5785 = vmatpush1.msra.mxu0 0.0
      %5786 = vmatprep.subr.mxu0 0.0
      %5787 = vmatpush1.msra.mxu0 0.0
      %5788 = vmatprep.subr.mxu0 0.0
      %5789 = vmatpush1.msra.mxu0 0.0
      %5790 = vmatprep.subr.mxu0 0.0
      %5791 = vmatpush1.msra.mxu0 0.0
      %5792 = vmatprep.subr.mxu0 0.0
      %5793 = vmatpush1.msra.mxu0 0.0
      %5794 = vmatprep.subr.mxu0 0.0
      %5795 = vmatpush1.msra.mxu0 0.0
      %5796 = vmatprep.subr.mxu0 0.0
      %5797 = vmatpush1.msra.mxu0 0.0
      %5798 = vmatprep.subr.mxu0 0.0
      %5799 = vmatpush1.msra.mxu0 0.0
      %5800 = vmatprep.subr.mxu0 0.0
      %5801 = vmatpush1.msra.mxu0 0.0
      %5802 = vmatprep.subr.mxu0 0.0
      %5803 = vmatpush1.msra.mxu0 0.0
      %5804 = vmatprep.subr.mxu0 0.0
      %5805 = vmatpush1.msra.mxu0 0.0
      %5806 = vmatprep.subr.mxu0 0.0
      %5807 = vmatpush1.msra.mxu0 0.0
      %5808 = vmatprep.subr.mxu0 0.0
      %5809 = vmatpush1.msra.mxu0 0.0
      %5810 = vmatprep.subr.mxu0 0.0
      %5811 = vmatpush1.msra.mxu0 0.0
      %5812 = vmatprep.subr.mxu0 0.0
      %5813 = vmatpush1.msra.mxu0 0.0
      %5814 = vmatprep.subr.mxu0 0.0
      %5815 = vmatpush1.msra.mxu0 0.0
      %5816 = vmatprep.subr.mxu0 0.0
      %5817 = vmatpush1.msra.mxu0 0.0
      %5818 = vmatprep.subr.mxu0 0.0
      %5819 = vmatpush1.msra.mxu0 0.0
      %5820 = vmatprep.subr.mxu0 0.0
      %5821 = vmatpush1.msra.mxu0 0.0
      %5822 = vmatprep.subr.mxu0 0.0
      %5823 = vmatpush1.msra.mxu0 0.0
      %5824 = vmatprep.subr.mxu0 0.0
      %5825 = vmatpush1.msra.mxu0 0.0
      %5826 = vmatprep.subr.mxu0 0.0
      %5827 = vmatpush1.msra.mxu0 0.0
      %5828 = vmatprep.subr.mxu0 0.0
      %5829 = vmatpush1.msra.mxu0 0.0
      %5830 = vmatprep.mubr.f32.mxu0 0.0
      %5831 = vmatmul.mubr.f32.gmra.mrb[0].mxu0 %v5526
      %v5832 = vpop.f32.mrb[0].mxu0
      %v5833 = vadd.f32 0.0, %v5832
      %v5834 = vpop.f32.mrb[0].mxu0
      %5835 = vdwg.mxu0
      %v5836 = vadd.f32 %v5761, %v5833
      %v5837 = vld [vmem:[%s857] sm:$0xf]
      %v5839 = vsel %vm616, %v5605, 0
      %v5842 = vsel %vm620, %v5837, 0
      %5844 = vmatprep.subr.mxu0 0.0
      %5845 = vmatpush1.msra.mxu0 %v5842
      %5846 = vmatprep.subr.mxu0 0.0
      %5847 = vmatpush1.msra.mxu0 0.0
      %5848 = vmatprep.subr.mxu0 0.0
      %5849 = vmatpush1.msra.mxu0 0.0
      %5850 = vmatprep.subr.mxu0 0.0
      %5851 = vmatpush1.msra.mxu0 0.0
      %5852 = vmatprep.subr.mxu0 0.0
      %5853 = vmatpush1.msra.mxu0 0.0
      %5854 = vmatprep.subr.mxu0 0.0
      %5855 = vmatpush1.msra.mxu0 0.0
      %5856 = vmatprep.subr.mxu0 0.0
      %5857 = vmatpush1.msra.mxu0 0.0
      %5858 = vmatprep.subr.mxu0 0.0
      %5859 = vmatpush1.msra.mxu0 0.0
      %5860 = vmatprep.subr.mxu0 0.0
      %5861 = vmatpush1.msra.mxu0 0.0
      %5862 = vmatprep.subr.mxu0 0.0
      %5863 = vmatpush1.msra.mxu0 0.0
      %5864 = vmatprep.subr.mxu0 0.0
      %5865 = vmatpush1.msra.mxu0 0.0
      %5866 = vmatprep.subr.mxu0 0.0
      %5867 = vmatpush1.msra.mxu0 0.0
      %5868 = vmatprep.subr.mxu0 0.0
      %5869 = vmatpush1.msra.mxu0 0.0
      %5870 = vmatprep.subr.mxu0 0.0
      %5871 = vmatpush1.msra.mxu0 0.0
      %5872 = vmatprep.subr.mxu0 0.0
      %5873 = vmatpush1.msra.mxu0 0.0
      %5874 = vmatprep.subr.mxu0 0.0
      %5875 = vmatpush1.msra.mxu0 0.0
      %5876 = vmatprep.subr.mxu0 0.0
      %5877 = vmatpush1.msra.mxu0 0.0
      %5878 = vmatprep.subr.mxu0 0.0
      %5879 = vmatpush1.msra.mxu0 0.0
      %5880 = vmatprep.subr.mxu0 0.0
      %5881 = vmatpush1.msra.mxu0 0.0
      %5882 = vmatprep.subr.mxu0 0.0
      %5883 = vmatpush1.msra.mxu0 0.0
      %5884 = vmatprep.subr.mxu0 0.0
      %5885 = vmatpush1.msra.mxu0 0.0
      %5886 = vmatprep.subr.mxu0 0.0
      %5887 = vmatpush1.msra.mxu0 0.0
      %5888 = vmatprep.subr.mxu0 0.0
      %5889 = vmatpush1.msra.mxu0 0.0
      %5890 = vmatprep.subr.mxu0 0.0
      %5891 = vmatpush1.msra.mxu0 0.0
      %5892 = vmatprep.subr.mxu0 0.0
      %5893 = vmatpush1.msra.mxu0 0.0
      %5894 = vmatprep.subr.mxu0 0.0
      %5895 = vmatpush1.msra.mxu0 0.0
      %5896 = vmatprep.subr.mxu0 0.0
      %5897 = vmatpush1.msra.mxu0 0.0
      %5898 = vmatprep.subr.mxu0 0.0
      %5899 = vmatpush1.msra.mxu0 0.0
      %5900 = vmatprep.subr.mxu0 0.0
      %5901 = vmatpush1.msra.mxu0 0.0
      %5902 = vmatprep.subr.mxu0 0.0
      %5903 = vmatpush1.msra.mxu0 0.0
      %5904 = vmatprep.subr.mxu0 0.0
      %5905 = vmatpush1.msra.mxu0 0.0
      %5906 = vmatprep.subr.mxu0 0.0
      %5907 = vmatpush1.msra.mxu0 0.0
      %5908 = vmatprep.mubr.f32.mxu0 0.0
      %5909 = vmatmul.mubr.f32.gmra.mrb[0].mxu0 %v5839
      %v5910 = vpop.f32.mrb[0].mxu0
      %v5911 = vadd.f32 0.0, %v5910
      %v5912 = vpop.f32.mrb[0].mxu0
      %5913 = vdwg.mxu0
      %v5914 = vadd.f32 %v5836, %v5911
      %v5915 = vld [vmem:[%s936] sm:$0xf]
      %v5917 = vsel %vm616, %v5608, 0
      %v5920 = vsel %vm620, %v5915, 0
      %5922 = vmatprep.subr.mxu0 0.0
      %5923 = vmatpush1.msra.mxu0 %v5920
      %5924 = vmatprep.subr.mxu0 0.0
      %5925 = vmatpush1.msra.mxu0 0.0
      %5926 = vmatprep.subr.mxu0 0.0
      %5927 = vmatpush1.msra.mxu0 0.0
      %5928 = vmatprep.subr.mxu0 0.0
      %5929 = vmatpush1.msra.mxu0 0.0
      %5930 = vmatprep.subr.mxu0 0.0
      %5931 = vmatpush1.msra.mxu0 0.0
      %5932 = vmatprep.subr.mxu0 0.0
      %5933 = vmatpush1.msra.mxu0 0.0
      %5934 = vmatprep.subr.mxu0 0.0
      %5935 = vmatpush1.msra.mxu0 0.0
      %5936 = vmatprep.subr.mxu0 0.0
      %5937 = vmatpush1.msra.mxu0 0.0
      %5938 = vmatprep.subr.mxu0 0.0
      %5939 = vmatpush1.msra.mxu0 0.0
      %5940 = vmatprep.subr.mxu0 0.0
      %5941 = vmatpush1.msra.mxu0 0.0
      %5942 = vmatprep.subr.mxu0 0.0
      %5943 = vmatpush1.msra.mxu0 0.0
      %5944 = vmatprep.subr.mxu0 0.0
      %5945 = vmatpush1.msra.mxu0 0.0
      %5946 = vmatprep.subr.mxu0 0.0
      %5947 = vmatpush1.msra.mxu0 0.0
      %5948 = vmatprep.subr.mxu0 0.0
      %5949 = vmatpush1.msra.mxu0 0.0
      %5950 = vmatprep.subr.mxu0 0.0
      %5951 = vmatpush1.msra.mxu0 0.0
      %5952 = vmatprep.subr.mxu0 0.0
      %5953 = vmatpush1.msra.mxu0 0.0
      %5954 = vmatprep.subr.mxu0 0.0
      %5955 = vmatpush1.msra.mxu0 0.0
      %5956 = vmatprep.subr.mxu0 0.0
      %5957 = vmatpush1.msra.mxu0 0.0
      %5958 = vmatprep.subr.mxu0 0.0
      %5959 = vmatpush1.msra.mxu0 0.0
      %5960 = vmatprep.subr.mxu0 0.0
      %5961 = vmatpush1.msra.mxu0 0.0
      %5962 = vmatprep.subr.mxu0 0.0
      %5963 = vmatpush1.msra.mxu0 0.0
      %5964 = vmatprep.subr.mxu0 0.0
      %5965 = vmatpush1.msra.mxu0 0.0
      %5966 = vmatprep.subr.mxu0 0.0
      %5967 = vmatpush1.msra.mxu0 0.0
      %5968 = vmatprep.subr.mxu0 0.0
      %5969 = vmatpush1.msra.mxu0 0.0
      %5970 = vmatprep.subr.mxu0 0.0
      %5971 = vmatpush1.msra.mxu0 0.0
      %5972 = vmatprep.subr.mxu0 0.0
      %5973 = vmatpush1.msra.mxu0 0.0
      %5974 = vmatprep.subr.mxu0 0.0
      %5975 = vmatpush1.msra.mxu0 0.0
      %5976 = vmatprep.subr.mxu0 0.0
      %5977 = vmatpush1.msra.mxu0 0.0
      %5978 = vmatprep.subr.mxu0 0.0
      %5979 = vmatpush1.msra.mxu0 0.0
      %5980 = vmatprep.subr.mxu0 0.0
      %5981 = vmatpush1.msra.mxu0 0.0
      %5982 = vmatprep.subr.mxu0 0.0
      %5983 = vmatpush1.msra.mxu0 0.0
      %5984 = vmatprep.subr.mxu0 0.0
      %5985 = vmatpush1.msra.mxu0 0.0
      %5986 = vmatprep.mubr.f32.mxu0 0.0
      %5987 = vmatmul.mubr.f32.gmra.mrb[0].mxu0 %v5917
      %v5988 = vpop.f32.mrb[0].mxu0
      %v5989 = vadd.f32 0.0, %v5988
      %v5990 = vpop.f32.mrb[0].mxu0
      %5991 = vdwg.mxu0
      %v5992 = vadd.f32 %v5914, %v5989
      %v5993 = vld [vmem:[%s1015] sm:$0xf]
      %v5995 = vrot.slane %v5605, 1
      %v5996 = vrot.slane %v5606, 1
      %v5997 = vsel %vm777, %v5995, %v5996
      %v5998 = vsel %vm616, %v5997, 0
      %v6001 = vsel %vm620, %v5993, 0
      %6003 = vmatprep.subr.mxu0 0.0
      %6004 = vmatpush1.msra.mxu0 %v6001
      %6005 = vmatprep.subr.mxu0 0.0
      %6006 = vmatpush1.msra.mxu0 0.0
      %6007 = vmatprep.subr.mxu0 0.0
      %6008 = vmatpush1.msra.mxu0 0.0
      %6009 = vmatprep.subr.mxu0 0.0
      %6010 = vmatpush1.msra.mxu0 0.0
      %6011 = vmatprep.subr.mxu0 0.0
      %6012 = vmatpush1.msra.mxu0 0.0
      %6013 = vmatprep.subr.mxu0 0.0
      %6014 = vmatpush1.msra.mxu0 0.0
      %6015 = vmatprep.subr.mxu0 0.0
      %6016 = vmatpush1.msra.mxu0 0.0
      %6017 = vmatprep.subr.mxu0 0.0
      %6018 = vmatpush1.msra.mxu0 0.0
      %6019 = vmatprep.subr.mxu0 0.0
      %6020 = vmatpush1.msra.mxu0 0.0
      %6021 = vmatprep.subr.mxu0 0.0
      %6022 = vmatpush1.msra.mxu0 0.0
      %6023 = vmatprep.subr.mxu0 0.0
      %6024 = vmatpush1.msra.mxu0 0.0
      %6025 = vmatprep.subr.mxu0 0.0
      %6026 = vmatpush1.msra.mxu0 0.0
      %6027 = vmatprep.subr.mxu0 0.0
      %6028 = vmatpush1.msra.mxu0 0.0
      %6029 = vmatprep.subr.mxu0 0.0
      %6030 = vmatpush1.msra.mxu0 0.0
      %6031 = vmatprep.subr.mxu0 0.0
      %6032 = vmatpush1.msra.mxu0 0.0
      %6033 = vmatprep.subr.mxu0 0.0
      %6034 = vmatpush1.msra.mxu0 0.0
      %6035 = vmatprep.subr.mxu0 0.0
      %6036 = vmatpush1.msra.mxu0 0.0
      %6037 = vmatprep.subr.mxu0 0.0
      %6038 = vmatpush1.msra.mxu0 0.0
      %6039 = vmatprep.subr.mxu0 0.0
      %6040 = vmatpush1.msra.mxu0 0.0
      %6041 = vmatprep.subr.mxu0 0.0
      %6042 = vmatpush1.msra.mxu0 0.0
      %6043 = vmatprep.subr.mxu0 0.0
      %6044 = vmatpush1.msra.mxu0 0.0
      %6045 = vmatprep.subr.mxu0 0.0
      %6046 = vmatpush1.msra.mxu0 0.0
      %6047 = vmatprep.subr.mxu0 0.0
      %6048 = vmatpush1.msra.mxu0 0.0
      %6049 = vmatprep.subr.mxu0 0.0
      %6050 = vmatpush1.msra.mxu0 0.0
      %6051 = vmatprep.subr.mxu0 0.0
      %6052 = vmatpush1.msra.mxu0 0.0
      %6053 = vmatprep.subr.mxu0 0.0
      %6054 = vmatpush1.msra.mxu0 0.0
      %6055 = vmatprep.subr.mxu0 0.0
      %6056 = vmatpush1.msra.mxu0 0.0
      %6057 = vmatprep.subr.mxu0 0.0
      %6058 = vmatpush1.msra.mxu0 0.0
      %6059 = vmatprep.subr.mxu0 0.0
      %6060 = vmatpush1.msra.mxu0 0.0
      %6061 = vmatprep.subr.mxu0 0.0
      %6062 = vmatpush1.msra.mxu0 0.0
      %6063 = vmatprep.subr.mxu0 0.0
      %6064 = vmatpush1.msra.mxu0 0.0
      %6065 = vmatprep.subr.mxu0 0.0
      %6066 = vmatpush1.msra.mxu0 0.0
      %6067 = vmatprep.mubr.f32.mxu0 0.0
      %6068 = vmatmul.mubr.f32.gmra.mrb[0].mxu0 %v5998
      %v6069 = vpop.f32.mrb[0].mxu0
      %v6070 = vadd.f32 0.0, %v6069
      %v6071 = vpop.f32.mrb[0].mxu0
      %6072 = vdwg.mxu0
      %v6073 = vadd.f32 %v5992, %v6070
      %v6074 = vld [vmem:[%s1097] sm:$0xf]
      %v6076 = vsel %vm616, %v5609, 0
      %v6079 = vsel %vm620, %v6074, 0
      %6081 = vmatprep.subr.mxu0 0.0
      %6082 = vmatpush1.msra.mxu0 %v6079
      %6083 = vmatprep.subr.mxu0 0.0
      %6084 = vmatpush1.msra.mxu0 0.0
      %6085 = vmatprep.subr.mxu0 0.0
      %6086 = vmatpush1.msra.mxu0 0.0
      %6087 = vmatprep.subr.mxu0 0.0
      %6088 = vmatpush1.msra.mxu0 0.0
      %6089 = vmatprep.subr.mxu0 0.0
      %6090 = vmatpush1.msra.mxu0 0.0
      %6091 = vmatprep.subr.mxu0 0.0
      %6092 = vmatpush1.msra.mxu0 0.0
      %6093 = vmatprep.subr.mxu0 0.0
      %6094 = vmatpush1.msra.mxu0 0.0
      %6095 = vmatprep.subr.mxu0 0.0
      %6096 = vmatpush1.msra.mxu0 0.0
      %6097 = vmatprep.subr.mxu0 0.0
      %6098 = vmatpush1.msra.mxu0 0.0
      %6099 = vmatprep.subr.mxu0 0.0
      %6100 = vmatpush1.msra.mxu0 0.0
      %6101 = vmatprep.subr.mxu0 0.0
      %6102 = vmatpush1.msra.mxu0 0.0
      %6103 = vmatprep.subr.mxu0 0.0
      %6104 = vmatpush1.msra.mxu0 0.0
      %6105 = vmatprep.subr.mxu0 0.0
      %6106 = vmatpush1.msra.mxu0 0.0
      %6107 = vmatprep.subr.mxu0 0.0
      %6108 = vmatpush1.msra.mxu0 0.0
      %6109 = vmatprep.subr.mxu0 0.0
      %6110 = vmatpush1.msra.mxu0 0.0
      %6111 = vmatprep.subr.mxu0 0.0
      %6112 = vmatpush1.msra.mxu0 0.0
      %6113 = vmatprep.subr.mxu0 0.0
      %6114 = vmatpush1.msra.mxu0 0.0
      %6115 = vmatprep.subr.mxu0 0.0
      %6116 = vmatpush1.msra.mxu0 0.0
      %6117 = vmatprep.subr.mxu0 0.0
      %6118 = vmatpush1.msra.mxu0 0.0
      %6119 = vmatprep.subr.mxu0 0.0
      %6120 = vmatpush1.msra.mxu0 0.0
      %6121 = vmatprep.subr.mxu0 0.0
      %6122 = vmatpush1.msra.mxu0 0.0
      %6123 = vmatprep.subr.mxu0 0.0
      %6124 = vmatpush1.msra.mxu0 0.0
      %6125 = vmatprep.subr.mxu0 0.0
      %6126 = vmatpush1.msra.mxu0 0.0
      %6127 = vmatprep.subr.mxu0 0.0
      %6128 = vmatpush1.msra.mxu0 0.0
      %6129 = vmatprep.subr.mxu0 0.0
      %6130 = vmatpush1.msra.mxu0 0.0
      %6131 = vmatprep.subr.mxu0 0.0
      %6132 = vmatpush1.msra.mxu0 0.0
      %6133 = vmatprep.subr.mxu0 0.0
      %6134 = vmatpush1.msra.mxu0 0.0
      %6135 = vmatprep.subr.mxu0 0.0
      %6136 = vmatpush1.msra.mxu0 0.0
      %6137 = vmatprep.subr.mxu0 0.0
      %6138 = vmatpush1.msra.mxu0 0.0
      %6139 = vmatprep.subr.mxu0 0.0
      %6140 = vmatpush1.msra.mxu0 0.0
      %6141 = vmatprep.subr.mxu0 0.0
      %6142 = vmatpush1.msra.mxu0 0.0
      %6143 = vmatprep.subr.mxu0 0.0
      %6144 = vmatpush1.msra.mxu0 0.0
      %6145 = vmatprep.mubr.f32.mxu0 0.0
      %6146 = vmatmul.mubr.f32.gmra.mrb[0].mxu0 %v6076
      %v6147 = vpop.f32.mrb[0].mxu0
      %v6148 = vadd.f32 0.0, %v6147
      %v6149 = vpop.f32.mrb[0].mxu0
      %6150 = vdwg.mxu0
      %v6151 = vadd.f32 %v6073, %v6148
      %v6152 = vld [vmem:[%s1176] sm:$0xf]
      %v6154 = vsel %vm616, %v5611, 0
      %v6157 = vsel %vm620, %v6152, 0
      %6159 = vmatprep.subr.mxu0 0.0
      %6160 = vmatpush1.msra.mxu0 %v6157
      %6161 = vmatprep.subr.mxu0 0.0
      %6162 = vmatpush1.msra.mxu0 0.0
      %6163 = vmatprep.subr.mxu0 0.0
      %6164 = vmatpush1.msra.mxu0 0.0
      %6165 = vmatprep.subr.mxu0 0.0
      %6166 = vmatpush1.msra.mxu0 0.0
      %6167 = vmatprep.subr.mxu0 0.0
      %6168 = vmatpush1.msra.mxu0 0.0
      %6169 = vmatprep.subr.mxu0 0.0
      %6170 = vmatpush1.msra.mxu0 0.0
      %6171 = vmatprep.subr.mxu0 0.0
      %6172 = vmatpush1.msra.mxu0 0.0
      %6173 = vmatprep.subr.mxu0 0.0
      %6174 = vmatpush1.msra.mxu0 0.0
      %6175 = vmatprep.subr.mxu0 0.0
      %6176 = vmatpush1.msra.mxu0 0.0
      %6177 = vmatprep.subr.mxu0 0.0
      %6178 = vmatpush1.msra.mxu0 0.0
      %6179 = vmatprep.subr.mxu0 0.0
      %6180 = vmatpush1.msra.mxu0 0.0
      %6181 = vmatprep.subr.mxu0 0.0
      %6182 = vmatpush1.msra.mxu0 0.0
      %6183 = vmatprep.subr.mxu0 0.0
      %6184 = vmatpush1.msra.mxu0 0.0
      %6185 = vmatprep.subr.mxu0 0.0
      %6186 = vmatpush1.msra.mxu0 0.0
      %6187 = vmatprep.subr.mxu0 0.0
      %6188 = vmatpush1.msra.mxu0 0.0
      %6189 = vmatprep.subr.mxu0 0.0
      %6190 = vmatpush1.msra.mxu0 0.0
      %6191 = vmatprep.subr.mxu0 0.0
      %6192 = vmatpush1.msra.mxu0 0.0
      %6193 = vmatprep.subr.mxu0 0.0
      %6194 = vmatpush1.msra.mxu0 0.0
      %6195 = vmatprep.subr.mxu0 0.0
      %6196 = vmatpush1.msra.mxu0 0.0
      %6197 = vmatprep.subr.mxu0 0.0
      %6198 = vmatpush1.msra.mxu0 0.0
      %6199 = vmatprep.subr.mxu0 0.0
      %6200 = vmatpush1.msra.mxu0 0.0
      %6201 = vmatprep.subr.mxu0 0.0
      %6202 = vmatpush1.msra.mxu0 0.0
      %6203 = vmatprep.subr.mxu0 0.0
      %6204 = vmatpush1.msra.mxu0 0.0
      %6205 = vmatprep.subr.mxu0 0.0
      %6206 = vmatpush1.msra.mxu0 0.0
      %6207 = vmatprep.subr.mxu0 0.0
      %6208 = vmatpush1.msra.mxu0 0.0
      %6209 = vmatprep.subr.mxu0 0.0
      %6210 = vmatpush1.msra.mxu0 0.0
      %6211 = vmatprep.subr.mxu0 0.0
      %6212 = vmatpush1.msra.mxu0 0.0
      %6213 = vmatprep.subr.mxu0 0.0
      %6214 = vmatpush1.msra.mxu0 0.0
      %6215 = vmatprep.subr.mxu0 0.0
      %6216 = vmatpush1.msra.mxu0 0.0
      %6217 = vmatprep.subr.mxu0 0.0
      %6218 = vmatpush1.msra.mxu0 0.0
      %6219 = vmatprep.subr.mxu0 0.0
      %6220 = vmatpush1.msra.mxu0 0.0
      %6221 = vmatprep.subr.mxu0 0.0
      %6222 = vmatpush1.msra.mxu0 0.0
      %6223 = vmatprep.mubr.f32.mxu0 0.0
      %6224 = vmatmul.mubr.f32.gmra.mrb[0].mxu0 %v6154
      %v6225 = vpop.f32.mrb[0].mxu0
      %v6226 = vadd.f32 0.0, %v6225
      %v6227 = vpop.f32.mrb[0].mxu0
      %6228 = vdwg.mxu0
      %v6229 = vadd.f32 %v6151, %v6226
      %v6230 = vld [vmem:[%s1255] sm:$0xf]
      %v6232 = vrot.slane %v5609, 1
      %v6233 = vrot.slane %v5610, 1
      %v6234 = vsel %vm777, %v6232, %v6233
      %v6235 = vsel %vm616, %v6234, 0
      %v6238 = vsel %vm620, %v6230, 0
      %6240 = vmatprep.subr.mxu0 0.0
      %6241 = vmatpush1.msra.mxu0 %v6238
      %6242 = vmatprep.subr.mxu0 0.0
      %6243 = vmatpush1.msra.mxu0 0.0
      %6244 = vmatprep.subr.mxu0 0.0
      %6245 = vmatpush1.msra.mxu0 0.0
      %6246 = vmatprep.subr.mxu0 0.0
      %6247 = vmatpush1.msra.mxu0 0.0
      %6248 = vmatprep.subr.mxu0 0.0
      %6249 = vmatpush1.msra.mxu0 0.0
      %6250 = vmatprep.subr.mxu0 0.0
      %6251 = vmatpush1.msra.mxu0 0.0
      %6252 = vmatprep.subr.mxu0 0.0
      %6253 = vmatpush1.msra.mxu0 0.0
      %6254 = vmatprep.subr.mxu0 0.0
      %6255 = vmatpush1.msra.mxu0 0.0
      %6256 = vmatprep.subr.mxu0 0.0
      %6257 = vmatpush1.msra.mxu0 0.0
      %6258 = vmatprep.subr.mxu0 0.0
      %6259 = vmatpush1.msra.mxu0 0.0
      %6260 = vmatprep.subr.mxu0 0.0
      %6261 = vmatpush1.msra.mxu0 0.0
      %6262 = vmatprep.subr.mxu0 0.0
      %6263 = vmatpush1.msra.mxu0 0.0
      %6264 = vmatprep.subr.mxu0 0.0
      %6265 = vmatpush1.msra.mxu0 0.0
      %6266 = vmatprep.subr.mxu0 0.0
      %6267 = vmatpush1.msra.mxu0 0.0
      %6268 = vmatprep.subr.mxu0 0.0
      %6269 = vmatpush1.msra.mxu0 0.0
      %6270 = vmatprep.subr.mxu0 0.0
      %6271 = vmatpush1.msra.mxu0 0.0
      %6272 = vmatprep.subr.mxu0 0.0
      %6273 = vmatpush1.msra.mxu0 0.0
      %6274 = vmatprep.subr.mxu0 0.0
      %6275 = vmatpush1.msra.mxu0 0.0
      %6276 = vmatprep.subr.mxu0 0.0
      %6277 = vmatpush1.msra.mxu0 0.0
      %6278 = vmatprep.subr.mxu0 0.0
      %6279 = vmatpush1.msra.mxu0 0.0
      %6280 = vmatprep.subr.mxu0 0.0
      %6281 = vmatpush1.msra.mxu0 0.0
      %6282 = vmatprep.subr.mxu0 0.0
      %6283 = vmatpush1.msra.mxu0 0.0
      %6284 = vmatprep.subr.mxu0 0.0
      %6285 = vmatpush1.msra.mxu0 0.0
      %6286 = vmatprep.subr.mxu0 0.0
      %6287 = vmatpush1.msra.mxu0 0.0
      %6288 = vmatprep.subr.mxu0 0.0
      %6289 = vmatpush1.msra.mxu0 0.0
      %6290 = vmatprep.subr.mxu0 0.0
      %6291 = vmatpush1.msra.mxu0 0.0
      %6292 = vmatprep.subr.mxu0 0.0
      %6293 = vmatpush1.msra.mxu0 0.0
      %6294 = vmatprep.subr.mxu0 0.0
      %6295 = vmatpush1.msra.mxu0 0.0
      %6296 = vmatprep.subr.mxu0 0.0
      %6297 = vmatpush1.msra.mxu0 0.0
      %6298 = vmatprep.subr.mxu0 0.0
      %6299 = vmatpush1.msra.mxu0 0.0
      %6300 = vmatprep.subr.mxu0 0.0
      %6301 = vmatpush1.msra.mxu0 0.0
      %6302 = vmatprep.subr.mxu0 0.0
      %6303 = vmatpush1.msra.mxu0 0.0
      %6304 = vmatprep.mubr.f32.mxu0 0.0
      %6305 = vmatmul.mubr.f32.gmra.mrb[0].mxu0 %v6235
      %v6306 = vpop.f32.mrb[0].mxu0
      %v6307 = vadd.f32 0.0, %v6306
      %v6308 = vpop.f32.mrb[0].mxu0
      %6309 = vdwg.mxu0
      %v6310 = vadd.f32 %v6229, %v6307
      %s6311 = scalar_lea.vmem %s595, 56
      %6312 = vst.msk [vmem:[%s6311] sm:$0xff] %vm616, %v6310
      %s6313 = smul.u32 8, %s24
      %p6314 = scmp.lt.s32.totalorder %s23, 1
      %s6315 = scalar_select %p6314, %s23, 1
      %p6316 = scmp.lt.s32.totalorder %s6313, 7
      %s6317 = scalar_select %p6316, %s6313, 7
      %s6318 = smul.addr %s6315, 8
      %s6319 = sadd.s32 %s6317, %s6318
      %s6320 = smul.addr %s6319, 8
      %s6321 = scalar_lea.vmem %s8, %s6320
      // Predicated region
      $region53: #{downsample_forward.1} parent=51 // pred_check
        %p6322 = pneg %p269
      $region54: #{downsample_forward.1} parent=51 // pred_check_branch
        %6324 = sbr.rel (%p6322) target = $region56
      $region55: #{downsample_forward.1} parent=51 // pred_region
        %s6325 = smul.u32 8, %s24
      $region56: #{downsample_forward.1} parent=51 // pred_fallthru
        _
    $region52: #{downsample_forward.1} parent=5 // pred_fallthru
      _
    %p6326 = scmp.le.s32.totalorder 2, %s14
    // Predicated region
    $region57: #{downsample_forward.1} parent=5 // pred_check
      %p6327 = pneg %p6326
    $region58: #{downsample_forward.1} parent=5 // pred_check_branch
      %6329 = sbr.rel (%p6327) target = $region60
    $region59: #{downsample_forward.1} parent=5 // pred_region
      %s6330 = ssub.s32 %s14, 2
      // Predicated region
      $region61: #{downsample_forward.1} parent=59 // pred_check
        %p6331 = pneg %p275
      $region62: #{downsample_forward.1} parent=59 // pred_check_branch
        %6333 = sbr.rel (%p6331) target = $region64
      $region63: #{downsample_forward.1} parent=59 // pred_region
        %s6334 = smul.u32 8, %s26
        %p6335 = scmp.lt.s32.totalorder %s25, 1
        %s6336 = scalar_select %p6335, %s25, 1
        %p6337 = scmp.lt.s32.totalorder %s6334, 7
        %s6338 = scalar_select %p6337, %s6334, 7
        %s6339 = smul.addr %s6336, 8
        %s6340 = sadd.s32 %s6338, %s6339
        %s6341 = smul.addr %s6340, 8
        %s6342 = scalar_lea.vmem %s8, %s6341
      $region64: #{downsample_forward.1} parent=59 // pred_fallthru
        _
    $region60: #{downsample_forward.1} parent=5 // pred_fallthru
      _
  $region6: #{downsample_forward.1} parent=0 // loop_footer
    %s18 = sadd.s32 1, %s14
  $region7: #{downsample_forward.1} parent=0 // loop_footer_branch
    %13 = sbr.rel target = $region3
  $region8: #{downsample_forward.1} parent=0 // loop_exit
    _

</llo_original>
